<compile_context>
chip_gen: v7x
topology: tpu7x:2x2x1
jax: 0.10.0
libtpu: 0.0.40
codegen_flags: <defaults>
</compile_context>

<pallas_src>
import functools

import jax
import jax.numpy as jnp
from jax.experimental import pallas as pl
from jax.experimental.pallas import tpu as pltpu

EPS = 1e-9    # WindowedNorm1d default eps
LANE = 128    # left margin of the padded VMEM slabs -> bulk stores stay lane-aligned


# ---------------------------------------------------------------------------
# The single fused kernel: style pool -> 3 x [adawin+snake -> conv1 -> adawin+snake
# -> conv2 -> residual], unrolled with static dilations.
# ---------------------------------------------------------------------------
def _ada_conv_block_kernel(
        x_ref, s_ref, invc_ref,
        fcw_ref, fcb_ref, cw_ref, cb_ref, a2x_ref, ainv_ref,
        o_ref,
        pool_ref, tap_ref,
        *, channels, window, ksize, dilations, length):
    C, T = channels, length
    p = window // 2
    inv_cnt = invc_ref[...]                                      # (1, T) f32

    # Zero the pooling-slab halos once; every windowed mean below reuses them, so no
    # per-tap validity masks / full-width boundary fixes are ever needed.
    R = pool_ref.shape[0]
    if p > 0:
        pool_ref[:, LANE - p:LANE] = jnp.zeros((R, p), jnp.float32)
        pool_ref[:, LANE + T:LANE + T + p] = jnp.zeros((R, p), jnp.float32)

    def pooled_mean(v):
        # AvgPool1d(window, stride=1, pad=window//2, count_include_pad=False):
        # write v into the zero-padded slab (lane-aligned store), sum 2p+1 shifted
        # windows, multiply by the precomputed position-dependent 1/count.
        rows = v.shape[0]
        pool_ref[0:rows, LANE:LANE + T] = v
        acc = pool_ref[0:rows, LANE - p:LANE - p + T]
        for k in range(1, 2 * p + 1):
            acc = acc + pool_ref[0:rows, LANE - p + k:LANE - p + k + T]
        return acc * inv_cnt

    # Pooled style, computed ONCE per batch row and shared by all AdaWin layers
    # (the window mean is linear, so pool(W s + b) == W pool(s) + b).
    sp = pooled_mean(s_ref[0].astype(jnp.float32)).astype(jnp.bfloat16)   # (S, T)

    def adawin_snake(v, j):
        # style FC on the pre-pooled style -> pooled gamma / beta directly
        h = jnp.dot(fcw_ref[j], sp, preferred_element_type=jnp.float32) + fcb_ref[j]
        gamma, beta = h[:C], h[C:]          # '+1' of (1+gamma) already folded into bias
        mean = pooled_mean(v)
        var = pooled_mean(jnp.square(v - mean))
        y = gamma * ((v - mean) * jax.lax.rsqrt(var + EPS)) + beta
        # snake: y + (1/a) sin(a y)^2  ==  y + (1/(2a)) (1 - cos(2 a y))
        return y + ainv_ref[j] * (1.0 - jnp.cos(a2x_ref[j] * y))

    def conv_reflect(v, j, dil):
        # Conv1d(C, C, K, dilation=dil, padding=(K-1)*dil//2, padding_mode='reflect')
        # as K accumulated (C,C)x(C,T) bf16 MXU matmuls over a reflect-padded slab.
        pad = (ksize - 1) * dil // 2
        tap_ref[:, LANE:LANE + T] = v.astype(tap_ref.dtype)      # lane-aligned store
        for m in range(1, pad + 1):                              # reflect halos: narrow
            tap_ref[:, LANE - m:LANE - m + 1] = tap_ref[:, LANE + m:LANE + m + 1]
            tap_ref[:, LANE + T - 1 + m:LANE + T + m] = \
                tap_ref[:, LANE + T - 1 - m:LANE + T - m]
        acc = cb_ref[j]                                          # (C, 1) broadcasts
        for k in range(ksize):
            start = LANE - pad + k * dil
            acc = acc + jnp.dot(cw_ref[j * ksize + k],
                                tap_ref[:, start:start + T],
                                preferred_element_type=jnp.float32)
        return acc

    for i, d in enumerate(dilations):
        # carry the activation through o_ref so only one (C, T) f32 value stays live
        xin = x_ref[0].astype(jnp.float32) if i == 0 else o_ref[0]
        y = adawin_snake(xin, 2 * i)
        y = conv_reflect(y, 2 * i, d)
        y = adawin_snake(y, 2 * i + 1)
        y = conv_reflect(y, 2 * i + 1, 1)
        o_ref[0] = (y + xin).astype(o_ref.dtype)                 # residual fused in


def ada_conv_block1d(x, s, params, *, window, ksize, dilations):
    """Forward pass of AdaConvBlock1d (lengths=None, eval mode) as one pallas_call."""
    B, C, T = x.shape
    S = s.shape[1]
    n = len(dilations)
    p = window // 2
    assert window % 2 == 1, "window_length must be odd to preserve length"
    assert p < T
    pad_max = (ksize - 1) * max(dilations) // 2
    for d in tuple(dilations) + (1,):
        assert (ksize - 1) * d % 2 == 0, "conv must preserve length for the residual"
        assert (ksize - 1) * d // 2 < T, "reflect pad must be smaller than T"

    # position-dependent mean-pool denominator (count_include_pad=False), once per call
    t = jnp.arange(T)
    cnt = sum(((t + k >= 0) & (t + k < T)).astype(jnp.float32)
              for k in range(-p, p + 1))
    inv_cnt = (1.0 / cnt).reshape(1, T)

    # stack / fold parameters once in XLA glue (tiny)
    fcw, fcb, cw, cb, a2x, ainv = [], [], [], [], [], []
    for i in range(n):
        prm = params[i]
        for stage in (1, 2):
            fcw.append(prm[f"fc{stage}_w"].astype(jnp.bfloat16))
            fcb.append(prm[f"fc{stage}_b"].at[:C].add(1.0))   # fold '+1' of (1 + gamma)
            # (Cout, Cin, K) -> (K, Cout, Cin): one (C,C) matmul weight per tap
            cw.append(jnp.transpose(prm[f"c{stage}_w"], (2, 0, 1)).astype(jnp.bfloat16))
            cb.append(prm[f"c{stage}_b"])
            a = prm[f"alpha{stage}"]
            a2x.append(2.0 * a)
            ainv.append(0.5 / a)
    FCW = jnp.stack(fcw)                     # (2n, 2C, S)  bf16
    FCB = jnp.stack(fcb)                     # (2n, 2C, 1)  f32, gamma rows +1
    CW = jnp.concatenate(cw, axis=0)         # (2n*K, C, C) bf16
    CB = jnp.stack(cb)                       # (2n, C, 1)
    A2X = jnp.stack(a2x)                     # (2n, C, 1)   = 2*alpha
    AINV = jnp.stack(ainv)                   # (2n, C, 1)   = 1/(2*alpha)

    R = max(C, S)
    kernel = functools.partial(_ada_conv_block_kernel, channels=C, window=window,
                               ksize=ksize, dilations=tuple(dilations), length=T)

    def cspec(shape):
        # constant-block spec (weights / 1-count): always block 0
        return pl.BlockSpec(shape, lambda b, _s=len(shape): (0,) * _s)

    return pl.pallas_call(
        kernel,
        out_shape=jax.ShapeDtypeStruct((B, C, T), jnp.float32),
        grid_spec=pltpu.PrefetchScalarGridSpec(
            num_scalar_prefetch=0,
            grid=(B,),
            in_specs=[
                pl.BlockSpec((1, C, T), lambda b: (b, 0, 0)),       # x
                pl.BlockSpec((1, S, T), lambda b: (b, 0, 0)),       # style s
                cspec((1, T)),                                      # 1 / pool count
                cspec((2 * n, 2 * C, S)),                           # fc weights (bf16)
                cspec((2 * n, 2 * C, 1)),                           # fc bias (+1 folded)
                cspec((2 * n * ksize, C, C)),                       # conv tap weights
                cspec((2 * n, C, 1)),                               # conv bias
                cspec((2 * n, C, 1)),                               # 2*alpha
                cspec((2 * n, C, 1)),                               # 1/(2*alpha)
            ],
            out_specs=pl.BlockSpec((1, C, T), lambda b: (b, 0, 0)),
            scratch_shapes=[
                pltpu.VMEM((R, LANE + T + p), jnp.float32),          # pooling slab
                pltpu.VMEM((C, LANE + T + pad_max), jnp.bfloat16),   # conv tap slab
            ]),
        compiler_params=pltpu.CompilerParams(
            dimension_semantics=("parallel",),
            vmem_limit_bytes=64 * 1024 * 1024),
    )(x, s, inv_cnt, FCW, FCB, CW, CB, A2X, AINV)


def init_params(key, channels, style_dim, ksize, n_blocks=3):
    params = []
    for i in range(n_blocks):
        ks = jax.random.split(jax.random.fold_in(key, i), 8)
        params.append({
            # weight_norm(Linear(style_dim, 2C)) -> plain weight at init
            "fc1_w": 0.05 * jax.random.normal(ks[0], (2 * channels, style_dim), jnp.float32),
            "fc1_b": 0.05 * jax.random.normal(ks[1], (2 * channels, 1), jnp.float32),
            "fc2_w": 0.05 * jax.random.normal(ks[2], (2 * channels, style_dim), jnp.float32),
            "fc2_b": 0.05 * jax.random.normal(ks[3], (2 * channels, 1), jnp.float32),
            # Conv1d weights in PyTorch (Cout, Cin, K) layout
            "c1_w": 0.05 * jax.random.normal(ks[4], (channels, channels, ksize), jnp.float32),
            "c1_b": 0.05 * jax.random.normal(ks[5], (channels, 1), jnp.float32),
            "c2_w": 0.05 * jax.random.normal(ks[6], (channels, channels, ksize), jnp.float32),
            "c2_b": 0.05 * jax.random.normal(ks[7], (channels, 1), jnp.float32),
            # snake alpha init = ones (1, C, 1) -> stored (C, 1)
            "alpha1": jnp.ones((channels, 1), jnp.float32),
            "alpha2": jnp.ones((channels, 1), jnp.float32),
        })
    return params


# ---------------------------------------------------------------------------
# Pure-JAX reference mirroring the PyTorch module (matmul operands cast to bf16
# like the kernel so the check isolates structural correctness from dtype rounding).
# ---------------------------------------------------------------------------
def _ref_pool_mean(v, window):
    p = window // 2
    T = v.shape[-1]
    t = jnp.arange(T)
    acc = jnp.zeros_like(v)
    cnt = jnp.zeros((T,), jnp.float32)
    for k in range(-p, p + 1):
        valid = (t + k >= 0) & (t + k < T)
        acc = acc + jnp.where(valid, jnp.roll(v, -k, axis=-1), 0.0)
        cnt = cnt + valid.astype(jnp.float32)
    return acc / cnt


def _ref_adawin_snake(x, s, fc_w, fc_b, alpha, window):
    C = x.shape[1]
    h = jnp.einsum("os,bst->bot", fc_w.astype(jnp.bfloat16), s.astype(jnp.bfloat16),
                   preferred_element_type=jnp.float32) + fc_b.reshape(1, -1, 1)
    gamma = _ref_pool_mean(h[:, :C], window)
    beta = _ref_pool_mean(h[:, C:], window)
    mean = _ref_pool_mean(x, window)
    var = _ref_pool_mean(jnp.square(x - mean), window)
    xn = (x - mean) / jnp.sqrt(var + EPS)
    y = (1.0 + gamma) * xn + beta
    a = alpha.reshape(1, C, 1)
    return y + (1.0 / a) * jnp.sin(a * y) ** 2


def _ref_conv1d_reflect(x, w, b, dilation):
    B, C, T = x.shape
    K = w.shape[-1]
    pad = (K - 1) * dilation // 2
    xp = jnp.pad(x, ((0, 0), (0, 0), (pad, pad)), mode="reflect")
    acc = jnp.zeros((B, C, T), jnp.float32)
    for k in range(K):
        acc = acc + jnp.einsum(
            "oc,bct->bot", w[:, :, k].astype(jnp.bfloat16),
            xp[:, :, k * dilation:k * dilation + T].astype(jnp.bfloat16),
            preferred_element_type=jnp.float32)
    return acc + b.reshape(1, -1, 1)


def _ref_forward(x, s, params, *, window, ksize, dilations):
    del ksize  # inferred from the conv weights
    for i, d in enumerate(dilations):
        prm = params[i]
        xt = _ref_adawin_snake(x, s, prm["fc1_w"], prm["fc1_b"], prm["alpha1"], window)
        xt = _ref_conv1d_reflect(xt, prm["c1_w"], prm["c1_b"], d)
        xt = _ref_adawin_snake(xt, s, prm["fc2_w"], prm["fc2_b"], prm["alpha2"], window)
        xt = _ref_conv1d_reflect(xt, prm["c2_w"], prm["c2_b"], 1)
        x = xt + x
    return x


if __name__ == "__main__":
    B, C, T = 2, 32, 128          # batch, channels, time
    STYLE_DIM = 64
    WINDOW = 5
    KSIZE = 3
    DILATIONS = (1, 3, 5)

    key = jax.random.PRNGKey(0)
    kx, ks_, kp = jax.random.split(key, 3)
    x = jax.random.normal(kx, (B, C, T), jnp.float32)
    s = jax.random.normal(ks_, (B, STYLE_DIM, T), jnp.float32)
    params = init_params(kp, C, STYLE_DIM, KSIZE, n_blocks=len(DILATIONS))

    fwd = jax.jit(functools.partial(ada_conv_block1d, window=WINDOW,
                                    ksize=KSIZE, dilations=DILATIONS))
    out = jax.block_until_ready(fwd(x, s, params))

    assert out.shape == (B, C, T)
    assert bool(jnp.all(jnp.isfinite(out)))

    # structural correctness check against a pure-JAX mirror of the PyTorch module
    # (tolerance loose because both sides use bf16 MXU feeds with different op order)
    ref = jax.jit(functools.partial(_ref_forward, window=WINDOW,
                                    ksize=KSIZE, dilations=DILATIONS))(x, s, params)
    max_err = float(jnp.max(jnp.abs(out - ref)))
    assert max_err < 1e-1, f"kernel deviates from reference: max |err| = {max_err}"
    print("KERNEL_OK")
</pallas_src>

<mosaic_0001>
module attributes {stable_mosaic.version = 11 : i64} {
  func.func @_ada_conv_block_kernel(%arg0: i32, %arg1: memref<1x32x128xf32, #tpu.memory_space<vmem>>, %arg2: memref<1x64x128xf32, #tpu.memory_space<vmem>>, %arg3: memref<1x128xf32, #tpu.memory_space<vmem>>, %arg4: memref<6x64x64xbf16, #tpu.memory_space<vmem>>, %arg5: memref<6x64x1xf32, #tpu.memory_space<vmem>>, %arg6: memref<18x32x32xbf16, #tpu.memory_space<vmem>>, %arg7: memref<6x32x1xf32, #tpu.memory_space<vmem>>, %arg8: memref<6x32x1xf32, #tpu.memory_space<vmem>>, %arg9: memref<6x32x1xf32, #tpu.memory_space<vmem>>, %arg10: memref<1x32x128xf32, #tpu.memory_space<vmem>>, %arg11: memref<64x258xf32, #tpu.memory_space<vmem>>, %arg12: memref<32x261xbf16, #tpu.memory_space<vmem>>) attributes {dimension_semantics = [#tpu.dimension_semantics<parallel>], iteration_bounds = array<i64: 2>, scalar_prefetch = 0 : i64, scratch_operands = 2 : i64, tpu.core_type = #tpu.core_type<tc>, window_params = [{transform_indices = @transform_0, window_bounds = array<i64: 1, 32, 128>}, {transform_indices = @transform_1, window_bounds = array<i64: 1, 64, 128>}, {pipeline_mode = #tpu.pipeline_mode<synchronous>, transform_indices = @transform_2, window_bounds = array<i64: 1, 128>}, {pipeline_mode = #tpu.pipeline_mode<synchronous>, transform_indices = @transform_3, window_bounds = array<i64: 6, 64, 64>}, {pipeline_mode = #tpu.pipeline_mode<synchronous>, transform_indices = @transform_4, window_bounds = array<i64: 6, 64, 1>}, {pipeline_mode = #tpu.pipeline_mode<synchronous>, transform_indices = @transform_5, window_bounds = array<i64: 18, 32, 32>}, {pipeline_mode = #tpu.pipeline_mode<synchronous>, transform_indices = @transform_6, window_bounds = array<i64: 6, 32, 1>}, {pipeline_mode = #tpu.pipeline_mode<synchronous>, transform_indices = @transform_7, window_bounds = array<i64: 6, 32, 1>}, {pipeline_mode = #tpu.pipeline_mode<synchronous>, transform_indices = @transform_8, window_bounds = array<i64: 6, 32, 1>}, {transform_indices = @transform_9, window_bounds = array<i64: 1, 32, 128>}]} {
    %c0 = arith.constant 0 : index
    %c0_0 = arith.constant 0 : index
    %0 = vector.load %arg3[%c0, %c0_0] : memref<1x128xf32, #tpu.memory_space<vmem>>, vector<1x128xf32>
    %cst = arith.constant 0.000000e+00 : f32
    %1 = vector.broadcast %cst : f32 to vector<64x2xf32>
    %c0_1 = arith.constant 0 : index
    %c126 = arith.constant 126 : index
    %2 = vector.load %arg11[%c0_1, %c126] : memref<64x258xf32, #tpu.memory_space<vmem>>, vector<64x2xf32>
    tpu.vector_store %arg11[%c0_1, %c126], %1 {strides = array<i32>} : memref<64x258xf32, #tpu.memory_space<vmem>>, vector<64x2xf32>,
    %cst_2 = arith.constant 0.000000e+00 : f32
    %3 = vector.broadcast %cst_2 : f32 to vector<64x2xf32>
    %c0_3 = arith.constant 0 : index
    %c256 = arith.constant 256 : index
    %4 = vector.load %arg11[%c0_3, %c256] : memref<64x258xf32, #tpu.memory_space<vmem>>, vector<64x2xf32>
    tpu.vector_store %arg11[%c0_3, %c256], %3 {strides = array<i32>} : memref<64x258xf32, #tpu.memory_space<vmem>>, vector<64x2xf32>,
    %c0_4 = arith.constant 0 : index
    %c0_5 = arith.constant 0 : index
    %c0_6 = arith.constant 0 : index
    %5 = vector.load %arg2[%c0_4, %c0_5, %c0_6] : memref<1x64x128xf32, #tpu.memory_space<vmem>>, vector<1x64x128xf32>
    %6 = vector.shape_cast %5 : vector<1x64x128xf32> to vector<64x128xf32>
    %c0_7 = arith.constant 0 : index
    %c128 = arith.constant 128 : index
    %7 = vector.load %arg11[%c0_7, %c128] : memref<64x258xf32, #tpu.memory_space<vmem>>, vector<64x128xf32>
    tpu.vector_store %arg11[%c0_7, %c128], %6 {strides = array<i32>} : memref<64x258xf32, #tpu.memory_space<vmem>>, vector<64x128xf32>,
    %c0_8 = arith.constant 0 : index
    %c126_9 = arith.constant 126 : index
    %8 = vector.load %arg11[%c0_8, %c126_9] : memref<64x258xf32, #tpu.memory_space<vmem>>, vector<64x128xf32>
    %c0_10 = arith.constant 0 : index
    %c127 = arith.constant 127 : index
    %9 = vector.load %arg11[%c0_10, %c127] : memref<64x258xf32, #tpu.memory_space<vmem>>, vector<64x128xf32>
    %10 = arith.addf %8, %9 : vector<64x128xf32>
    %c0_11 = arith.constant 0 : index
    %c128_12 = arith.constant 128 : index
    %11 = vector.load %arg11[%c0_11, %c128_12] : memref<64x258xf32, #tpu.memory_space<vmem>>, vector<64x128xf32>
    %12 = arith.addf %10, %11 : vector<64x128xf32>
    %c0_13 = arith.constant 0 : index
    %c129 = arith.constant 129 : index
    %13 = vector.load %arg11[%c0_13, %c129] : memref<64x258xf32, #tpu.memory_space<vmem>>, vector<64x128xf32>
    %14 = arith.addf %12, %13 : vector<64x128xf32>
    %c0_14 = arith.constant 0 : index
    %c130 = arith.constant 130 : index
    %15 = vector.load %arg11[%c0_14, %c130] : memref<64x258xf32, #tpu.memory_space<vmem>>, vector<64x128xf32>
    %16 = arith.addf %14, %15 : vector<64x128xf32>
    %17 = vector.broadcast %0 : vector<1x128xf32> to vector<64x128xf32>
    %18 = arith.mulf %16, %17 : vector<64x128xf32>
    %19 = arith.truncf %18 : vector<64x128xf32> to vector<64x128xbf16>
    %c0_15 = arith.constant 0 : index
    %c0_16 = arith.constant 0 : index
    %c0_17 = arith.constant 0 : index
    %20 = vector.load %arg1[%c0_15, %c0_16, %c0_17] : memref<1x32x128xf32, #tpu.memory_space<vmem>>, vector<1x32x128xf32>
    %21 = vector.shape_cast %20 : vector<1x32x128xf32> to vector<32x128xf32>
    %c0_18 = arith.constant 0 : index
    %c0_19 = arith.constant 0 : index
    %c0_20 = arith.constant 0 : index
    %22 = vector.load %arg4[%c0_18, %c0_19, %c0_20] : memref<6x64x64xbf16, #tpu.memory_space<vmem>>, vector<1x64x64xbf16>
    %23 = vector.shape_cast %22 : vector<1x64x64xbf16> to vector<64x64xbf16>
    %cst_21 = arith.constant dense<0.000000e+00> : vector<64x128xf32>
    %24 = tpu.matmul %23, %19, %cst_21 {dimension_numbers = #tpu.dot_dimension_numbers<[1], [0], [0], [1], [0, 0, 1, 1], [], []>} : vector<64x64xbf16>, vector<64x128xbf16>, vector<64x128xf32> -> vector<64x128xf32>
    %c0_22 = arith.constant 0 : index
    %c0_23 = arith.constant 0 : index
    %c0_24 = arith.constant 0 : index
    %25 = vector.load %arg5[%c0_22, %c0_23, %c0_24] : memref<6x64x1xf32, #tpu.memory_space<vmem>>, vector<1x64x1xf32>
    %26 = vector.shape_cast %25 : vector<1x64x1xf32> to vector<64x1xf32>
    %27 = vector.broadcast %26 : vector<64x1xf32> to vector<64x128xf32>
    %28 = arith.addf %24, %27 : vector<64x128xf32>
    %29 = vector.extract_strided_slice %28 {offsets = [0, 0], sizes = [32, 128], strides = [1, 1]} : vector<64x128xf32> to vector<32x128xf32>
    %30 = vector.extract_strided_slice %28 {offsets = [32, 0], sizes = [32, 128], strides = [1, 1]} : vector<64x128xf32> to vector<32x128xf32>
    %c0_25 = arith.constant 0 : index
    %c128_26 = arith.constant 128 : index
    %31 = vector.load %arg11[%c0_25, %c128_26] : memref<64x258xf32, #tpu.memory_space<vmem>>, vector<32x128xf32>
    tpu.vector_store %arg11[%c0_25, %c128_26], %21 {strides = array<i32>} : memref<64x258xf32, #tpu.memory_space<vmem>>, vector<32x128xf32>,
    %c0_27 = arith.constant 0 : index
    %c126_28 = arith.constant 126 : index
    %32 = vector.load %arg11[%c0_27, %c126_28] : memref<64x258xf32, #tpu.memory_space<vmem>>, vector<32x128xf32>
    %c0_29 = arith.constant 0 : index
    %c127_30 = arith.constant 127 : index
    %33 = vector.load %arg11[%c0_29, %c127_30] : memref<64x258xf32, #tpu.memory_space<vmem>>, vector<32x128xf32>
    %34 = arith.addf %32, %33 : vector<32x128xf32>
    %c0_31 = arith.constant 0 : index
    %c128_32 = arith.constant 128 : index
    %35 = vector.load %arg11[%c0_31, %c128_32] : memref<64x258xf32, #tpu.memory_space<vmem>>, vector<32x128xf32>
    %36 = arith.addf %34, %35 : vector<32x128xf32>
    %c0_33 = arith.constant 0 : index
    %c129_34 = arith.constant 129 : index
    %37 = vector.load %arg11[%c0_33, %c129_34] : memref<64x258xf32, #tpu.memory_space<vmem>>, vector<32x128xf32>
    %38 = arith.addf %36, %37 : vector<32x128xf32>
    %c0_35 = arith.constant 0 : index
    %c130_36 = arith.constant 130 : index
    %39 = vector.load %arg11[%c0_35, %c130_36] : memref<64x258xf32, #tpu.memory_space<vmem>>, vector<32x128xf32>
    %40 = arith.addf %38, %39 : vector<32x128xf32>
    %41 = vector.broadcast %0 : vector<1x128xf32> to vector<32x128xf32>
    %42 = arith.mulf %40, %41 : vector<32x128xf32>
    %43 = arith.subf %21, %42 : vector<32x128xf32>
    %44 = arith.mulf %43, %43 : vector<32x128xf32>
    %c0_37 = arith.constant 0 : index
    %c128_38 = arith.constant 128 : index
    %45 = vector.load %arg11[%c0_37, %c128_38] : memref<64x258xf32, #tpu.memory_space<vmem>>, vector<32x128xf32>
    tpu.vector_store %arg11[%c0_37, %c128_38], %44 {strides = array<i32>} : memref<64x258xf32, #tpu.memory_space<vmem>>, vector<32x128xf32>,
    %c0_39 = arith.constant 0 : index
    %c126_40 = arith.constant 126 : index
    %46 = vector.load %arg11[%c0_39, %c126_40] : memref<64x258xf32, #tpu.memory_space<vmem>>, vector<32x128xf32>
    %c0_41 = arith.constant 0 : index
    %c127_42 = arith.constant 127 : index
    %47 = vector.load %arg11[%c0_41, %c127_42] : memref<64x258xf32, #tpu.memory_space<vmem>>, vector<32x128xf32>
    %48 = arith.addf %46, %47 : vector<32x128xf32>
    %c0_43 = arith.constant 0 : index
    %c128_44 = arith.constant 128 : index
    %49 = vector.load %arg11[%c0_43, %c128_44] : memref<64x258xf32, #tpu.memory_space<vmem>>, vector<32x128xf32>
    %50 = arith.addf %48, %49 : vector<32x128xf32>
    %c0_45 = arith.constant 0 : index
    %c129_46 = arith.constant 129 : index
    %51 = vector.load %arg11[%c0_45, %c129_46] : memref<64x258xf32, #tpu.memory_space<vmem>>, vector<32x128xf32>
    %52 = arith.addf %50, %51 : vector<32x128xf32>
    %c0_47 = arith.constant 0 : index
    %c130_48 = arith.constant 130 : index
    %53 = vector.load %arg11[%c0_47, %c130_48] : memref<64x258xf32, #tpu.memory_space<vmem>>, vector<32x128xf32>
    %54 = arith.addf %52, %53 : vector<32x128xf32>
    %55 = vector.broadcast %0 : vector<1x128xf32> to vector<32x128xf32>
    %56 = arith.mulf %54, %55 : vector<32x128xf32>
    %57 = arith.subf %21, %42 : vector<32x128xf32>
    %cst_49 = arith.constant 9.99999971E-10 : f32
    %58 = vector.broadcast %cst_49 : f32 to vector<32x128xf32>
    %59 = arith.addf %56, %58 : vector<32x128xf32>
    %60 = math.rsqrt %59 : vector<32x128xf32>
    %61 = arith.mulf %57, %60 : vector<32x128xf32>
    %62 = arith.mulf %29, %61 : vector<32x128xf32>
    %63 = arith.addf %62, %30 : vector<32x128xf32>
    %c0_50 = arith.constant 0 : index
    %c0_51 = arith.constant 0 : index
    %c0_52 = arith.constant 0 : index
    %64 = vector.load %arg9[%c0_50, %c0_51, %c0_52] : memref<6x32x1xf32, #tpu.memory_space<vmem>>, vector<1x32x1xf32>
    %65 = vector.shape_cast %64 : vector<1x32x1xf32> to vector<32x1xf32>
    %c0_53 = arith.constant 0 : index
    %c0_54 = arith.constant 0 : index
    %c0_55 = arith.constant 0 : index
    %66 = vector.load %arg8[%c0_53, %c0_54, %c0_55] : memref<6x32x1xf32, #tpu.memory_space<vmem>>, vector<1x32x1xf32>
    %67 = vector.shape_cast %66 : vector<1x32x1xf32> to vector<32x1xf32>
    %68 = vector.broadcast %67 : vector<32x1xf32> to vector<32x128xf32>
    %69 = arith.mulf %68, %63 : vector<32x128xf32>
    %70 = math.cos %69 : vector<32x128xf32>
    %cst_56 = arith.constant 1.000000e+00 : f32
    %71 = vector.broadcast %cst_56 : f32 to vector<32x128xf32>
    %72 = arith.subf %71, %70 : vector<32x128xf32>
    %73 = vector.broadcast %65 : vector<32x1xf32> to vector<32x128xf32>
    %74 = arith.mulf %73, %72 : vector<32x128xf32>
    %75 = arith.addf %63, %74 : vector<32x128xf32>
    %76 = arith.truncf %75 : vector<32x128xf32> to vector<32x128xbf16>
    %c0_57 = arith.constant 0 : index
    %c128_58 = arith.constant 128 : index
    %77 = vector.load %arg12[%c0_57, %c128_58] : memref<32x261xbf16, #tpu.memory_space<vmem>>, vector<32x128xbf16>
    tpu.vector_store %arg12[%c0_57, %c128_58], %76 {strides = array<i32>} : memref<32x261xbf16, #tpu.memory_space<vmem>>, vector<32x128xbf16>,
    %c0_59 = arith.constant 0 : index
    %c129_60 = arith.constant 129 : index
    %78 = vector.load %arg12[%c0_59, %c129_60] : memref<32x261xbf16, #tpu.memory_space<vmem>>, vector<32x1xbf16>
    %c0_61 = arith.constant 0 : index
    %c127_62 = arith.constant 127 : index
    %79 = vector.load %arg12[%c0_61, %c127_62] : memref<32x261xbf16, #tpu.memory_space<vmem>>, vector<32x1xbf16>
    tpu.vector_store %arg12[%c0_61, %c127_62], %78 {strides = array<i32>} : memref<32x261xbf16, #tpu.memory_space<vmem>>, vector<32x1xbf16>,
    %c0_63 = arith.constant 0 : index
    %c254 = arith.constant 254 : index
    %80 = vector.load %arg12[%c0_63, %c254] : memref<32x261xbf16, #tpu.memory_space<vmem>>, vector<32x1xbf16>
    %c0_64 = arith.constant 0 : index
    %c256_65 = arith.constant 256 : index
    %81 = vector.load %arg12[%c0_64, %c256_65] : memref<32x261xbf16, #tpu.memory_space<vmem>>, vector<32x1xbf16>
    tpu.vector_store %arg12[%c0_64, %c256_65], %80 {strides = array<i32>} : memref<32x261xbf16, #tpu.memory_space<vmem>>, vector<32x1xbf16>,
    %c0_66 = arith.constant 0 : index
    %c0_67 = arith.constant 0 : index
    %c0_68 = arith.constant 0 : index
    %82 = vector.load %arg7[%c0_66, %c0_67, %c0_68] : memref<6x32x1xf32, #tpu.memory_space<vmem>>, vector<1x32x1xf32>
    %83 = vector.shape_cast %82 : vector<1x32x1xf32> to vector<32x1xf32>
    %c0_69 = arith.constant 0 : index
    %c0_70 = arith.constant 0 : index
    %c0_71 = arith.constant 0 : index
    %84 = vector.load %arg6[%c0_69, %c0_70, %c0_71] : memref<18x32x32xbf16, #tpu.memory_space<vmem>>, vector<1x32x32xbf16>
    %85 = vector.shape_cast %84 : vector<1x32x32xbf16> to vector<32x32xbf16>
    %c0_72 = arith.constant 0 : index
    %c127_73 = arith.constant 127 : index
    %86 = vector.load %arg12[%c0_72, %c127_73] : memref<32x261xbf16, #tpu.memory_space<vmem>>, vector<32x128xbf16>
    %cst_74 = arith.constant dense<0.000000e+00> : vector<32x128xf32>
    %87 = tpu.matmul %85, %86, %cst_74 {dimension_numbers = #tpu.dot_dimension_numbers<[1], [0], [0], [1], [0, 0, 1, 1], [], []>} : vector<32x32xbf16>, vector<32x128xbf16>, vector<32x128xf32> -> vector<32x128xf32>
    %88 = vector.broadcast %83 : vector<32x1xf32> to vector<32x128xf32>
    %89 = arith.addf %88, %87 : vector<32x128xf32>
    %c1 = arith.constant 1 : index
    %c0_75 = arith.constant 0 : index
    %c0_76 = arith.constant 0 : index
    %90 = vector.load %arg6[%c1, %c0_75, %c0_76] : memref<18x32x32xbf16, #tpu.memory_space<vmem>>, vector<1x32x32xbf16>
    %91 = vector.shape_cast %90 : vector<1x32x32xbf16> to vector<32x32xbf16>
    %c0_77 = arith.constant 0 : index
    %c128_78 = arith.constant 128 : index
    %92 = vector.load %arg12[%c0_77, %c128_78] : memref<32x261xbf16, #tpu.memory_space<vmem>>, vector<32x128xbf16>
    %cst_79 = arith.constant dense<0.000000e+00> : vector<32x128xf32>
    %93 = tpu.matmul %91, %92, %cst_79 {dimension_numbers = #tpu.dot_dimension_numbers<[1], [0], [0], [1], [0, 0, 1, 1], [], []>} : vector<32x32xbf16>, vector<32x128xbf16>, vector<32x128xf32> -> vector<32x128xf32>
    %94 = arith.addf %89, %93 : vector<32x128xf32>
    %c2 = arith.constant 2 : index
    %c0_80 = arith.constant 0 : index
    %c0_81 = arith.constant 0 : index
    %95 = vector.load %arg6[%c2, %c0_80, %c0_81] : memref<18x32x32xbf16, #tpu.memory_space<vmem>>, vector<1x32x32xbf16>
    %96 = vector.shape_cast %95 : vector<1x32x32xbf16> to vector<32x32xbf16>
    %c0_82 = arith.constant 0 : index
    %c129_83 = arith.constant 129 : index
    %97 = vector.load %arg12[%c0_82, %c129_83] : memref<32x261xbf16, #tpu.memory_space<vmem>>, vector<32x128xbf16>
    %cst_84 = arith.constant dense<0.000000e+00> : vector<32x128xf32>
    %98 = tpu.matmul %96, %97, %cst_84 {dimension_numbers = #tpu.dot_dimension_numbers<[1], [0], [0], [1], [0, 0, 1, 1], [], []>} : vector<32x32xbf16>, vector<32x128xbf16>, vector<32x128xf32> -> vector<32x128xf32>
    %99 = arith.addf %94, %98 : vector<32x128xf32>
    %c1_85 = arith.constant 1 : index
    %c0_86 = arith.constant 0 : index
    %c0_87 = arith.constant 0 : index
    %100 = vector.load %arg4[%c1_85, %c0_86, %c0_87] : memref<6x64x64xbf16, #tpu.memory_space<vmem>>, vector<1x64x64xbf16>
    %101 = vector.shape_cast %100 : vector<1x64x64xbf16> to vector<64x64xbf16>
    %cst_88 = arith.constant dense<0.000000e+00> : vector<64x128xf32>
    %102 = tpu.matmul %101, %19, %cst_88 {dimension_numbers = #tpu.dot_dimension_numbers<[1], [0], [0], [1], [0, 0, 1, 1], [], []>} : vector<64x64xbf16>, vector<64x128xbf16>, vector<64x128xf32> -> vector<64x128xf32>
    %c1_89 = arith.constant 1 : index
    %c0_90 = arith.constant 0 : index
    %c0_91 = arith.constant 0 : index
    %103 = vector.load %arg5[%c1_89, %c0_90, %c0_91] : memref<6x64x1xf32, #tpu.memory_space<vmem>>, vector<1x64x1xf32>
    %104 = vector.shape_cast %103 : vector<1x64x1xf32> to vector<64x1xf32>
    %105 = vector.broadcast %104 : vector<64x1xf32> to vector<64x128xf32>
    %106 = arith.addf %102, %105 : vector<64x128xf32>
    %107 = vector.extract_strided_slice %106 {offsets = [0, 0], sizes = [32, 128], strides = [1, 1]} : vector<64x128xf32> to vector<32x128xf32>
    %108 = vector.extract_strided_slice %106 {offsets = [32, 0], sizes = [32, 128], strides = [1, 1]} : vector<64x128xf32> to vector<32x128xf32>
    %c0_92 = arith.constant 0 : index
    %c128_93 = arith.constant 128 : index
    %109 = vector.load %arg11[%c0_92, %c128_93] : memref<64x258xf32, #tpu.memory_space<vmem>>, vector<32x128xf32>
    tpu.vector_store %arg11[%c0_92, %c128_93], %99 {strides = array<i32>} : memref<64x258xf32, #tpu.memory_space<vmem>>, vector<32x128xf32>,
    %c0_94 = arith.constant 0 : index
    %c126_95 = arith.constant 126 : index
    %110 = vector.load %arg11[%c0_94, %c126_95] : memref<64x258xf32, #tpu.memory_space<vmem>>, vector<32x128xf32>
    %c0_96 = arith.constant 0 : index
    %c127_97 = arith.constant 127 : index
    %111 = vector.load %arg11[%c0_96, %c127_97] : memref<64x258xf32, #tpu.memory_space<vmem>>, vector<32x128xf32>
    %112 = arith.addf %110, %111 : vector<32x128xf32>
    %c0_98 = arith.constant 0 : index
    %c128_99 = arith.constant 128 : index
    %113 = vector.load %arg11[%c0_98, %c128_99] : memref<64x258xf32, #tpu.memory_space<vmem>>, vector<32x128xf32>
    %114 = arith.addf %112, %113 : vector<32x128xf32>
    %c0_100 = arith.constant 0 : index
    %c129_101 = arith.constant 129 : index
    %115 = vector.load %arg11[%c0_100, %c129_101] : memref<64x258xf32, #tpu.memory_space<vmem>>, vector<32x128xf32>
    %116 = arith.addf %114, %115 : vector<32x128xf32>
    %c0_102 = arith.constant 0 : index
    %c130_103 = arith.constant 130 : index
    %117 = vector.load %arg11[%c0_102, %c130_103] : memref<64x258xf32, #tpu.memory_space<vmem>>, vector<32x128xf32>
    %118 = arith.addf %116, %117 : vector<32x128xf32>
    %119 = vector.broadcast %0 : vector<1x128xf32> to vector<32x128xf32>
    %120 = arith.mulf %118, %119 : vector<32x128xf32>
    %121 = arith.subf %99, %120 : vector<32x128xf32>
    %122 = arith.mulf %121, %121 : vector<32x128xf32>
    %c0_104 = arith.constant 0 : index
    %c128_105 = arith.constant 128 : index
    %123 = vector.load %arg11[%c0_104, %c128_105] : memref<64x258xf32, #tpu.memory_space<vmem>>, vector<32x128xf32>
    tpu.vector_store %arg11[%c0_104, %c128_105], %122 {strides = array<i32>} : memref<64x258xf32, #tpu.memory_space<vmem>>, vector<32x128xf32>,
    %c0_106 = arith.constant 0 : index
    %c126_107 = arith.constant 126 : index
    %124 = vector.load %arg11[%c0_106, %c126_107] : memref<64x258xf32, #tpu.memory_space<vmem>>, vector<32x128xf32>
    %c0_108 = arith.constant 0 : index
    %c127_109 = arith.constant 127 : index
    %125 = vector.load %arg11[%c0_108, %c127_109] : memref<64x258xf32, #tpu.memory_space<vmem>>, vector<32x128xf32>
    %126 = arith.addf %124, %125 : vector<32x128xf32>
    %c0_110 = arith.constant 0 : index
    %c128_111 = arith.constant 128 : index
    %127 = vector.load %arg11[%c0_110, %c128_111] : memref<64x258xf32, #tpu.memory_space<vmem>>, vector<32x128xf32>
    %128 = arith.addf %126, %127 : vector<32x128xf32>
    %c0_112 = arith.constant 0 : index
    %c129_113 = arith.constant 129 : index
    %129 = vector.load %arg11[%c0_112, %c129_113] : memref<64x258xf32, #tpu.memory_space<vmem>>, vector<32x128xf32>
    %130 = arith.addf %128, %129 : vector<32x128xf32>
    %c0_114 = arith.constant 0 : index
    %c130_115 = arith.constant 130 : index
    %131 = vector.load %arg11[%c0_114, %c130_115] : memref<64x258xf32, #tpu.memory_space<vmem>>, vector<32x128xf32>
    %132 = arith.addf %130, %131 : vector<32x128xf32>
    %133 = vector.broadcast %0 : vector<1x128xf32> to vector<32x128xf32>
    %134 = arith.mulf %132, %133 : vector<32x128xf32>
    %135 = arith.subf %99, %120 : vector<32x128xf32>
    %cst_116 = arith.constant 9.99999971E-10 : f32
    %136 = vector.broadcast %cst_116 : f32 to vector<32x128xf32>
    %137 = arith.addf %134, %136 : vector<32x128xf32>
    %138 = math.rsqrt %137 : vector<32x128xf32>
    %139 = arith.mulf %135, %138 : vector<32x128xf32>
    %140 = arith.mulf %107, %139 : vector<32x128xf32>
    %141 = arith.addf %140, %108 : vector<32x128xf32>
    %c1_117 = arith.constant 1 : index
    %c0_118 = arith.constant 0 : index
    %c0_119 = arith.constant 0 : index
    %142 = vector.load %arg9[%c1_117, %c0_118, %c0_119] : memref<6x32x1xf32, #tpu.memory_space<vmem>>, vector<1x32x1xf32>
    %143 = vector.shape_cast %142 : vector<1x32x1xf32> to vector<32x1xf32>
    %c1_120 = arith.constant 1 : index
    %c0_121 = arith.constant 0 : index
    %c0_122 = arith.constant 0 : index
    %144 = vector.load %arg8[%c1_120, %c0_121, %c0_122] : memref<6x32x1xf32, #tpu.memory_space<vmem>>, vector<1x32x1xf32>
    %145 = vector.shape_cast %144 : vector<1x32x1xf32> to vector<32x1xf32>
    %146 = vector.broadcast %145 : vector<32x1xf32> to vector<32x128xf32>
    %147 = arith.mulf %146, %141 : vector<32x128xf32>
    %148 = math.cos %147 : vector<32x128xf32>
    %cst_123 = arith.constant 1.000000e+00 : f32
    %149 = vector.broadcast %cst_123 : f32 to vector<32x128xf32>
    %150 = arith.subf %149, %148 : vector<32x128xf32>
    %151 = vector.broadcast %143 : vector<32x1xf32> to vector<32x128xf32>
    %152 = arith.mulf %151, %150 : vector<32x128xf32>
    %153 = arith.addf %141, %152 : vector<32x128xf32>
    %154 = arith.truncf %153 : vector<32x128xf32> to vector<32x128xbf16>
    %c0_124 = arith.constant 0 : index
    %c128_125 = arith.constant 128 : index
    %155 = vector.load %arg12[%c0_124, %c128_125] : memref<32x261xbf16, #tpu.memory_space<vmem>>, vector<32x128xbf16>
    tpu.vector_store %arg12[%c0_124, %c128_125], %154 {strides = array<i32>} : memref<32x261xbf16, #tpu.memory_space<vmem>>, vector<32x128xbf16>,
    %c0_126 = arith.constant 0 : index
    %c129_127 = arith.constant 129 : index
    %156 = vector.load %arg12[%c0_126, %c129_127] : memref<32x261xbf16, #tpu.memory_space<vmem>>, vector<32x1xbf16>
    %c0_128 = arith.constant 0 : index
    %c127_129 = arith.constant 127 : index
    %157 = vector.load %arg12[%c0_128, %c127_129] : memref<32x261xbf16, #tpu.memory_space<vmem>>, vector<32x1xbf16>
    tpu.vector_store %arg12[%c0_128, %c127_129], %156 {strides = array<i32>} : memref<32x261xbf16, #tpu.memory_space<vmem>>, vector<32x1xbf16>,
    %c0_130 = arith.constant 0 : index
    %c254_131 = arith.constant 254 : index
    %158 = vector.load %arg12[%c0_130, %c254_131] : memref<32x261xbf16, #tpu.memory_space<vmem>>, vector<32x1xbf16>
    %c0_132 = arith.constant 0 : index
    %c256_133 = arith.constant 256 : index
    %159 = vector.load %arg12[%c0_132, %c256_133] : memref<32x261xbf16, #tpu.memory_space<vmem>>, vector<32x1xbf16>
    tpu.vector_store %arg12[%c0_132, %c256_133], %158 {strides = array<i32>} : memref<32x261xbf16, #tpu.memory_space<vmem>>, vector<32x1xbf16>,
    %c1_134 = arith.constant 1 : index
    %c0_135 = arith.constant 0 : index
    %c0_136 = arith.constant 0 : index
    %160 = vector.load %arg7[%c1_134, %c0_135, %c0_136] : memref<6x32x1xf32, #tpu.memory_space<vmem>>, vector<1x32x1xf32>
    %161 = vector.shape_cast %160 : vector<1x32x1xf32> to vector<32x1xf32>
    %c3 = arith.constant 3 : index
    %c0_137 = arith.constant 0 : index
    %c0_138 = arith.constant 0 : index
    %162 = vector.load %arg6[%c3, %c0_137, %c0_138] : memref<18x32x32xbf16, #tpu.memory_space<vmem>>, vector<1x32x32xbf16>
    %163 = vector.shape_cast %162 : vector<1x32x32xbf16> to vector<32x32xbf16>
    %c0_139 = arith.constant 0 : index
    %c127_140 = arith.constant 127 : index
    %164 = vector.load %arg12[%c0_139, %c127_140] : memref<32x261xbf16, #tpu.memory_space<vmem>>, vector<32x128xbf16>
    %cst_141 = arith.constant dense<0.000000e+00> : vector<32x128xf32>
    %165 = tpu.matmul %163, %164, %cst_141 {dimension_numbers = #tpu.dot_dimension_numbers<[1], [0], [0], [1], [0, 0, 1, 1], [], []>} : vector<32x32xbf16>, vector<32x128xbf16>, vector<32x128xf32> -> vector<32x128xf32>
    %166 = vector.broadcast %161 : vector<32x1xf32> to vector<32x128xf32>
    %167 = arith.addf %166, %165 : vector<32x128xf32>
    %c4 = arith.constant 4 : index
    %c0_142 = arith.constant 0 : index
    %c0_143 = arith.constant 0 : index
    %168 = vector.load %arg6[%c4, %c0_142, %c0_143] : memref<18x32x32xbf16, #tpu.memory_space<vmem>>, vector<1x32x32xbf16>
    %169 = vector.shape_cast %168 : vector<1x32x32xbf16> to vector<32x32xbf16>
    %c0_144 = arith.constant 0 : index
    %c128_145 = arith.constant 128 : index
    %170 = vector.load %arg12[%c0_144, %c128_145] : memref<32x261xbf16, #tpu.memory_space<vmem>>, vector<32x128xbf16>
    %cst_146 = arith.constant dense<0.000000e+00> : vector<32x128xf32>
    %171 = tpu.matmul %169, %170, %cst_146 {dimension_numbers = #tpu.dot_dimension_numbers<[1], [0], [0], [1], [0, 0, 1, 1], [], []>} : vector<32x32xbf16>, vector<32x128xbf16>, vector<32x128xf32> -> vector<32x128xf32>
    %172 = arith.addf %167, %171 : vector<32x128xf32>
    %c5 = arith.constant 5 : index
    %c0_147 = arith.constant 0 : index
    %c0_148 = arith.constant 0 : index
    %173 = vector.load %arg6[%c5, %c0_147, %c0_148] : memref<18x32x32xbf16, #tpu.memory_space<vmem>>, vector<1x32x32xbf16>
    %174 = vector.shape_cast %173 : vector<1x32x32xbf16> to vector<32x32xbf16>
    %c0_149 = arith.constant 0 : index
    %c129_150 = arith.constant 129 : index
    %175 = vector.load %arg12[%c0_149, %c129_150] : memref<32x261xbf16, #tpu.memory_space<vmem>>, vector<32x128xbf16>
    %cst_151 = arith.constant dense<0.000000e+00> : vector<32x128xf32>
    %176 = tpu.matmul %174, %175, %cst_151 {dimension_numbers = #tpu.dot_dimension_numbers<[1], [0], [0], [1], [0, 0, 1, 1], [], []>} : vector<32x32xbf16>, vector<32x128xbf16>, vector<32x128xf32> -> vector<32x128xf32>
    %177 = arith.addf %172, %176 : vector<32x128xf32>
    %178 = arith.addf %177, %21 : vector<32x128xf32>
    %c0_152 = arith.constant 0 : index
    %c0_153 = arith.constant 0 : index
    %c0_154 = arith.constant 0 : index
    %179 = vector.load %arg10[%c0_152, %c0_153, %c0_154] : memref<1x32x128xf32, #tpu.memory_space<vmem>>, vector<1x32x128xf32>
    %180 = vector.shape_cast %179 : vector<1x32x128xf32> to vector<32x128xf32>
    %181 = vector.shape_cast %178 : vector<32x128xf32> to vector<1x32x128xf32>
    tpu.vector_store %arg10[%c0_152, %c0_153, %c0_154], %181 {strides = array<i32>} : memref<1x32x128xf32, #tpu.memory_space<vmem>>, vector<1x32x128xf32>,
    %c0_155 = arith.constant 0 : index
    %c0_156 = arith.constant 0 : index
    %c0_157 = arith.constant 0 : index
    %182 = vector.load %arg10[%c0_155, %c0_156, %c0_157] : memref<1x32x128xf32, #tpu.memory_space<vmem>>, vector<1x32x128xf32>
    %183 = vector.shape_cast %182 : vector<1x32x128xf32> to vector<32x128xf32>
    %c2_158 = arith.constant 2 : index
    %c0_159 = arith.constant 0 : index
    %c0_160 = arith.constant 0 : index
    %184 = vector.load %arg4[%c2_158, %c0_159, %c0_160] : memref<6x64x64xbf16, #tpu.memory_space<vmem>>, vector<1x64x64xbf16>
    %185 = vector.shape_cast %184 : vector<1x64x64xbf16> to vector<64x64xbf16>
    %cst_161 = arith.constant dense<0.000000e+00> : vector<64x128xf32>
    %186 = tpu.matmul %185, %19, %cst_161 {dimension_numbers = #tpu.dot_dimension_numbers<[1], [0], [0], [1], [0, 0, 1, 1], [], []>} : vector<64x64xbf16>, vector<64x128xbf16>, vector<64x128xf32> -> vector<64x128xf32>
    %c2_162 = arith.constant 2 : index
    %c0_163 = arith.constant 0 : index
    %c0_164 = arith.constant 0 : index
    %187 = vector.load %arg5[%c2_162, %c0_163, %c0_164] : memref<6x64x1xf32, #tpu.memory_space<vmem>>, vector<1x64x1xf32>
    %188 = vector.shape_cast %187 : vector<1x64x1xf32> to vector<64x1xf32>
    %189 = vector.broadcast %188 : vector<64x1xf32> to vector<64x128xf32>
    %190 = arith.addf %186, %189 : vector<64x128xf32>
    %191 = vector.extract_strided_slice %190 {offsets = [0, 0], sizes = [32, 128], strides = [1, 1]} : vector<64x128xf32> to vector<32x128xf32>
    %192 = vector.extract_strided_slice %190 {offsets = [32, 0], sizes = [32, 128], strides = [1, 1]} : vector<64x128xf32> to vector<32x128xf32>
    %c0_165 = arith.constant 0 : index
    %c128_166 = arith.constant 128 : index
    %193 = vector.load %arg11[%c0_165, %c128_166] : memref<64x258xf32, #tpu.memory_space<vmem>>, vector<32x128xf32>
    tpu.vector_store %arg11[%c0_165, %c128_166], %183 {strides = array<i32>} : memref<64x258xf32, #tpu.memory_space<vmem>>, vector<32x128xf32>,
    %c0_167 = arith.constant 0 : index
    %c126_168 = arith.constant 126 : index
    %194 = vector.load %arg11[%c0_167, %c126_168] : memref<64x258xf32, #tpu.memory_space<vmem>>, vector<32x128xf32>
    %c0_169 = arith.constant 0 : index
    %c127_170 = arith.constant 127 : index
    %195 = vector.load %arg11[%c0_169, %c127_170] : memref<64x258xf32, #tpu.memory_space<vmem>>, vector<32x128xf32>
    %196 = arith.addf %194, %195 : vector<32x128xf32>
    %c0_171 = arith.constant 0 : index
    %c128_172 = arith.constant 128 : index
    %197 = vector.load %arg11[%c0_171, %c128_172] : memref<64x258xf32, #tpu.memory_space<vmem>>, vector<32x128xf32>
    %198 = arith.addf %196, %197 : vector<32x128xf32>
    %c0_173 = arith.constant 0 : index
    %c129_174 = arith.constant 129 : index
    %199 = vector.load %arg11[%c0_173, %c129_174] : memref<64x258xf32, #tpu.memory_space<vmem>>, vector<32x128xf32>
    %200 = arith.addf %198, %199 : vector<32x128xf32>
    %c0_175 = arith.constant 0 : index
    %c130_176 = arith.constant 130 : index
    %201 = vector.load %arg11[%c0_175, %c130_176] : memref<64x258xf32, #tpu.memory_space<vmem>>, vector<32x128xf32>
    %202 = arith.addf %200, %201 : vector<32x128xf32>
    %203 = vector.broadcast %0 : vector<1x128xf32> to vector<32x128xf32>
    %204 = arith.mulf %202, %203 : vector<32x128xf32>
    %205 = arith.subf %183, %204 : vector<32x128xf32>
    %206 = arith.mulf %205, %205 : vector<32x128xf32>
    %c0_177 = arith.constant 0 : index
    %c128_178 = arith.constant 128 : index
    %207 = vector.load %arg11[%c0_177, %c128_178] : memref<64x258xf32, #tpu.memory_space<vmem>>, vector<32x128xf32>
    tpu.vector_store %arg11[%c0_177, %c128_178], %206 {strides = array<i32>} : memref<64x258xf32, #tpu.memory_space<vmem>>, vector<32x128xf32>,
    %c0_179 = arith.constant 0 : index
    %c126_180 = arith.constant 126 : index
    %208 = vector.load %arg11[%c0_179, %c126_180] : memref<64x258xf32, #tpu.memory_space<vmem>>, vector<32x128xf32>
    %c0_181 = arith.constant 0 : index
    %c127_182 = arith.constant 127 : index
    %209 = vector.load %arg11[%c0_181, %c127_182] : memref<64x258xf32, #tpu.memory_space<vmem>>, vector<32x128xf32>
    %210 = arith.addf %208, %209 : vector<32x128xf32>
    %c0_183 = arith.constant 0 : index
    %c128_184 = arith.constant 128 : index
    %211 = vector.load %arg11[%c0_183, %c128_184] : memref<64x258xf32, #tpu.memory_space<vmem>>, vector<32x128xf32>
    %212 = arith.addf %210, %211 : vector<32x128xf32>
    %c0_185 = arith.constant 0 : index
    %c129_186 = arith.constant 129 : index
    %213 = vector.load %arg11[%c0_185, %c129_186] : memref<64x258xf32, #tpu.memory_space<vmem>>, vector<32x128xf32>
    %214 = arith.addf %212, %213 : vector<32x128xf32>
    %c0_187 = arith.constant 0 : index
    %c130_188 = arith.constant 130 : index
    %215 = vector.load %arg11[%c0_187, %c130_188] : memref<64x258xf32, #tpu.memory_space<vmem>>, vector<32x128xf32>
    %216 = arith.addf %214, %215 : vector<32x128xf32>
    %217 = vector.broadcast %0 : vector<1x128xf32> to vector<32x128xf32>
    %218 = arith.mulf %216, %217 : vector<32x128xf32>
    %219 = arith.subf %183, %204 : vector<32x128xf32>
    %cst_189 = arith.constant 9.99999971E-10 : f32
    %220 = vector.broadcast %cst_189 : f32 to vector<32x128xf32>
    %221 = arith.addf %218, %220 : vector<32x128xf32>
    %222 = math.rsqrt %221 : vector<32x128xf32>
    %223 = arith.mulf %219, %222 : vector<32x128xf32>
    %224 = arith.mulf %191, %223 : vector<32x128xf32>
    %225 = arith.addf %224, %192 : vector<32x128xf32>
    %c2_190 = arith.constant 2 : index
    %c0_191 = arith.constant 0 : index
    %c0_192 = arith.constant 0 : index
    %226 = vector.load %arg9[%c2_190, %c0_191, %c0_192] : memref<6x32x1xf32, #tpu.memory_space<vmem>>, vector<1x32x1xf32>
    %227 = vector.shape_cast %226 : vector<1x32x1xf32> to vector<32x1xf32>
    %c2_193 = arith.constant 2 : index
    %c0_194 = arith.constant 0 : index
    %c0_195 = arith.constant 0 : index
    %228 = vector.load %arg8[%c2_193, %c0_194, %c0_195] : memref<6x32x1xf32, #tpu.memory_space<vmem>>, vector<1x32x1xf32>
    %229 = vector.shape_cast %228 : vector<1x32x1xf32> to vector<32x1xf32>
    %230 = vector.broadcast %229 : vector<32x1xf32> to vector<32x128xf32>
    %231 = arith.mulf %230, %225 : vector<32x128xf32>
    %232 = math.cos %231 : vector<32x128xf32>
    %cst_196 = arith.constant 1.000000e+00 : f32
    %233 = vector.broadcast %cst_196 : f32 to vector<32x128xf32>
    %234 = arith.subf %233, %232 : vector<32x128xf32>
    %235 = vector.broadcast %227 : vector<32x1xf32> to vector<32x128xf32>
    %236 = arith.mulf %235, %234 : vector<32x128xf32>
    %237 = arith.addf %225, %236 : vector<32x128xf32>
    %238 = arith.truncf %237 : vector<32x128xf32> to vector<32x128xbf16>
    %c0_197 = arith.constant 0 : index
    %c128_198 = arith.constant 128 : index
    %239 = vector.load %arg12[%c0_197, %c128_198] : memref<32x261xbf16, #tpu.memory_space<vmem>>, vector<32x128xbf16>
    tpu.vector_store %arg12[%c0_197, %c128_198], %238 {strides = array<i32>} : memref<32x261xbf16, #tpu.memory_space<vmem>>, vector<32x128xbf16>,
    %c0_199 = arith.constant 0 : index
    %c129_200 = arith.constant 129 : index
    %240 = vector.load %arg12[%c0_199, %c129_200] : memref<32x261xbf16, #tpu.memory_space<vmem>>, vector<32x1xbf16>
    %c0_201 = arith.constant 0 : index
    %c127_202 = arith.constant 127 : index
    %241 = vector.load %arg12[%c0_201, %c127_202] : memref<32x261xbf16, #tpu.memory_space<vmem>>, vector<32x1xbf16>
    tpu.vector_store %arg12[%c0_201, %c127_202], %240 {strides = array<i32>} : memref<32x261xbf16, #tpu.memory_space<vmem>>, vector<32x1xbf16>,
    %c0_203 = arith.constant 0 : index
    %c254_204 = arith.constant 254 : index
    %242 = vector.load %arg12[%c0_203, %c254_204] : memref<32x261xbf16, #tpu.memory_space<vmem>>, vector<32x1xbf16>
    %c0_205 = arith.constant 0 : index
    %c256_206 = arith.constant 256 : index
    %243 = vector.load %arg12[%c0_205, %c256_206] : memref<32x261xbf16, #tpu.memory_space<vmem>>, vector<32x1xbf16>
    tpu.vector_store %arg12[%c0_205, %c256_206], %242 {strides = array<i32>} : memref<32x261xbf16, #tpu.memory_space<vmem>>, vector<32x1xbf16>,
    %c0_207 = arith.constant 0 : index
    %c130_208 = arith.constant 130 : index
    %244 = vector.load %arg12[%c0_207, %c130_208] : memref<32x261xbf16, #tpu.memory_space<vmem>>, vector<32x1xbf16>
    %c0_209 = arith.constant 0 : index
    %c126_210 = arith.constant 126 : index
    %245 = vector.load %arg12[%c0_209, %c126_210] : memref<32x261xbf16, #tpu.memory_space<vmem>>, vector<32x1xbf16>
    tpu.vector_store %arg12[%c0_209, %c126_210], %244 {strides = array<i32>} : memref<32x261xbf16, #tpu.memory_space<vmem>>, vector<32x1xbf16>,
    %c0_211 = arith.constant 0 : index
    %c253 = arith.constant 253 : index
    %246 = vector.load %arg12[%c0_211, %c253] : memref<32x261xbf16, #tpu.memory_space<vmem>>, vector<32x1xbf16>
    %c0_212 = arith.constant 0 : index
    %c257 = arith.constant 257 : index
    %247 = vector.load %arg12[%c0_212, %c257] : memref<32x261xbf16, #tpu.memory_space<vmem>>, vector<32x1xbf16>
    tpu.vector_store %arg12[%c0_212, %c257], %246 {strides = array<i32>} : memref<32x261xbf16, #tpu.memory_space<vmem>>, vector<32x1xbf16>,
    %c0_213 = arith.constant 0 : index
    %c131 = arith.constant 131 : index
    %248 = vector.load %arg12[%c0_213, %c131] : memref<32x261xbf16, #tpu.memory_space<vmem>>, vector<32x1xbf16>
    %c0_214 = arith.constant 0 : index
    %c125 = arith.constant 125 : index
    %249 = vector.load %arg12[%c0_214, %c125] : memref<32x261xbf16, #tpu.memory_space<vmem>>, vector<32x1xbf16>
    tpu.vector_store %arg12[%c0_214, %c125], %248 {strides = array<i32>} : memref<32x261xbf16, #tpu.memory_space<vmem>>, vector<32x1xbf16>,
    %c0_215 = arith.constant 0 : index
    %c252 = arith.constant 252 : index
    %250 = vector.load %arg12[%c0_215, %c252] : memref<32x261xbf16, #tpu.memory_space<vmem>>, vector<32x1xbf16>
    %c0_216 = arith.constant 0 : index
    %c258 = arith.constant 258 : index
    %251 = vector.load %arg12[%c0_216, %c258] : memref<32x261xbf16, #tpu.memory_space<vmem>>, vector<32x1xbf16>
    tpu.vector_store %arg12[%c0_216, %c258], %250 {strides = array<i32>} : memref<32x261xbf16, #tpu.memory_space<vmem>>, vector<32x1xbf16>,
    %c2_217 = arith.constant 2 : index
    %c0_218 = arith.constant 0 : index
    %c0_219 = arith.constant 0 : index
    %252 = vector.load %arg7[%c2_217, %c0_218, %c0_219] : memref<6x32x1xf32, #tpu.memory_space<vmem>>, vector<1x32x1xf32>
    %253 = vector.shape_cast %252 : vector<1x32x1xf32> to vector<32x1xf32>
    %c6 = arith.constant 6 : index
    %c0_220 = arith.constant 0 : index
    %c0_221 = arith.constant 0 : index
    %254 = vector.load %arg6[%c6, %c0_220, %c0_221] : memref<18x32x32xbf16, #tpu.memory_space<vmem>>, vector<1x32x32xbf16>
    %255 = vector.shape_cast %254 : vector<1x32x32xbf16> to vector<32x32xbf16>
    %c0_222 = arith.constant 0 : index
    %c125_223 = arith.constant 125 : index
    %256 = vector.load %arg12[%c0_222, %c125_223] : memref<32x261xbf16, #tpu.memory_space<vmem>>, vector<32x128xbf16>
    %cst_224 = arith.constant dense<0.000000e+00> : vector<32x128xf32>
    %257 = tpu.matmul %255, %256, %cst_224 {dimension_numbers = #tpu.dot_dimension_numbers<[1], [0], [0], [1], [0, 0, 1, 1], [], []>} : vector<32x32xbf16>, vector<32x128xbf16>, vector<32x128xf32> -> vector<32x128xf32>
    %258 = vector.broadcast %253 : vector<32x1xf32> to vector<32x128xf32>
    %259 = arith.addf %258, %257 : vector<32x128xf32>
    %c7 = arith.constant 7 : index
    %c0_225 = arith.constant 0 : index
    %c0_226 = arith.constant 0 : index
    %260 = vector.load %arg6[%c7, %c0_225, %c0_226] : memref<18x32x32xbf16, #tpu.memory_space<vmem>>, vector<1x32x32xbf16>
    %261 = vector.shape_cast %260 : vector<1x32x32xbf16> to vector<32x32xbf16>
    %c0_227 = arith.constant 0 : index
    %c128_228 = arith.constant 128 : index
    %262 = vector.load %arg12[%c0_227, %c128_228] : memref<32x261xbf16, #tpu.memory_space<vmem>>, vector<32x128xbf16>
    %cst_229 = arith.constant dense<0.000000e+00> : vector<32x128xf32>
    %263 = tpu.matmul %261, %262, %cst_229 {dimension_numbers = #tpu.dot_dimension_numbers<[1], [0], [0], [1], [0, 0, 1, 1], [], []>} : vector<32x32xbf16>, vector<32x128xbf16>, vector<32x128xf32> -> vector<32x128xf32>
    %264 = arith.addf %259, %263 : vector<32x128xf32>
    %c8 = arith.constant 8 : index
    %c0_230 = arith.constant 0 : index
    %c0_231 = arith.constant 0 : index
    %265 = vector.load %arg6[%c8, %c0_230, %c0_231] : memref<18x32x32xbf16, #tpu.memory_space<vmem>>, vector<1x32x32xbf16>
    %266 = vector.shape_cast %265 : vector<1x32x32xbf16> to vector<32x32xbf16>
    %c0_232 = arith.constant 0 : index
    %c131_233 = arith.constant 131 : index
    %267 = vector.load %arg12[%c0_232, %c131_233] : memref<32x261xbf16, #tpu.memory_space<vmem>>, vector<32x128xbf16>
    %cst_234 = arith.constant dense<0.000000e+00> : vector<32x128xf32>
    %268 = tpu.matmul %266, %267, %cst_234 {dimension_numbers = #tpu.dot_dimension_numbers<[1], [0], [0], [1], [0, 0, 1, 1], [], []>} : vector<32x32xbf16>, vector<32x128xbf16>, vector<32x128xf32> -> vector<32x128xf32>
    %269 = arith.addf %264, %268 : vector<32x128xf32>
    %c3_235 = arith.constant 3 : index
    %c0_236 = arith.constant 0 : index
    %c0_237 = arith.constant 0 : index
    %270 = vector.load %arg4[%c3_235, %c0_236, %c0_237] : memref<6x64x64xbf16, #tpu.memory_space<vmem>>, vector<1x64x64xbf16>
    %271 = vector.shape_cast %270 : vector<1x64x64xbf16> to vector<64x64xbf16>
    %cst_238 = arith.constant dense<0.000000e+00> : vector<64x128xf32>
    %272 = tpu.matmul %271, %19, %cst_238 {dimension_numbers = #tpu.dot_dimension_numbers<[1], [0], [0], [1], [0, 0, 1, 1], [], []>} : vector<64x64xbf16>, vector<64x128xbf16>, vector<64x128xf32> -> vector<64x128xf32>
    %c3_239 = arith.constant 3 : index
    %c0_240 = arith.constant 0 : index
    %c0_241 = arith.constant 0 : index
    %273 = vector.load %arg5[%c3_239, %c0_240, %c0_241] : memref<6x64x1xf32, #tpu.memory_space<vmem>>, vector<1x64x1xf32>
    %274 = vector.shape_cast %273 : vector<1x64x1xf32> to vector<64x1xf32>
    %275 = vector.broadcast %274 : vector<64x1xf32> to vector<64x128xf32>
    %276 = arith.addf %272, %275 : vector<64x128xf32>
    %277 = vector.extract_strided_slice %276 {offsets = [0, 0], sizes = [32, 128], strides = [1, 1]} : vector<64x128xf32> to vector<32x128xf32>
    %278 = vector.extract_strided_slice %276 {offsets = [32, 0], sizes = [32, 128], strides = [1, 1]} : vector<64x128xf32> to vector<32x128xf32>
    %c0_242 = arith.constant 0 : index
    %c128_243 = arith.constant 128 : index
    %279 = vector.load %arg11[%c0_242, %c128_243] : memref<64x258xf32, #tpu.memory_space<vmem>>, vector<32x128xf32>
    tpu.vector_store %arg11[%c0_242, %c128_243], %269 {strides = array<i32>} : memref<64x258xf32, #tpu.memory_space<vmem>>, vector<32x128xf32>,
    %c0_244 = arith.constant 0 : index
    %c126_245 = arith.constant 126 : index
    %280 = vector.load %arg11[%c0_244, %c126_245] : memref<64x258xf32, #tpu.memory_space<vmem>>, vector<32x128xf32>
    %c0_246 = arith.constant 0 : index
    %c127_247 = arith.constant 127 : index
    %281 = vector.load %arg11[%c0_246, %c127_247] : memref<64x258xf32, #tpu.memory_space<vmem>>, vector<32x128xf32>
    %282 = arith.addf %280, %281 : vector<32x128xf32>
    %c0_248 = arith.constant 0 : index
    %c128_249 = arith.constant 128 : index
    %283 = vector.load %arg11[%c0_248, %c128_249] : memref<64x258xf32, #tpu.memory_space<vmem>>, vector<32x128xf32>
    %284 = arith.addf %282, %283 : vector<32x128xf32>
    %c0_250 = arith.constant 0 : index
    %c129_251 = arith.constant 129 : index
    %285 = vector.load %arg11[%c0_250, %c129_251] : memref<64x258xf32, #tpu.memory_space<vmem>>, vector<32x128xf32>
    %286 = arith.addf %284, %285 : vector<32x128xf32>
    %c0_252 = arith.constant 0 : index
    %c130_253 = arith.constant 130 : index
    %287 = vector.load %arg11[%c0_252, %c130_253] : memref<64x258xf32, #tpu.memory_space<vmem>>, vector<32x128xf32>
    %288 = arith.addf %286, %287 : vector<32x128xf32>
    %289 = vector.broadcast %0 : vector<1x128xf32> to vector<32x128xf32>
    %290 = arith.mulf %288, %289 : vector<32x128xf32>
    %291 = arith.subf %269, %290 : vector<32x128xf32>
    %292 = arith.mulf %291, %291 : vector<32x128xf32>
    %c0_254 = arith.constant 0 : index
    %c128_255 = arith.constant 128 : index
    %293 = vector.load %arg11[%c0_254, %c128_255] : memref<64x258xf32, #tpu.memory_space<vmem>>, vector<32x128xf32>
    tpu.vector_store %arg11[%c0_254, %c128_255], %292 {strides = array<i32>} : memref<64x258xf32, #tpu.memory_space<vmem>>, vector<32x128xf32>,
    %c0_256 = arith.constant 0 : index
    %c126_257 = arith.constant 126 : index
    %294 = vector.load %arg11[%c0_256, %c126_257] : memref<64x258xf32, #tpu.memory_space<vmem>>, vector<32x128xf32>
    %c0_258 = arith.constant 0 : index
    %c127_259 = arith.constant 127 : index
    %295 = vector.load %arg11[%c0_258, %c127_259] : memref<64x258xf32, #tpu.memory_space<vmem>>, vector<32x128xf32>
    %296 = arith.addf %294, %295 : vector<32x128xf32>
    %c0_260 = arith.constant 0 : index
    %c128_261 = arith.constant 128 : index
    %297 = vector.load %arg11[%c0_260, %c128_261] : memref<64x258xf32, #tpu.memory_space<vmem>>, vector<32x128xf32>
    %298 = arith.addf %296, %297 : vector<32x128xf32>
    %c0_262 = arith.constant 0 : index
    %c129_263 = arith.constant 129 : index
    %299 = vector.load %arg11[%c0_262, %c129_263] : memref<64x258xf32, #tpu.memory_space<vmem>>, vector<32x128xf32>
    %300 = arith.addf %298, %299 : vector<32x128xf32>
    %c0_264 = arith.constant 0 : index
    %c130_265 = arith.constant 130 : index
    %301 = vector.load %arg11[%c0_264, %c130_265] : memref<64x258xf32, #tpu.memory_space<vmem>>, vector<32x128xf32>
    %302 = arith.addf %300, %301 : vector<32x128xf32>
    %303 = vector.broadcast %0 : vector<1x128xf32> to vector<32x128xf32>
    %304 = arith.mulf %302, %303 : vector<32x128xf32>
    %305 = arith.subf %269, %290 : vector<32x128xf32>
    %cst_266 = arith.constant 9.99999971E-10 : f32
    %306 = vector.broadcast %cst_266 : f32 to vector<32x128xf32>
    %307 = arith.addf %304, %306 : vector<32x128xf32>
    %308 = math.rsqrt %307 : vector<32x128xf32>
    %309 = arith.mulf %305, %308 : vector<32x128xf32>
    %310 = arith.mulf %277, %309 : vector<32x128xf32>
    %311 = arith.addf %310, %278 : vector<32x128xf32>
    %c3_267 = arith.constant 3 : index
    %c0_268 = arith.constant 0 : index
    %c0_269 = arith.constant 0 : index
    %312 = vector.load %arg9[%c3_267, %c0_268, %c0_269] : memref<6x32x1xf32, #tpu.memory_space<vmem>>, vector<1x32x1xf32>
    %313 = vector.shape_cast %312 : vector<1x32x1xf32> to vector<32x1xf32>
    %c3_270 = arith.constant 3 : index
    %c0_271 = arith.constant 0 : index
    %c0_272 = arith.constant 0 : index
    %314 = vector.load %arg8[%c3_270, %c0_271, %c0_272] : memref<6x32x1xf32, #tpu.memory_space<vmem>>, vector<1x32x1xf32>
    %315 = vector.shape_cast %314 : vector<1x32x1xf32> to vector<32x1xf32>
    %316 = vector.broadcast %315 : vector<32x1xf32> to vector<32x128xf32>
    %317 = arith.mulf %316, %311 : vector<32x128xf32>
    %318 = math.cos %317 : vector<32x128xf32>
    %cst_273 = arith.constant 1.000000e+00 : f32
    %319 = vector.broadcast %cst_273 : f32 to vector<32x128xf32>
    %320 = arith.subf %319, %318 : vector<32x128xf32>
    %321 = vector.broadcast %313 : vector<32x1xf32> to vector<32x128xf32>
    %322 = arith.mulf %321, %320 : vector<32x128xf32>
    %323 = arith.addf %311, %322 : vector<32x128xf32>
    %324 = arith.truncf %323 : vector<32x128xf32> to vector<32x128xbf16>
    %c0_274 = arith.constant 0 : index
    %c128_275 = arith.constant 128 : index
    %325 = vector.load %arg12[%c0_274, %c128_275] : memref<32x261xbf16, #tpu.memory_space<vmem>>, vector<32x128xbf16>
    tpu.vector_store %arg12[%c0_274, %c128_275], %324 {strides = array<i32>} : memref<32x261xbf16, #tpu.memory_space<vmem>>, vector<32x128xbf16>,
    %c0_276 = arith.constant 0 : index
    %c129_277 = arith.constant 129 : index
    %326 = vector.load %arg12[%c0_276, %c129_277] : memref<32x261xbf16, #tpu.memory_space<vmem>>, vector<32x1xbf16>
    %c0_278 = arith.constant 0 : index
    %c127_279 = arith.constant 127 : index
    %327 = vector.load %arg12[%c0_278, %c127_279] : memref<32x261xbf16, #tpu.memory_space<vmem>>, vector<32x1xbf16>
    tpu.vector_store %arg12[%c0_278, %c127_279], %326 {strides = array<i32>} : memref<32x261xbf16, #tpu.memory_space<vmem>>, vector<32x1xbf16>,
    %c0_280 = arith.constant 0 : index
    %c254_281 = arith.constant 254 : index
    %328 = vector.load %arg12[%c0_280, %c254_281] : memref<32x261xbf16, #tpu.memory_space<vmem>>, vector<32x1xbf16>
    %c0_282 = arith.constant 0 : index
    %c256_283 = arith.constant 256 : index
    %329 = vector.load %arg12[%c0_282, %c256_283] : memref<32x261xbf16, #tpu.memory_space<vmem>>, vector<32x1xbf16>
    tpu.vector_store %arg12[%c0_282, %c256_283], %328 {strides = array<i32>} : memref<32x261xbf16, #tpu.memory_space<vmem>>, vector<32x1xbf16>,
    %c3_284 = arith.constant 3 : index
    %c0_285 = arith.constant 0 : index
    %c0_286 = arith.constant 0 : index
    %330 = vector.load %arg7[%c3_284, %c0_285, %c0_286] : memref<6x32x1xf32, #tpu.memory_space<vmem>>, vector<1x32x1xf32>
    %331 = vector.shape_cast %330 : vector<1x32x1xf32> to vector<32x1xf32>
    %c9 = arith.constant 9 : index
    %c0_287 = arith.constant 0 : index
    %c0_288 = arith.constant 0 : index
    %332 = vector.load %arg6[%c9, %c0_287, %c0_288] : memref<18x32x32xbf16, #tpu.memory_space<vmem>>, vector<1x32x32xbf16>
    %333 = vector.shape_cast %332 : vector<1x32x32xbf16> to vector<32x32xbf16>
    %c0_289 = arith.constant 0 : index
    %c127_290 = arith.constant 127 : index
    %334 = vector.load %arg12[%c0_289, %c127_290] : memref<32x261xbf16, #tpu.memory_space<vmem>>, vector<32x128xbf16>
    %cst_291 = arith.constant dense<0.000000e+00> : vector<32x128xf32>
    %335 = tpu.matmul %333, %334, %cst_291 {dimension_numbers = #tpu.dot_dimension_numbers<[1], [0], [0], [1], [0, 0, 1, 1], [], []>} : vector<32x32xbf16>, vector<32x128xbf16>, vector<32x128xf32> -> vector<32x128xf32>
    %336 = vector.broadcast %331 : vector<32x1xf32> to vector<32x128xf32>
    %337 = arith.addf %336, %335 : vector<32x128xf32>
    %c10 = arith.constant 10 : index
    %c0_292 = arith.constant 0 : index
    %c0_293 = arith.constant 0 : index
    %338 = vector.load %arg6[%c10, %c0_292, %c0_293] : memref<18x32x32xbf16, #tpu.memory_space<vmem>>, vector<1x32x32xbf16>
    %339 = vector.shape_cast %338 : vector<1x32x32xbf16> to vector<32x32xbf16>
    %c0_294 = arith.constant 0 : index
    %c128_295 = arith.constant 128 : index
    %340 = vector.load %arg12[%c0_294, %c128_295] : memref<32x261xbf16, #tpu.memory_space<vmem>>, vector<32x128xbf16>
    %cst_296 = arith.constant dense<0.000000e+00> : vector<32x128xf32>
    %341 = tpu.matmul %339, %340, %cst_296 {dimension_numbers = #tpu.dot_dimension_numbers<[1], [0], [0], [1], [0, 0, 1, 1], [], []>} : vector<32x32xbf16>, vector<32x128xbf16>, vector<32x128xf32> -> vector<32x128xf32>
    %342 = arith.addf %337, %341 : vector<32x128xf32>
    %c11 = arith.constant 11 : index
    %c0_297 = arith.constant 0 : index
    %c0_298 = arith.constant 0 : index
    %343 = vector.load %arg6[%c11, %c0_297, %c0_298] : memref<18x32x32xbf16, #tpu.memory_space<vmem>>, vector<1x32x32xbf16>
    %344 = vector.shape_cast %343 : vector<1x32x32xbf16> to vector<32x32xbf16>
    %c0_299 = arith.constant 0 : index
    %c129_300 = arith.constant 129 : index
    %345 = vector.load %arg12[%c0_299, %c129_300] : memref<32x261xbf16, #tpu.memory_space<vmem>>, vector<32x128xbf16>
    %cst_301 = arith.constant dense<0.000000e+00> : vector<32x128xf32>
    %346 = tpu.matmul %344, %345, %cst_301 {dimension_numbers = #tpu.dot_dimension_numbers<[1], [0], [0], [1], [0, 0, 1, 1], [], []>} : vector<32x32xbf16>, vector<32x128xbf16>, vector<32x128xf32> -> vector<32x128xf32>
    %347 = arith.addf %342, %346 : vector<32x128xf32>
    %348 = arith.addf %347, %183 : vector<32x128xf32>
    %c0_302 = arith.constant 0 : index
    %c0_303 = arith.constant 0 : index
    %c0_304 = arith.constant 0 : index
    %349 = vector.load %arg10[%c0_302, %c0_303, %c0_304] : memref<1x32x128xf32, #tpu.memory_space<vmem>>, vector<1x32x128xf32>
    %350 = vector.shape_cast %349 : vector<1x32x128xf32> to vector<32x128xf32>
    %351 = vector.shape_cast %348 : vector<32x128xf32> to vector<1x32x128xf32>
    tpu.vector_store %arg10[%c0_302, %c0_303, %c0_304], %351 {strides = array<i32>} : memref<1x32x128xf32, #tpu.memory_space<vmem>>, vector<1x32x128xf32>,
    %c0_305 = arith.constant 0 : index
    %c0_306 = arith.constant 0 : index
    %c0_307 = arith.constant 0 : index
    %352 = vector.load %arg10[%c0_305, %c0_306, %c0_307] : memref<1x32x128xf32, #tpu.memory_space<vmem>>, vector<1x32x128xf32>
    %353 = vector.shape_cast %352 : vector<1x32x128xf32> to vector<32x128xf32>
    %c4_308 = arith.constant 4 : index
    %c0_309 = arith.constant 0 : index
    %c0_310 = arith.constant 0 : index
    %354 = vector.load %arg4[%c4_308, %c0_309, %c0_310] : memref<6x64x64xbf16, #tpu.memory_space<vmem>>, vector<1x64x64xbf16>
    %355 = vector.shape_cast %354 : vector<1x64x64xbf16> to vector<64x64xbf16>
    %cst_311 = arith.constant dense<0.000000e+00> : vector<64x128xf32>
    %356 = tpu.matmul %355, %19, %cst_311 {dimension_numbers = #tpu.dot_dimension_numbers<[1], [0], [0], [1], [0, 0, 1, 1], [], []>} : vector<64x64xbf16>, vector<64x128xbf16>, vector<64x128xf32> -> vector<64x128xf32>
    %c4_312 = arith.constant 4 : index
    %c0_313 = arith.constant 0 : index
    %c0_314 = arith.constant 0 : index
    %357 = vector.load %arg5[%c4_312, %c0_313, %c0_314] : memref<6x64x1xf32, #tpu.memory_space<vmem>>, vector<1x64x1xf32>
    %358 = vector.shape_cast %357 : vector<1x64x1xf32> to vector<64x1xf32>
    %359 = vector.broadcast %358 : vector<64x1xf32> to vector<64x128xf32>
    %360 = arith.addf %356, %359 : vector<64x128xf32>
    %361 = vector.extract_strided_slice %360 {offsets = [0, 0], sizes = [32, 128], strides = [1, 1]} : vector<64x128xf32> to vector<32x128xf32>
    %362 = vector.extract_strided_slice %360 {offsets = [32, 0], sizes = [32, 128], strides = [1, 1]} : vector<64x128xf32> to vector<32x128xf32>
    %c0_315 = arith.constant 0 : index
    %c128_316 = arith.constant 128 : index
    %363 = vector.load %arg11[%c0_315, %c128_316] : memref<64x258xf32, #tpu.memory_space<vmem>>, vector<32x128xf32>
    tpu.vector_store %arg11[%c0_315, %c128_316], %353 {strides = array<i32>} : memref<64x258xf32, #tpu.memory_space<vmem>>, vector<32x128xf32>,
    %c0_317 = arith.constant 0 : index
    %c126_318 = arith.constant 126 : index
    %364 = vector.load %arg11[%c0_317, %c126_318] : memref<64x258xf32, #tpu.memory_space<vmem>>, vector<32x128xf32>
    %c0_319 = arith.constant 0 : index
    %c127_320 = arith.constant 127 : index
    %365 = vector.load %arg11[%c0_319, %c127_320] : memref<64x258xf32, #tpu.memory_space<vmem>>, vector<32x128xf32>
    %366 = arith.addf %364, %365 : vector<32x128xf32>
    %c0_321 = arith.constant 0 : index
    %c128_322 = arith.constant 128 : index
    %367 = vector.load %arg11[%c0_321, %c128_322] : memref<64x258xf32, #tpu.memory_space<vmem>>, vector<32x128xf32>
    %368 = arith.addf %366, %367 : vector<32x128xf32>
    %c0_323 = arith.constant 0 : index
    %c129_324 = arith.constant 129 : index
    %369 = vector.load %arg11[%c0_323, %c129_324] : memref<64x258xf32, #tpu.memory_space<vmem>>, vector<32x128xf32>
    %370 = arith.addf %368, %369 : vector<32x128xf32>
    %c0_325 = arith.constant 0 : index
    %c130_326 = arith.constant 130 : index
    %371 = vector.load %arg11[%c0_325, %c130_326] : memref<64x258xf32, #tpu.memory_space<vmem>>, vector<32x128xf32>
    %372 = arith.addf %370, %371 : vector<32x128xf32>
    %373 = vector.broadcast %0 : vector<1x128xf32> to vector<32x128xf32>
    %374 = arith.mulf %372, %373 : vector<32x128xf32>
    %375 = arith.subf %353, %374 : vector<32x128xf32>
    %376 = arith.mulf %375, %375 : vector<32x128xf32>
    %c0_327 = arith.constant 0 : index
    %c128_328 = arith.constant 128 : index
    %377 = vector.load %arg11[%c0_327, %c128_328] : memref<64x258xf32, #tpu.memory_space<vmem>>, vector<32x128xf32>
    tpu.vector_store %arg11[%c0_327, %c128_328], %376 {strides = array<i32>} : memref<64x258xf32, #tpu.memory_space<vmem>>, vector<32x128xf32>,
    %c0_329 = arith.constant 0 : index
    %c126_330 = arith.constant 126 : index
    %378 = vector.load %arg11[%c0_329, %c126_330] : memref<64x258xf32, #tpu.memory_space<vmem>>, vector<32x128xf32>
    %c0_331 = arith.constant 0 : index
    %c127_332 = arith.constant 127 : index
    %379 = vector.load %arg11[%c0_331, %c127_332] : memref<64x258xf32, #tpu.memory_space<vmem>>, vector<32x128xf32>
    %380 = arith.addf %378, %379 : vector<32x128xf32>
    %c0_333 = arith.constant 0 : index
    %c128_334 = arith.constant 128 : index
    %381 = vector.load %arg11[%c0_333, %c128_334] : memref<64x258xf32, #tpu.memory_space<vmem>>, vector<32x128xf32>
    %382 = arith.addf %380, %381 : vector<32x128xf32>
    %c0_335 = arith.constant 0 : index
    %c129_336 = arith.constant 129 : index
    %383 = vector.load %arg11[%c0_335, %c129_336] : memref<64x258xf32, #tpu.memory_space<vmem>>, vector<32x128xf32>
    %384 = arith.addf %382, %383 : vector<32x128xf32>
    %c0_337 = arith.constant 0 : index
    %c130_338 = arith.constant 130 : index
    %385 = vector.load %arg11[%c0_337, %c130_338] : memref<64x258xf32, #tpu.memory_space<vmem>>, vector<32x128xf32>
    %386 = arith.addf %384, %385 : vector<32x128xf32>
    %387 = vector.broadcast %0 : vector<1x128xf32> to vector<32x128xf32>
    %388 = arith.mulf %386, %387 : vector<32x128xf32>
    %389 = arith.subf %353, %374 : vector<32x128xf32>
    %cst_339 = arith.constant 9.99999971E-10 : f32
    %390 = vector.broadcast %cst_339 : f32 to vector<32x128xf32>
    %391 = arith.addf %388, %390 : vector<32x128xf32>
    %392 = math.rsqrt %391 : vector<32x128xf32>
    %393 = arith.mulf %389, %392 : vector<32x128xf32>
    %394 = arith.mulf %361, %393 : vector<32x128xf32>
    %395 = arith.addf %394, %362 : vector<32x128xf32>
    %c4_340 = arith.constant 4 : index
    %c0_341 = arith.constant 0 : index
    %c0_342 = arith.constant 0 : index
    %396 = vector.load %arg9[%c4_340, %c0_341, %c0_342] : memref<6x32x1xf32, #tpu.memory_space<vmem>>, vector<1x32x1xf32>
    %397 = vector.shape_cast %396 : vector<1x32x1xf32> to vector<32x1xf32>
    %c4_343 = arith.constant 4 : index
    %c0_344 = arith.constant 0 : index
    %c0_345 = arith.constant 0 : index
    %398 = vector.load %arg8[%c4_343, %c0_344, %c0_345] : memref<6x32x1xf32, #tpu.memory_space<vmem>>, vector<1x32x1xf32>
    %399 = vector.shape_cast %398 : vector<1x32x1xf32> to vector<32x1xf32>
    %400 = vector.broadcast %399 : vector<32x1xf32> to vector<32x128xf32>
    %401 = arith.mulf %400, %395 : vector<32x128xf32>
    %402 = math.cos %401 : vector<32x128xf32>
    %cst_346 = arith.constant 1.000000e+00 : f32
    %403 = vector.broadcast %cst_346 : f32 to vector<32x128xf32>
    %404 = arith.subf %403, %402 : vector<32x128xf32>
    %405 = vector.broadcast %397 : vector<32x1xf32> to vector<32x128xf32>
    %406 = arith.mulf %405, %404 : vector<32x128xf32>
    %407 = arith.addf %395, %406 : vector<32x128xf32>
    %408 = arith.truncf %407 : vector<32x128xf32> to vector<32x128xbf16>
    %c0_347 = arith.constant 0 : index
    %c128_348 = arith.constant 128 : index
    %409 = vector.load %arg12[%c0_347, %c128_348] : memref<32x261xbf16, #tpu.memory_space<vmem>>, vector<32x128xbf16>
    tpu.vector_store %arg12[%c0_347, %c128_348], %408 {strides = array<i32>} : memref<32x261xbf16, #tpu.memory_space<vmem>>, vector<32x128xbf16>,
    %c0_349 = arith.constant 0 : index
    %c129_350 = arith.constant 129 : index
    %410 = vector.load %arg12[%c0_349, %c129_350] : memref<32x261xbf16, #tpu.memory_space<vmem>>, vector<32x1xbf16>
    %c0_351 = arith.constant 0 : index
    %c127_352 = arith.constant 127 : index
    %411 = vector.load %arg12[%c0_351, %c127_352] : memref<32x261xbf16, #tpu.memory_space<vmem>>, vector<32x1xbf16>
    tpu.vector_store %arg12[%c0_351, %c127_352], %410 {strides = array<i32>} : memref<32x261xbf16, #tpu.memory_space<vmem>>, vector<32x1xbf16>,
    %c0_353 = arith.constant 0 : index
    %c254_354 = arith.constant 254 : index
    %412 = vector.load %arg12[%c0_353, %c254_354] : memref<32x261xbf16, #tpu.memory_space<vmem>>, vector<32x1xbf16>
    %c0_355 = arith.constant 0 : index
    %c256_356 = arith.constant 256 : index
    %413 = vector.load %arg12[%c0_355, %c256_356] : memref<32x261xbf16, #tpu.memory_space<vmem>>, vector<32x1xbf16>
    tpu.vector_store %arg12[%c0_355, %c256_356], %412 {strides = array<i32>} : memref<32x261xbf16, #tpu.memory_space<vmem>>, vector<32x1xbf16>,
    %c0_357 = arith.constant 0 : index
    %c130_358 = arith.constant 130 : index
    %414 = vector.load %arg12[%c0_357, %c130_358] : memref<32x261xbf16, #tpu.memory_space<vmem>>, vector<32x1xbf16>
    %c0_359 = arith.constant 0 : index
    %c126_360 = arith.constant 126 : index
    %415 = vector.load %arg12[%c0_359, %c126_360] : memref<32x261xbf16, #tpu.memory_space<vmem>>, vector<32x1xbf16>
    tpu.vector_store %arg12[%c0_359, %c126_360], %414 {strides = array<i32>} : memref<32x261xbf16, #tpu.memory_space<vmem>>, vector<32x1xbf16>,
    %c0_361 = arith.constant 0 : index
    %c253_362 = arith.constant 253 : index
    %416 = vector.load %arg12[%c0_361, %c253_362] : memref<32x261xbf16, #tpu.memory_space<vmem>>, vector<32x1xbf16>
    %c0_363 = arith.constant 0 : index
    %c257_364 = arith.constant 257 : index
    %417 = vector.load %arg12[%c0_363, %c257_364] : memref<32x261xbf16, #tpu.memory_space<vmem>>, vector<32x1xbf16>
    tpu.vector_store %arg12[%c0_363, %c257_364], %416 {strides = array<i32>} : memref<32x261xbf16, #tpu.memory_space<vmem>>, vector<32x1xbf16>,
    %c0_365 = arith.constant 0 : index
    %c131_366 = arith.constant 131 : index
    %418 = vector.load %arg12[%c0_365, %c131_366] : memref<32x261xbf16, #tpu.memory_space<vmem>>, vector<32x1xbf16>
    %c0_367 = arith.constant 0 : index
    %c125_368 = arith.constant 125 : index
    %419 = vector.load %arg12[%c0_367, %c125_368] : memref<32x261xbf16, #tpu.memory_space<vmem>>, vector<32x1xbf16>
    tpu.vector_store %arg12[%c0_367, %c125_368], %418 {strides = array<i32>} : memref<32x261xbf16, #tpu.memory_space<vmem>>, vector<32x1xbf16>,
    %c0_369 = arith.constant 0 : index
    %c252_370 = arith.constant 252 : index
    %420 = vector.load %arg12[%c0_369, %c252_370] : memref<32x261xbf16, #tpu.memory_space<vmem>>, vector<32x1xbf16>
    %c0_371 = arith.constant 0 : index
    %c258_372 = arith.constant 258 : index
    %421 = vector.load %arg12[%c0_371, %c258_372] : memref<32x261xbf16, #tpu.memory_space<vmem>>, vector<32x1xbf16>
    tpu.vector_store %arg12[%c0_371, %c258_372], %420 {strides = array<i32>} : memref<32x261xbf16, #tpu.memory_space<vmem>>, vector<32x1xbf16>,
    %c0_373 = arith.constant 0 : index
    %c132 = arith.constant 132 : index
    %422 = vector.load %arg12[%c0_373, %c132] : memref<32x261xbf16, #tpu.memory_space<vmem>>, vector<32x1xbf16>
    %c0_374 = arith.constant 0 : index
    %c124 = arith.constant 124 : index
    %423 = vector.load %arg12[%c0_374, %c124] : memref<32x261xbf16, #tpu.memory_space<vmem>>, vector<32x1xbf16>
    tpu.vector_store %arg12[%c0_374, %c124], %422 {strides = array<i32>} : memref<32x261xbf16, #tpu.memory_space<vmem>>, vector<32x1xbf16>,
    %c0_375 = arith.constant 0 : index
    %c251 = arith.constant 251 : index
    %424 = vector.load %arg12[%c0_375, %c251] : memref<32x261xbf16, #tpu.memory_space<vmem>>, vector<32x1xbf16>
    %c0_376 = arith.constant 0 : index
    %c259 = arith.constant 259 : index
    %425 = vector.load %arg12[%c0_376, %c259] : memref<32x261xbf16, #tpu.memory_space<vmem>>, vector<32x1xbf16>
    tpu.vector_store %arg12[%c0_376, %c259], %424 {strides = array<i32>} : memref<32x261xbf16, #tpu.memory_space<vmem>>, vector<32x1xbf16>,
    %c0_377 = arith.constant 0 : index
    %c133 = arith.constant 133 : index
    %426 = vector.load %arg12[%c0_377, %c133] : memref<32x261xbf16, #tpu.memory_space<vmem>>, vector<32x1xbf16>
    %c0_378 = arith.constant 0 : index
    %c123 = arith.constant 123 : index
    %427 = vector.load %arg12[%c0_378, %c123] : memref<32x261xbf16, #tpu.memory_space<vmem>>, vector<32x1xbf16>
    tpu.vector_store %arg12[%c0_378, %c123], %426 {strides = array<i32>} : memref<32x261xbf16, #tpu.memory_space<vmem>>, vector<32x1xbf16>,
    %c0_379 = arith.constant 0 : index
    %c250 = arith.constant 250 : index
    %428 = vector.load %arg12[%c0_379, %c250] : memref<32x261xbf16, #tpu.memory_space<vmem>>, vector<32x1xbf16>
    %c0_380 = arith.constant 0 : index
    %c260 = arith.constant 260 : index
    %429 = vector.load %arg12[%c0_380, %c260] : memref<32x261xbf16, #tpu.memory_space<vmem>>, vector<32x1xbf16>
    tpu.vector_store %arg12[%c0_380, %c260], %428 {strides = array<i32>} : memref<32x261xbf16, #tpu.memory_space<vmem>>, vector<32x1xbf16>,
    %c4_381 = arith.constant 4 : index
    %c0_382 = arith.constant 0 : index
    %c0_383 = arith.constant 0 : index
    %430 = vector.load %arg7[%c4_381, %c0_382, %c0_383] : memref<6x32x1xf32, #tpu.memory_space<vmem>>, vector<1x32x1xf32>
    %431 = vector.shape_cast %430 : vector<1x32x1xf32> to vector<32x1xf32>
    %c12 = arith.constant 12 : index
    %c0_384 = arith.constant 0 : index
    %c0_385 = arith.constant 0 : index
    %432 = vector.load %arg6[%c12, %c0_384, %c0_385] : memref<18x32x32xbf16, #tpu.memory_space<vmem>>, vector<1x32x32xbf16>
    %433 = vector.shape_cast %432 : vector<1x32x32xbf16> to vector<32x32xbf16>
    %c0_386 = arith.constant 0 : index
    %c123_387 = arith.constant 123 : index
    %434 = vector.load %arg12[%c0_386, %c123_387] : memref<32x261xbf16, #tpu.memory_space<vmem>>, vector<32x128xbf16>
    %cst_388 = arith.constant dense<0.000000e+00> : vector<32x128xf32>
    %435 = tpu.matmul %433, %434, %cst_388 {dimension_numbers = #tpu.dot_dimension_numbers<[1], [0], [0], [1], [0, 0, 1, 1], [], []>} : vector<32x32xbf16>, vector<32x128xbf16>, vector<32x128xf32> -> vector<32x128xf32>
    %436 = vector.broadcast %431 : vector<32x1xf32> to vector<32x128xf32>
    %437 = arith.addf %436, %435 : vector<32x128xf32>
    %c13 = arith.constant 13 : index
    %c0_389 = arith.constant 0 : index
    %c0_390 = arith.constant 0 : index
    %438 = vector.load %arg6[%c13, %c0_389, %c0_390] : memref<18x32x32xbf16, #tpu.memory_space<vmem>>, vector<1x32x32xbf16>
    %439 = vector.shape_cast %438 : vector<1x32x32xbf16> to vector<32x32xbf16>
    %c0_391 = arith.constant 0 : index
    %c128_392 = arith.constant 128 : index
    %440 = vector.load %arg12[%c0_391, %c128_392] : memref<32x261xbf16, #tpu.memory_space<vmem>>, vector<32x128xbf16>
    %cst_393 = arith.constant dense<0.000000e+00> : vector<32x128xf32>
    %441 = tpu.matmul %439, %440, %cst_393 {dimension_numbers = #tpu.dot_dimension_numbers<[1], [0], [0], [1], [0, 0, 1, 1], [], []>} : vector<32x32xbf16>, vector<32x128xbf16>, vector<32x128xf32> -> vector<32x128xf32>
    %442 = arith.addf %437, %441 : vector<32x128xf32>
    %c14 = arith.constant 14 : index
    %c0_394 = arith.constant 0 : index
    %c0_395 = arith.constant 0 : index
    %443 = vector.load %arg6[%c14, %c0_394, %c0_395] : memref<18x32x32xbf16, #tpu.memory_space<vmem>>, vector<1x32x32xbf16>
    %444 = vector.shape_cast %443 : vector<1x32x32xbf16> to vector<32x32xbf16>
    %c0_396 = arith.constant 0 : index
    %c133_397 = arith.constant 133 : index
    %445 = vector.load %arg12[%c0_396, %c133_397] : memref<32x261xbf16, #tpu.memory_space<vmem>>, vector<32x128xbf16>
    %cst_398 = arith.constant dense<0.000000e+00> : vector<32x128xf32>
    %446 = tpu.matmul %444, %445, %cst_398 {dimension_numbers = #tpu.dot_dimension_numbers<[1], [0], [0], [1], [0, 0, 1, 1], [], []>} : vector<32x32xbf16>, vector<32x128xbf16>, vector<32x128xf32> -> vector<32x128xf32>
    %447 = arith.addf %442, %446 : vector<32x128xf32>
    %c5_399 = arith.constant 5 : index
    %c0_400 = arith.constant 0 : index
    %c0_401 = arith.constant 0 : index
    %448 = vector.load %arg4[%c5_399, %c0_400, %c0_401] : memref<6x64x64xbf16, #tpu.memory_space<vmem>>, vector<1x64x64xbf16>
    %449 = vector.shape_cast %448 : vector<1x64x64xbf16> to vector<64x64xbf16>
    %cst_402 = arith.constant dense<0.000000e+00> : vector<64x128xf32>
    %450 = tpu.matmul %449, %19, %cst_402 {dimension_numbers = #tpu.dot_dimension_numbers<[1], [0], [0], [1], [0, 0, 1, 1], [], []>} : vector<64x64xbf16>, vector<64x128xbf16>, vector<64x128xf32> -> vector<64x128xf32>
    %c5_403 = arith.constant 5 : index
    %c0_404 = arith.constant 0 : index
    %c0_405 = arith.constant 0 : index
    %451 = vector.load %arg5[%c5_403, %c0_404, %c0_405] : memref<6x64x1xf32, #tpu.memory_space<vmem>>, vector<1x64x1xf32>
    %452 = vector.shape_cast %451 : vector<1x64x1xf32> to vector<64x1xf32>
    %453 = vector.broadcast %452 : vector<64x1xf32> to vector<64x128xf32>
    %454 = arith.addf %450, %453 : vector<64x128xf32>
    %455 = vector.extract_strided_slice %454 {offsets = [0, 0], sizes = [32, 128], strides = [1, 1]} : vector<64x128xf32> to vector<32x128xf32>
    %456 = vector.extract_strided_slice %454 {offsets = [32, 0], sizes = [32, 128], strides = [1, 1]} : vector<64x128xf32> to vector<32x128xf32>
    %c0_406 = arith.constant 0 : index
    %c128_407 = arith.constant 128 : index
    %457 = vector.load %arg11[%c0_406, %c128_407] : memref<64x258xf32, #tpu.memory_space<vmem>>, vector<32x128xf32>
    tpu.vector_store %arg11[%c0_406, %c128_407], %447 {strides = array<i32>} : memref<64x258xf32, #tpu.memory_space<vmem>>, vector<32x128xf32>,
    %c0_408 = arith.constant 0 : index
    %c126_409 = arith.constant 126 : index
    %458 = vector.load %arg11[%c0_408, %c126_409] : memref<64x258xf32, #tpu.memory_space<vmem>>, vector<32x128xf32>
    %c0_410 = arith.constant 0 : index
    %c127_411 = arith.constant 127 : index
    %459 = vector.load %arg11[%c0_410, %c127_411] : memref<64x258xf32, #tpu.memory_space<vmem>>, vector<32x128xf32>
    %460 = arith.addf %458, %459 : vector<32x128xf32>
    %c0_412 = arith.constant 0 : index
    %c128_413 = arith.constant 128 : index
    %461 = vector.load %arg11[%c0_412, %c128_413] : memref<64x258xf32, #tpu.memory_space<vmem>>, vector<32x128xf32>
    %462 = arith.addf %460, %461 : vector<32x128xf32>
    %c0_414 = arith.constant 0 : index
    %c129_415 = arith.constant 129 : index
    %463 = vector.load %arg11[%c0_414, %c129_415] : memref<64x258xf32, #tpu.memory_space<vmem>>, vector<32x128xf32>
    %464 = arith.addf %462, %463 : vector<32x128xf32>
    %c0_416 = arith.constant 0 : index
    %c130_417 = arith.constant 130 : index
    %465 = vector.load %arg11[%c0_416, %c130_417] : memref<64x258xf32, #tpu.memory_space<vmem>>, vector<32x128xf32>
    %466 = arith.addf %464, %465 : vector<32x128xf32>
    %467 = vector.broadcast %0 : vector<1x128xf32> to vector<32x128xf32>
    %468 = arith.mulf %466, %467 : vector<32x128xf32>
    %469 = arith.subf %447, %468 : vector<32x128xf32>
    %470 = arith.mulf %469, %469 : vector<32x128xf32>
    %c0_418 = arith.constant 0 : index
    %c128_419 = arith.constant 128 : index
    %471 = vector.load %arg11[%c0_418, %c128_419] : memref<64x258xf32, #tpu.memory_space<vmem>>, vector<32x128xf32>
    tpu.vector_store %arg11[%c0_418, %c128_419], %470 {strides = array<i32>} : memref<64x258xf32, #tpu.memory_space<vmem>>, vector<32x128xf32>,
    %c0_420 = arith.constant 0 : index
    %c126_421 = arith.constant 126 : index
    %472 = vector.load %arg11[%c0_420, %c126_421] : memref<64x258xf32, #tpu.memory_space<vmem>>, vector<32x128xf32>
    %c0_422 = arith.constant 0 : index
    %c127_423 = arith.constant 127 : index
    %473 = vector.load %arg11[%c0_422, %c127_423] : memref<64x258xf32, #tpu.memory_space<vmem>>, vector<32x128xf32>
    %474 = arith.addf %472, %473 : vector<32x128xf32>
    %c0_424 = arith.constant 0 : index
    %c128_425 = arith.constant 128 : index
    %475 = vector.load %arg11[%c0_424, %c128_425] : memref<64x258xf32, #tpu.memory_space<vmem>>, vector<32x128xf32>
    %476 = arith.addf %474, %475 : vector<32x128xf32>
    %c0_426 = arith.constant 0 : index
    %c129_427 = arith.constant 129 : index
    %477 = vector.load %arg11[%c0_426, %c129_427] : memref<64x258xf32, #tpu.memory_space<vmem>>, vector<32x128xf32>
    %478 = arith.addf %476, %477 : vector<32x128xf32>
    %c0_428 = arith.constant 0 : index
    %c130_429 = arith.constant 130 : index
    %479 = vector.load %arg11[%c0_428, %c130_429] : memref<64x258xf32, #tpu.memory_space<vmem>>, vector<32x128xf32>
    %480 = arith.addf %478, %479 : vector<32x128xf32>
    %481 = vector.broadcast %0 : vector<1x128xf32> to vector<32x128xf32>
    %482 = arith.mulf %480, %481 : vector<32x128xf32>
    %483 = arith.subf %447, %468 : vector<32x128xf32>
    %cst_430 = arith.constant 9.99999971E-10 : f32
    %484 = vector.broadcast %cst_430 : f32 to vector<32x128xf32>
    %485 = arith.addf %482, %484 : vector<32x128xf32>
    %486 = math.rsqrt %485 : vector<32x128xf32>
    %487 = arith.mulf %483, %486 : vector<32x128xf32>
    %488 = arith.mulf %455, %487 : vector<32x128xf32>
    %489 = arith.addf %488, %456 : vector<32x128xf32>
    %c5_431 = arith.constant 5 : index
    %c0_432 = arith.constant 0 : index
    %c0_433 = arith.constant 0 : index
    %490 = vector.load %arg9[%c5_431, %c0_432, %c0_433] : memref<6x32x1xf32, #tpu.memory_space<vmem>>, vector<1x32x1xf32>
    %491 = vector.shape_cast %490 : vector<1x32x1xf32> to vector<32x1xf32>
    %c5_434 = arith.constant 5 : index
    %c0_435 = arith.constant 0 : index
    %c0_436 = arith.constant 0 : index
    %492 = vector.load %arg8[%c5_434, %c0_435, %c0_436] : memref<6x32x1xf32, #tpu.memory_space<vmem>>, vector<1x32x1xf32>
    %493 = vector.shape_cast %492 : vector<1x32x1xf32> to vector<32x1xf32>
    %494 = vector.broadcast %493 : vector<32x1xf32> to vector<32x128xf32>
    %495 = arith.mulf %494, %489 : vector<32x128xf32>
    %496 = math.cos %495 : vector<32x128xf32>
    %cst_437 = arith.constant 1.000000e+00 : f32
    %497 = vector.broadcast %cst_437 : f32 to vector<32x128xf32>
    %498 = arith.subf %497, %496 : vector<32x128xf32>
    %499 = vector.broadcast %491 : vector<32x1xf32> to vector<32x128xf32>
    %500 = arith.mulf %499, %498 : vector<32x128xf32>
    %501 = arith.addf %489, %500 : vector<32x128xf32>
    %502 = arith.truncf %501 : vector<32x128xf32> to vector<32x128xbf16>
    %c0_438 = arith.constant 0 : index
    %c128_439 = arith.constant 128 : index
    %503 = vector.load %arg12[%c0_438, %c128_439] : memref<32x261xbf16, #tpu.memory_space<vmem>>, vector<32x128xbf16>
    tpu.vector_store %arg12[%c0_438, %c128_439], %502 {strides = array<i32>} : memref<32x261xbf16, #tpu.memory_space<vmem>>, vector<32x128xbf16>,
    %c0_440 = arith.constant 0 : index
    %c129_441 = arith.constant 129 : index
    %504 = vector.load %arg12[%c0_440, %c129_441] : memref<32x261xbf16, #tpu.memory_space<vmem>>, vector<32x1xbf16>
    %c0_442 = arith.constant 0 : index
    %c127_443 = arith.constant 127 : index
    %505 = vector.load %arg12[%c0_442, %c127_443] : memref<32x261xbf16, #tpu.memory_space<vmem>>, vector<32x1xbf16>
    tpu.vector_store %arg12[%c0_442, %c127_443], %504 {strides = array<i32>} : memref<32x261xbf16, #tpu.memory_space<vmem>>, vector<32x1xbf16>,
    %c0_444 = arith.constant 0 : index
    %c254_445 = arith.constant 254 : index
    %506 = vector.load %arg12[%c0_444, %c254_445] : memref<32x261xbf16, #tpu.memory_space<vmem>>, vector<32x1xbf16>
    %c0_446 = arith.constant 0 : index
    %c256_447 = arith.constant 256 : index
    %507 = vector.load %arg12[%c0_446, %c256_447] : memref<32x261xbf16, #tpu.memory_space<vmem>>, vector<32x1xbf16>
    tpu.vector_store %arg12[%c0_446, %c256_447], %506 {strides = array<i32>} : memref<32x261xbf16, #tpu.memory_space<vmem>>, vector<32x1xbf16>,
    %c5_448 = arith.constant 5 : index
    %c0_449 = arith.constant 0 : index
    %c0_450 = arith.constant 0 : index
    %508 = vector.load %arg7[%c5_448, %c0_449, %c0_450] : memref<6x32x1xf32, #tpu.memory_space<vmem>>, vector<1x32x1xf32>
    %509 = vector.shape_cast %508 : vector<1x32x1xf32> to vector<32x1xf32>
    %c15 = arith.constant 15 : index
    %c0_451 = arith.constant 0 : index
    %c0_452 = arith.constant 0 : index
    %510 = vector.load %arg6[%c15, %c0_451, %c0_452] : memref<18x32x32xbf16, #tpu.memory_space<vmem>>, vector<1x32x32xbf16>
    %511 = vector.shape_cast %510 : vector<1x32x32xbf16> to vector<32x32xbf16>
    %c0_453 = arith.constant 0 : index
    %c127_454 = arith.constant 127 : index
    %512 = vector.load %arg12[%c0_453, %c127_454] : memref<32x261xbf16, #tpu.memory_space<vmem>>, vector<32x128xbf16>
    %cst_455 = arith.constant dense<0.000000e+00> : vector<32x128xf32>
    %513 = tpu.matmul %511, %512, %cst_455 {dimension_numbers = #tpu.dot_dimension_numbers<[1], [0], [0], [1], [0, 0, 1, 1], [], []>} : vector<32x32xbf16>, vector<32x128xbf16>, vector<32x128xf32> -> vector<32x128xf32>
    %514 = vector.broadcast %509 : vector<32x1xf32> to vector<32x128xf32>
    %515 = arith.addf %514, %513 : vector<32x128xf32>
    %c16 = arith.constant 16 : index
    %c0_456 = arith.constant 0 : index
    %c0_457 = arith.constant 0 : index
    %516 = vector.load %arg6[%c16, %c0_456, %c0_457] : memref<18x32x32xbf16, #tpu.memory_space<vmem>>, vector<1x32x32xbf16>
    %517 = vector.shape_cast %516 : vector<1x32x32xbf16> to vector<32x32xbf16>
    %c0_458 = arith.constant 0 : index
    %c128_459 = arith.constant 128 : index
    %518 = vector.load %arg12[%c0_458, %c128_459] : memref<32x261xbf16, #tpu.memory_space<vmem>>, vector<32x128xbf16>
    %cst_460 = arith.constant dense<0.000000e+00> : vector<32x128xf32>
    %519 = tpu.matmul %517, %518, %cst_460 {dimension_numbers = #tpu.dot_dimension_numbers<[1], [0], [0], [1], [0, 0, 1, 1], [], []>} : vector<32x32xbf16>, vector<32x128xbf16>, vector<32x128xf32> -> vector<32x128xf32>
    %520 = arith.addf %515, %519 : vector<32x128xf32>
    %c17 = arith.constant 17 : index
    %c0_461 = arith.constant 0 : index
    %c0_462 = arith.constant 0 : index
    %521 = vector.load %arg6[%c17, %c0_461, %c0_462] : memref<18x32x32xbf16, #tpu.memory_space<vmem>>, vector<1x32x32xbf16>
    %522 = vector.shape_cast %521 : vector<1x32x32xbf16> to vector<32x32xbf16>
    %c0_463 = arith.constant 0 : index
    %c129_464 = arith.constant 129 : index
    %523 = vector.load %arg12[%c0_463, %c129_464] : memref<32x261xbf16, #tpu.memory_space<vmem>>, vector<32x128xbf16>
    %cst_465 = arith.constant dense<0.000000e+00> : vector<32x128xf32>
    %524 = tpu.matmul %522, %523, %cst_465 {dimension_numbers = #tpu.dot_dimension_numbers<[1], [0], [0], [1], [0, 0, 1, 1], [], []>} : vector<32x32xbf16>, vector<32x128xbf16>, vector<32x128xf32> -> vector<32x128xf32>
    %525 = arith.addf %520, %524 : vector<32x128xf32>
    %526 = arith.addf %525, %353 : vector<32x128xf32>
    %c0_466 = arith.constant 0 : index
    %c0_467 = arith.constant 0 : index
    %c0_468 = arith.constant 0 : index
    %527 = vector.load %arg10[%c0_466, %c0_467, %c0_468] : memref<1x32x128xf32, #tpu.memory_space<vmem>>, vector<1x32x128xf32>
    %528 = vector.shape_cast %527 : vector<1x32x128xf32> to vector<32x128xf32>
    %529 = vector.shape_cast %526 : vector<32x128xf32> to vector<1x32x128xf32>
    tpu.vector_store %arg10[%c0_466, %c0_467, %c0_468], %529 {strides = array<i32>} : memref<1x32x128xf32, #tpu.memory_space<vmem>>, vector<1x32x128xf32>,
    return
  }
  func.func @transform_0(%arg0: i32) -> (i32, i32, i32) {
    %c0_i32 = arith.constant 0 : i32
    %c0_i32_0 = arith.constant 0 : i32
    %c0_i32_1 = arith.constant 0 : i32
    return %arg0, %c0_i32, %c0_i32_0 : i32, i32, i32
  }
  func.func @transform_1(%arg0: i32) -> (i32, i32, i32) {
    %c0_i32 = arith.constant 0 : i32
    %c0_i32_0 = arith.constant 0 : i32
    %c0_i32_1 = arith.constant 0 : i32
    return %arg0, %c0_i32, %c0_i32_0 : i32, i32, i32
  }
  func.func @transform_2(%arg0: i32) -> (i32, i32) {
    %c0_i32 = arith.constant 0 : i32
    %c0_i32_0 = arith.constant 0 : i32
    %c0_i32_1 = arith.constant 0 : i32
    return %c0_i32, %c0_i32_0 : i32, i32
  }
  func.func @transform_3(%arg0: i32) -> (i32, i32, i32) {
    %c0_i32 = arith.constant 0 : i32
    %c0_i32_0 = arith.constant 0 : i32
    %c0_i32_1 = arith.constant 0 : i32
    %c0_i32_2 = arith.constant 0 : i32
    return %c0_i32, %c0_i32_0, %c0_i32_1 : i32, i32, i32
  }
  func.func @transform_4(%arg0: i32) -> (i32, i32, i32) {
    %c0_i32 = arith.constant 0 : i32
    %c0_i32_0 = arith.constant 0 : i32
    %c0_i32_1 = arith.constant 0 : i32
    %c0_i32_2 = arith.constant 0 : i32
    return %c0_i32, %c0_i32_0, %c0_i32_1 : i32, i32, i32
  }
  func.func @transform_5(%arg0: i32) -> (i32, i32, i32) {
    %c0_i32 = arith.constant 0 : i32
    %c0_i32_0 = arith.constant 0 : i32
    %c0_i32_1 = arith.constant 0 : i32
    %c0_i32_2 = arith.constant 0 : i32
    return %c0_i32, %c0_i32_0, %c0_i32_1 : i32, i32, i32
  }
  func.func @transform_6(%arg0: i32) -> (i32, i32, i32) {
    %c0_i32 = arith.constant 0 : i32
    %c0_i32_0 = arith.constant 0 : i32
    %c0_i32_1 = arith.constant 0 : i32
    %c0_i32_2 = arith.constant 0 : i32
    return %c0_i32, %c0_i32_0, %c0_i32_1 : i32, i32, i32
  }
  func.func @transform_7(%arg0: i32) -> (i32, i32, i32) {
    %c0_i32 = arith.constant 0 : i32
    %c0_i32_0 = arith.constant 0 : i32
    %c0_i32_1 = arith.constant 0 : i32
    %c0_i32_2 = arith.constant 0 : i32
    return %c0_i32, %c0_i32_0, %c0_i32_1 : i32, i32, i32
  }
  func.func @transform_8(%arg0: i32) -> (i32, i32, i32) {
    %c0_i32 = arith.constant 0 : i32
    %c0_i32_0 = arith.constant 0 : i32
    %c0_i32_1 = arith.constant 0 : i32
    %c0_i32_2 = arith.constant 0 : i32
    return %c0_i32, %c0_i32_0, %c0_i32_1 : i32, i32, i32
  }
  func.func @transform_9(%arg0: i32) -> (i32, i32, i32) {
    %c0_i32 = arith.constant 0 : i32
    %c0_i32_0 = arith.constant 0 : i32
    %c0_i32_1 = arith.constant 0 : i32
    return %arg0, %c0_i32, %c0_i32_0 : i32, i32, i32
  }
}

</mosaic_0001>

<llo_original>
// kernel: ada_conv_block1d.1
$region0: #{ada_conv_block1d.1}
  #allocation0 [shape = 'u32[]', space=smem, size = 0x4, offset = 0x4, fixed_abs, tag = 'smem constant byte address 0x4 - core index']
  #allocation1 [shape = 'u32[144,128]{1,0:T(1,128)}', space=vmem, size = 0x12000, scoped, tag = 'internal scratch']
  #allocation2 [shape = 'f32[64,258]{1,0:T(8,128)}', space=vmem, size = 0x18000, scoped, tag = 'scratch operand']
  #allocation3 [shape = 'bf16[32,261]{1,0:T(16,128)(2,1)}', space=vmem, size = 0x6000, scoped, tag = 'scratch operand']
  %s0 = inlined_call_operand.hbm [shape: f32[2,32,128], index: 0, kind: input, shape index: {}]
  %s1 = inlined_call_operand.hbm [shape: f32[2,64,128], index: 1, kind: input, shape index: {}]
  %s2 = inlined_call_operand.hbm [shape: f32[1,128], index: 2, kind: input, shape index: {}]
  %s3 = inlined_call_operand.hbm [shape: bf16[6,64,64], index: 3, kind: input, shape index: {}]
  %s4 = inlined_call_operand.hbm [shape: f32[6,64,1], index: 4, kind: input, shape index: {}]
  %s5 = inlined_call_operand.hbm [shape: bf16[18,32,32], index: 5, kind: input, shape index: {}]
  %s6 = inlined_call_operand.hbm [shape: f32[6,32,1], index: 6, kind: input, shape index: {}]
  %s7 = inlined_call_operand.hbm [shape: f32[6,32,1], index: 7, kind: input, shape index: {}]
  %s8 = inlined_call_operand.hbm [shape: f32[6,32,1], index: 8, kind: input, shape index: {}]
  %s9 = inlined_call_operand.hbm [shape: f32[2,32,128], index: 9, kind: output, shape index: {}]
  %s10 = sld [smem:[#allocation0]]
  $region105: #{ada_conv_block1d.1} parent=0
    _
  %s12 = ssub.s32 1, %s10
  %s13 = scalar_select 0, %s12, %s10
  $region1: #{ada_conv_block1d.1} parent=0
    #allocation4 [shape = 'u8[32768]{0}', space=vmem, size = 0x8000, scoped, tag = 'input window, operand 0']
    #allocation5 [shape = 's32[2]{0}', space=sflag, size = 0x8, scoped, tag = 'scoped memory for ada_conv_block1d.1']
    #allocation6 [shape = 's32[2]{0}', space=sflag, size = 0x8, scoped, tag = 'scoped memory for ada_conv_block1d.1']
    #allocation7 [shape = 'u8[65536]{0}', space=vmem, size = 0x10000, scoped, tag = 'input window, operand 1']
    #allocation8 [shape = 's32[2]{0}', space=sflag, size = 0x8, scoped, tag = 'scoped memory for ada_conv_block1d.1']
    #allocation9 [shape = 'u8[512]{0}', space=vmem, size = 0x400, scoped, tag = 'input window, operand 2, single buffered']
    #allocation10 [shape = 'u8[98304]{0}', space=vmem, size = 0x18000, scoped, tag = 'input window, operand 3, single buffered']
    #allocation11 [shape = 's32[1]{0}', space=sflag, size = 0x4, scoped, tag = 'scoped memory for ada_conv_block1d.1']
    #allocation12 [shape = 'u8[196608]{0}', space=vmem, size = 0x30000, scoped, tag = 'input window, operand 4, single buffered']
    #allocation13 [shape = 'u8[147456]{0}', space=vmem, size = 0x24000, scoped, tag = 'input window, operand 5, single buffered']
    #allocation14 [shape = 's32[1]{0}', space=sflag, size = 0x4, scoped, tag = 'scoped memory for ada_conv_block1d.1']
    #allocation15 [shape = 'u8[98304]{0}', space=vmem, size = 0x18000, scoped, tag = 'input window, operand 6, single buffered']
    #allocation16 [shape = 'u8[98304]{0}', space=vmem, size = 0x18000, scoped, tag = 'input window, operand 7, single buffered']
    #allocation17 [shape = 's32[1]{0}', space=sflag, size = 0x4, scoped, tag = 'scoped memory for ada_conv_block1d.1']
    #allocation18 [shape = 'u8[98304]{0}', space=vmem, size = 0x18000, scoped, tag = 'input window, operand 8, single buffered']
    #allocation19 [shape = 'u8[32768]{0}', space=vmem, size = 0x8000, scoped, tag = 'output window, operand 0']
    %14 = vsyncpa [#allocation5], 0
    %s15 = scalar_lea.sflag [#allocation5], 1
    %16 = vsyncpa %s15, 0
    %17 = vsyncpa [#allocation8], 0
    %s18 = scalar_lea.sflag [#allocation8], 1
    %19 = vsyncpa %s18, 0
    %20 = vsyncpa [#allocation11], 0
    %21 = vsyncpa [#allocation14], 0
    %22 = vsyncpa [#allocation17], 0
    %23 = vsyncpa [#allocation6], 0
    %s24 = scalar_lea.sflag [#allocation6], 1
    %25 = vsyncpa %s24, 0
    loop: start=0, step=1, limit=4
    $region2: #{ada_conv_block1d.1} parent=1 // loop_pre_header
      _
    $region3: #{ada_conv_block1d.1} parent=1 // loop_header
      %s27 = sphi 0, %s31
      %p28 = scmp.ge.s32.totalorder %s27, 4
      %s37 = sphi 0, %s39
      %s40 = sphi 0, %s37
      %s41 = sphi 0, %s40
      %s57 = sphi 0, %s41
      %s63 = sphi 0, %s65
      %s66 = sphi 0, %s63
      %s67 = sphi 0, %s66
      %s83 = sphi 0, %s67
      %s87 = sphi 0, %s87
      %s89 = sphi 0, %s87
      %s90 = sphi 0, %s89
      %s104 = sphi 0, %s90
      %s108 = sphi 0, %s108
      %s110 = sphi 0, %s108
      %s111 = sphi 0, %s110
      %s125 = sphi 0, %s111
      %s129 = sphi 0, %s129
      %s131 = sphi 0, %s129
      %s132 = sphi 0, %s131
      %s146 = sphi 0, %s132
      %s150 = sphi 0, %s150
      %s152 = sphi 0, %s150
      %s153 = sphi 0, %s152
      %s167 = sphi 0, %s153
      %s171 = sphi 0, %s171
      %s173 = sphi 0, %s171
      %s174 = sphi 0, %s173
      %s188 = sphi 0, %s174
      %s192 = sphi 0, %s192
      %s194 = sphi 0, %s192
      %s195 = sphi 0, %s194
      %s209 = sphi 0, %s195
      %s213 = sphi 0, %s213
      %s215 = sphi 0, %s213
      %s216 = sphi 0, %s215
      %s230 = sphi 0, %s216
      %s236 = sphi 0, %s238
      %s239 = sphi 0, %s236
      %s240 = sphi 0, %s239
      %s256 = sphi 0, %s240
    $region4: #{ada_conv_block1d.1} parent=1 // loop_header_branch
      %30 = sbr.rel (%p28) target = $region8
    $region5: #{ada_conv_block1d.1} parent=1 // loop_body
      %s32 = ssub.s32 %s27, 1
      %s33 = ssub.s32 %s27, 2
      %s34 = sadd.s32 %s27, 1
      %s35 = ssub.s32 %s27, %s34
      %p36 = scmp.eq.s32.totalorder %s35, 0
      %s38 = sadd.s32 %s37, 1
      %s39 = scalar_select %p36, %s37, %s38
      %p42 = pneg %p36
      %p43 = scmp.eq.s32.totalorder %s27, 1
      %p44 = por %p42, %p43
      %p45 = scmp.ne.s32.totalorder %s37, %s40
      %p46 = scmp.eq.s32.totalorder %s27, 0
      %p47 = por %p45, %p46
      %p48 = scmp.ne.s32.totalorder %s37, %s40
      %p49 = scmp.eq.s32.totalorder %s32, 1
      %p50 = por %p48, %p49
      %p51 = scmp.ne.s32.totalorder %s40, %s41
      %p52 = scmp.eq.s32.totalorder %s32, 0
      %p53 = por %p51, %p52
      %p54 = scmp.ne.s32.totalorder %s40, %s41
      %p55 = scmp.eq.s32.totalorder %s33, 1
      %p56 = por %p54, %p55
      %p58 = scmp.ne.s32.totalorder %s41, %s57
      %p59 = scmp.eq.s32.totalorder %s33, 0
      %p60 = por %p58, %p59
      %s61 = ssub.s32 %s27, %s34
      %p62 = scmp.eq.s32.totalorder %s61, 0
      %s64 = sadd.s32 %s63, 1
      %s65 = scalar_select %p62, %s63, %s64
      %p68 = pneg %p62
      %p69 = scmp.eq.s32.totalorder %s27, 1
      %p70 = por %p68, %p69
      %p71 = scmp.ne.s32.totalorder %s63, %s66
      %p72 = scmp.eq.s32.totalorder %s27, 0
      %p73 = por %p71, %p72
      %p74 = scmp.ne.s32.totalorder %s63, %s66
      %p75 = scmp.eq.s32.totalorder %s32, 1
      %p76 = por %p74, %p75
      %p77 = scmp.ne.s32.totalorder %s66, %s67
      %p78 = scmp.eq.s32.totalorder %s32, 0
      %p79 = por %p77, %p78
      %p80 = scmp.ne.s32.totalorder %s66, %s67
      %p81 = scmp.eq.s32.totalorder %s33, 1
      %p82 = por %p80, %p81
      %p84 = scmp.ne.s32.totalorder %s67, %s83
      %p85 = scmp.eq.s32.totalorder %s33, 0
      %p86 = por %p84, %p85
      %s88 = sadd.s32 %s87, 1
      %p91 = scmp.eq.s32.totalorder %s27, 1
      %p92 = scmp.ne.s32.totalorder %s87, %s89
      %p93 = scmp.eq.s32.totalorder %s27, 0
      %p94 = por %p92, %p93
      %p95 = scmp.ne.s32.totalorder %s87, %s89
      %p96 = scmp.eq.s32.totalorder %s32, 1
      %p97 = por %p95, %p96
      %p98 = scmp.ne.s32.totalorder %s89, %s90
      %p99 = scmp.eq.s32.totalorder %s32, 0
      %p100 = por %p98, %p99
      %p101 = scmp.ne.s32.totalorder %s89, %s90
      %p102 = scmp.eq.s32.totalorder %s33, 1
      %p103 = por %p101, %p102
      %p105 = scmp.ne.s32.totalorder %s90, %s104
      %p106 = scmp.eq.s32.totalorder %s33, 0
      %p107 = por %p105, %p106
      %s109 = sadd.s32 %s108, 1
      %p112 = scmp.eq.s32.totalorder %s27, 1
      %p113 = scmp.ne.s32.totalorder %s108, %s110
      %p114 = scmp.eq.s32.totalorder %s27, 0
      %p115 = por %p113, %p114
      %p116 = scmp.ne.s32.totalorder %s108, %s110
      %p117 = scmp.eq.s32.totalorder %s32, 1
      %p118 = por %p116, %p117
      %p119 = scmp.ne.s32.totalorder %s110, %s111
      %p120 = scmp.eq.s32.totalorder %s32, 0
      %p121 = por %p119, %p120
      %p122 = scmp.ne.s32.totalorder %s110, %s111
      %p123 = scmp.eq.s32.totalorder %s33, 1
      %p124 = por %p122, %p123
      %p126 = scmp.ne.s32.totalorder %s111, %s125
      %p127 = scmp.eq.s32.totalorder %s33, 0
      %p128 = por %p126, %p127
      %s130 = sadd.s32 %s129, 1
      %p133 = scmp.eq.s32.totalorder %s27, 1
      %p134 = scmp.ne.s32.totalorder %s129, %s131
      %p135 = scmp.eq.s32.totalorder %s27, 0
      %p136 = por %p134, %p135
      %p137 = scmp.ne.s32.totalorder %s129, %s131
      %p138 = scmp.eq.s32.totalorder %s32, 1
      %p139 = por %p137, %p138
      %p140 = scmp.ne.s32.totalorder %s131, %s132
      %p141 = scmp.eq.s32.totalorder %s32, 0
      %p142 = por %p140, %p141
      %p143 = scmp.ne.s32.totalorder %s131, %s132
      %p144 = scmp.eq.s32.totalorder %s33, 1
      %p145 = por %p143, %p144
      %p147 = scmp.ne.s32.totalorder %s132, %s146
      %p148 = scmp.eq.s32.totalorder %s33, 0
      %p149 = por %p147, %p148
      %s151 = sadd.s32 %s150, 1
      %p154 = scmp.eq.s32.totalorder %s27, 1
      %p155 = scmp.ne.s32.totalorder %s150, %s152
      %p156 = scmp.eq.s32.totalorder %s27, 0
      %p157 = por %p155, %p156
      %p158 = scmp.ne.s32.totalorder %s150, %s152
      %p159 = scmp.eq.s32.totalorder %s32, 1
      %p160 = por %p158, %p159
      %p161 = scmp.ne.s32.totalorder %s152, %s153
      %p162 = scmp.eq.s32.totalorder %s32, 0
      %p163 = por %p161, %p162
      %p164 = scmp.ne.s32.totalorder %s152, %s153
      %p165 = scmp.eq.s32.totalorder %s33, 1
      %p166 = por %p164, %p165
      %p168 = scmp.ne.s32.totalorder %s153, %s167
      %p169 = scmp.eq.s32.totalorder %s33, 0
      %p170 = por %p168, %p169
      %s172 = sadd.s32 %s171, 1
      %p175 = scmp.eq.s32.totalorder %s27, 1
      %p176 = scmp.ne.s32.totalorder %s171, %s173
      %p177 = scmp.eq.s32.totalorder %s27, 0
      %p178 = por %p176, %p177
      %p179 = scmp.ne.s32.totalorder %s171, %s173
      %p180 = scmp.eq.s32.totalorder %s32, 1
      %p181 = por %p179, %p180
      %p182 = scmp.ne.s32.totalorder %s173, %s174
      %p183 = scmp.eq.s32.totalorder %s32, 0
      %p184 = por %p182, %p183
      %p185 = scmp.ne.s32.totalorder %s173, %s174
      %p186 = scmp.eq.s32.totalorder %s33, 1
      %p187 = por %p185, %p186
      %p189 = scmp.ne.s32.totalorder %s174, %s188
      %p190 = scmp.eq.s32.totalorder %s33, 0
      %p191 = por %p189, %p190
      %s193 = sadd.s32 %s192, 1
      %p196 = scmp.eq.s32.totalorder %s27, 1
      %p197 = scmp.ne.s32.totalorder %s192, %s194
      %p198 = scmp.eq.s32.totalorder %s27, 0
      %p199 = por %p197, %p198
      %p200 = scmp.ne.s32.totalorder %s192, %s194
      %p201 = scmp.eq.s32.totalorder %s32, 1
      %p202 = por %p200, %p201
      %p203 = scmp.ne.s32.totalorder %s194, %s195
      %p204 = scmp.eq.s32.totalorder %s32, 0
      %p205 = por %p203, %p204
      %p206 = scmp.ne.s32.totalorder %s194, %s195
      %p207 = scmp.eq.s32.totalorder %s33, 1
      %p208 = por %p206, %p207
      %p210 = scmp.ne.s32.totalorder %s195, %s209
      %p211 = scmp.eq.s32.totalorder %s33, 0
      %p212 = por %p210, %p211
      %s214 = sadd.s32 %s213, 1
      %p217 = scmp.eq.s32.totalorder %s27, 1
      %p218 = scmp.ne.s32.totalorder %s213, %s215
      %p219 = scmp.eq.s32.totalorder %s27, 0
      %p220 = por %p218, %p219
      %p221 = scmp.ne.s32.totalorder %s213, %s215
      %p222 = scmp.eq.s32.totalorder %s32, 1
      %p223 = por %p221, %p222
      %p224 = scmp.ne.s32.totalorder %s215, %s216
      %p225 = scmp.eq.s32.totalorder %s32, 0
      %p226 = por %p224, %p225
      %p227 = scmp.ne.s32.totalorder %s215, %s216
      %p228 = scmp.eq.s32.totalorder %s33, 1
      %p229 = por %p227, %p228
      %p231 = scmp.ne.s32.totalorder %s216, %s230
      %p232 = scmp.eq.s32.totalorder %s33, 0
      %p233 = por %p231, %p232
      %s234 = ssub.s32 %s27, %s34
      %p235 = scmp.eq.s32.totalorder %s234, 0
      %s237 = sadd.s32 %s236, 1
      %s238 = scalar_select %p235, %s236, %s237
      %p241 = pneg %p235
      %p242 = scmp.eq.s32.totalorder %s27, 1
      %p243 = por %p241, %p242
      %p244 = scmp.ne.s32.totalorder %s236, %s239
      %p245 = scmp.eq.s32.totalorder %s27, 0
      %p246 = por %p244, %p245
      %p247 = scmp.ne.s32.totalorder %s236, %s239
      %p248 = scmp.eq.s32.totalorder %s32, 1
      %p249 = por %p247, %p248
      %p250 = scmp.ne.s32.totalorder %s239, %s240
      %p251 = scmp.eq.s32.totalorder %s32, 0
      %p252 = por %p250, %p251
      %p253 = scmp.ne.s32.totalorder %s239, %s240
      %p254 = scmp.eq.s32.totalorder %s33, 1
      %p255 = por %p253, %p254
      %p257 = scmp.ne.s32.totalorder %s240, %s256
      %p258 = scmp.eq.s32.totalorder %s33, 0
      %p259 = por %p257, %p258
      %p260 = scmp.le.s32.totalorder 1, %s27
      %p261 = scmp.lt.s32.totalorder %s27, 3
      %p262 = pnand %p260, %p261
      %p263 = pneg %p262
      // Predicated region
      $region9: #{ada_conv_block1d.1} parent=5 // pred_check
        _
      $region10: #{ada_conv_block1d.1} parent=5 // pred_check_branch
        %265 = sbr.rel (%p262) target = $region12
      $region11: #{ada_conv_block1d.1} parent=5 // pred_region
        %s266 = ssub.s32 %s27, 1
        // Predicated region
        $region13: #{ada_conv_block1d.1} parent=11 // pred_check
          %p267 = pneg %p100
        $region14: #{ada_conv_block1d.1} parent=11 // pred_check_branch
          %269 = sbr.rel (%p267) target = $region16
        $region15: #{ada_conv_block1d.1} parent=11 // pred_region
          %s271 = ssub.s32 16, 16
          %272 = vsyncadd [#allocation8], %s271
          %s274 = sshll.u32 [#allocation9], 4
          %s275 = int_to_ptr.vmem [resolvable:$true] %s274
          %277 = dma.hbm_to_vmem [thread:$0]  %s2, 16, %s275, [#allocation8]
        $region16: #{ada_conv_block1d.1} parent=11 // pred_fallthru
          _
        // Predicated region
        $region17: #{ada_conv_block1d.1} parent=11 // pred_check
          %p278 = pneg %p121
        $region18: #{ada_conv_block1d.1} parent=11 // pred_check_branch
          %280 = sbr.rel (%p278) target = $region20
        $region19: #{ada_conv_block1d.1} parent=11 // pred_region
          %s282 = ssub.s32 3072, 3072
          %283 = vsyncadd [#allocation11], %s282
          %s284 = sshll.u32 [#allocation10], 4
          %s285 = int_to_ptr.vmem [resolvable:$true] %s284
          %290 = dma.hbm_to_vmem [thread:$0]  %s3, 3072, %s285, [#allocation11], 64, 64, 4
        $region20: #{ada_conv_block1d.1} parent=11 // pred_fallthru
          _
        // Predicated region
        $region21: #{ada_conv_block1d.1} parent=11 // pred_check
          %p291 = pneg %p142
        $region22: #{ada_conv_block1d.1} parent=11 // pred_check_branch
          %293 = sbr.rel (%p291) target = $region24
        $region23: #{ada_conv_block1d.1} parent=11 // pred_region
          %s295 = ssub.s32 6144, 6144
          %296 = vsyncadd [#allocation11], %s295
          %s297 = sshll.u32 [#allocation12], 4
          %s298 = int_to_ptr.vmem [resolvable:$true] %s297
          %303 = dma.hbm_to_vmem [thread:$0]  %s4, 6144, %s298, [#allocation11], 128, 128, 8
        $region24: #{ada_conv_block1d.1} parent=11 // pred_fallthru
          _
        // Predicated region
        $region25: #{ada_conv_block1d.1} parent=11 // pred_check
          %p304 = pneg %p163
        $region26: #{ada_conv_block1d.1} parent=11 // pred_check_branch
          %306 = sbr.rel (%p304) target = $region28
        $region27: #{ada_conv_block1d.1} parent=11 // pred_region
          %s308 = ssub.s32 4608, 4608
          %309 = vsyncadd [#allocation14], %s308
          %s310 = sshll.u32 [#allocation13], 4
          %s311 = int_to_ptr.vmem [resolvable:$true] %s310
          %316 = dma.hbm_to_vmem [thread:$0]  %s5, 4608, %s311, [#allocation14], 64, 64, 4
        $region28: #{ada_conv_block1d.1} parent=11 // pred_fallthru
          _
        // Predicated region
        $region29: #{ada_conv_block1d.1} parent=11 // pred_check
          %p317 = pneg %p184
        $region30: #{ada_conv_block1d.1} parent=11 // pred_check_branch
          %319 = sbr.rel (%p317) target = $region32
        $region31: #{ada_conv_block1d.1} parent=11 // pred_region
          %s321 = ssub.s32 3072, 3072
          %322 = vsyncadd [#allocation14], %s321
          %s323 = sshll.u32 [#allocation15], 4
          %s324 = int_to_ptr.vmem [resolvable:$true] %s323
          %329 = dma.hbm_to_vmem [thread:$0]  %s6, 3072, %s324, [#allocation14], 128, 128, 8
        $region32: #{ada_conv_block1d.1} parent=11 // pred_fallthru
          _
        // Predicated region
        $region33: #{ada_conv_block1d.1} parent=11 // pred_check
          %p330 = pneg %p205
        $region34: #{ada_conv_block1d.1} parent=11 // pred_check_branch
          %332 = sbr.rel (%p330) target = $region36
        $region35: #{ada_conv_block1d.1} parent=11 // pred_region
          %s334 = ssub.s32 3072, 3072
          %335 = vsyncadd [#allocation17], %s334
          %s336 = sshll.u32 [#allocation16], 4
          %s337 = int_to_ptr.vmem [resolvable:$true] %s336
          %342 = dma.hbm_to_vmem [thread:$0]  %s7, 3072, %s337, [#allocation17], 128, 128, 8
        $region36: #{ada_conv_block1d.1} parent=11 // pred_fallthru
          _
        // Predicated region
        $region37: #{ada_conv_block1d.1} parent=11 // pred_check
          %p343 = pneg %p226
        $region38: #{ada_conv_block1d.1} parent=11 // pred_check_branch
          %345 = sbr.rel (%p343) target = $region40
        $region39: #{ada_conv_block1d.1} parent=11 // pred_region
          %s347 = ssub.s32 3072, 3072
          %348 = vsyncadd [#allocation17], %s347
          %s349 = sshll.u32 [#allocation18], 4
          %s350 = int_to_ptr.vmem [resolvable:$true] %s349
          %355 = dma.hbm_to_vmem [thread:$0]  %s8, 3072, %s350, [#allocation17], 128, 128, 8
        $region40: #{ada_conv_block1d.1} parent=11 // pred_fallthru
          _
      $region12: #{ada_conv_block1d.1} parent=5 // pred_fallthru
        _
      %p356 = scmp.lt.s32.totalorder %s27, 2
      // Predicated region
      $region41: #{ada_conv_block1d.1} parent=5 // pred_check
        %p357 = pneg %p356
      $region42: #{ada_conv_block1d.1} parent=5 // pred_check_branch
        %359 = sbr.rel (%p357) target = $region44
      $region43: #{ada_conv_block1d.1} parent=5 // pred_region
        // Predicated region
        $region45: #{ada_conv_block1d.1} parent=43 // pred_check
          %p360 = pneg %p47
        $region46: #{ada_conv_block1d.1} parent=43 // pred_check_branch
          %362 = sbr.rel (%p360) target = $region48
        $region47: #{ada_conv_block1d.1} parent=43 // pred_region
          %s363 = sand.u32 %s37, 1
          %s364 = scalar_lea.sflag [#allocation5], %s363
          %s365 = sand.u32 %s37, 1
          %s366 = smul.addr %s365, 32
          %s367 = scalar_lea.vmem [#allocation4], %s366
          %s369 = ssub.s32 512, 512
          %370 = vsyncadd %s364, %s369
          %s371 = smul.addr %s27, 4
          %s372 = smul.addr %s371, 128
          %s373 = scalar_lea.hbm %s0, %s372
          %s374 = sshll.u32 %s367, 4
          %s375 = int_to_ptr.vmem [resolvable:$true] %s374
          %380 = dma.hbm_to_vmem [thread:$0]  %s373, 512, %s375, %s364, 128, 128, 8
        $region48: #{ada_conv_block1d.1} parent=43 // pred_fallthru
          _
        // Predicated region
        $region49: #{ada_conv_block1d.1} parent=43 // pred_check
          %p381 = pneg %p73
        $region50: #{ada_conv_block1d.1} parent=43 // pred_check_branch
          %383 = sbr.rel (%p381) target = $region52
        $region51: #{ada_conv_block1d.1} parent=43 // pred_region
          %s384 = sand.u32 %s27, 1
          %s385 = scalar_lea.sflag [#allocation8], %s384
          %s386 = sand.u32 %s63, 1
          %s387 = smul.addr %s386, 64
          %s388 = scalar_lea.vmem [#allocation7], %s387
          %s390 = ssub.s32 1024, 1024
          %391 = vsyncadd %s385, %s390
          %s392 = smul.addr %s27, 8
          %s393 = smul.addr %s392, 128
          %s394 = scalar_lea.hbm %s1, %s393
          %s395 = sshll.u32 %s388, 4
          %s396 = int_to_ptr.vmem [resolvable:$true] %s395
          %401 = dma.hbm_to_vmem [thread:$0]  %s394, 1024, %s396, %s385, 128, 128, 8
        $region52: #{ada_conv_block1d.1} parent=43 // pred_fallthru
          _
      $region44: #{ada_conv_block1d.1} parent=5 // pred_fallthru
        _
      %p402 = scmp.le.s32.totalorder 1, %s27
      %p403 = scmp.lt.s32.totalorder %s27, 3
      %p404 = pnand %p402, %p403
      %p405 = pneg %p404
      // Predicated region
      $region53: #{ada_conv_block1d.1} parent=5 // pred_check
        _
      $region54: #{ada_conv_block1d.1} parent=5 // pred_check_branch
        %407 = sbr.rel (%p404) target = $region56
      $region55: #{ada_conv_block1d.1} parent=5 // pred_region
        %s408 = ssub.s32 %s27, 1
        %s409 = sand.u32 %s40, 1
        %s410 = scalar_lea.sflag [#allocation5], %s409
        %s411 = sand.u32 %s40, 1
        %s412 = smul.addr %s411, 32
        %s413 = scalar_lea.vmem [#allocation4], %s412
        // Predicated region
        $region57: #{ada_conv_block1d.1} parent=55 // pred_check
          %p414 = pneg %p53
        $region58: #{ada_conv_block1d.1} parent=55 // pred_check_branch
          %416 = sbr.rel (%p414) target = $region60
        $region59: #{ada_conv_block1d.1} parent=55 // pred_region
          %417 = dma.done %s410, 512
        $region60: #{ada_conv_block1d.1} parent=55 // pred_fallthru
          _
        %s418 = sand.u32 %s32, 1
        %s419 = scalar_lea.sflag [#allocation8], %s418
        %s420 = sand.u32 %s66, 1
        %s421 = smul.addr %s420, 64
        %s422 = scalar_lea.vmem [#allocation7], %s421
        // Predicated region
        $region61: #{ada_conv_block1d.1} parent=55 // pred_check
          %p423 = pneg %p79
        $region62: #{ada_conv_block1d.1} parent=55 // pred_check_branch
          %425 = sbr.rel (%p423) target = $region64
        $region63: #{ada_conv_block1d.1} parent=55 // pred_region
          %426 = dma.done %s419, 1024
        $region64: #{ada_conv_block1d.1} parent=55 // pred_fallthru
          _
        // Predicated region
        $region65: #{ada_conv_block1d.1} parent=55 // pred_check
          %p427 = pneg %p100
        $region66: #{ada_conv_block1d.1} parent=55 // pred_check_branch
          %429 = sbr.rel (%p427) target = $region68
        $region67: #{ada_conv_block1d.1} parent=55 // pred_region
          %430 = dma.done [#allocation8], 16
        $region68: #{ada_conv_block1d.1} parent=55 // pred_fallthru
          _
        // Predicated region
        $region69: #{ada_conv_block1d.1} parent=55 // pred_check
          %p431 = pneg %p121
        $region70: #{ada_conv_block1d.1} parent=55 // pred_check_branch
          %433 = sbr.rel (%p431) target = $region72
        $region71: #{ada_conv_block1d.1} parent=55 // pred_region
          %434 = dma.done [#allocation11], 3072
        $region72: #{ada_conv_block1d.1} parent=55 // pred_fallthru
          _
        // Predicated region
        $region73: #{ada_conv_block1d.1} parent=55 // pred_check
          %p435 = pneg %p142
        $region74: #{ada_conv_block1d.1} parent=55 // pred_check_branch
          %437 = sbr.rel (%p435) target = $region76
        $region75: #{ada_conv_block1d.1} parent=55 // pred_region
          %438 = dma.done [#allocation11], 6144
        $region76: #{ada_conv_block1d.1} parent=55 // pred_fallthru
          _
        // Predicated region
        $region77: #{ada_conv_block1d.1} parent=55 // pred_check
          %p439 = pneg %p163
        $region78: #{ada_conv_block1d.1} parent=55 // pred_check_branch
          %441 = sbr.rel (%p439) target = $region80
        $region79: #{ada_conv_block1d.1} parent=55 // pred_region
          %442 = dma.done [#allocation14], 4608
        $region80: #{ada_conv_block1d.1} parent=55 // pred_fallthru
          _
        // Predicated region
        $region81: #{ada_conv_block1d.1} parent=55 // pred_check
          %p443 = pneg %p184
        $region82: #{ada_conv_block1d.1} parent=55 // pred_check_branch
          %445 = sbr.rel (%p443) target = $region84
        $region83: #{ada_conv_block1d.1} parent=55 // pred_region
          %446 = dma.done [#allocation14], 3072
        $region84: #{ada_conv_block1d.1} parent=55 // pred_fallthru
          _
        // Predicated region
        $region85: #{ada_conv_block1d.1} parent=55 // pred_check
          %p447 = pneg %p205
        $region86: #{ada_conv_block1d.1} parent=55 // pred_check_branch
          %449 = sbr.rel (%p447) target = $region88
        $region87: #{ada_conv_block1d.1} parent=55 // pred_region
          %450 = dma.done [#allocation17], 3072
        $region88: #{ada_conv_block1d.1} parent=55 // pred_fallthru
          _
        // Predicated region
        $region89: #{ada_conv_block1d.1} parent=55 // pred_check
          %p451 = pneg %p226
        $region90: #{ada_conv_block1d.1} parent=55 // pred_check_branch
          %453 = sbr.rel (%p451) target = $region92
        $region91: #{ada_conv_block1d.1} parent=55 // pred_region
          %454 = dma.done [#allocation17], 3072
        $region92: #{ada_conv_block1d.1} parent=55 // pred_fallthru
          _
        %s455 = sand.u32 %s40, 1
        %s456 = scalar_lea.sflag [#allocation5], %s455
        %s457 = sand.u32 %s40, 1
        %s458 = smul.addr %s457, 32
        %s459 = scalar_lea.vmem [#allocation4], %s458
        %p460 = pneg %p53
        %p461 = pneg %p50
        %s462 = sand.u32 %s32, 1
        %s463 = scalar_lea.sflag [#allocation8], %s462
        %s464 = sand.u32 %s66, 1
        %s465 = smul.addr %s464, 64
        %s466 = scalar_lea.vmem [#allocation7], %s465
        %p467 = pneg %p79
        %p468 = pneg %p76
        %p469 = pneg %p100
        %p470 = pneg %p97
        %p471 = pneg %p121
        %p472 = pneg %p118
        %p473 = pneg %p142
        %p474 = pneg %p139
        %p475 = pneg %p163
        %p476 = pneg %p160
        %p477 = pneg %p184
        %p478 = pneg %p181
        %p479 = pneg %p205
        %p480 = pneg %p202
        %p481 = pneg %p226
        %p482 = pneg %p223
        %p483 = pneg %p252
        %p484 = pneg %p249
        %s485 = sand.u32 %s239, 1
        %s486 = scalar_lea.sflag [#allocation6], %s485
        %s487 = sand.u32 %s239, 1
        %s488 = smul.addr %s487, 32
        %s489 = scalar_lea.vmem [#allocation19], %s488
        %v491 = vld [vmem:[#allocation9] sm:$0x1]
        %vm492 = vcmask 1048560
        %493 = vst.msk [vmem:[#allocation2] sm:$0xff] %vm492, 0.0
        %494 = vst.msk [vmem:[#allocation2 + $0x18] sm:$0xff] %vm492, 0.0
        %495 = vst.msk [vmem:[#allocation2 + $0x30] sm:$0xff] %vm492, 0.0
        %496 = vst.msk [vmem:[#allocation2 + $0x48] sm:$0xff] %vm492, 0.0
        %497 = vst.msk [vmem:[#allocation2 + $0x60] sm:$0xff] %vm492, 0.0
        %498 = vst.msk [vmem:[#allocation2 + $0x78] sm:$0xff] %vm492, 0.0
        %499 = vst.msk [vmem:[#allocation2 + $0x90] sm:$0xff] %vm492, 0.0
        %500 = vst.msk [vmem:[#allocation2 + $0xa8] sm:$0xff] %vm492, 0.0
        %vm501 = vcmask 15360
        %502 = vst.msk [vmem:[#allocation2 + $0x10] sm:$0xff] %vm501, 0.0
        %503 = vst.msk [vmem:[#allocation2 + $0x28] sm:$0xff] %vm501, 0.0
        %504 = vst.msk [vmem:[#allocation2 + $0x40] sm:$0xff] %vm501, 0.0
        %505 = vst.msk [vmem:[#allocation2 + $0x58] sm:$0xff] %vm501, 0.0
        %506 = vst.msk [vmem:[#allocation2 + $0x70] sm:$0xff] %vm501, 0.0
        %507 = vst.msk [vmem:[#allocation2 + $0x88] sm:$0xff] %vm501, 0.0
        %508 = vst.msk [vmem:[#allocation2 + $0xa0] sm:$0xff] %vm501, 0.0
        %509 = vst.msk [vmem:[#allocation2 + $0xb8] sm:$0xff] %vm501, 0.0
        %v510 = vld [vmem:[%s422] sm:$0xff]
        %v511 = vld [vmem:[%s422 + $0x8] sm:$0xff]
        %v512 = vld [vmem:[%s422 + $0x10] sm:$0xff]
        %v513 = vld [vmem:[%s422 + $0x18] sm:$0xff]
        %v514 = vld [vmem:[%s422 + $0x20] sm:$0xff]
        %v515 = vld [vmem:[%s422 + $0x28] sm:$0xff]
        %v516 = vld [vmem:[%s422 + $0x30] sm:$0xff]
        %v517 = vld [vmem:[%s422 + $0x38] sm:$0xff]
        %518 = vst [vmem:[#allocation2 + $0x8] sm:$0xff] %v510
        %519 = vst [vmem:[#allocation2 + $0x20] sm:$0xff] %v511
        %520 = vst [vmem:[#allocation2 + $0x38] sm:$0xff] %v512
        %521 = vst [vmem:[#allocation2 + $0x50] sm:$0xff] %v513
        %522 = vst [vmem:[#allocation2 + $0x68] sm:$0xff] %v514
        %523 = vst [vmem:[#allocation2 + $0x80] sm:$0xff] %v515
        %524 = vst [vmem:[#allocation2 + $0x98] sm:$0xff] %v516
        %525 = vst [vmem:[#allocation2 + $0xb0] sm:$0xff] %v517
        %v526 = vld [vmem:[#allocation2] sm:$0xff]
        %v527 = vld [vmem:[#allocation2 + $0x8] sm:$0xff]
        %v528 = vld [vmem:[#allocation2 + $0x18] sm:$0xff]
        %v529 = vld [vmem:[#allocation2 + $0x20] sm:$0xff]
        %v530 = vld [vmem:[#allocation2 + $0x30] sm:$0xff]
        %v531 = vld [vmem:[#allocation2 + $0x38] sm:$0xff]
        %v532 = vld [vmem:[#allocation2 + $0x48] sm:$0xff]
        %v533 = vld [vmem:[#allocation2 + $0x50] sm:$0xff]
        %v534 = vld [vmem:[#allocation2 + $0x60] sm:$0xff]
        %v535 = vld [vmem:[#allocation2 + $0x68] sm:$0xff]
        %v536 = vld [vmem:[#allocation2 + $0x78] sm:$0xff]
        %v537 = vld [vmem:[#allocation2 + $0x80] sm:$0xff]
        %v538 = vld [vmem:[#allocation2 + $0x90] sm:$0xff]
        %v539 = vld [vmem:[#allocation2 + $0x98] sm:$0xff]
        %v540 = vld [vmem:[#allocation2 + $0xa8] sm:$0xff]
        %v541 = vld [vmem:[#allocation2 + $0xb0] sm:$0xff]
        %558 = vrot.lane.b32.xlu0 %v526, 127
        %v559 = vpop.permute.xlu0 %558
        %560 = vrot.lane.b32.xlu0 %v527, 127
        %v561 = vpop.permute.xlu0 %560
        %562 = vrot.lane.b32.xlu0 %v528, 127
        %v563 = vpop.permute.xlu0 %562
        %564 = vrot.lane.b32.xlu0 %v529, 127
        %v565 = vpop.permute.xlu0 %564
        %566 = vrot.lane.b32.xlu0 %v530, 127
        %v567 = vpop.permute.xlu0 %566
        %568 = vrot.lane.b32.xlu0 %v531, 127
        %v569 = vpop.permute.xlu0 %568
        %570 = vrot.lane.b32.xlu0 %v532, 127
        %v571 = vpop.permute.xlu0 %570
        %572 = vrot.lane.b32.xlu0 %v533, 127
        %v573 = vpop.permute.xlu0 %572
        %574 = vrot.lane.b32.xlu0 %v534, 127
        %v575 = vpop.permute.xlu0 %574
        %576 = vrot.lane.b32.xlu0 %v535, 127
        %v577 = vpop.permute.xlu0 %576
        %578 = vrot.lane.b32.xlu0 %v536, 127
        %v579 = vpop.permute.xlu0 %578
        %580 = vrot.lane.b32.xlu0 %v537, 127
        %v581 = vpop.permute.xlu0 %580
        %582 = vrot.lane.b32.xlu0 %v538, 127
        %v583 = vpop.permute.xlu0 %582
        %584 = vrot.lane.b32.xlu0 %v539, 127
        %v585 = vpop.permute.xlu0 %584
        %586 = vrot.lane.b32.xlu0 %v540, 127
        %v587 = vpop.permute.xlu0 %586
        %588 = vrot.lane.b32.xlu0 %v541, 127
        %v589 = vpop.permute.xlu0 %588
        %vm590 = vcmask 1039360
        %v591 = vsel %vm590, %v559, %v561
        %v592 = vsel %vm590, %v563, %v565
        %v593 = vsel %vm590, %v567, %v569
        %v594 = vsel %vm590, %v571, %v573
        %v595 = vsel %vm590, %v575, %v577
        %v596 = vsel %vm590, %v579, %v581
        %v597 = vsel %vm590, %v583, %v585
        %v598 = vsel %vm590, %v587, %v589
        %v615 = vadd.f32 %v526, %v591
        %v616 = vadd.f32 %v527, %v561
        %v617 = vadd.f32 %v528, %v592
        %v618 = vadd.f32 %v529, %v565
        %v619 = vadd.f32 %v530, %v593
        %v620 = vadd.f32 %v531, %v569
        %v621 = vadd.f32 %v532, %v594
        %v622 = vadd.f32 %v533, %v573
        %v623 = vadd.f32 %v534, %v595
        %v624 = vadd.f32 %v535, %v577
        %v625 = vadd.f32 %v536, %v596
        %v626 = vadd.f32 %v537, %v581
        %v627 = vadd.f32 %v538, %v597
        %v628 = vadd.f32 %v539, %v585
        %v629 = vadd.f32 %v540, %v598
        %v630 = vadd.f32 %v541, %v589
        %631 = vrot.lane.b32.xlu0 %v527, 126
        %v632 = vpop.permute.xlu0 %631
        %633 = vrot.lane.b32.xlu0 %v529, 126
        %v634 = vpop.permute.xlu0 %633
        %635 = vrot.lane.b32.xlu0 %v531, 126
        %v636 = vpop.permute.xlu0 %635
        %637 = vrot.lane.b32.xlu0 %v533, 126
        %v638 = vpop.permute.xlu0 %637
        %639 = vrot.lane.b32.xlu0 %v535, 126
        %v640 = vpop.permute.xlu0 %639
        %641 = vrot.lane.b32.xlu0 %v537, 126
        %v642 = vpop.permute.xlu0 %641
        %643 = vrot.lane.b32.xlu0 %v539, 126
        %v644 = vpop.permute.xlu0 %643
        %645 = vrot.lane.b32.xlu0 %v541, 126
        %v646 = vpop.permute.xlu0 %645
        %v655 = vadd.f32 %v615, %v632
        %v656 = vadd.f32 %v616, %v632
        %v657 = vadd.f32 %v617, %v634
        %v658 = vadd.f32 %v618, %v634
        %v659 = vadd.f32 %v619, %v636
        %v660 = vadd.f32 %v620, %v636
        %v661 = vadd.f32 %v621, %v638
        %v662 = vadd.f32 %v622, %v638
        %v663 = vadd.f32 %v623, %v640
        %v664 = vadd.f32 %v624, %v640
        %v665 = vadd.f32 %v625, %v642
        %v666 = vadd.f32 %v626, %v642
        %v667 = vadd.f32 %v627, %v644
        %v668 = vadd.f32 %v628, %v644
        %v669 = vadd.f32 %v629, %v646
        %v670 = vadd.f32 %v630, %v646
        %v671 = vld [vmem:[#allocation2 + $0x10] sm:$0xff]
        %v672 = vld [vmem:[#allocation2 + $0x28] sm:$0xff]
        %v673 = vld [vmem:[#allocation2 + $0x40] sm:$0xff]
        %v674 = vld [vmem:[#allocation2 + $0x58] sm:$0xff]
        %v675 = vld [vmem:[#allocation2 + $0x70] sm:$0xff]
        %v676 = vld [vmem:[#allocation2 + $0x88] sm:$0xff]
        %v677 = vld [vmem:[#allocation2 + $0xa0] sm:$0xff]
        %v678 = vld [vmem:[#allocation2 + $0xb8] sm:$0xff]
        %687 = vrot.lane.b32.xlu0 %v527, 125
        %v688 = vpop.permute.xlu0 %687
        %689 = vrot.lane.b32.xlu0 %v671, 125
        %v690 = vpop.permute.xlu0 %689
        %691 = vrot.lane.b32.xlu0 %v529, 125
        %v692 = vpop.permute.xlu0 %691
        %693 = vrot.lane.b32.xlu0 %v672, 125
        %v694 = vpop.permute.xlu0 %693
        %695 = vrot.lane.b32.xlu0 %v531, 125
        %v696 = vpop.permute.xlu0 %695
        %697 = vrot.lane.b32.xlu0 %v673, 125
        %v698 = vpop.permute.xlu0 %697
        %699 = vrot.lane.b32.xlu0 %v533, 125
        %v700 = vpop.permute.xlu0 %699
        %701 = vrot.lane.b32.xlu0 %v674, 125
        %v702 = vpop.permute.xlu0 %701
        %703 = vrot.lane.b32.xlu0 %v535, 125
        %v704 = vpop.permute.xlu0 %703
        %705 = vrot.lane.b32.xlu0 %v675, 125
        %v706 = vpop.permute.xlu0 %705
        %707 = vrot.lane.b32.xlu0 %v537, 125
        %v708 = vpop.permute.xlu0 %707
        %709 = vrot.lane.b32.xlu0 %v676, 125
        %v710 = vpop.permute.xlu0 %709
        %711 = vrot.lane.b32.xlu0 %v539, 125
        %v712 = vpop.permute.xlu0 %711
        %713 = vrot.lane.b32.xlu0 %v677, 125
        %v714 = vpop.permute.xlu0 %713
        %715 = vrot.lane.b32.xlu0 %v541, 125
        %v716 = vpop.permute.xlu0 %715
        %717 = vrot.lane.b32.xlu0 %v678, 125
        %v718 = vpop.permute.xlu0 %717
        %vm719 = vcmask 1022976
        %v720 = vsel %vm719, %v688, %v690
        %v721 = vsel %vm719, %v692, %v694
        %v722 = vsel %vm719, %v696, %v698
        %v723 = vsel %vm719, %v700, %v702
        %v724 = vsel %vm719, %v704, %v706
        %v725 = vsel %vm719, %v708, %v710
        %v726 = vsel %vm719, %v712, %v714
        %v727 = vsel %vm719, %v716, %v718
        %v744 = vadd.f32 %v655, %v688
        %v745 = vadd.f32 %v656, %v720
        %v746 = vadd.f32 %v657, %v692
        %v747 = vadd.f32 %v658, %v721
        %v748 = vadd.f32 %v659, %v696
        %v749 = vadd.f32 %v660, %v722
        %v750 = vadd.f32 %v661, %v700
        %v751 = vadd.f32 %v662, %v723
        %v752 = vadd.f32 %v663, %v704
        %v753 = vadd.f32 %v664, %v724
        %v754 = vadd.f32 %v665, %v708
        %v755 = vadd.f32 %v666, %v725
        %v756 = vadd.f32 %v667, %v712
        %v757 = vadd.f32 %v668, %v726
        %v758 = vadd.f32 %v669, %v716
        %v759 = vadd.f32 %v670, %v727
        %760 = vrot.lane.b32.xlu0 %v527, 124
        %v761 = vpop.permute.xlu0 %760
        %762 = vrot.lane.b32.xlu0 %v671, 124
        %v763 = vpop.permute.xlu0 %762
        %764 = vrot.lane.b32.xlu0 %v529, 124
        %v765 = vpop.permute.xlu0 %764
        %766 = vrot.lane.b32.xlu0 %v672, 124
        %v767 = vpop.permute.xlu0 %766
        %768 = vrot.lane.b32.xlu0 %v531, 124
        %v769 = vpop.permute.xlu0 %768
        %770 = vrot.lane.b32.xlu0 %v673, 124
        %v771 = vpop.permute.xlu0 %770
        %772 = vrot.lane.b32.xlu0 %v533, 124
        %v773 = vpop.permute.xlu0 %772
        %774 = vrot.lane.b32.xlu0 %v674, 124
        %v775 = vpop.permute.xlu0 %774
        %776 = vrot.lane.b32.xlu0 %v535, 124
        %v777 = vpop.permute.xlu0 %776
        %778 = vrot.lane.b32.xlu0 %v675, 124
        %v779 = vpop.permute.xlu0 %778
        %780 = vrot.lane.b32.xlu0 %v537, 124
        %v781 = vpop.permute.xlu0 %780
        %782 = vrot.lane.b32.xlu0 %v676, 124
        %v783 = vpop.permute.xlu0 %782
        %784 = vrot.lane.b32.xlu0 %v539, 124
        %v785 = vpop.permute.xlu0 %784
        %786 = vrot.lane.b32.xlu0 %v677, 124
        %v787 = vpop.permute.xlu0 %786
        %788 = vrot.lane.b32.xlu0 %v541, 124
        %v789 = vpop.permute.xlu0 %788
        %790 = vrot.lane.b32.xlu0 %v678, 124
        %v791 = vpop.permute.xlu0 %790
        %vm792 = vcmask 1014784
        %v793 = vsel %vm792, %v761, %v763
        %v794 = vsel %vm792, %v765, %v767
        %v795 = vsel %vm792, %v769, %v771
        %v796 = vsel %vm792, %v773, %v775
        %v797 = vsel %vm792, %v777, %v779
        %v798 = vsel %vm792, %v781, %v783
        %v799 = vsel %vm792, %v785, %v787
        %v800 = vsel %vm792, %v789, %v791
        %v817 = vadd.f32 %v744, %v761
        %v818 = vadd.f32 %v745, %v793
        %v819 = vadd.f32 %v746, %v765
        %v820 = vadd.f32 %v747, %v794
        %v821 = vadd.f32 %v748, %v769
        %v822 = vadd.f32 %v749, %v795
        %v823 = vadd.f32 %v750, %v773
        %v824 = vadd.f32 %v751, %v796
        %v825 = vadd.f32 %v752, %v777
        %v826 = vadd.f32 %v753, %v797
        %v827 = vadd.f32 %v754, %v781
        %v828 = vadd.f32 %v755, %v798
        %v829 = vadd.f32 %v756, %v785
        %v830 = vadd.f32 %v757, %v799
        %v831 = vadd.f32 %v758, %v789
        %v832 = vadd.f32 %v759, %v800
        %v834 = vlaneseq
        %v835 = vshrl.u32 %v834, 7
        %v836 = vsub.s32 0, %v835
        %v837 = vrot.slane %v491, %v836
        %838 = vrot.lane.b32.xlu0 %v837, 126
        %v839 = vpop.permute.xlu0 %838
        %v841 = vmul.f32 %v817, %v839
        %v842 = vmul.f32 %v818, %v839
        %v843 = vmul.f32 %v819, %v839
        %v844 = vmul.f32 %v820, %v839
        %v845 = vmul.f32 %v821, %v839
        %v846 = vmul.f32 %v822, %v839
        %v847 = vmul.f32 %v823, %v839
        %v848 = vmul.f32 %v824, %v839
        %v849 = vmul.f32 %v825, %v839
        %v850 = vmul.f32 %v826, %v839
        %v851 = vmul.f32 %v827, %v839
        %v852 = vmul.f32 %v828, %v839
        %v853 = vmul.f32 %v829, %v839
        %v854 = vmul.f32 %v830, %v839
        %v855 = vmul.f32 %v831, %v839
        %v856 = vmul.f32 %v832, %v839
        %v857 = vpack.c.bf16 %v843, %v841
        %v858 = vpack.c.bf16 %v844, %v842
        %v859 = vpack.c.bf16 %v847, %v845
        %v860 = vpack.c.bf16 %v848, %v846
        %v861 = vpack.c.bf16 %v851, %v849
        %v862 = vpack.c.bf16 %v852, %v850
        %v863 = vpack.c.bf16 %v855, %v853
        %v864 = vpack.c.bf16 %v856, %v854
        %v865 = vld [vmem:[%s413] sm:$0xff]
        %v866 = vld [vmem:[%s413 + $0x8] sm:$0xff]
        %v867 = vld [vmem:[%s413 + $0x10] sm:$0xff]
        %v868 = vld [vmem:[%s413 + $0x18] sm:$0xff]
        %v869 = vld [vmem:[#allocation10] sm:$0xf]
        %v870 = vld [vmem:[#allocation10 + $0x4] sm:$0xf]
        %v871 = vld [vmem:[#allocation10 + $0x8] sm:$0xf]
        %v872 = vld [vmem:[#allocation10 + $0xc] sm:$0xf]
        %v873 = vld [vmem:[#allocation10 + $0x10] sm:$0xf]
        %v874 = vld [vmem:[#allocation10 + $0x14] sm:$0xf]
        %v875 = vld [vmem:[#allocation10 + $0x18] sm:$0xf]
        %v876 = vld [vmem:[#allocation10 + $0x1c] sm:$0xf]
        %v877 = vld [vmem:[#allocation12] sm:$0xff]
        %v878 = vld [vmem:[#allocation12 + $0x8] sm:$0xff]
        %v879 = vld [vmem:[#allocation12 + $0x10] sm:$0xff]
        %v880 = vld [vmem:[#allocation12 + $0x18] sm:$0xff]
        %v881 = vld [vmem:[#allocation12 + $0x20] sm:$0xff]
        %v882 = vld [vmem:[#allocation12 + $0x28] sm:$0xff]
        %v883 = vld [vmem:[#allocation12 + $0x30] sm:$0xff]
        %v884 = vld [vmem:[#allocation12 + $0x38] sm:$0xff]
        %886 = vset.pattern.permute.xlu0 0
        %887 = vperm.xlu0 %886, %v877
        %v888 = vpop.permute.xlu0 %887
        %891 = vset.pattern.permute.xlu0 0
        %892 = vperm.xlu0 %891, %v878
        %v893 = vpop.permute.xlu0 %892
        %896 = vset.pattern.permute.xlu0 0
        %897 = vperm.xlu0 %896, %v879
        %v898 = vpop.permute.xlu0 %897
        %901 = vset.pattern.permute.xlu0 0
        %902 = vperm.xlu0 %901, %v880
        %v903 = vpop.permute.xlu0 %902
        %906 = vset.pattern.permute.xlu0 0
        %907 = vperm.xlu0 %906, %v881
        %v908 = vpop.permute.xlu0 %907
        %911 = vset.pattern.permute.xlu0 0
        %912 = vperm.xlu0 %911, %v882
        %v913 = vpop.permute.xlu0 %912
        %916 = vset.pattern.permute.xlu0 0
        %917 = vperm.xlu0 %916, %v883
        %v918 = vpop.permute.xlu0 %917
        %921 = vset.pattern.permute.xlu0 0
        %922 = vperm.xlu0 %921, %v884
        %v923 = vpop.permute.xlu0 %922
        %v933 = vunpack.c.l.b16 %v869
        %v934 = vunpack.c.l.b16 %v870
        %v935 = vunpack.c.l.b16 %v871
        %v936 = vunpack.c.l.b16 %v872
        %v937 = vunpack.c.l.b16 %v873
        %v938 = vunpack.c.l.b16 %v874
        %v939 = vunpack.c.l.b16 %v875
        %v940 = vunpack.c.l.b16 %v876
        %v941 = vpack.c.b16 %v934, %v933
        %v942 = vpack.c.b16 %v936, %v935
        %v943 = vpack.c.b16 %v938, %v937
        %v944 = vpack.c.b16 %v940, %v939
        %953 = vrot.lane.b32.xlu0 %v857, 2
        %v954 = vpop.permute.xlu0 %953
        %955 = vrot.lane.b32.xlu0 %v858, 2
        %v956 = vpop.permute.xlu0 %955
        %957 = vrot.lane.b32.xlu0 %v859, 2
        %v958 = vpop.permute.xlu0 %957
        %959 = vrot.lane.b32.xlu0 %v860, 2
        %v960 = vpop.permute.xlu0 %959
        %961 = vrot.lane.b32.xlu0 %v861, 2
        %v962 = vpop.permute.xlu0 %961
        %963 = vrot.lane.b32.xlu0 %v862, 2
        %v964 = vpop.permute.xlu0 %963
        %965 = vrot.lane.b32.xlu0 %v863, 2
        %v966 = vpop.permute.xlu0 %965
        %967 = vrot.lane.b32.xlu0 %v864, 2
        %v968 = vpop.permute.xlu0 %967
        %vm969 = vcmask 15360
        %v970 = vsel %vm969, %v954, %v956
        %v971 = vsel %vm969, %v958, %v960
        %v972 = vsel %vm969, %v962, %v964
        %v973 = vsel %vm969, %v966, %v968
        %vm978 = vcmask 523264
        %v980 = vsel %vm978, %v941, 0
        %v983 = vsel %vm978, %v942, 0
        %v986 = vsel %vm978, %v943, 0
        %v989 = vsel %vm978, %v944, 0
        %991 = vmatprep.subr.bf16.mxu0 0
        %992 = vmatpush1.bf16.msra.mxu0 %v970
        %993 = vmatprep.subr.bf16.mxu0 0
        %994 = vmatpush1.bf16.msra.mxu0 %v971
        %995 = vmatprep.subr.bf16.mxu0 0
        %996 = vmatpush1.bf16.msra.mxu0 %v972
        %997 = vmatprep.subr.bf16.mxu0 0
        %998 = vmatpush1.bf16.msra.mxu0 %v973
        %999 = vmatprep.subr.bf16.mxu0 0
        %1000 = vmatpush1.bf16.msra.mxu0 0
        %1001 = vmatprep.subr.bf16.mxu0 0
        %1002 = vmatpush1.bf16.msra.mxu0 0
        %1003 = vmatprep.subr.bf16.mxu0 0
        %1004 = vmatpush1.bf16.msra.mxu0 0
        %1005 = vmatprep.subr.bf16.mxu0 0
        %1006 = vmatpush1.bf16.msra.mxu0 0
        %1007 = vmatprep.subr.bf16.mxu0 0
        %1008 = vmatpush1.bf16.msra.mxu0 0
        %1009 = vmatprep.subr.bf16.mxu0 0
        %1010 = vmatpush1.bf16.msra.mxu0 0
        %1011 = vmatprep.subr.bf16.mxu0 0
        %1012 = vmatpush1.bf16.msra.mxu0 0
        %1013 = vmatprep.subr.bf16.mxu0 0
        %1014 = vmatpush1.bf16.msra.mxu0 0
        %1015 = vmatprep.subr.bf16.mxu0 0
        %1016 = vmatpush1.bf16.msra.mxu0 0
        %1017 = vmatprep.subr.bf16.mxu0 0
        %1018 = vmatpush1.bf16.msra.mxu0 0
        %1019 = vmatprep.subr.bf16.mxu0 0
        %1020 = vmatpush1.bf16.msra.mxu0 0
        %1021 = vmatprep.subr.bf16.mxu0 0
        %1022 = vmatpush1.bf16.msra.mxu0 0
        %1023 = vmatprep.mubr.bf16.mxu0 0
        %1024 = vmatmul.mubr.bf16.gmra.mrb[0].mxu0 %v980
        %v1025 = vpop.f32.mrb[0].mxu0
        %v1026 = vadd.f32 %v888, %v1025
        %v1027 = vpop.f32.mrb[0].mxu0
        %v1028 = vpop.f32.mrb[0].mxu0
        %v1029 = vadd.f32 %v893, %v1028
        %v1030 = vpop.f32.mrb[0].mxu0
        %1031 = vmatprep.mubr.bf16.mxu0 0
        %1032 = vmatmul.mubr.bf16.gmra.mrb[0].mxu0 %v983
        %v1033 = vpop.f32.mrb[0].mxu0
        %v1034 = vadd.f32 %v898, %v1033
        %v1035 = vpop.f32.mrb[0].mxu0
        %v1036 = vpop.f32.mrb[0].mxu0
        %v1037 = vadd.f32 %v903, %v1036
        %v1038 = vpop.f32.mrb[0].mxu0
        %1039 = vmatprep.mubr.bf16.mxu0 0
        %1040 = vmatmul.mubr.bf16.gmra.mrb[0].mxu0 %v986
        %v1041 = vpop.f32.mrb[0].mxu0
        %v1042 = vadd.f32 %v908, %v1041
        %v1043 = vpop.f32.mrb[0].mxu0
        %v1044 = vpop.f32.mrb[0].mxu0
        %v1045 = vadd.f32 %v913, %v1044
        %v1046 = vpop.f32.mrb[0].mxu0
        %1047 = vmatprep.mubr.bf16.mxu0 0
        %1048 = vmatmul.mubr.bf16.gmra.mrb[0].mxu0 %v989
        %v1049 = vpop.f32.mrb[0].mxu0
        %v1050 = vadd.f32 %v918, %v1049
        %v1051 = vpop.f32.mrb[0].mxu0
        %v1052 = vpop.f32.mrb[0].mxu0
        %v1053 = vadd.f32 %v923, %v1052
        %v1054 = vpop.f32.mrb[0].mxu0
        %1055 = vdwg.mxu0
        %1056 = vst [vmem:[#allocation2 + $0x8] sm:$0xff] %v865
        %1057 = vst [vmem:[#allocation2 + $0x20] sm:$0xff] %v866
        %1058 = vst [vmem:[#allocation2 + $0x38] sm:$0xff] %v867
        %1059 = vst [vmem:[#allocation2 + $0x50] sm:$0xff] %v868
        %v1060 = vld [vmem:[#allocation2] sm:$0xff]
        %v1061 = vld [vmem:[#allocation2 + $0x8] sm:$0xff]
        %v1062 = vld [vmem:[#allocation2 + $0x18] sm:$0xff]
        %v1063 = vld [vmem:[#allocation2 + $0x20] sm:$0xff]
        %v1064 = vld [vmem:[#allocation2 + $0x30] sm:$0xff]
        %v1065 = vld [vmem:[#allocation2 + $0x38] sm:$0xff]
        %v1066 = vld [vmem:[#allocation2 + $0x48] sm:$0xff]
        %v1067 = vld [vmem:[#allocation2 + $0x50] sm:$0xff]
        %1076 = vrot.lane.b32.xlu0 %v1060, 127
        %v1077 = vpop.permute.xlu0 %1076
        %1078 = vrot.lane.b32.xlu0 %v1061, 127
        %v1079 = vpop.permute.xlu0 %1078
        %1080 = vrot.lane.b32.xlu0 %v1062, 127
        %v1081 = vpop.permute.xlu0 %1080
        %1082 = vrot.lane.b32.xlu0 %v1063, 127
        %v1083 = vpop.permute.xlu0 %1082
        %1084 = vrot.lane.b32.xlu0 %v1064, 127
        %v1085 = vpop.permute.xlu0 %1084
        %1086 = vrot.lane.b32.xlu0 %v1065, 127
        %v1087 = vpop.permute.xlu0 %1086
        %1088 = vrot.lane.b32.xlu0 %v1066, 127
        %v1089 = vpop.permute.xlu0 %1088
        %1090 = vrot.lane.b32.xlu0 %v1067, 127
        %v1091 = vpop.permute.xlu0 %1090
        %v1092 = vsel %vm590, %v1077, %v1079
        %v1093 = vsel %vm590, %v1081, %v1083
        %v1094 = vsel %vm590, %v1085, %v1087
        %v1095 = vsel %vm590, %v1089, %v1091
        %v1104 = vadd.f32 %v1060, %v1092
        %v1105 = vadd.f32 %v1061, %v1079
        %v1106 = vadd.f32 %v1062, %v1093
        %v1107 = vadd.f32 %v1063, %v1083
        %v1108 = vadd.f32 %v1064, %v1094
        %v1109 = vadd.f32 %v1065, %v1087
        %v1110 = vadd.f32 %v1066, %v1095
        %v1111 = vadd.f32 %v1067, %v1091
        %1112 = vrot.lane.b32.xlu0 %v1061, 126
        %v1113 = vpop.permute.xlu0 %1112
        %1114 = vrot.lane.b32.xlu0 %v1063, 126
        %v1115 = vpop.permute.xlu0 %1114
        %1116 = vrot.lane.b32.xlu0 %v1065, 126
        %v1117 = vpop.permute.xlu0 %1116
        %1118 = vrot.lane.b32.xlu0 %v1067, 126
        %v1119 = vpop.permute.xlu0 %1118
        %v1124 = vadd.f32 %v1104, %v1113
        %v1125 = vadd.f32 %v1105, %v1113
        %v1126 = vadd.f32 %v1106, %v1115
        %v1127 = vadd.f32 %v1107, %v1115
        %v1128 = vadd.f32 %v1108, %v1117
        %v1129 = vadd.f32 %v1109, %v1117
        %v1130 = vadd.f32 %v1110, %v1119
        %v1131 = vadd.f32 %v1111, %v1119
        %v1132 = vld [vmem:[#allocation2 + $0x10] sm:$0xff]
        %v1133 = vld [vmem:[#allocation2 + $0x28] sm:$0xff]
        %v1134 = vld [vmem:[#allocation2 + $0x40] sm:$0xff]
        %v1135 = vld [vmem:[#allocation2 + $0x58] sm:$0xff]
        %1140 = vrot.lane.b32.xlu0 %v1061, 125
        %v1141 = vpop.permute.xlu0 %1140
        %1142 = vrot.lane.b32.xlu0 %v1132, 125
        %v1143 = vpop.permute.xlu0 %1142
        %1144 = vrot.lane.b32.xlu0 %v1063, 125
        %v1145 = vpop.permute.xlu0 %1144
        %1146 = vrot.lane.b32.xlu0 %v1133, 125
        %v1147 = vpop.permute.xlu0 %1146
        %1148 = vrot.lane.b32.xlu0 %v1065, 125
        %v1149 = vpop.permute.xlu0 %1148
        %1150 = vrot.lane.b32.xlu0 %v1134, 125
        %v1151 = vpop.permute.xlu0 %1150
        %1152 = vrot.lane.b32.xlu0 %v1067, 125
        %v1153 = vpop.permute.xlu0 %1152
        %1154 = vrot.lane.b32.xlu0 %v1135, 125
        %v1155 = vpop.permute.xlu0 %1154
        %v1156 = vsel %vm719, %v1141, %v1143
        %v1157 = vsel %vm719, %v1145, %v1147
        %v1158 = vsel %vm719, %v1149, %v1151
        %v1159 = vsel %vm719, %v1153, %v1155
        %v1168 = vadd.f32 %v1124, %v1141
        %v1169 = vadd.f32 %v1125, %v1156
        %v1170 = vadd.f32 %v1126, %v1145
        %v1171 = vadd.f32 %v1127, %v1157
        %v1172 = vadd.f32 %v1128, %v1149
        %v1173 = vadd.f32 %v1129, %v1158
        %v1174 = vadd.f32 %v1130, %v1153
        %v1175 = vadd.f32 %v1131, %v1159
        %1176 = vrot.lane.b32.xlu0 %v1061, 124
        %v1177 = vpop.permute.xlu0 %1176
        %1178 = vrot.lane.b32.xlu0 %v1132, 124
        %v1179 = vpop.permute.xlu0 %1178
        %1180 = vrot.lane.b32.xlu0 %v1063, 124
        %v1181 = vpop.permute.xlu0 %1180
        %1182 = vrot.lane.b32.xlu0 %v1133, 124
        %v1183 = vpop.permute.xlu0 %1182
        %1184 = vrot.lane.b32.xlu0 %v1065, 124
        %v1185 = vpop.permute.xlu0 %1184
        %1186 = vrot.lane.b32.xlu0 %v1134, 124
        %v1187 = vpop.permute.xlu0 %1186
        %1188 = vrot.lane.b32.xlu0 %v1067, 124
        %v1189 = vpop.permute.xlu0 %1188
        %1190 = vrot.lane.b32.xlu0 %v1135, 124
        %v1191 = vpop.permute.xlu0 %1190
        %v1192 = vsel %vm792, %v1177, %v1179
        %v1193 = vsel %vm792, %v1181, %v1183
        %v1194 = vsel %vm792, %v1185, %v1187
        %v1195 = vsel %vm792, %v1189, %v1191
        %v1204 = vadd.f32 %v1168, %v1177
        %v1205 = vadd.f32 %v1169, %v1192
        %v1206 = vadd.f32 %v1170, %v1181
        %v1207 = vadd.f32 %v1171, %v1193
        %v1208 = vadd.f32 %v1172, %v1185
        %v1209 = vadd.f32 %v1173, %v1194
        %v1210 = vadd.f32 %v1174, %v1189
        %v1211 = vadd.f32 %v1175, %v1195
        %v1212 = vmul.f32 %v1204, %v839
        %v1213 = vmul.f32 %v1205, %v839
        %v1214 = vmul.f32 %v1206, %v839
        %v1215 = vmul.f32 %v1207, %v839
        %v1216 = vmul.f32 %v1208, %v839
        %v1217 = vmul.f32 %v1209, %v839
        %v1218 = vmul.f32 %v1210, %v839
        %v1219 = vmul.f32 %v1211, %v839
        %1228 = vrot.lane.b32.xlu0 %v1212, 2
        %v1229 = vpop.permute.xlu0 %1228
        %1230 = vrot.lane.b32.xlu0 %v1213, 2
        %v1231 = vpop.permute.xlu0 %1230
        %1232 = vrot.lane.b32.xlu0 %v1214, 2
        %v1233 = vpop.permute.xlu0 %1232
        %1234 = vrot.lane.b32.xlu0 %v1215, 2
        %v1235 = vpop.permute.xlu0 %1234
        %1236 = vrot.lane.b32.xlu0 %v1216, 2
        %v1237 = vpop.permute.xlu0 %1236
        %1238 = vrot.lane.b32.xlu0 %v1217, 2
        %v1239 = vpop.permute.xlu0 %1238
        %1240 = vrot.lane.b32.xlu0 %v1218, 2
        %v1241 = vpop.permute.xlu0 %1240
        %1242 = vrot.lane.b32.xlu0 %v1219, 2
        %v1243 = vpop.permute.xlu0 %1242
        %v1244 = vsel %vm501, %v1229, %v1231
        %v1245 = vsel %vm501, %v1233, %v1235
        %v1246 = vsel %vm501, %v1237, %v1239
        %v1247 = vsel %vm501, %v1241, %v1243
        %v1252 = vsub.f32 %v865, %v1244
        %v1253 = vsub.f32 %v866, %v1245
        %v1254 = vsub.f32 %v867, %v1246
        %v1255 = vsub.f32 %v868, %v1247
        %v1256 = vmul.f32 %v1252, %v1252
        %v1257 = vmul.f32 %v1253, %v1253
        %v1258 = vmul.f32 %v1254, %v1254
        %v1259 = vmul.f32 %v1255, %v1255
        %1260 = vst [vmem:[#allocation2 + $0x8] sm:$0xff] %v1256
        %1261 = vst [vmem:[#allocation2 + $0x20] sm:$0xff] %v1257
        %1262 = vst [vmem:[#allocation2 + $0x38] sm:$0xff] %v1258
        %1263 = vst [vmem:[#allocation2 + $0x50] sm:$0xff] %v1259
        %v1264 = vld [vmem:[#allocation2] sm:$0xff]
        %v1265 = vld [vmem:[#allocation2 + $0x8] sm:$0xff]
        %v1266 = vld [vmem:[#allocation2 + $0x18] sm:$0xff]
        %v1267 = vld [vmem:[#allocation2 + $0x20] sm:$0xff]
        %v1268 = vld [vmem:[#allocation2 + $0x30] sm:$0xff]
        %v1269 = vld [vmem:[#allocation2 + $0x38] sm:$0xff]
        %v1270 = vld [vmem:[#allocation2 + $0x48] sm:$0xff]
        %v1271 = vld [vmem:[#allocation2 + $0x50] sm:$0xff]
        %1280 = vrot.lane.b32.xlu0 %v1264, 127
        %v1281 = vpop.permute.xlu0 %1280
        %1282 = vrot.lane.b32.xlu0 %v1265, 127
        %v1283 = vpop.permute.xlu0 %1282
        %1284 = vrot.lane.b32.xlu0 %v1266, 127
        %v1285 = vpop.permute.xlu0 %1284
        %1286 = vrot.lane.b32.xlu0 %v1267, 127
        %v1287 = vpop.permute.xlu0 %1286
        %1288 = vrot.lane.b32.xlu0 %v1268, 127
        %v1289 = vpop.permute.xlu0 %1288
        %1290 = vrot.lane.b32.xlu0 %v1269, 127
        %v1291 = vpop.permute.xlu0 %1290
        %1292 = vrot.lane.b32.xlu0 %v1270, 127
        %v1293 = vpop.permute.xlu0 %1292
        %1294 = vrot.lane.b32.xlu0 %v1271, 127
        %v1295 = vpop.permute.xlu0 %1294
        %v1296 = vsel %vm590, %v1281, %v1283
        %v1297 = vsel %vm590, %v1285, %v1287
        %v1298 = vsel %vm590, %v1289, %v1291
        %v1299 = vsel %vm590, %v1293, %v1295
        %v1308 = vadd.f32 %v1264, %v1296
        %v1309 = vadd.f32 %v1265, %v1283
        %v1310 = vadd.f32 %v1266, %v1297
        %v1311 = vadd.f32 %v1267, %v1287
        %v1312 = vadd.f32 %v1268, %v1298
        %v1313 = vadd.f32 %v1269, %v1291
        %v1314 = vadd.f32 %v1270, %v1299
        %v1315 = vadd.f32 %v1271, %v1295
        %1316 = vrot.lane.b32.xlu0 %v1265, 126
        %v1317 = vpop.permute.xlu0 %1316
        %1318 = vrot.lane.b32.xlu0 %v1267, 126
        %v1319 = vpop.permute.xlu0 %1318
        %1320 = vrot.lane.b32.xlu0 %v1269, 126
        %v1321 = vpop.permute.xlu0 %1320
        %1322 = vrot.lane.b32.xlu0 %v1271, 126
        %v1323 = vpop.permute.xlu0 %1322
        %v1328 = vadd.f32 %v1308, %v1317
        %v1329 = vadd.f32 %v1309, %v1317
        %v1330 = vadd.f32 %v1310, %v1319
        %v1331 = vadd.f32 %v1311, %v1319
        %v1332 = vadd.f32 %v1312, %v1321
        %v1333 = vadd.f32 %v1313, %v1321
        %v1334 = vadd.f32 %v1314, %v1323
        %v1335 = vadd.f32 %v1315, %v1323
        %v1336 = vld [vmem:[#allocation2 + $0x10] sm:$0xff]
        %v1337 = vld [vmem:[#allocation2 + $0x28] sm:$0xff]
        %v1338 = vld [vmem:[#allocation2 + $0x40] sm:$0xff]
        %v1339 = vld [vmem:[#allocation2 + $0x58] sm:$0xff]
        %1344 = vrot.lane.b32.xlu0 %v1265, 125
        %v1345 = vpop.permute.xlu0 %1344
        %1346 = vrot.lane.b32.xlu0 %v1336, 125
        %v1347 = vpop.permute.xlu0 %1346
        %1348 = vrot.lane.b32.xlu0 %v1267, 125
        %v1349 = vpop.permute.xlu0 %1348
        %1350 = vrot.lane.b32.xlu0 %v1337, 125
        %v1351 = vpop.permute.xlu0 %1350
        %1352 = vrot.lane.b32.xlu0 %v1269, 125
        %v1353 = vpop.permute.xlu0 %1352
        %1354 = vrot.lane.b32.xlu0 %v1338, 125
        %v1355 = vpop.permute.xlu0 %1354
        %1356 = vrot.lane.b32.xlu0 %v1271, 125
        %v1357 = vpop.permute.xlu0 %1356
        %1358 = vrot.lane.b32.xlu0 %v1339, 125
        %v1359 = vpop.permute.xlu0 %1358
        %v1360 = vsel %vm719, %v1345, %v1347
        %v1361 = vsel %vm719, %v1349, %v1351
        %v1362 = vsel %vm719, %v1353, %v1355
        %v1363 = vsel %vm719, %v1357, %v1359
        %v1372 = vadd.f32 %v1328, %v1345
        %v1373 = vadd.f32 %v1329, %v1360
        %v1374 = vadd.f32 %v1330, %v1349
        %v1375 = vadd.f32 %v1331, %v1361
        %v1376 = vadd.f32 %v1332, %v1353
        %v1377 = vadd.f32 %v1333, %v1362
        %v1378 = vadd.f32 %v1334, %v1357
        %v1379 = vadd.f32 %v1335, %v1363
        %1380 = vrot.lane.b32.xlu0 %v1265, 124
        %v1381 = vpop.permute.xlu0 %1380
        %1382 = vrot.lane.b32.xlu0 %v1336, 124
        %v1383 = vpop.permute.xlu0 %1382
        %1384 = vrot.lane.b32.xlu0 %v1267, 124
        %v1385 = vpop.permute.xlu0 %1384
        %1386 = vrot.lane.b32.xlu0 %v1337, 124
        %v1387 = vpop.permute.xlu0 %1386
        %1388 = vrot.lane.b32.xlu0 %v1269, 124
        %v1389 = vpop.permute.xlu0 %1388
        %1390 = vrot.lane.b32.xlu0 %v1338, 124
        %v1391 = vpop.permute.xlu0 %1390
        %1392 = vrot.lane.b32.xlu0 %v1271, 124
        %v1393 = vpop.permute.xlu0 %1392
        %1394 = vrot.lane.b32.xlu0 %v1339, 124
        %v1395 = vpop.permute.xlu0 %1394
        %v1396 = vsel %vm792, %v1381, %v1383
        %v1397 = vsel %vm792, %v1385, %v1387
        %v1398 = vsel %vm792, %v1389, %v1391
        %v1399 = vsel %vm792, %v1393, %v1395
        %v1408 = vadd.f32 %v1372, %v1381
        %v1409 = vadd.f32 %v1373, %v1396
        %v1410 = vadd.f32 %v1374, %v1385
        %v1411 = vadd.f32 %v1375, %v1397
        %v1412 = vadd.f32 %v1376, %v1389
        %v1413 = vadd.f32 %v1377, %v1398
        %v1414 = vadd.f32 %v1378, %v1393
        %v1415 = vadd.f32 %v1379, %v1399
        %v1416 = vmul.f32 %v1408, %v839
        %v1417 = vmul.f32 %v1409, %v839
        %v1418 = vmul.f32 %v1410, %v839
        %v1419 = vmul.f32 %v1411, %v839
        %v1420 = vmul.f32 %v1412, %v839
        %v1421 = vmul.f32 %v1413, %v839
        %v1422 = vmul.f32 %v1414, %v839
        %v1423 = vmul.f32 %v1415, %v839
        %v1424 = vadd.f32 %v1416, 1e-09
        %v1425 = vadd.f32 %v1417, 1e-09
        %v1426 = vadd.f32 %v1418, 1e-09
        %v1427 = vadd.f32 %v1419, 1e-09
        %v1428 = vadd.f32 %v1420, 1e-09
        %v1429 = vadd.f32 %v1421, 1e-09
        %v1430 = vadd.f32 %v1422, 1e-09
        %v1431 = vadd.f32 %v1423, 1e-09
        %v1432 = vrsqrt.pop %v1424
        %v1433 = vrsqrt.pop %v1425
        %v1434 = vrsqrt.pop %v1426
        %v1435 = vrsqrt.pop %v1427
        %v1436 = vrsqrt.pop %v1428
        %v1437 = vrsqrt.pop %v1429
        %v1438 = vrsqrt.pop %v1430
        %v1439 = vrsqrt.pop %v1431
        %1448 = vrot.lane.b32.xlu0 %v1432, 2
        %v1449 = vpop.permute.xlu0 %1448
        %1450 = vrot.lane.b32.xlu0 %v1433, 2
        %v1451 = vpop.permute.xlu0 %1450
        %1452 = vrot.lane.b32.xlu0 %v1434, 2
        %v1453 = vpop.permute.xlu0 %1452
        %1454 = vrot.lane.b32.xlu0 %v1435, 2
        %v1455 = vpop.permute.xlu0 %1454
        %1456 = vrot.lane.b32.xlu0 %v1436, 2
        %v1457 = vpop.permute.xlu0 %1456
        %1458 = vrot.lane.b32.xlu0 %v1437, 2
        %v1459 = vpop.permute.xlu0 %1458
        %1460 = vrot.lane.b32.xlu0 %v1438, 2
        %v1461 = vpop.permute.xlu0 %1460
        %1462 = vrot.lane.b32.xlu0 %v1439, 2
        %v1463 = vpop.permute.xlu0 %1462
        %v1464 = vsel %vm501, %v1449, %v1451
        %v1465 = vsel %vm501, %v1453, %v1455
        %v1466 = vsel %vm501, %v1457, %v1459
        %v1467 = vsel %vm501, %v1461, %v1463
        %v1472 = vmul.f32 %v1252, %v1464
        %v1473 = vmul.f32 %v1253, %v1465
        %v1474 = vmul.f32 %v1254, %v1466
        %v1475 = vmul.f32 %v1255, %v1467
        %v1476 = vmul.f32 %v1026, %v1472
        %v1477 = vmul.f32 %v1029, %v1473
        %v1478 = vmul.f32 %v1034, %v1474
        %v1479 = vmul.f32 %v1037, %v1475
        %v1480 = vadd.f32 %v1476, %v1042
        %v1481 = vadd.f32 %v1477, %v1045
        %v1482 = vadd.f32 %v1478, %v1050
        %v1483 = vadd.f32 %v1479, %v1053
        %v1484 = vld [vmem:[#allocation18] sm:$0xff]
        %v1485 = vld [vmem:[#allocation18 + $0x8] sm:$0xff]
        %v1486 = vld [vmem:[#allocation18 + $0x10] sm:$0xff]
        %v1487 = vld [vmem:[#allocation18 + $0x18] sm:$0xff]
        %v1488 = vld [vmem:[#allocation16] sm:$0xff]
        %v1489 = vld [vmem:[#allocation16 + $0x8] sm:$0xff]
        %v1490 = vld [vmem:[#allocation16 + $0x10] sm:$0xff]
        %v1491 = vld [vmem:[#allocation16 + $0x18] sm:$0xff]
        %1493 = vset.pattern.permute.xlu0 0
        %1494 = vperm.xlu0 %1493, %v1488
        %v1495 = vpop.permute.xlu0 %1494
        %1498 = vset.pattern.permute.xlu0 0
        %1499 = vperm.xlu0 %1498, %v1489
        %v1500 = vpop.permute.xlu0 %1499
        %1503 = vset.pattern.permute.xlu0 0
        %1504 = vperm.xlu0 %1503, %v1490
        %v1505 = vpop.permute.xlu0 %1504
        %1508 = vset.pattern.permute.xlu0 0
        %1509 = vperm.xlu0 %1508, %v1491
        %v1510 = vpop.permute.xlu0 %1509
        %v1512 = vmul.f32 %v1495, %v1480
        %v1513 = vmul.f32 %v1500, %v1481
        %v1514 = vmul.f32 %v1505, %v1482
        %v1515 = vmul.f32 %v1510, %v1483
        %v1516 = vand.u32 2147483647, %v1512
        %vm1517 = vcmp.le.f32.partialorder %v1516, 0.7853982
        %vm1518 = vcmp.lt.s32.totalorder %v1512, 0
        %v1519 = vand.u32 %v1512, 2139095040
        %v1520 = vshrl.u32 %v1519, 23
        %v1521 = vsub.s32 %v1520, 127
        %v1522 = vand.u32 2147483647, %v1512
        %v1523 = vand.u32 %v1522, 8388607
        %v1524 = vor.u32 %v1523, 8388608
        %v1525 = vsub.s32 0, %v1524
        %v1526 = vadd.s32 %v1521, 1
        %vm1527 = vcmp.gt.s32.totalorder %v1526, 0
        %v1528 = vsel %vm1527, %v1526, 0
        %v1529 = vshrl.u32 %v1528, 5
        %v1530 = vand.u32 %v1528, 31
        %v1531 = vsub.s32 32, %v1530
        %v1532 = vshrl.u32 683565275, %v1531
        %v1533 = vshll.u32 683565275, %v1530
        %v1534 = vshrl.u32 2475754826, %v1531
        %v1535 = vor.u32 %v1533, %v1534
        %v1536 = vshll.u32 2475754826, %v1530
        %v1537 = vshrl.u32 2131351028, %v1531
        %v1538 = vor.u32 %v1536, %v1537
        %v1539 = vshll.u32 2131351028, %v1530
        %v1540 = vshrl.u32 2102212464, %v1531
        %v1541 = vor.u32 %v1539, %v1540
        %v1542 = vshll.u32 2102212464, %v1530
        %v1543 = vshrl.u32 920167782, %v1531
        %v1544 = vor.u32 %v1542, %v1543
        %v1545 = vshll.u32 920167782, %v1530
        %v1546 = vshrl.u32 1326507024, %v1531
        %v1547 = vor.u32 %v1545, %v1546
        %vm1548 = vcmp.lt.s32.totalorder %v1529, 1
        %vm1549 = vcmp.lt.s32.totalorder %v1529, 2
        %vm1550 = vcmp.lt.s32.totalorder %v1529, 3
        %vm1551 = vcmp.lt.s32.totalorder %v1529, 4
        %v1552 = vsel %vm1548, %v1532, %v1535
        %v1553 = vsel %vm1551, %v1541, 2102212464
        %v1554 = vsel %vm1550, %v1538, %v1553
        %v1555 = vsel %vm1549, %v1552, %v1554
        %v1556 = vsel %vm1548, %v1535, %v1538
        %v1557 = vsel %vm1551, %v1544, 920167782
        %v1558 = vsel %vm1550, %v1541, %v1557
        %v1559 = vsel %vm1549, %v1556, %v1558
        %v1560 = vsel %vm1548, %v1538, %v1541
        %v1561 = vsel %vm1551, %v1547, 1326507024
        %v1562 = vsel %vm1550, %v1544, %v1561
        %v1563 = vsel %vm1549, %v1560, %v1562
        %v1564 = vshll.u32 %v1524, 8
        %v1565 = vmul.u32.u64.compose %v1564, %v1563
        %v1566 = vextract.low.u32 %v1565
        %v1567 = vextract.high.u32 %v1565
        %v1568 = vmul.u32.u64.compose %v1564, %v1559
        %v1569 = vextract.low.u32 %v1568
        %v1570 = vextract.high.u32 %v1568
        %v1571 = vmul.u32 %v1564, %v1555
        %v1572 = vadd.s32 %v1567, %v1569
        %vm1573 = vc.u32 %v1567, %v1569
        %v1574 = vadd.s32 %v1570, 1
        %v1575 = vsel %vm1573, %v1574, %v1570
        %v1576 = vadd.s32 %v1571, %v1575
        %v1577 = vadd.s32 %v1576, 536870912
        %v1578 = vshrl.u32 %v1577, 30
        %v1579 = vshll.u32 %v1578, 30
        %v1580 = vsub.s32 %v1576, %v1579
        %vm1581 = vcmp.lt.s32.totalorder %v1580, 0
        %v1582 = vsub.s32 0, %v1580
        %v1583 = vsel %vm1581, %v1582, %v1580
        %v1584 = vclz %v1583
        %v1585 = vsub.s32 %v1584, 2
        %vm1586 = vcmp.gt.s32.totalorder 0, %v1585
        %v1587 = vsel %vm1586, 0, %v1585
        %v1588 = vsub.s32 32, %v1587
        %v1589 = vshll.u32 %v1580, %v1587
        %v1590 = vshrl.u32 %v1572, %v1588
        %v1591 = vor.u32 %v1589, %v1590
        %v1592 = vsub.s32 4294967266, %v1587
        %v1593 = vadd.s32 %v1592, 127
        %v1594 = vshll.u32 %v1593, 23
        %v1595 = vor.u32 4788187, %v1594
        %v1596 = vand.u32 2147483647, %v1595
        %v1598 = vcvt.s32.f32 %v1591
        %v1599 = vmul.f32 %v1598, %v1596
        %v1600 = vxor.u32 %v1599, 2147483648
        %v1601 = vsel %vm1518, %v1600, %v1599
        %v1602 = vsub.s32 4, %v1578
        %v1603 = vsel %vm1518, %v1602, %v1578
        %v1604 = vsel %vm1517, %v1512, %v1601
        %v1605 = vsel %vm1517, 0, %v1603
        %v1606 = vcosq.f32.pop %v1604
        %v1607 = vsinq.f32.pop %v1604
        %vm1608 = vweird.f32 %v1512
        %v1609 = vand.u32 %v1605, 3
        %vm1610 = vcmp.lt.s32.totalorder %v1609, 2
        %vm1611 = vcmp.eq.s32.totalorder %v1609, 0
        %v1612 = vxor.u32 %v1607, 2147483648
        %v1613 = vsel %vm1611, %v1606, %v1612
        %vm1614 = vcmp.eq.s32.totalorder %v1609, 2
        %v1615 = vxor.u32 %v1606, 2147483648
        %v1616 = vsel %vm1614, %v1615, %v1607
        %v1617 = vsel %vm1610, %v1613, %v1616
        %v1618 = vsel %vm1608, nan, %v1617
        %v1619 = vand.u32 2147483647, %v1513
        %vm1620 = vcmp.le.f32.partialorder %v1619, 0.7853982
        %vm1621 = vcmp.lt.s32.totalorder %v1513, 0
        %v1622 = vand.u32 %v1513, 2139095040
        %v1623 = vshrl.u32 %v1622, 23
        %v1624 = vsub.s32 %v1623, 127
        %v1625 = vand.u32 2147483647, %v1513
        %v1626 = vand.u32 %v1625, 8388607
        %v1627 = vor.u32 %v1626, 8388608
        %v1628 = vsub.s32 0, %v1627
        %v1629 = vadd.s32 %v1624, 1
        %vm1630 = vcmp.gt.s32.totalorder %v1629, 0
        %v1631 = vsel %vm1630, %v1629, 0
        %v1632 = vshrl.u32 %v1631, 5
        %v1633 = vand.u32 %v1631, 31
        %v1634 = vsub.s32 32, %v1633
        %v1635 = vshrl.u32 683565275, %v1634
        %v1636 = vshll.u32 683565275, %v1633
        %v1637 = vshrl.u32 2475754826, %v1634
        %v1638 = vor.u32 %v1636, %v1637
        %v1639 = vshll.u32 2475754826, %v1633
        %v1640 = vshrl.u32 2131351028, %v1634
        %v1641 = vor.u32 %v1639, %v1640
        %v1642 = vshll.u32 2131351028, %v1633
        %v1643 = vshrl.u32 2102212464, %v1634
        %v1644 = vor.u32 %v1642, %v1643
        %v1645 = vshll.u32 2102212464, %v1633
        %v1646 = vshrl.u32 920167782, %v1634
        %v1647 = vor.u32 %v1645, %v1646
        %v1648 = vshll.u32 920167782, %v1633
        %v1649 = vshrl.u32 1326507024, %v1634
        %v1650 = vor.u32 %v1648, %v1649
        %vm1651 = vcmp.lt.s32.totalorder %v1632, 1
        %vm1652 = vcmp.lt.s32.totalorder %v1632, 2
        %vm1653 = vcmp.lt.s32.totalorder %v1632, 3
        %vm1654 = vcmp.lt.s32.totalorder %v1632, 4
        %v1655 = vsel %vm1651, %v1635, %v1638
        %v1656 = vsel %vm1654, %v1644, 2102212464
        %v1657 = vsel %vm1653, %v1641, %v1656
        %v1658 = vsel %vm1652, %v1655, %v1657
        %v1659 = vsel %vm1651, %v1638, %v1641
        %v1660 = vsel %vm1654, %v1647, 920167782
        %v1661 = vsel %vm1653, %v1644, %v1660
        %v1662 = vsel %vm1652, %v1659, %v1661
        %v1663 = vsel %vm1651, %v1641, %v1644
        %v1664 = vsel %vm1654, %v1650, 1326507024
        %v1665 = vsel %vm1653, %v1647, %v1664
        %v1666 = vsel %vm1652, %v1663, %v1665
        %v1667 = vshll.u32 %v1627, 8
        %v1668 = vmul.u32.u64.compose %v1667, %v1666
        %v1669 = vextract.low.u32 %v1668
        %v1670 = vextract.high.u32 %v1668
        %v1671 = vmul.u32.u64.compose %v1667, %v1662
        %v1672 = vextract.low.u32 %v1671
        %v1673 = vextract.high.u32 %v1671
        %v1674 = vmul.u32 %v1667, %v1658
        %v1675 = vadd.s32 %v1670, %v1672
        %vm1676 = vc.u32 %v1670, %v1672
        %v1677 = vadd.s32 %v1673, 1
        %v1678 = vsel %vm1676, %v1677, %v1673
        %v1679 = vadd.s32 %v1674, %v1678
        %v1680 = vadd.s32 %v1679, 536870912
        %v1681 = vshrl.u32 %v1680, 30
        %v1682 = vshll.u32 %v1681, 30
        %v1683 = vsub.s32 %v1679, %v1682
        %vm1684 = vcmp.lt.s32.totalorder %v1683, 0
        %v1685 = vsub.s32 0, %v1683
        %v1686 = vsel %vm1684, %v1685, %v1683
        %v1687 = vclz %v1686
        %v1688 = vsub.s32 %v1687, 2
        %vm1689 = vcmp.gt.s32.totalorder 0, %v1688
        %v1690 = vsel %vm1689, 0, %v1688
        %v1691 = vsub.s32 32, %v1690
        %v1692 = vshll.u32 %v1683, %v1690
        %v1693 = vshrl.u32 %v1675, %v1691
        %v1694 = vor.u32 %v1692, %v1693
        %v1695 = vsub.s32 4294967266, %v1690
        %v1696 = vadd.s32 %v1695, 127
        %v1697 = vshll.u32 %v1696, 23
        %v1698 = vor.u32 4788187, %v1697
        %v1699 = vand.u32 2147483647, %v1698
        %v1701 = vcvt.s32.f32 %v1694
        %v1702 = vmul.f32 %v1701, %v1699
        %v1703 = vxor.u32 %v1702, 2147483648
        %v1704 = vsel %vm1621, %v1703, %v1702
        %v1705 = vsub.s32 4, %v1681
        %v1706 = vsel %vm1621, %v1705, %v1681
        %v1707 = vsel %vm1620, %v1513, %v1704
        %v1708 = vsel %vm1620, 0, %v1706
        %v1709 = vcosq.f32.pop %v1707
        %v1710 = vsinq.f32.pop %v1707
        %vm1711 = vweird.f32 %v1513
        %v1712 = vand.u32 %v1708, 3
        %vm1713 = vcmp.lt.s32.totalorder %v1712, 2
        %vm1714 = vcmp.eq.s32.totalorder %v1712, 0
        %v1715 = vxor.u32 %v1710, 2147483648
        %v1716 = vsel %vm1714, %v1709, %v1715
        %vm1717 = vcmp.eq.s32.totalorder %v1712, 2
        %v1718 = vxor.u32 %v1709, 2147483648
        %v1719 = vsel %vm1717, %v1718, %v1710
        %v1720 = vsel %vm1713, %v1716, %v1719
        %v1721 = vsel %vm1711, nan, %v1720
        %v1722 = vand.u32 2147483647, %v1514
        %vm1723 = vcmp.le.f32.partialorder %v1722, 0.7853982
        %vm1724 = vcmp.lt.s32.totalorder %v1514, 0
        %v1725 = vand.u32 %v1514, 2139095040
        %v1726 = vshrl.u32 %v1725, 23
        %v1727 = vsub.s32 %v1726, 127
        %v1728 = vand.u32 2147483647, %v1514
        %v1729 = vand.u32 %v1728, 8388607
        %v1730 = vor.u32 %v1729, 8388608
        %v1731 = vsub.s32 0, %v1730
        %v1732 = vadd.s32 %v1727, 1
        %vm1733 = vcmp.gt.s32.totalorder %v1732, 0
        %v1734 = vsel %vm1733, %v1732, 0
        %v1735 = vshrl.u32 %v1734, 5
        %v1736 = vand.u32 %v1734, 31
        %v1737 = vsub.s32 32, %v1736
        %v1738 = vshrl.u32 683565275, %v1737
        %v1739 = vshll.u32 683565275, %v1736
        %v1740 = vshrl.u32 2475754826, %v1737
        %v1741 = vor.u32 %v1739, %v1740
        %v1742 = vshll.u32 2475754826, %v1736
        %v1743 = vshrl.u32 2131351028, %v1737
        %v1744 = vor.u32 %v1742, %v1743
        %v1745 = vshll.u32 2131351028, %v1736
        %v1746 = vshrl.u32 2102212464, %v1737
        %v1747 = vor.u32 %v1745, %v1746
        %v1748 = vshll.u32 2102212464, %v1736
        %v1749 = vshrl.u32 920167782, %v1737
        %v1750 = vor.u32 %v1748, %v1749
        %v1751 = vshll.u32 920167782, %v1736
        %v1752 = vshrl.u32 1326507024, %v1737
        %v1753 = vor.u32 %v1751, %v1752
        %vm1754 = vcmp.lt.s32.totalorder %v1735, 1
        %vm1755 = vcmp.lt.s32.totalorder %v1735, 2
        %vm1756 = vcmp.lt.s32.totalorder %v1735, 3
        %vm1757 = vcmp.lt.s32.totalorder %v1735, 4
        %v1758 = vsel %vm1754, %v1738, %v1741
        %v1759 = vsel %vm1757, %v1747, 2102212464
        %v1760 = vsel %vm1756, %v1744, %v1759
        %v1761 = vsel %vm1755, %v1758, %v1760
        %v1762 = vsel %vm1754, %v1741, %v1744
        %v1763 = vsel %vm1757, %v1750, 920167782
        %v1764 = vsel %vm1756, %v1747, %v1763
        %v1765 = vsel %vm1755, %v1762, %v1764
        %v1766 = vsel %vm1754, %v1744, %v1747
        %v1767 = vsel %vm1757, %v1753, 1326507024
        %v1768 = vsel %vm1756, %v1750, %v1767
        %v1769 = vsel %vm1755, %v1766, %v1768
        %v1770 = vshll.u32 %v1730, 8
        %v1771 = vmul.u32.u64.compose %v1770, %v1769
        %v1772 = vextract.low.u32 %v1771
        %v1773 = vextract.high.u32 %v1771
        %v1774 = vmul.u32.u64.compose %v1770, %v1765
        %v1775 = vextract.low.u32 %v1774
        %v1776 = vextract.high.u32 %v1774
        %v1777 = vmul.u32 %v1770, %v1761
        %v1778 = vadd.s32 %v1773, %v1775
        %vm1779 = vc.u32 %v1773, %v1775
        %v1780 = vadd.s32 %v1776, 1
        %v1781 = vsel %vm1779, %v1780, %v1776
        %v1782 = vadd.s32 %v1777, %v1781
        %v1783 = vadd.s32 %v1782, 536870912
        %v1784 = vshrl.u32 %v1783, 30
        %v1785 = vshll.u32 %v1784, 30
        %v1786 = vsub.s32 %v1782, %v1785
        %vm1787 = vcmp.lt.s32.totalorder %v1786, 0
        %v1788 = vsub.s32 0, %v1786
        %v1789 = vsel %vm1787, %v1788, %v1786
        %v1790 = vclz %v1789
        %v1791 = vsub.s32 %v1790, 2
        %vm1792 = vcmp.gt.s32.totalorder 0, %v1791
        %v1793 = vsel %vm1792, 0, %v1791
        %v1794 = vsub.s32 32, %v1793
        %v1795 = vshll.u32 %v1786, %v1793
        %v1796 = vshrl.u32 %v1778, %v1794
        %v1797 = vor.u32 %v1795, %v1796
        %v1798 = vsub.s32 4294967266, %v1793
        %v1799 = vadd.s32 %v1798, 127
        %v1800 = vshll.u32 %v1799, 23
        %v1801 = vor.u32 4788187, %v1800
        %v1802 = vand.u32 2147483647, %v1801
        %v1804 = vcvt.s32.f32 %v1797
        %v1805 = vmul.f32 %v1804, %v1802
        %v1806 = vxor.u32 %v1805, 2147483648
        %v1807 = vsel %vm1724, %v1806, %v1805
        %v1808 = vsub.s32 4, %v1784
        %v1809 = vsel %vm1724, %v1808, %v1784
        %v1810 = vsel %vm1723, %v1514, %v1807
        %v1811 = vsel %vm1723, 0, %v1809
        %v1812 = vcosq.f32.pop %v1810
        %v1813 = vsinq.f32.pop %v1810
        %vm1814 = vweird.f32 %v1514
        %v1815 = vand.u32 %v1811, 3
        %vm1816 = vcmp.lt.s32.totalorder %v1815, 2
        %vm1817 = vcmp.eq.s32.totalorder %v1815, 0
        %v1818 = vxor.u32 %v1813, 2147483648
        %v1819 = vsel %vm1817, %v1812, %v1818
        %vm1820 = vcmp.eq.s32.totalorder %v1815, 2
        %v1821 = vxor.u32 %v1812, 2147483648
        %v1822 = vsel %vm1820, %v1821, %v1813
        %v1823 = vsel %vm1816, %v1819, %v1822
        %v1824 = vsel %vm1814, nan, %v1823
        %v1825 = vand.u32 2147483647, %v1515
        %vm1826 = vcmp.le.f32.partialorder %v1825, 0.7853982
        %vm1827 = vcmp.lt.s32.totalorder %v1515, 0
        %v1828 = vand.u32 %v1515, 2139095040
        %v1829 = vshrl.u32 %v1828, 23
        %v1830 = vsub.s32 %v1829, 127
        %v1831 = vand.u32 2147483647, %v1515
        %v1832 = vand.u32 %v1831, 8388607
        %v1833 = vor.u32 %v1832, 8388608
        %v1834 = vsub.s32 0, %v1833
        %v1835 = vadd.s32 %v1830, 1
        %vm1836 = vcmp.gt.s32.totalorder %v1835, 0
        %v1837 = vsel %vm1836, %v1835, 0
        %v1838 = vshrl.u32 %v1837, 5
        %v1839 = vand.u32 %v1837, 31
        %v1840 = vsub.s32 32, %v1839
        %v1841 = vshrl.u32 683565275, %v1840
        %v1842 = vshll.u32 683565275, %v1839
        %v1843 = vshrl.u32 2475754826, %v1840
        %v1844 = vor.u32 %v1842, %v1843
        %v1845 = vshll.u32 2475754826, %v1839
        %v1846 = vshrl.u32 2131351028, %v1840
        %v1847 = vor.u32 %v1845, %v1846
        %v1848 = vshll.u32 2131351028, %v1839
        %v1849 = vshrl.u32 2102212464, %v1840
        %v1850 = vor.u32 %v1848, %v1849
        %v1851 = vshll.u32 2102212464, %v1839
        %v1852 = vshrl.u32 920167782, %v1840
        %v1853 = vor.u32 %v1851, %v1852
        %v1854 = vshll.u32 920167782, %v1839
        %v1855 = vshrl.u32 1326507024, %v1840
        %v1856 = vor.u32 %v1854, %v1855
        %vm1857 = vcmp.lt.s32.totalorder %v1838, 1
        %vm1858 = vcmp.lt.s32.totalorder %v1838, 2
        %vm1859 = vcmp.lt.s32.totalorder %v1838, 3
        %vm1860 = vcmp.lt.s32.totalorder %v1838, 4
        %v1861 = vsel %vm1857, %v1841, %v1844
        %v1862 = vsel %vm1860, %v1850, 2102212464
        %v1863 = vsel %vm1859, %v1847, %v1862
        %v1864 = vsel %vm1858, %v1861, %v1863
        %v1865 = vsel %vm1857, %v1844, %v1847
        %v1866 = vsel %vm1860, %v1853, 920167782
        %v1867 = vsel %vm1859, %v1850, %v1866
        %v1868 = vsel %vm1858, %v1865, %v1867
        %v1869 = vsel %vm1857, %v1847, %v1850
        %v1870 = vsel %vm1860, %v1856, 1326507024
        %v1871 = vsel %vm1859, %v1853, %v1870
        %v1872 = vsel %vm1858, %v1869, %v1871
        %v1873 = vshll.u32 %v1833, 8
        %v1874 = vmul.u32.u64.compose %v1873, %v1872
        %v1875 = vextract.low.u32 %v1874
        %v1876 = vextract.high.u32 %v1874
        %v1877 = vmul.u32.u64.compose %v1873, %v1868
        %v1878 = vextract.low.u32 %v1877
        %v1879 = vextract.high.u32 %v1877
        %v1880 = vmul.u32 %v1873, %v1864
        %v1881 = vadd.s32 %v1876, %v1878
        %vm1882 = vc.u32 %v1876, %v1878
        %v1883 = vadd.s32 %v1879, 1
        %v1884 = vsel %vm1882, %v1883, %v1879
        %v1885 = vadd.s32 %v1880, %v1884
        %v1886 = vadd.s32 %v1885, 536870912
        %v1887 = vshrl.u32 %v1886, 30
        %v1888 = vshll.u32 %v1887, 30
        %v1889 = vsub.s32 %v1885, %v1888
        %vm1890 = vcmp.lt.s32.totalorder %v1889, 0
        %v1891 = vsub.s32 0, %v1889
        %v1892 = vsel %vm1890, %v1891, %v1889
        %v1893 = vclz %v1892
        %v1894 = vsub.s32 %v1893, 2
        %vm1895 = vcmp.gt.s32.totalorder 0, %v1894
        %v1896 = vsel %vm1895, 0, %v1894
        %v1897 = vsub.s32 32, %v1896
        %v1898 = vshll.u32 %v1889, %v1896
        %v1899 = vshrl.u32 %v1881, %v1897
        %v1900 = vor.u32 %v1898, %v1899
        %v1901 = vsub.s32 4294967266, %v1896
        %v1902 = vadd.s32 %v1901, 127
        %v1903 = vshll.u32 %v1902, 23
        %v1904 = vor.u32 4788187, %v1903
        %v1905 = vand.u32 2147483647, %v1904
        %v1907 = vcvt.s32.f32 %v1900
        %v1908 = vmul.f32 %v1907, %v1905
        %v1909 = vxor.u32 %v1908, 2147483648
        %v1910 = vsel %vm1827, %v1909, %v1908
        %v1911 = vsub.s32 4, %v1887
        %v1912 = vsel %vm1827, %v1911, %v1887
        %v1913 = vsel %vm1826, %v1515, %v1910
        %v1914 = vsel %vm1826, 0, %v1912
        %v1915 = vcosq.f32.pop %v1913
        %v1916 = vsinq.f32.pop %v1913
        %vm1917 = vweird.f32 %v1515
        %v1918 = vand.u32 %v1914, 3
        %vm1919 = vcmp.lt.s32.totalorder %v1918, 2
        %vm1920 = vcmp.eq.s32.totalorder %v1918, 0
        %v1921 = vxor.u32 %v1916, 2147483648
        %v1922 = vsel %vm1920, %v1915, %v1921
        %vm1923 = vcmp.eq.s32.totalorder %v1918, 2
        %v1924 = vxor.u32 %v1915, 2147483648
        %v1925 = vsel %vm1923, %v1924, %v1916
        %v1926 = vsel %vm1919, %v1922, %v1925
        %v1927 = vsel %vm1917, nan, %v1926
        %v1928 = vsub.f32 1.0, %v1618
        %v1929 = vsub.f32 1.0, %v1721
        %v1930 = vsub.f32 1.0, %v1824
        %v1931 = vsub.f32 1.0, %v1927
        %1933 = vset.pattern.permute.xlu0 0
        %1934 = vperm.xlu0 %1933, %v1484
        %v1935 = vpop.permute.xlu0 %1934
        %1938 = vset.pattern.permute.xlu0 0
        %1939 = vperm.xlu0 %1938, %v1485
        %v1940 = vpop.permute.xlu0 %1939
        %1943 = vset.pattern.permute.xlu0 0
        %1944 = vperm.xlu0 %1943, %v1486
        %v1945 = vpop.permute.xlu0 %1944
        %1948 = vset.pattern.permute.xlu0 0
        %1949 = vperm.xlu0 %1948, %v1487
        %v1950 = vpop.permute.xlu0 %1949
        %v1952 = vmul.f32 %v1935, %v1928
        %v1953 = vmul.f32 %v1940, %v1929
        %v1954 = vmul.f32 %v1945, %v1930
        %v1955 = vmul.f32 %v1950, %v1931
        %v1956 = vadd.f32 %v1480, %v1952
        %v1957 = vadd.f32 %v1481, %v1953
        %v1958 = vadd.f32 %v1482, %v1954
        %v1959 = vadd.f32 %v1483, %v1955
        %v1960 = vpack.c.bf16 %v1957, %v1956
        %v1961 = vpack.c.bf16 %v1959, %v1958
        %1962 = vst [vmem:[#allocation3 + $0x8] sm:$0xff] %v1960
        %1963 = vst [vmem:[#allocation3 + $0x20] sm:$0xff] %v1961
        %v1964 = vld [vmem:[#allocation3 + $0x8] sm:$0xff]
        %v1965 = vld [vmem:[#allocation3 + $0x20] sm:$0xff]
        %1968 = vrot.lane.b32.xlu0 %v1964, 126
        %v1969 = vpop.permute.xlu0 %1968
        %1970 = vrot.lane.b32.xlu0 %v1965, 126
        %v1971 = vpop.permute.xlu0 %1970
        %vm1974 = vcmask 1048568
        %1975 = vst.msk [vmem:[#allocation3] sm:$0xff] %vm1974, %v1969
        %1976 = vst.msk [vmem:[#allocation3 + $0x18] sm:$0xff] %vm1974, %v1971
        %v1977 = vld [vmem:[#allocation3 + $0x8] sm:$0xff]
        %v1978 = vld [vmem:[#allocation3 + $0x20] sm:$0xff]
        %1981 = vrot.lane.b32.xlu0 %v1977, 2
        %v1982 = vpop.permute.xlu0 %1981
        %1983 = vrot.lane.b32.xlu0 %v1978, 2
        %v1984 = vpop.permute.xlu0 %1983
        %vm1987 = vcmask 7168
        %1988 = vst.msk [vmem:[#allocation3 + $0x10] sm:$0xff] %vm1987, %v1982
        %1989 = vst.msk [vmem:[#allocation3 + $0x28] sm:$0xff] %vm1987, %v1984
        %v1990 = vld [vmem:[#allocation15] sm:$0xff]
        %v1991 = vld [vmem:[#allocation15 + $0x8] sm:$0xff]
        %v1992 = vld [vmem:[#allocation15 + $0x10] sm:$0xff]
        %v1993 = vld [vmem:[#allocation15 + $0x18] sm:$0xff]
        %v1994 = vld [vmem:[#allocation13] sm:$0xf]
        %v1995 = vld [vmem:[#allocation13 + $0x4] sm:$0xf]
        %v1996 = vld [vmem:[#allocation13 + $0x8] sm:$0xf]
        %v1997 = vld [vmem:[#allocation13 + $0xc] sm:$0xf]
        %v1998 = vld [vmem:[#allocation3] sm:$0xff]
        %v1999 = vld [vmem:[#allocation3 + $0x8] sm:$0xff]
        %v2000 = vld [vmem:[#allocation3 + $0x18] sm:$0xff]
        %v2001 = vld [vmem:[#allocation3 + $0x20] sm:$0xff]
        %v2006 = vunpack.c.l.b16 %v1994
        %v2007 = vunpack.c.l.b16 %v1995
        %v2008 = vunpack.c.l.b16 %v1996
        %v2009 = vunpack.c.l.b16 %v1997
        %v2010 = vpack.c.b16 %v2007, %v2006
        %v2011 = vpack.c.b16 %v2009, %v2008
        %2016 = vrot.lane.b32.xlu0 %v1998, 1
        %v2017 = vpop.permute.xlu0 %2016
        %2018 = vrot.lane.b32.xlu0 %v1999, 1
        %v2019 = vpop.permute.xlu0 %2018
        %2020 = vrot.lane.b32.xlu0 %v2000, 1
        %v2021 = vpop.permute.xlu0 %2020
        %2022 = vrot.lane.b32.xlu0 %v2001, 1
        %v2023 = vpop.permute.xlu0 %2022
        %vm2024 = vcmask 7168
        %v2025 = vsel %vm2024, %v2017, %v2019
        %v2026 = vsel %vm2024, %v2021, %v2023
        %vm2029 = vcmask 261120
        %v2031 = vsel %vm2029, %v2010, 0
        %v2034 = vsel %vm2029, %v2011, 0
        %2036 = vmatprep.subr.bf16.mxu0 0
        %2037 = vmatpush1.bf16.msra.mxu0 %v2025
        %2038 = vmatprep.subr.bf16.mxu0 0
        %2039 = vmatpush1.bf16.msra.mxu0 %v2026
        %2040 = vmatprep.subr.bf16.mxu0 0
        %2041 = vmatpush1.bf16.msra.mxu0 0
        %2042 = vmatprep.subr.bf16.mxu0 0
        %2043 = vmatpush1.bf16.msra.mxu0 0
        %2044 = vmatprep.subr.bf16.mxu0 0
        %2045 = vmatpush1.bf16.msra.mxu0 0
        %2046 = vmatprep.subr.bf16.mxu0 0
        %2047 = vmatpush1.bf16.msra.mxu0 0
        %2048 = vmatprep.subr.bf16.mxu0 0
        %2049 = vmatpush1.bf16.msra.mxu0 0
        %2050 = vmatprep.subr.bf16.mxu0 0
        %2051 = vmatpush1.bf16.msra.mxu0 0
        %2052 = vmatprep.subr.bf16.mxu0 0
        %2053 = vmatpush1.bf16.msra.mxu0 0
        %2054 = vmatprep.subr.bf16.mxu0 0
        %2055 = vmatpush1.bf16.msra.mxu0 0
        %2056 = vmatprep.subr.bf16.mxu0 0
        %2057 = vmatpush1.bf16.msra.mxu0 0
        %2058 = vmatprep.subr.bf16.mxu0 0
        %2059 = vmatpush1.bf16.msra.mxu0 0
        %2060 = vmatprep.subr.bf16.mxu0 0
        %2061 = vmatpush1.bf16.msra.mxu0 0
        %2062 = vmatprep.subr.bf16.mxu0 0
        %2063 = vmatpush1.bf16.msra.mxu0 0
        %2064 = vmatprep.subr.bf16.mxu0 0
        %2065 = vmatpush1.bf16.msra.mxu0 0
        %2066 = vmatprep.subr.bf16.mxu0 0
        %2067 = vmatpush1.bf16.msra.mxu0 0
        %2068 = vmatprep.mubr.bf16.mxu0 0
        %2069 = vmatmul.mubr.bf16.gmra.mrb[0].mxu0 %v2031
        %v2070 = vpop.f32.mrb[0].mxu0
        %v2071 = vadd.f32 0.0, %v2070
        %v2072 = vpop.f32.mrb[0].mxu0
        %v2073 = vpop.f32.mrb[0].mxu0
        %v2074 = vadd.f32 0.0, %v2073
        %v2075 = vpop.f32.mrb[0].mxu0
        %2076 = vmatprep.mubr.bf16.mxu0 0
        %2077 = vmatmul.mubr.bf16.gmra.mrb[0].mxu0 %v2034
        %v2078 = vpop.f32.mrb[0].mxu0
        %v2079 = vadd.f32 0.0, %v2078
        %v2080 = vpop.f32.mrb[0].mxu0
        %v2081 = vpop.f32.mrb[0].mxu0
        %v2082 = vadd.f32 0.0, %v2081
        %v2083 = vpop.f32.mrb[0].mxu0
        %2084 = vdwg.mxu0
        %2086 = vset.pattern.permute.xlu0 0
        %2087 = vperm.xlu0 %2086, %v1990
        %v2088 = vpop.permute.xlu0 %2087
        %2091 = vset.pattern.permute.xlu0 0
        %2092 = vperm.xlu0 %2091, %v1991
        %v2093 = vpop.permute.xlu0 %2092
        %2096 = vset.pattern.permute.xlu0 0
        %2097 = vperm.xlu0 %2096, %v1992
        %v2098 = vpop.permute.xlu0 %2097
        %2101 = vset.pattern.permute.xlu0 0
        %2102 = vperm.xlu0 %2101, %v1993
        %v2103 = vpop.permute.xlu0 %2102
        %v2105 = vadd.f32 %v2088, %v2071
        %v2106 = vadd.f32 %v2093, %v2074
        %v2107 = vadd.f32 %v2098, %v2079
        %v2108 = vadd.f32 %v2103, %v2082
        %s2109 = scalar_lea.vmem [#allocation13], 16
        %v2110 = vld [vmem:[%s2109] sm:$0xf]
        %v2111 = vld [vmem:[%s2109 + $0x4] sm:$0xf]
        %v2112 = vld [vmem:[%s2109 + $0x8] sm:$0xf]
        %v2113 = vld [vmem:[%s2109 + $0xc] sm:$0xf]
        %v2118 = vunpack.c.l.b16 %v2110
        %v2119 = vunpack.c.l.b16 %v2111
        %v2120 = vunpack.c.l.b16 %v2112
        %v2121 = vunpack.c.l.b16 %v2113
        %v2122 = vpack.c.b16 %v2119, %v2118
        %v2123 = vpack.c.b16 %v2121, %v2120
        %v2125 = vsel %vm2029, %v2122, 0
        %v2128 = vsel %vm2029, %v2123, 0
        %2130 = vmatprep.subr.bf16.mxu0 0
        %2131 = vmatpush1.bf16.msra.mxu0 %v1999
        %2132 = vmatprep.subr.bf16.mxu0 0
        %2133 = vmatpush1.bf16.msra.mxu0 %v2001
        %2134 = vmatprep.subr.bf16.mxu0 0
        %2135 = vmatpush1.bf16.msra.mxu0 0
        %2136 = vmatprep.subr.bf16.mxu0 0
        %2137 = vmatpush1.bf16.msra.mxu0 0
        %2138 = vmatprep.subr.bf16.mxu0 0
        %2139 = vmatpush1.bf16.msra.mxu0 0
        %2140 = vmatprep.subr.bf16.mxu0 0
        %2141 = vmatpush1.bf16.msra.mxu0 0
        %2142 = vmatprep.subr.bf16.mxu0 0
        %2143 = vmatpush1.bf16.msra.mxu0 0
        %2144 = vmatprep.subr.bf16.mxu0 0
        %2145 = vmatpush1.bf16.msra.mxu0 0
        %2146 = vmatprep.subr.bf16.mxu0 0
        %2147 = vmatpush1.bf16.msra.mxu0 0
        %2148 = vmatprep.subr.bf16.mxu0 0
        %2149 = vmatpush1.bf16.msra.mxu0 0
        %2150 = vmatprep.subr.bf16.mxu0 0
        %2151 = vmatpush1.bf16.msra.mxu0 0
        %2152 = vmatprep.subr.bf16.mxu0 0
        %2153 = vmatpush1.bf16.msra.mxu0 0
        %2154 = vmatprep.subr.bf16.mxu0 0
        %2155 = vmatpush1.bf16.msra.mxu0 0
        %2156 = vmatprep.subr.bf16.mxu0 0
        %2157 = vmatpush1.bf16.msra.mxu0 0
        %2158 = vmatprep.subr.bf16.mxu0 0
        %2159 = vmatpush1.bf16.msra.mxu0 0
        %2160 = vmatprep.subr.bf16.mxu0 0
        %2161 = vmatpush1.bf16.msra.mxu0 0
        %2162 = vmatprep.mubr.bf16.mxu0 0
        %2163 = vmatmul.mubr.bf16.gmra.mrb[0].mxu0 %v2125
        %v2164 = vpop.f32.mrb[0].mxu0
        %v2165 = vadd.f32 0.0, %v2164
        %v2166 = vpop.f32.mrb[0].mxu0
        %v2167 = vpop.f32.mrb[0].mxu0
        %v2168 = vadd.f32 0.0, %v2167
        %v2169 = vpop.f32.mrb[0].mxu0
        %2170 = vmatprep.mubr.bf16.mxu0 0
        %2171 = vmatmul.mubr.bf16.gmra.mrb[0].mxu0 %v2128
        %v2172 = vpop.f32.mrb[0].mxu0
        %v2173 = vadd.f32 0.0, %v2172
        %v2174 = vpop.f32.mrb[0].mxu0
        %v2175 = vpop.f32.mrb[0].mxu0
        %v2176 = vadd.f32 0.0, %v2175
        %v2177 = vpop.f32.mrb[0].mxu0
        %2178 = vdwg.mxu0
        %v2179 = vadd.f32 %v2105, %v2165
        %v2180 = vadd.f32 %v2106, %v2168
        %v2181 = vadd.f32 %v2107, %v2173
        %v2182 = vadd.f32 %v2108, %v2176
        %s2183 = scalar_lea.vmem [#allocation13], 32
        %v2184 = vld [vmem:[%s2183] sm:$0xf]
        %v2185 = vld [vmem:[%s2183 + $0x4] sm:$0xf]
        %v2186 = vld [vmem:[%s2183 + $0x8] sm:$0xf]
        %v2187 = vld [vmem:[%s2183 + $0xc] sm:$0xf]
        %v2188 = vld [vmem:[#allocation3 + $0x8] sm:$0xff]
        %v2189 = vld [vmem:[#allocation3 + $0x10] sm:$0xff]
        %v2190 = vld [vmem:[#allocation3 + $0x20] sm:$0xff]
        %v2191 = vld [vmem:[#allocation3 + $0x28] sm:$0xff]
        %v2196 = vunpack.c.l.b16 %v2184
        %v2197 = vunpack.c.l.b16 %v2185
        %v2198 = vunpack.c.l.b16 %v2186
        %v2199 = vunpack.c.l.b16 %v2187
        %v2200 = vpack.c.b16 %v2197, %v2196
        %v2201 = vpack.c.b16 %v2199, %v2198
        %2206 = vrot.lane.b32.xlu0 %v2188, 127
        %v2207 = vpop.permute.xlu0 %2206
        %2208 = vrot.lane.b32.xlu0 %v2189, 127
        %v2209 = vpop.permute.xlu0 %2208
        %2210 = vrot.lane.b32.xlu0 %v2190, 127
        %v2211 = vpop.permute.xlu0 %2210
        %2212 = vrot.lane.b32.xlu0 %v2191, 127
        %v2213 = vpop.permute.xlu0 %2212
        %vm2214 = vcmask 1039360
        %v2215 = vsel %vm2214, %v2207, %v2209
        %v2216 = vsel %vm2214, %v2211, %v2213
        %v2220 = vsel %vm2029, %v2200, 0
        %v2223 = vsel %vm2029, %v2201, 0
        %2225 = vmatprep.subr.bf16.mxu0 0
        %2226 = vmatpush1.bf16.msra.mxu0 %v2215
        %2227 = vmatprep.subr.bf16.mxu0 0
        %2228 = vmatpush1.bf16.msra.mxu0 %v2216
        %2229 = vmatprep.subr.bf16.mxu0 0
        %2230 = vmatpush1.bf16.msra.mxu0 0
        %2231 = vmatprep.subr.bf16.mxu0 0
        %2232 = vmatpush1.bf16.msra.mxu0 0
        %2233 = vmatprep.subr.bf16.mxu0 0
        %2234 = vmatpush1.bf16.msra.mxu0 0
        %2235 = vmatprep.subr.bf16.mxu0 0
        %2236 = vmatpush1.bf16.msra.mxu0 0
        %2237 = vmatprep.subr.bf16.mxu0 0
        %2238 = vmatpush1.bf16.msra.mxu0 0
        %2239 = vmatprep.subr.bf16.mxu0 0
        %2240 = vmatpush1.bf16.msra.mxu0 0
        %2241 = vmatprep.subr.bf16.mxu0 0
        %2242 = vmatpush1.bf16.msra.mxu0 0
        %2243 = vmatprep.subr.bf16.mxu0 0
        %2244 = vmatpush1.bf16.msra.mxu0 0
        %2245 = vmatprep.subr.bf16.mxu0 0
        %2246 = vmatpush1.bf16.msra.mxu0 0
        %2247 = vmatprep.subr.bf16.mxu0 0
        %2248 = vmatpush1.bf16.msra.mxu0 0
        %2249 = vmatprep.subr.bf16.mxu0 0
        %2250 = vmatpush1.bf16.msra.mxu0 0
        %2251 = vmatprep.subr.bf16.mxu0 0
        %2252 = vmatpush1.bf16.msra.mxu0 0
        %2253 = vmatprep.subr.bf16.mxu0 0
        %2254 = vmatpush1.bf16.msra.mxu0 0
        %2255 = vmatprep.subr.bf16.mxu0 0
        %2256 = vmatpush1.bf16.msra.mxu0 0
        %2257 = vmatprep.mubr.bf16.mxu0 0
        %2258 = vmatmul.mubr.bf16.gmra.mrb[0].mxu0 %v2220
        %v2259 = vpop.f32.mrb[0].mxu0
        %v2260 = vadd.f32 0.0, %v2259
        %v2261 = vpop.f32.mrb[0].mxu0
        %v2262 = vpop.f32.mrb[0].mxu0
        %v2263 = vadd.f32 0.0, %v2262
        %v2264 = vpop.f32.mrb[0].mxu0
        %2265 = vmatprep.mubr.bf16.mxu0 0
        %2266 = vmatmul.mubr.bf16.gmra.mrb[0].mxu0 %v2223
        %v2267 = vpop.f32.mrb[0].mxu0
        %v2268 = vadd.f32 0.0, %v2267
        %v2269 = vpop.f32.mrb[0].mxu0
        %v2270 = vpop.f32.mrb[0].mxu0
        %v2271 = vadd.f32 0.0, %v2270
        %v2272 = vpop.f32.mrb[0].mxu0
        %2273 = vdwg.mxu0
        %v2274 = vadd.f32 %v2179, %v2260
        %v2275 = vadd.f32 %v2180, %v2263
        %v2276 = vadd.f32 %v2181, %v2268
        %v2277 = vadd.f32 %v2182, %v2271
        %s2278 = scalar_lea.vmem [#allocation10], 32
        %v2279 = vld [vmem:[%s2278] sm:$0xf]
        %v2280 = vld [vmem:[%s2278 + $0x4] sm:$0xf]
        %v2281 = vld [vmem:[%s2278 + $0x8] sm:$0xf]
        %v2282 = vld [vmem:[%s2278 + $0xc] sm:$0xf]
        %v2283 = vld [vmem:[%s2278 + $0x10] sm:$0xf]
        %v2284 = vld [vmem:[%s2278 + $0x14] sm:$0xf]
        %v2285 = vld [vmem:[%s2278 + $0x18] sm:$0xf]
        %v2286 = vld [vmem:[%s2278 + $0x1c] sm:$0xf]
        %s2287 = scalar_lea.vmem [#allocation12], 64
        %v2288 = vld [vmem:[%s2287] sm:$0xff]
        %v2289 = vld [vmem:[%s2287 + $0x8] sm:$0xff]
        %v2290 = vld [vmem:[%s2287 + $0x10] sm:$0xff]
        %v2291 = vld [vmem:[%s2287 + $0x18] sm:$0xff]
        %v2292 = vld [vmem:[%s2287 + $0x20] sm:$0xff]
        %v2293 = vld [vmem:[%s2287 + $0x28] sm:$0xff]
        %v2294 = vld [vmem:[%s2287 + $0x30] sm:$0xff]
        %v2295 = vld [vmem:[%s2287 + $0x38] sm:$0xff]
        %2297 = vset.pattern.permute.xlu0 0
        %2298 = vperm.xlu0 %2297, %v2288
        %v2299 = vpop.permute.xlu0 %2298
        %2302 = vset.pattern.permute.xlu0 0
        %2303 = vperm.xlu0 %2302, %v2289
        %v2304 = vpop.permute.xlu0 %2303
        %2307 = vset.pattern.permute.xlu0 0
        %2308 = vperm.xlu0 %2307, %v2290
        %v2309 = vpop.permute.xlu0 %2308
        %2312 = vset.pattern.permute.xlu0 0
        %2313 = vperm.xlu0 %2312, %v2291
        %v2314 = vpop.permute.xlu0 %2313
        %2317 = vset.pattern.permute.xlu0 0
        %2318 = vperm.xlu0 %2317, %v2292
        %v2319 = vpop.permute.xlu0 %2318
        %2322 = vset.pattern.permute.xlu0 0
        %2323 = vperm.xlu0 %2322, %v2293
        %v2324 = vpop.permute.xlu0 %2323
        %2327 = vset.pattern.permute.xlu0 0
        %2328 = vperm.xlu0 %2327, %v2294
        %v2329 = vpop.permute.xlu0 %2328
        %2332 = vset.pattern.permute.xlu0 0
        %2333 = vperm.xlu0 %2332, %v2295
        %v2334 = vpop.permute.xlu0 %2333
        %v2344 = vunpack.c.l.b16 %v2279
        %v2345 = vunpack.c.l.b16 %v2280
        %v2346 = vunpack.c.l.b16 %v2281
        %v2347 = vunpack.c.l.b16 %v2282
        %v2348 = vunpack.c.l.b16 %v2283
        %v2349 = vunpack.c.l.b16 %v2284
        %v2350 = vunpack.c.l.b16 %v2285
        %v2351 = vunpack.c.l.b16 %v2286
        %v2352 = vpack.c.b16 %v2345, %v2344
        %v2353 = vpack.c.b16 %v2347, %v2346
        %v2354 = vpack.c.b16 %v2349, %v2348
        %v2355 = vpack.c.b16 %v2351, %v2350
        %v2357 = vsel %vm978, %v2352, 0
        %v2360 = vsel %vm978, %v2353, 0
        %v2363 = vsel %vm978, %v2354, 0
        %v2366 = vsel %vm978, %v2355, 0
        %2368 = vmatprep.subr.bf16.mxu0 0
        %2369 = vmatpush1.bf16.msra.mxu0 %v970
        %2370 = vmatprep.subr.bf16.mxu0 0
        %2371 = vmatpush1.bf16.msra.mxu0 %v971
        %2372 = vmatprep.subr.bf16.mxu0 0
        %2373 = vmatpush1.bf16.msra.mxu0 %v972
        %2374 = vmatprep.subr.bf16.mxu0 0
        %2375 = vmatpush1.bf16.msra.mxu0 %v973
        %2376 = vmatprep.subr.bf16.mxu0 0
        %2377 = vmatpush1.bf16.msra.mxu0 0
        %2378 = vmatprep.subr.bf16.mxu0 0
        %2379 = vmatpush1.bf16.msra.mxu0 0
        %2380 = vmatprep.subr.bf16.mxu0 0
        %2381 = vmatpush1.bf16.msra.mxu0 0
        %2382 = vmatprep.subr.bf16.mxu0 0
        %2383 = vmatpush1.bf16.msra.mxu0 0
        %2384 = vmatprep.subr.bf16.mxu0 0
        %2385 = vmatpush1.bf16.msra.mxu0 0
        %2386 = vmatprep.subr.bf16.mxu0 0
        %2387 = vmatpush1.bf16.msra.mxu0 0
        %2388 = vmatprep.subr.bf16.mxu0 0
        %2389 = vmatpush1.bf16.msra.mxu0 0
        %2390 = vmatprep.subr.bf16.mxu0 0
        %2391 = vmatpush1.bf16.msra.mxu0 0
        %2392 = vmatprep.subr.bf16.mxu0 0
        %2393 = vmatpush1.bf16.msra.mxu0 0
        %2394 = vmatprep.subr.bf16.mxu0 0
        %2395 = vmatpush1.bf16.msra.mxu0 0
        %2396 = vmatprep.subr.bf16.mxu0 0
        %2397 = vmatpush1.bf16.msra.mxu0 0
        %2398 = vmatprep.subr.bf16.mxu0 0
        %2399 = vmatpush1.bf16.msra.mxu0 0
        %2400 = vmatprep.mubr.bf16.mxu0 0
        %2401 = vmatmul.mubr.bf16.gmra.mrb[0].mxu0 %v2357
        %v2402 = vpop.f32.mrb[0].mxu0
        %v2403 = vadd.f32 %v2299, %v2402
        %v2404 = vpop.f32.mrb[0].mxu0
        %v2405 = vpop.f32.mrb[0].mxu0
        %v2406 = vadd.f32 %v2304, %v2405
        %v2407 = vpop.f32.mrb[0].mxu0
        %2408 = vmatprep.mubr.bf16.mxu0 0
        %2409 = vmatmul.mubr.bf16.gmra.mrb[0].mxu0 %v2360
        %v2410 = vpop.f32.mrb[0].mxu0
        %v2411 = vadd.f32 %v2309, %v2410
        %v2412 = vpop.f32.mrb[0].mxu0
        %v2413 = vpop.f32.mrb[0].mxu0
        %v2414 = vadd.f32 %v2314, %v2413
        %v2415 = vpop.f32.mrb[0].mxu0
        %2416 = vmatprep.mubr.bf16.mxu0 0
        %2417 = vmatmul.mubr.bf16.gmra.mrb[0].mxu0 %v2363
        %v2418 = vpop.f32.mrb[0].mxu0
        %v2419 = vadd.f32 %v2319, %v2418
        %v2420 = vpop.f32.mrb[0].mxu0
        %v2421 = vpop.f32.mrb[0].mxu0
        %v2422 = vadd.f32 %v2324, %v2421
        %v2423 = vpop.f32.mrb[0].mxu0
        %2424 = vmatprep.mubr.bf16.mxu0 0
        %2425 = vmatmul.mubr.bf16.gmra.mrb[0].mxu0 %v2366
        %v2426 = vpop.f32.mrb[0].mxu0
        %v2427 = vadd.f32 %v2329, %v2426
        %v2428 = vpop.f32.mrb[0].mxu0
        %v2429 = vpop.f32.mrb[0].mxu0
        %v2430 = vadd.f32 %v2334, %v2429
        %v2431 = vpop.f32.mrb[0].mxu0
        %2432 = vdwg.mxu0
        %2433 = vst [vmem:[#allocation2 + $0x8] sm:$0xff] %v2274
        %2434 = vst [vmem:[#allocation2 + $0x20] sm:$0xff] %v2275
        %2435 = vst [vmem:[#allocation2 + $0x38] sm:$0xff] %v2276
        %2436 = vst [vmem:[#allocation2 + $0x50] sm:$0xff] %v2277
        %v2437 = vld [vmem:[#allocation2] sm:$0xff]
        %v2438 = vld [vmem:[#allocation2 + $0x8] sm:$0xff]
        %v2439 = vld [vmem:[#allocation2 + $0x18] sm:$0xff]
        %v2440 = vld [vmem:[#allocation2 + $0x20] sm:$0xff]
        %v2441 = vld [vmem:[#allocation2 + $0x30] sm:$0xff]
        %v2442 = vld [vmem:[#allocation2 + $0x38] sm:$0xff]
        %v2443 = vld [vmem:[#allocation2 + $0x48] sm:$0xff]
        %v2444 = vld [vmem:[#allocation2 + $0x50] sm:$0xff]
        %2453 = vrot.lane.b32.xlu0 %v2437, 127
        %v2454 = vpop.permute.xlu0 %2453
        %2455 = vrot.lane.b32.xlu0 %v2438, 127
        %v2456 = vpop.permute.xlu0 %2455
        %2457 = vrot.lane.b32.xlu0 %v2439, 127
        %v2458 = vpop.permute.xlu0 %2457
        %2459 = vrot.lane.b32.xlu0 %v2440, 127
        %v2460 = vpop.permute.xlu0 %2459
        %2461 = vrot.lane.b32.xlu0 %v2441, 127
        %v2462 = vpop.permute.xlu0 %2461
        %2463 = vrot.lane.b32.xlu0 %v2442, 127
        %v2464 = vpop.permute.xlu0 %2463
        %2465 = vrot.lane.b32.xlu0 %v2443, 127
        %v2466 = vpop.permute.xlu0 %2465
        %2467 = vrot.lane.b32.xlu0 %v2444, 127
        %v2468 = vpop.permute.xlu0 %2467
        %v2469 = vsel %vm590, %v2454, %v2456
        %v2470 = vsel %vm590, %v2458, %v2460
        %v2471 = vsel %vm590, %v2462, %v2464
        %v2472 = vsel %vm590, %v2466, %v2468
        %v2481 = vadd.f32 %v2437, %v2469
        %v2482 = vadd.f32 %v2438, %v2456
        %v2483 = vadd.f32 %v2439, %v2470
        %v2484 = vadd.f32 %v2440, %v2460
        %v2485 = vadd.f32 %v2441, %v2471
        %v2486 = vadd.f32 %v2442, %v2464
        %v2487 = vadd.f32 %v2443, %v2472
        %v2488 = vadd.f32 %v2444, %v2468
        %2489 = vrot.lane.b32.xlu0 %v2438, 126
        %v2490 = vpop.permute.xlu0 %2489
        %2491 = vrot.lane.b32.xlu0 %v2440, 126
        %v2492 = vpop.permute.xlu0 %2491
        %2493 = vrot.lane.b32.xlu0 %v2442, 126
        %v2494 = vpop.permute.xlu0 %2493
        %2495 = vrot.lane.b32.xlu0 %v2444, 126
        %v2496 = vpop.permute.xlu0 %2495
        %v2501 = vadd.f32 %v2481, %v2490
        %v2502 = vadd.f32 %v2482, %v2490
        %v2503 = vadd.f32 %v2483, %v2492
        %v2504 = vadd.f32 %v2484, %v2492
        %v2505 = vadd.f32 %v2485, %v2494
        %v2506 = vadd.f32 %v2486, %v2494
        %v2507 = vadd.f32 %v2487, %v2496
        %v2508 = vadd.f32 %v2488, %v2496
        %v2509 = vld [vmem:[#allocation2 + $0x10] sm:$0xff]
        %v2510 = vld [vmem:[#allocation2 + $0x28] sm:$0xff]
        %v2511 = vld [vmem:[#allocation2 + $0x40] sm:$0xff]
        %v2512 = vld [vmem:[#allocation2 + $0x58] sm:$0xff]
        %2517 = vrot.lane.b32.xlu0 %v2438, 125
        %v2518 = vpop.permute.xlu0 %2517
        %2519 = vrot.lane.b32.xlu0 %v2509, 125
        %v2520 = vpop.permute.xlu0 %2519
        %2521 = vrot.lane.b32.xlu0 %v2440, 125
        %v2522 = vpop.permute.xlu0 %2521
        %2523 = vrot.lane.b32.xlu0 %v2510, 125
        %v2524 = vpop.permute.xlu0 %2523
        %2525 = vrot.lane.b32.xlu0 %v2442, 125
        %v2526 = vpop.permute.xlu0 %2525
        %2527 = vrot.lane.b32.xlu0 %v2511, 125
        %v2528 = vpop.permute.xlu0 %2527
        %2529 = vrot.lane.b32.xlu0 %v2444, 125
        %v2530 = vpop.permute.xlu0 %2529
        %2531 = vrot.lane.b32.xlu0 %v2512, 125
        %v2532 = vpop.permute.xlu0 %2531
        %v2533 = vsel %vm719, %v2518, %v2520
        %v2534 = vsel %vm719, %v2522, %v2524
        %v2535 = vsel %vm719, %v2526, %v2528
        %v2536 = vsel %vm719, %v2530, %v2532
        %v2545 = vadd.f32 %v2501, %v2518
        %v2546 = vadd.f32 %v2502, %v2533
        %v2547 = vadd.f32 %v2503, %v2522
        %v2548 = vadd.f32 %v2504, %v2534
        %v2549 = vadd.f32 %v2505, %v2526
        %v2550 = vadd.f32 %v2506, %v2535
        %v2551 = vadd.f32 %v2507, %v2530
        %v2552 = vadd.f32 %v2508, %v2536
        %2553 = vrot.lane.b32.xlu0 %v2438, 124
        %v2554 = vpop.permute.xlu0 %2553
        %2555 = vrot.lane.b32.xlu0 %v2509, 124
        %v2556 = vpop.permute.xlu0 %2555
        %2557 = vrot.lane.b32.xlu0 %v2440, 124
        %v2558 = vpop.permute.xlu0 %2557
        %2559 = vrot.lane.b32.xlu0 %v2510, 124
        %v2560 = vpop.permute.xlu0 %2559
        %2561 = vrot.lane.b32.xlu0 %v2442, 124
        %v2562 = vpop.permute.xlu0 %2561
        %2563 = vrot.lane.b32.xlu0 %v2511, 124
        %v2564 = vpop.permute.xlu0 %2563
        %2565 = vrot.lane.b32.xlu0 %v2444, 124
        %v2566 = vpop.permute.xlu0 %2565
        %2567 = vrot.lane.b32.xlu0 %v2512, 124
        %v2568 = vpop.permute.xlu0 %2567
        %v2569 = vsel %vm792, %v2554, %v2556
        %v2570 = vsel %vm792, %v2558, %v2560
        %v2571 = vsel %vm792, %v2562, %v2564
        %v2572 = vsel %vm792, %v2566, %v2568
        %v2581 = vadd.f32 %v2545, %v2554
        %v2582 = vadd.f32 %v2546, %v2569
        %v2583 = vadd.f32 %v2547, %v2558
        %v2584 = vadd.f32 %v2548, %v2570
        %v2585 = vadd.f32 %v2549, %v2562
        %v2586 = vadd.f32 %v2550, %v2571
        %v2587 = vadd.f32 %v2551, %v2566
        %v2588 = vadd.f32 %v2552, %v2572
        %v2589 = vmul.f32 %v2581, %v839
        %v2590 = vmul.f32 %v2582, %v839
        %v2591 = vmul.f32 %v2583, %v839
        %v2592 = vmul.f32 %v2584, %v839
        %v2593 = vmul.f32 %v2585, %v839
        %v2594 = vmul.f32 %v2586, %v839
        %v2595 = vmul.f32 %v2587, %v839
        %v2596 = vmul.f32 %v2588, %v839
        %2605 = vrot.lane.b32.xlu0 %v2589, 2
        %v2606 = vpop.permute.xlu0 %2605
        %2607 = vrot.lane.b32.xlu0 %v2590, 2
        %v2608 = vpop.permute.xlu0 %2607
        %2609 = vrot.lane.b32.xlu0 %v2591, 2
        %v2610 = vpop.permute.xlu0 %2609
        %2611 = vrot.lane.b32.xlu0 %v2592, 2
        %v2612 = vpop.permute.xlu0 %2611
        %2613 = vrot.lane.b32.xlu0 %v2593, 2
        %v2614 = vpop.permute.xlu0 %2613
        %2615 = vrot.lane.b32.xlu0 %v2594, 2
        %v2616 = vpop.permute.xlu0 %2615
        %2617 = vrot.lane.b32.xlu0 %v2595, 2
        %v2618 = vpop.permute.xlu0 %2617
        %2619 = vrot.lane.b32.xlu0 %v2596, 2
        %v2620 = vpop.permute.xlu0 %2619
        %v2621 = vsel %vm501, %v2606, %v2608
        %v2622 = vsel %vm501, %v2610, %v2612
        %v2623 = vsel %vm501, %v2614, %v2616
        %v2624 = vsel %vm501, %v2618, %v2620
        %v2629 = vsub.f32 %v2274, %v2621
        %v2630 = vsub.f32 %v2275, %v2622
        %v2631 = vsub.f32 %v2276, %v2623
        %v2632 = vsub.f32 %v2277, %v2624
        %v2633 = vmul.f32 %v2629, %v2629
        %v2634 = vmul.f32 %v2630, %v2630
        %v2635 = vmul.f32 %v2631, %v2631
        %v2636 = vmul.f32 %v2632, %v2632
        %2637 = vst [vmem:[#allocation2 + $0x8] sm:$0xff] %v2633
        %2638 = vst [vmem:[#allocation2 + $0x20] sm:$0xff] %v2634
        %2639 = vst [vmem:[#allocation2 + $0x38] sm:$0xff] %v2635
        %2640 = vst [vmem:[#allocation2 + $0x50] sm:$0xff] %v2636
        %v2641 = vld [vmem:[#allocation2] sm:$0xff]
        %v2642 = vld [vmem:[#allocation2 + $0x8] sm:$0xff]
        %v2643 = vld [vmem:[#allocation2 + $0x18] sm:$0xff]
        %v2644 = vld [vmem:[#allocation2 + $0x20] sm:$0xff]
        %v2645 = vld [vmem:[#allocation2 + $0x30] sm:$0xff]
        %v2646 = vld [vmem:[#allocation2 + $0x38] sm:$0xff]
        %v2647 = vld [vmem:[#allocation2 + $0x48] sm:$0xff]
        %v2648 = vld [vmem:[#allocation2 + $0x50] sm:$0xff]
        %2657 = vrot.lane.b32.xlu0 %v2641, 127
        %v2658 = vpop.permute.xlu0 %2657
        %2659 = vrot.lane.b32.xlu0 %v2642, 127
        %v2660 = vpop.permute.xlu0 %2659
        %2661 = vrot.lane.b32.xlu0 %v2643, 127
        %v2662 = vpop.permute.xlu0 %2661
        %2663 = vrot.lane.b32.xlu0 %v2644, 127
        %v2664 = vpop.permute.xlu0 %2663
        %2665 = vrot.lane.b32.xlu0 %v2645, 127
        %v2666 = vpop.permute.xlu0 %2665
        %2667 = vrot.lane.b32.xlu0 %v2646, 127
        %v2668 = vpop.permute.xlu0 %2667
        %2669 = vrot.lane.b32.xlu0 %v2647, 127
        %v2670 = vpop.permute.xlu0 %2669
        %2671 = vrot.lane.b32.xlu0 %v2648, 127
        %v2672 = vpop.permute.xlu0 %2671
        %v2673 = vsel %vm590, %v2658, %v2660
        %v2674 = vsel %vm590, %v2662, %v2664
        %v2675 = vsel %vm590, %v2666, %v2668
        %v2676 = vsel %vm590, %v2670, %v2672
        %v2685 = vadd.f32 %v2641, %v2673
        %v2686 = vadd.f32 %v2642, %v2660
        %v2687 = vadd.f32 %v2643, %v2674
        %v2688 = vadd.f32 %v2644, %v2664
        %v2689 = vadd.f32 %v2645, %v2675
        %v2690 = vadd.f32 %v2646, %v2668
        %v2691 = vadd.f32 %v2647, %v2676
        %v2692 = vadd.f32 %v2648, %v2672
        %2693 = vrot.lane.b32.xlu0 %v2642, 126
        %v2694 = vpop.permute.xlu0 %2693
        %2695 = vrot.lane.b32.xlu0 %v2644, 126
        %v2696 = vpop.permute.xlu0 %2695
        %2697 = vrot.lane.b32.xlu0 %v2646, 126
        %v2698 = vpop.permute.xlu0 %2697
        %2699 = vrot.lane.b32.xlu0 %v2648, 126
        %v2700 = vpop.permute.xlu0 %2699
        %v2705 = vadd.f32 %v2685, %v2694
        %v2706 = vadd.f32 %v2686, %v2694
        %v2707 = vadd.f32 %v2687, %v2696
        %v2708 = vadd.f32 %v2688, %v2696
        %v2709 = vadd.f32 %v2689, %v2698
        %v2710 = vadd.f32 %v2690, %v2698
        %v2711 = vadd.f32 %v2691, %v2700
        %v2712 = vadd.f32 %v2692, %v2700
        %v2713 = vld [vmem:[#allocation2 + $0x10] sm:$0xff]
        %v2714 = vld [vmem:[#allocation2 + $0x28] sm:$0xff]
        %v2715 = vld [vmem:[#allocation2 + $0x40] sm:$0xff]
        %v2716 = vld [vmem:[#allocation2 + $0x58] sm:$0xff]
        %2721 = vrot.lane.b32.xlu0 %v2642, 125
        %v2722 = vpop.permute.xlu0 %2721
        %2723 = vrot.lane.b32.xlu0 %v2713, 125
        %v2724 = vpop.permute.xlu0 %2723
        %2725 = vrot.lane.b32.xlu0 %v2644, 125
        %v2726 = vpop.permute.xlu0 %2725
        %2727 = vrot.lane.b32.xlu0 %v2714, 125
        %v2728 = vpop.permute.xlu0 %2727
        %2729 = vrot.lane.b32.xlu0 %v2646, 125
        %v2730 = vpop.permute.xlu0 %2729
        %2731 = vrot.lane.b32.xlu0 %v2715, 125
        %v2732 = vpop.permute.xlu0 %2731
        %2733 = vrot.lane.b32.xlu0 %v2648, 125
        %v2734 = vpop.permute.xlu0 %2733
        %2735 = vrot.lane.b32.xlu0 %v2716, 125
        %v2736 = vpop.permute.xlu0 %2735
        %v2737 = vsel %vm719, %v2722, %v2724
        %v2738 = vsel %vm719, %v2726, %v2728
        %v2739 = vsel %vm719, %v2730, %v2732
        %v2740 = vsel %vm719, %v2734, %v2736
        %v2749 = vadd.f32 %v2705, %v2722
        %v2750 = vadd.f32 %v2706, %v2737
        %v2751 = vadd.f32 %v2707, %v2726
        %v2752 = vadd.f32 %v2708, %v2738
        %v2753 = vadd.f32 %v2709, %v2730
        %v2754 = vadd.f32 %v2710, %v2739
        %v2755 = vadd.f32 %v2711, %v2734
        %v2756 = vadd.f32 %v2712, %v2740
        %2757 = vrot.lane.b32.xlu0 %v2642, 124
        %v2758 = vpop.permute.xlu0 %2757
        %2759 = vrot.lane.b32.xlu0 %v2713, 124
        %v2760 = vpop.permute.xlu0 %2759
        %2761 = vrot.lane.b32.xlu0 %v2644, 124
        %v2762 = vpop.permute.xlu0 %2761
        %2763 = vrot.lane.b32.xlu0 %v2714, 124
        %v2764 = vpop.permute.xlu0 %2763
        %2765 = vrot.lane.b32.xlu0 %v2646, 124
        %v2766 = vpop.permute.xlu0 %2765
        %2767 = vrot.lane.b32.xlu0 %v2715, 124
        %v2768 = vpop.permute.xlu0 %2767
        %2769 = vrot.lane.b32.xlu0 %v2648, 124
        %v2770 = vpop.permute.xlu0 %2769
        %2771 = vrot.lane.b32.xlu0 %v2716, 124
        %v2772 = vpop.permute.xlu0 %2771
        %v2773 = vsel %vm792, %v2758, %v2760
        %v2774 = vsel %vm792, %v2762, %v2764
        %v2775 = vsel %vm792, %v2766, %v2768
        %v2776 = vsel %vm792, %v2770, %v2772
        %v2785 = vadd.f32 %v2749, %v2758
        %v2786 = vadd.f32 %v2750, %v2773
        %v2787 = vadd.f32 %v2751, %v2762
        %v2788 = vadd.f32 %v2752, %v2774
        %v2789 = vadd.f32 %v2753, %v2766
        %v2790 = vadd.f32 %v2754, %v2775
        %v2791 = vadd.f32 %v2755, %v2770
        %v2792 = vadd.f32 %v2756, %v2776
        %v2793 = vmul.f32 %v2785, %v839
        %v2794 = vmul.f32 %v2786, %v839
        %v2795 = vmul.f32 %v2787, %v839
        %v2796 = vmul.f32 %v2788, %v839
        %v2797 = vmul.f32 %v2789, %v839
        %v2798 = vmul.f32 %v2790, %v839
        %v2799 = vmul.f32 %v2791, %v839
        %v2800 = vmul.f32 %v2792, %v839
        %v2801 = vadd.f32 %v2793, 1e-09
        %v2802 = vadd.f32 %v2794, 1e-09
        %v2803 = vadd.f32 %v2795, 1e-09
        %v2804 = vadd.f32 %v2796, 1e-09
        %v2805 = vadd.f32 %v2797, 1e-09
        %v2806 = vadd.f32 %v2798, 1e-09
        %v2807 = vadd.f32 %v2799, 1e-09
        %v2808 = vadd.f32 %v2800, 1e-09
        %v2809 = vrsqrt.pop %v2801
        %v2810 = vrsqrt.pop %v2802
        %v2811 = vrsqrt.pop %v2803
        %v2812 = vrsqrt.pop %v2804
        %v2813 = vrsqrt.pop %v2805
        %v2814 = vrsqrt.pop %v2806
        %v2815 = vrsqrt.pop %v2807
        %v2816 = vrsqrt.pop %v2808
        %2825 = vrot.lane.b32.xlu0 %v2809, 2
        %v2826 = vpop.permute.xlu0 %2825
        %2827 = vrot.lane.b32.xlu0 %v2810, 2
        %v2828 = vpop.permute.xlu0 %2827
        %2829 = vrot.lane.b32.xlu0 %v2811, 2
        %v2830 = vpop.permute.xlu0 %2829
        %2831 = vrot.lane.b32.xlu0 %v2812, 2
        %v2832 = vpop.permute.xlu0 %2831
        %2833 = vrot.lane.b32.xlu0 %v2813, 2
        %v2834 = vpop.permute.xlu0 %2833
        %2835 = vrot.lane.b32.xlu0 %v2814, 2
        %v2836 = vpop.permute.xlu0 %2835
        %2837 = vrot.lane.b32.xlu0 %v2815, 2
        %v2838 = vpop.permute.xlu0 %2837
        %2839 = vrot.lane.b32.xlu0 %v2816, 2
        %v2840 = vpop.permute.xlu0 %2839
        %v2841 = vsel %vm501, %v2826, %v2828
        %v2842 = vsel %vm501, %v2830, %v2832
        %v2843 = vsel %vm501, %v2834, %v2836
        %v2844 = vsel %vm501, %v2838, %v2840
        %v2849 = vmul.f32 %v2629, %v2841
        %v2850 = vmul.f32 %v2630, %v2842
        %v2851 = vmul.f32 %v2631, %v2843
        %v2852 = vmul.f32 %v2632, %v2844
        %v2853 = vmul.f32 %v2403, %v2849
        %v2854 = vmul.f32 %v2406, %v2850
        %v2855 = vmul.f32 %v2411, %v2851
        %v2856 = vmul.f32 %v2414, %v2852
        %v2857 = vadd.f32 %v2853, %v2419
        %v2858 = vadd.f32 %v2854, %v2422
        %v2859 = vadd.f32 %v2855, %v2427
        %v2860 = vadd.f32 %v2856, %v2430
        %s2861 = scalar_lea.vmem [#allocation18], 32
        %v2862 = vld [vmem:[%s2861] sm:$0xff]
        %v2863 = vld [vmem:[%s2861 + $0x8] sm:$0xff]
        %v2864 = vld [vmem:[%s2861 + $0x10] sm:$0xff]
        %v2865 = vld [vmem:[%s2861 + $0x18] sm:$0xff]
        %s2866 = scalar_lea.vmem [#allocation16], 32
        %v2867 = vld [vmem:[%s2866] sm:$0xff]
        %v2868 = vld [vmem:[%s2866 + $0x8] sm:$0xff]
        %v2869 = vld [vmem:[%s2866 + $0x10] sm:$0xff]
        %v2870 = vld [vmem:[%s2866 + $0x18] sm:$0xff]
        %2872 = vset.pattern.permute.xlu0 0
        %2873 = vperm.xlu0 %2872, %v2867
        %v2874 = vpop.permute.xlu0 %2873
        %2877 = vset.pattern.permute.xlu0 0
        %2878 = vperm.xlu0 %2877, %v2868
        %v2879 = vpop.permute.xlu0 %2878
        %2882 = vset.pattern.permute.xlu0 0
        %2883 = vperm.xlu0 %2882, %v2869
        %v2884 = vpop.permute.xlu0 %2883
        %2887 = vset.pattern.permute.xlu0 0
        %2888 = vperm.xlu0 %2887, %v2870
        %v2889 = vpop.permute.xlu0 %2888
        %v2891 = vmul.f32 %v2874, %v2857
        %v2892 = vmul.f32 %v2879, %v2858
        %v2893 = vmul.f32 %v2884, %v2859
        %v2894 = vmul.f32 %v2889, %v2860
        %v2895 = vand.u32 2147483647, %v2891
        %vm2896 = vcmp.le.f32.partialorder %v2895, 0.7853982
        %vm2897 = vcmp.lt.s32.totalorder %v2891, 0
        %v2898 = vand.u32 %v2891, 2139095040
        %v2899 = vshrl.u32 %v2898, 23
        %v2900 = vsub.s32 %v2899, 127
        %v2901 = vand.u32 2147483647, %v2891
        %v2902 = vand.u32 %v2901, 8388607
        %v2903 = vor.u32 %v2902, 8388608
        %v2904 = vsub.s32 0, %v2903
        %v2905 = vadd.s32 %v2900, 1
        %vm2906 = vcmp.gt.s32.totalorder %v2905, 0
        %v2907 = vsel %vm2906, %v2905, 0
        %v2908 = vshrl.u32 %v2907, 5
        %v2909 = vand.u32 %v2907, 31
        %v2910 = vsub.s32 32, %v2909
        %v2911 = vshrl.u32 683565275, %v2910
        %v2912 = vshll.u32 683565275, %v2909
        %v2913 = vshrl.u32 2475754826, %v2910
        %v2914 = vor.u32 %v2912, %v2913
        %v2915 = vshll.u32 2475754826, %v2909
        %v2916 = vshrl.u32 2131351028, %v2910
        %v2917 = vor.u32 %v2915, %v2916
        %v2918 = vshll.u32 2131351028, %v2909
        %v2919 = vshrl.u32 2102212464, %v2910
        %v2920 = vor.u32 %v2918, %v2919
        %v2921 = vshll.u32 2102212464, %v2909
        %v2922 = vshrl.u32 920167782, %v2910
        %v2923 = vor.u32 %v2921, %v2922
        %v2924 = vshll.u32 920167782, %v2909
        %v2925 = vshrl.u32 1326507024, %v2910
        %v2926 = vor.u32 %v2924, %v2925
        %vm2927 = vcmp.lt.s32.totalorder %v2908, 1
        %vm2928 = vcmp.lt.s32.totalorder %v2908, 2
        %vm2929 = vcmp.lt.s32.totalorder %v2908, 3
        %vm2930 = vcmp.lt.s32.totalorder %v2908, 4
        %v2931 = vsel %vm2927, %v2911, %v2914
        %v2932 = vsel %vm2930, %v2920, 2102212464
        %v2933 = vsel %vm2929, %v2917, %v2932
        %v2934 = vsel %vm2928, %v2931, %v2933
        %v2935 = vsel %vm2927, %v2914, %v2917
        %v2936 = vsel %vm2930, %v2923, 920167782
        %v2937 = vsel %vm2929, %v2920, %v2936
        %v2938 = vsel %vm2928, %v2935, %v2937
        %v2939 = vsel %vm2927, %v2917, %v2920
        %v2940 = vsel %vm2930, %v2926, 1326507024
        %v2941 = vsel %vm2929, %v2923, %v2940
        %v2942 = vsel %vm2928, %v2939, %v2941
        %v2943 = vshll.u32 %v2903, 8
        %v2944 = vmul.u32.u64.compose %v2943, %v2942
        %v2945 = vextract.low.u32 %v2944
        %v2946 = vextract.high.u32 %v2944
        %v2947 = vmul.u32.u64.compose %v2943, %v2938
        %v2948 = vextract.low.u32 %v2947
        %v2949 = vextract.high.u32 %v2947
        %v2950 = vmul.u32 %v2943, %v2934
        %v2951 = vadd.s32 %v2946, %v2948
        %vm2952 = vc.u32 %v2946, %v2948
        %v2953 = vadd.s32 %v2949, 1
        %v2954 = vsel %vm2952, %v2953, %v2949
        %v2955 = vadd.s32 %v2950, %v2954
        %v2956 = vadd.s32 %v2955, 536870912
        %v2957 = vshrl.u32 %v2956, 30
        %v2958 = vshll.u32 %v2957, 30
        %v2959 = vsub.s32 %v2955, %v2958
        %vm2960 = vcmp.lt.s32.totalorder %v2959, 0
        %v2961 = vsub.s32 0, %v2959
        %v2962 = vsel %vm2960, %v2961, %v2959
        %v2963 = vclz %v2962
        %v2964 = vsub.s32 %v2963, 2
        %vm2965 = vcmp.gt.s32.totalorder 0, %v2964
        %v2966 = vsel %vm2965, 0, %v2964
        %v2967 = vsub.s32 32, %v2966
        %v2968 = vshll.u32 %v2959, %v2966
        %v2969 = vshrl.u32 %v2951, %v2967
        %v2970 = vor.u32 %v2968, %v2969
        %v2971 = vsub.s32 4294967266, %v2966
        %v2972 = vadd.s32 %v2971, 127
        %v2973 = vshll.u32 %v2972, 23
        %v2974 = vor.u32 4788187, %v2973
        %v2975 = vand.u32 2147483647, %v2974
        %v2977 = vcvt.s32.f32 %v2970
        %v2978 = vmul.f32 %v2977, %v2975
        %v2979 = vxor.u32 %v2978, 2147483648
        %v2980 = vsel %vm2897, %v2979, %v2978
        %v2981 = vsub.s32 4, %v2957
        %v2982 = vsel %vm2897, %v2981, %v2957
        %v2983 = vsel %vm2896, %v2891, %v2980
        %v2984 = vsel %vm2896, 0, %v2982
        %v2985 = vcosq.f32.pop %v2983
        %v2986 = vsinq.f32.pop %v2983
        %vm2987 = vweird.f32 %v2891
        %v2988 = vand.u32 %v2984, 3
        %vm2989 = vcmp.lt.s32.totalorder %v2988, 2
        %vm2990 = vcmp.eq.s32.totalorder %v2988, 0
        %v2991 = vxor.u32 %v2986, 2147483648
        %v2992 = vsel %vm2990, %v2985, %v2991
        %vm2993 = vcmp.eq.s32.totalorder %v2988, 2
        %v2994 = vxor.u32 %v2985, 2147483648
        %v2995 = vsel %vm2993, %v2994, %v2986
        %v2996 = vsel %vm2989, %v2992, %v2995
        %v2997 = vsel %vm2987, nan, %v2996
        %v2998 = vand.u32 2147483647, %v2892
        %vm2999 = vcmp.le.f32.partialorder %v2998, 0.7853982
        %vm3000 = vcmp.lt.s32.totalorder %v2892, 0
        %v3001 = vand.u32 %v2892, 2139095040
        %v3002 = vshrl.u32 %v3001, 23
        %v3003 = vsub.s32 %v3002, 127
        %v3004 = vand.u32 2147483647, %v2892
        %v3005 = vand.u32 %v3004, 8388607
        %v3006 = vor.u32 %v3005, 8388608
        %v3007 = vsub.s32 0, %v3006
        %v3008 = vadd.s32 %v3003, 1
        %vm3009 = vcmp.gt.s32.totalorder %v3008, 0
        %v3010 = vsel %vm3009, %v3008, 0
        %v3011 = vshrl.u32 %v3010, 5
        %v3012 = vand.u32 %v3010, 31
        %v3013 = vsub.s32 32, %v3012
        %v3014 = vshrl.u32 683565275, %v3013
        %v3015 = vshll.u32 683565275, %v3012
        %v3016 = vshrl.u32 2475754826, %v3013
        %v3017 = vor.u32 %v3015, %v3016
        %v3018 = vshll.u32 2475754826, %v3012
        %v3019 = vshrl.u32 2131351028, %v3013
        %v3020 = vor.u32 %v3018, %v3019
        %v3021 = vshll.u32 2131351028, %v3012
        %v3022 = vshrl.u32 2102212464, %v3013
        %v3023 = vor.u32 %v3021, %v3022
        %v3024 = vshll.u32 2102212464, %v3012
        %v3025 = vshrl.u32 920167782, %v3013
        %v3026 = vor.u32 %v3024, %v3025
        %v3027 = vshll.u32 920167782, %v3012
        %v3028 = vshrl.u32 1326507024, %v3013
        %v3029 = vor.u32 %v3027, %v3028
        %vm3030 = vcmp.lt.s32.totalorder %v3011, 1
        %vm3031 = vcmp.lt.s32.totalorder %v3011, 2
        %vm3032 = vcmp.lt.s32.totalorder %v3011, 3
        %vm3033 = vcmp.lt.s32.totalorder %v3011, 4
        %v3034 = vsel %vm3030, %v3014, %v3017
        %v3035 = vsel %vm3033, %v3023, 2102212464
        %v3036 = vsel %vm3032, %v3020, %v3035
        %v3037 = vsel %vm3031, %v3034, %v3036
        %v3038 = vsel %vm3030, %v3017, %v3020
        %v3039 = vsel %vm3033, %v3026, 920167782
        %v3040 = vsel %vm3032, %v3023, %v3039
        %v3041 = vsel %vm3031, %v3038, %v3040
        %v3042 = vsel %vm3030, %v3020, %v3023
        %v3043 = vsel %vm3033, %v3029, 1326507024
        %v3044 = vsel %vm3032, %v3026, %v3043
        %v3045 = vsel %vm3031, %v3042, %v3044
        %v3046 = vshll.u32 %v3006, 8
        %v3047 = vmul.u32.u64.compose %v3046, %v3045
        %v3048 = vextract.low.u32 %v3047
        %v3049 = vextract.high.u32 %v3047
        %v3050 = vmul.u32.u64.compose %v3046, %v3041
        %v3051 = vextract.low.u32 %v3050
        %v3052 = vextract.high.u32 %v3050
        %v3053 = vmul.u32 %v3046, %v3037
        %v3054 = vadd.s32 %v3049, %v3051
        %vm3055 = vc.u32 %v3049, %v3051
        %v3056 = vadd.s32 %v3052, 1
        %v3057 = vsel %vm3055, %v3056, %v3052
        %v3058 = vadd.s32 %v3053, %v3057
        %v3059 = vadd.s32 %v3058, 536870912
        %v3060 = vshrl.u32 %v3059, 30
        %v3061 = vshll.u32 %v3060, 30
        %v3062 = vsub.s32 %v3058, %v3061
        %vm3063 = vcmp.lt.s32.totalorder %v3062, 0
        %v3064 = vsub.s32 0, %v3062
        %v3065 = vsel %vm3063, %v3064, %v3062
        %v3066 = vclz %v3065
        %v3067 = vsub.s32 %v3066, 2
        %vm3068 = vcmp.gt.s32.totalorder 0, %v3067
        %v3069 = vsel %vm3068, 0, %v3067
        %v3070 = vsub.s32 32, %v3069
        %v3071 = vshll.u32 %v3062, %v3069
        %v3072 = vshrl.u32 %v3054, %v3070
        %v3073 = vor.u32 %v3071, %v3072
        %v3074 = vsub.s32 4294967266, %v3069
        %v3075 = vadd.s32 %v3074, 127
        %v3076 = vshll.u32 %v3075, 23
        %v3077 = vor.u32 4788187, %v3076
        %v3078 = vand.u32 2147483647, %v3077
        %v3080 = vcvt.s32.f32 %v3073
        %v3081 = vmul.f32 %v3080, %v3078
        %v3082 = vxor.u32 %v3081, 2147483648
        %v3083 = vsel %vm3000, %v3082, %v3081
        %v3084 = vsub.s32 4, %v3060
        %v3085 = vsel %vm3000, %v3084, %v3060
        %v3086 = vsel %vm2999, %v2892, %v3083
        %v3087 = vsel %vm2999, 0, %v3085
        %v3088 = vcosq.f32.pop %v3086
        %v3089 = vsinq.f32.pop %v3086
        %vm3090 = vweird.f32 %v2892
        %v3091 = vand.u32 %v3087, 3
        %vm3092 = vcmp.lt.s32.totalorder %v3091, 2
        %vm3093 = vcmp.eq.s32.totalorder %v3091, 0
        %v3094 = vxor.u32 %v3089, 2147483648
        %v3095 = vsel %vm3093, %v3088, %v3094
        %vm3096 = vcmp.eq.s32.totalorder %v3091, 2
        %v3097 = vxor.u32 %v3088, 2147483648
        %v3098 = vsel %vm3096, %v3097, %v3089
        %v3099 = vsel %vm3092, %v3095, %v3098
        %v3100 = vsel %vm3090, nan, %v3099
        %v3101 = vand.u32 2147483647, %v2893
        %vm3102 = vcmp.le.f32.partialorder %v3101, 0.7853982
        %vm3103 = vcmp.lt.s32.totalorder %v2893, 0
        %v3104 = vand.u32 %v2893, 2139095040
        %v3105 = vshrl.u32 %v3104, 23
        %v3106 = vsub.s32 %v3105, 127
        %v3107 = vand.u32 2147483647, %v2893
        %v3108 = vand.u32 %v3107, 8388607
        %v3109 = vor.u32 %v3108, 8388608
        %v3110 = vsub.s32 0, %v3109
        %v3111 = vadd.s32 %v3106, 1
        %vm3112 = vcmp.gt.s32.totalorder %v3111, 0
        %v3113 = vsel %vm3112, %v3111, 0
        %v3114 = vshrl.u32 %v3113, 5
        %v3115 = vand.u32 %v3113, 31
        %v3116 = vsub.s32 32, %v3115
        %v3117 = vshrl.u32 683565275, %v3116
        %v3118 = vshll.u32 683565275, %v3115
        %v3119 = vshrl.u32 2475754826, %v3116
        %v3120 = vor.u32 %v3118, %v3119
        %v3121 = vshll.u32 2475754826, %v3115
        %v3122 = vshrl.u32 2131351028, %v3116
        %v3123 = vor.u32 %v3121, %v3122
        %v3124 = vshll.u32 2131351028, %v3115
        %v3125 = vshrl.u32 2102212464, %v3116
        %v3126 = vor.u32 %v3124, %v3125
        %v3127 = vshll.u32 2102212464, %v3115
        %v3128 = vshrl.u32 920167782, %v3116
        %v3129 = vor.u32 %v3127, %v3128
        %v3130 = vshll.u32 920167782, %v3115
        %v3131 = vshrl.u32 1326507024, %v3116
        %v3132 = vor.u32 %v3130, %v3131
        %vm3133 = vcmp.lt.s32.totalorder %v3114, 1
        %vm3134 = vcmp.lt.s32.totalorder %v3114, 2
        %vm3135 = vcmp.lt.s32.totalorder %v3114, 3
        %vm3136 = vcmp.lt.s32.totalorder %v3114, 4
        %v3137 = vsel %vm3133, %v3117, %v3120
        %v3138 = vsel %vm3136, %v3126, 2102212464
        %v3139 = vsel %vm3135, %v3123, %v3138
        %v3140 = vsel %vm3134, %v3137, %v3139
        %v3141 = vsel %vm3133, %v3120, %v3123
        %v3142 = vsel %vm3136, %v3129, 920167782
        %v3143 = vsel %vm3135, %v3126, %v3142
        %v3144 = vsel %vm3134, %v3141, %v3143
        %v3145 = vsel %vm3133, %v3123, %v3126
        %v3146 = vsel %vm3136, %v3132, 1326507024
        %v3147 = vsel %vm3135, %v3129, %v3146
        %v3148 = vsel %vm3134, %v3145, %v3147
        %v3149 = vshll.u32 %v3109, 8
        %v3150 = vmul.u32.u64.compose %v3149, %v3148
        %v3151 = vextract.low.u32 %v3150
        %v3152 = vextract.high.u32 %v3150
        %v3153 = vmul.u32.u64.compose %v3149, %v3144
        %v3154 = vextract.low.u32 %v3153
        %v3155 = vextract.high.u32 %v3153
        %v3156 = vmul.u32 %v3149, %v3140
        %v3157 = vadd.s32 %v3152, %v3154
        %vm3158 = vc.u32 %v3152, %v3154
        %v3159 = vadd.s32 %v3155, 1
        %v3160 = vsel %vm3158, %v3159, %v3155
        %v3161 = vadd.s32 %v3156, %v3160
        %v3162 = vadd.s32 %v3161, 536870912
        %v3163 = vshrl.u32 %v3162, 30
        %v3164 = vshll.u32 %v3163, 30
        %v3165 = vsub.s32 %v3161, %v3164
        %vm3166 = vcmp.lt.s32.totalorder %v3165, 0
        %v3167 = vsub.s32 0, %v3165
        %v3168 = vsel %vm3166, %v3167, %v3165
        %v3169 = vclz %v3168
        %v3170 = vsub.s32 %v3169, 2
        %vm3171 = vcmp.gt.s32.totalorder 0, %v3170
        %v3172 = vsel %vm3171, 0, %v3170
        %v3173 = vsub.s32 32, %v3172
        %v3174 = vshll.u32 %v3165, %v3172
        %v3175 = vshrl.u32 %v3157, %v3173
        %v3176 = vor.u32 %v3174, %v3175
        %v3177 = vsub.s32 4294967266, %v3172
        %v3178 = vadd.s32 %v3177, 127
        %v3179 = vshll.u32 %v3178, 23
        %v3180 = vor.u32 4788187, %v3179
        %v3181 = vand.u32 2147483647, %v3180
        %v3183 = vcvt.s32.f32 %v3176
        %v3184 = vmul.f32 %v3183, %v3181
        %v3185 = vxor.u32 %v3184, 2147483648
        %v3186 = vsel %vm3103, %v3185, %v3184
        %v3187 = vsub.s32 4, %v3163
        %v3188 = vsel %vm3103, %v3187, %v3163
        %v3189 = vsel %vm3102, %v2893, %v3186
        %v3190 = vsel %vm3102, 0, %v3188
        %v3191 = vcosq.f32.pop %v3189
        %v3192 = vsinq.f32.pop %v3189
        %vm3193 = vweird.f32 %v2893
        %v3194 = vand.u32 %v3190, 3
        %vm3195 = vcmp.lt.s32.totalorder %v3194, 2
        %vm3196 = vcmp.eq.s32.totalorder %v3194, 0
        %v3197 = vxor.u32 %v3192, 2147483648
        %v3198 = vsel %vm3196, %v3191, %v3197
        %vm3199 = vcmp.eq.s32.totalorder %v3194, 2
        %v3200 = vxor.u32 %v3191, 2147483648
        %v3201 = vsel %vm3199, %v3200, %v3192
        %v3202 = vsel %vm3195, %v3198, %v3201
        %v3203 = vsel %vm3193, nan, %v3202
        %v3204 = vand.u32 2147483647, %v2894
        %vm3205 = vcmp.le.f32.partialorder %v3204, 0.7853982
        %vm3206 = vcmp.lt.s32.totalorder %v2894, 0
        %v3207 = vand.u32 %v2894, 2139095040
        %v3208 = vshrl.u32 %v3207, 23
        %v3209 = vsub.s32 %v3208, 127
        %v3210 = vand.u32 2147483647, %v2894
        %v3211 = vand.u32 %v3210, 8388607
        %v3212 = vor.u32 %v3211, 8388608
        %v3213 = vsub.s32 0, %v3212
        %v3214 = vadd.s32 %v3209, 1
        %vm3215 = vcmp.gt.s32.totalorder %v3214, 0
        %v3216 = vsel %vm3215, %v3214, 0
        %v3217 = vshrl.u32 %v3216, 5
        %v3218 = vand.u32 %v3216, 31
        %v3219 = vsub.s32 32, %v3218
        %v3220 = vshrl.u32 683565275, %v3219
        %v3221 = vshll.u32 683565275, %v3218
        %v3222 = vshrl.u32 2475754826, %v3219
        %v3223 = vor.u32 %v3221, %v3222
        %v3224 = vshll.u32 2475754826, %v3218
        %v3225 = vshrl.u32 2131351028, %v3219
        %v3226 = vor.u32 %v3224, %v3225
        %v3227 = vshll.u32 2131351028, %v3218
        %v3228 = vshrl.u32 2102212464, %v3219
        %v3229 = vor.u32 %v3227, %v3228
        %v3230 = vshll.u32 2102212464, %v3218
        %v3231 = vshrl.u32 920167782, %v3219
        %v3232 = vor.u32 %v3230, %v3231
        %v3233 = vshll.u32 920167782, %v3218
        %v3234 = vshrl.u32 1326507024, %v3219
        %v3235 = vor.u32 %v3233, %v3234
        %vm3236 = vcmp.lt.s32.totalorder %v3217, 1
        %vm3237 = vcmp.lt.s32.totalorder %v3217, 2
        %vm3238 = vcmp.lt.s32.totalorder %v3217, 3
        %vm3239 = vcmp.lt.s32.totalorder %v3217, 4
        %v3240 = vsel %vm3236, %v3220, %v3223
        %v3241 = vsel %vm3239, %v3229, 2102212464
        %v3242 = vsel %vm3238, %v3226, %v3241
        %v3243 = vsel %vm3237, %v3240, %v3242
        %v3244 = vsel %vm3236, %v3223, %v3226
        %v3245 = vsel %vm3239, %v3232, 920167782
        %v3246 = vsel %vm3238, %v3229, %v3245
        %v3247 = vsel %vm3237, %v3244, %v3246
        %v3248 = vsel %vm3236, %v3226, %v3229
        %v3249 = vsel %vm3239, %v3235, 1326507024
        %v3250 = vsel %vm3238, %v3232, %v3249
        %v3251 = vsel %vm3237, %v3248, %v3250
        %v3252 = vshll.u32 %v3212, 8
        %v3253 = vmul.u32.u64.compose %v3252, %v3251
        %v3254 = vextract.low.u32 %v3253
        %v3255 = vextract.high.u32 %v3253
        %v3256 = vmul.u32.u64.compose %v3252, %v3247
        %v3257 = vextract.low.u32 %v3256
        %v3258 = vextract.high.u32 %v3256
        %v3259 = vmul.u32 %v3252, %v3243
        %v3260 = vadd.s32 %v3255, %v3257
        %vm3261 = vc.u32 %v3255, %v3257
        %v3262 = vadd.s32 %v3258, 1
        %v3263 = vsel %vm3261, %v3262, %v3258
        %v3264 = vadd.s32 %v3259, %v3263
        %v3265 = vadd.s32 %v3264, 536870912
        %v3266 = vshrl.u32 %v3265, 30
        %v3267 = vshll.u32 %v3266, 30
        %v3268 = vsub.s32 %v3264, %v3267
        %vm3269 = vcmp.lt.s32.totalorder %v3268, 0
        %v3270 = vsub.s32 0, %v3268
        %v3271 = vsel %vm3269, %v3270, %v3268
        %v3272 = vclz %v3271
        %v3273 = vsub.s32 %v3272, 2
        %vm3274 = vcmp.gt.s32.totalorder 0, %v3273
        %v3275 = vsel %vm3274, 0, %v3273
        %v3276 = vsub.s32 32, %v3275
        %v3277 = vshll.u32 %v3268, %v3275
        %v3278 = vshrl.u32 %v3260, %v3276
        %v3279 = vor.u32 %v3277, %v3278
        %v3280 = vsub.s32 4294967266, %v3275
        %v3281 = vadd.s32 %v3280, 127
        %v3282 = vshll.u32 %v3281, 23
        %v3283 = vor.u32 4788187, %v3282
        %v3284 = vand.u32 2147483647, %v3283
        %v3286 = vcvt.s32.f32 %v3279
        %v3287 = vmul.f32 %v3286, %v3284
        %v3288 = vxor.u32 %v3287, 2147483648
        %v3289 = vsel %vm3206, %v3288, %v3287
        %v3290 = vsub.s32 4, %v3266
        %v3291 = vsel %vm3206, %v3290, %v3266
        %v3292 = vsel %vm3205, %v2894, %v3289
        %v3293 = vsel %vm3205, 0, %v3291
        %v3294 = vcosq.f32.pop %v3292
        %v3295 = vsinq.f32.pop %v3292
        %vm3296 = vweird.f32 %v2894
        %v3297 = vand.u32 %v3293, 3
        %vm3298 = vcmp.lt.s32.totalorder %v3297, 2
        %vm3299 = vcmp.eq.s32.totalorder %v3297, 0
        %v3300 = vxor.u32 %v3295, 2147483648
        %v3301 = vsel %vm3299, %v3294, %v3300
        %vm3302 = vcmp.eq.s32.totalorder %v3297, 2
        %v3303 = vxor.u32 %v3294, 2147483648
        %v3304 = vsel %vm3302, %v3303, %v3295
        %v3305 = vsel %vm3298, %v3301, %v3304
        %v3306 = vsel %vm3296, nan, %v3305
        %v3307 = vsub.f32 1.0, %v2997
        %v3308 = vsub.f32 1.0, %v3100
        %v3309 = vsub.f32 1.0, %v3203
        %v3310 = vsub.f32 1.0, %v3306
        %3312 = vset.pattern.permute.xlu0 0
        %3313 = vperm.xlu0 %3312, %v2862
        %v3314 = vpop.permute.xlu0 %3313
        %3317 = vset.pattern.permute.xlu0 0
        %3318 = vperm.xlu0 %3317, %v2863
        %v3319 = vpop.permute.xlu0 %3318
        %3322 = vset.pattern.permute.xlu0 0
        %3323 = vperm.xlu0 %3322, %v2864
        %v3324 = vpop.permute.xlu0 %3323
        %3327 = vset.pattern.permute.xlu0 0
        %3328 = vperm.xlu0 %3327, %v2865
        %v3329 = vpop.permute.xlu0 %3328
        %v3331 = vmul.f32 %v3314, %v3307
        %v3332 = vmul.f32 %v3319, %v3308
        %v3333 = vmul.f32 %v3324, %v3309
        %v3334 = vmul.f32 %v3329, %v3310
        %v3335 = vadd.f32 %v2857, %v3331
        %v3336 = vadd.f32 %v2858, %v3332
        %v3337 = vadd.f32 %v2859, %v3333
        %v3338 = vadd.f32 %v2860, %v3334
        %v3339 = vpack.c.bf16 %v3336, %v3335
        %v3340 = vpack.c.bf16 %v3338, %v3337
        %3341 = vst [vmem:[#allocation3 + $0x8] sm:$0xff] %v3339
        %3342 = vst [vmem:[#allocation3 + $0x20] sm:$0xff] %v3340
        %v3343 = vld [vmem:[#allocation3 + $0x8] sm:$0xff]
        %v3344 = vld [vmem:[#allocation3 + $0x20] sm:$0xff]
        %3347 = vrot.lane.b32.xlu0 %v3343, 126
        %v3348 = vpop.permute.xlu0 %3347
        %3349 = vrot.lane.b32.xlu0 %v3344, 126
        %v3350 = vpop.permute.xlu0 %3349
        %3353 = vst.msk [vmem:[#allocation3] sm:$0xff] %vm1974, %v3348
        %3354 = vst.msk [vmem:[#allocation3 + $0x18] sm:$0xff] %vm1974, %v3350
        %v3355 = vld [vmem:[#allocation3 + $0x8] sm:$0xff]
        %v3356 = vld [vmem:[#allocation3 + $0x20] sm:$0xff]
        %3359 = vrot.lane.b32.xlu0 %v3355, 2
        %v3360 = vpop.permute.xlu0 %3359
        %3361 = vrot.lane.b32.xlu0 %v3356, 2
        %v3362 = vpop.permute.xlu0 %3361
        %3365 = vst.msk [vmem:[#allocation3 + $0x10] sm:$0xff] %vm1987, %v3360
        %3366 = vst.msk [vmem:[#allocation3 + $0x28] sm:$0xff] %vm1987, %v3362
        %s3367 = scalar_lea.vmem [#allocation15], 32
        %v3368 = vld [vmem:[%s3367] sm:$0xff]
        %v3369 = vld [vmem:[%s3367 + $0x8] sm:$0xff]
        %v3370 = vld [vmem:[%s3367 + $0x10] sm:$0xff]
        %v3371 = vld [vmem:[%s3367 + $0x18] sm:$0xff]
        %s3372 = scalar_lea.vmem [#allocation13], 48
        %v3373 = vld [vmem:[%s3372] sm:$0xf]
        %v3374 = vld [vmem:[%s3372 + $0x4] sm:$0xf]
        %v3375 = vld [vmem:[%s3372 + $0x8] sm:$0xf]
        %v3376 = vld [vmem:[%s3372 + $0xc] sm:$0xf]
        %v3377 = vld [vmem:[#allocation3] sm:$0xff]
        %v3378 = vld [vmem:[#allocation3 + $0x8] sm:$0xff]
        %v3379 = vld [vmem:[#allocation3 + $0x18] sm:$0xff]
        %v3380 = vld [vmem:[#allocation3 + $0x20] sm:$0xff]
        %v3385 = vunpack.c.l.b16 %v3373
        %v3386 = vunpack.c.l.b16 %v3374
        %v3387 = vunpack.c.l.b16 %v3375
        %v3388 = vunpack.c.l.b16 %v3376
        %v3389 = vpack.c.b16 %v3386, %v3385
        %v3390 = vpack.c.b16 %v3388, %v3387
        %3395 = vrot.lane.b32.xlu0 %v3377, 1
        %v3396 = vpop.permute.xlu0 %3395
        %3397 = vrot.lane.b32.xlu0 %v3378, 1
        %v3398 = vpop.permute.xlu0 %3397
        %3399 = vrot.lane.b32.xlu0 %v3379, 1
        %v3400 = vpop.permute.xlu0 %3399
        %3401 = vrot.lane.b32.xlu0 %v3380, 1
        %v3402 = vpop.permute.xlu0 %3401
        %v3403 = vsel %vm2024, %v3396, %v3398
        %v3404 = vsel %vm2024, %v3400, %v3402
        %v3408 = vsel %vm2029, %v3389, 0
        %v3411 = vsel %vm2029, %v3390, 0
        %3413 = vmatprep.subr.bf16.mxu0 0
        %3414 = vmatpush1.bf16.msra.mxu0 %v3403
        %3415 = vmatprep.subr.bf16.mxu0 0
        %3416 = vmatpush1.bf16.msra.mxu0 %v3404
        %3417 = vmatprep.subr.bf16.mxu0 0
        %3418 = vmatpush1.bf16.msra.mxu0 0
        %3419 = vmatprep.subr.bf16.mxu0 0
        %3420 = vmatpush1.bf16.msra.mxu0 0
        %3421 = vmatprep.subr.bf16.mxu0 0
        %3422 = vmatpush1.bf16.msra.mxu0 0
        %3423 = vmatprep.subr.bf16.mxu0 0
        %3424 = vmatpush1.bf16.msra.mxu0 0
        %3425 = vmatprep.subr.bf16.mxu0 0
        %3426 = vmatpush1.bf16.msra.mxu0 0
        %3427 = vmatprep.subr.bf16.mxu0 0
        %3428 = vmatpush1.bf16.msra.mxu0 0
        %3429 = vmatprep.subr.bf16.mxu0 0
        %3430 = vmatpush1.bf16.msra.mxu0 0
        %3431 = vmatprep.subr.bf16.mxu0 0
        %3432 = vmatpush1.bf16.msra.mxu0 0
        %3433 = vmatprep.subr.bf16.mxu0 0
        %3434 = vmatpush1.bf16.msra.mxu0 0
        %3435 = vmatprep.subr.bf16.mxu0 0
        %3436 = vmatpush1.bf16.msra.mxu0 0
        %3437 = vmatprep.subr.bf16.mxu0 0
        %3438 = vmatpush1.bf16.msra.mxu0 0
        %3439 = vmatprep.subr.bf16.mxu0 0
        %3440 = vmatpush1.bf16.msra.mxu0 0
        %3441 = vmatprep.subr.bf16.mxu0 0
        %3442 = vmatpush1.bf16.msra.mxu0 0
        %3443 = vmatprep.subr.bf16.mxu0 0
        %3444 = vmatpush1.bf16.msra.mxu0 0
        %3445 = vmatprep.mubr.bf16.mxu0 0
        %3446 = vmatmul.mubr.bf16.gmra.mrb[0].mxu0 %v3408
        %v3447 = vpop.f32.mrb[0].mxu0
        %v3448 = vadd.f32 0.0, %v3447
        %v3449 = vpop.f32.mrb[0].mxu0
        %v3450 = vpop.f32.mrb[0].mxu0
        %v3451 = vadd.f32 0.0, %v3450
        %v3452 = vpop.f32.mrb[0].mxu0
        %3453 = vmatprep.mubr.bf16.mxu0 0
        %3454 = vmatmul.mubr.bf16.gmra.mrb[0].mxu0 %v3411
        %v3455 = vpop.f32.mrb[0].mxu0
        %v3456 = vadd.f32 0.0, %v3455
        %v3457 = vpop.f32.mrb[0].mxu0
        %v3458 = vpop.f32.mrb[0].mxu0
        %v3459 = vadd.f32 0.0, %v3458
        %v3460 = vpop.f32.mrb[0].mxu0
        %3461 = vdwg.mxu0
        %3463 = vset.pattern.permute.xlu0 0
        %3464 = vperm.xlu0 %3463, %v3368
        %v3465 = vpop.permute.xlu0 %3464
        %3468 = vset.pattern.permute.xlu0 0
        %3469 = vperm.xlu0 %3468, %v3369
        %v3470 = vpop.permute.xlu0 %3469
        %3473 = vset.pattern.permute.xlu0 0
        %3474 = vperm.xlu0 %3473, %v3370
        %v3475 = vpop.permute.xlu0 %3474
        %3478 = vset.pattern.permute.xlu0 0
        %3479 = vperm.xlu0 %3478, %v3371
        %v3480 = vpop.permute.xlu0 %3479
        %v3482 = vadd.f32 %v3465, %v3448
        %v3483 = vadd.f32 %v3470, %v3451
        %v3484 = vadd.f32 %v3475, %v3456
        %v3485 = vadd.f32 %v3480, %v3459
        %s3486 = scalar_lea.vmem [#allocation13], 64
        %v3487 = vld [vmem:[%s3486] sm:$0xf]
        %v3488 = vld [vmem:[%s3486 + $0x4] sm:$0xf]
        %v3489 = vld [vmem:[%s3486 + $0x8] sm:$0xf]
        %v3490 = vld [vmem:[%s3486 + $0xc] sm:$0xf]
        %v3495 = vunpack.c.l.b16 %v3487
        %v3496 = vunpack.c.l.b16 %v3488
        %v3497 = vunpack.c.l.b16 %v3489
        %v3498 = vunpack.c.l.b16 %v3490
        %v3499 = vpack.c.b16 %v3496, %v3495
        %v3500 = vpack.c.b16 %v3498, %v3497
        %v3502 = vsel %vm2029, %v3499, 0
        %v3505 = vsel %vm2029, %v3500, 0
        %3507 = vmatprep.subr.bf16.mxu0 0
        %3508 = vmatpush1.bf16.msra.mxu0 %v3378
        %3509 = vmatprep.subr.bf16.mxu0 0
        %3510 = vmatpush1.bf16.msra.mxu0 %v3380
        %3511 = vmatprep.subr.bf16.mxu0 0
        %3512 = vmatpush1.bf16.msra.mxu0 0
        %3513 = vmatprep.subr.bf16.mxu0 0
        %3514 = vmatpush1.bf16.msra.mxu0 0
        %3515 = vmatprep.subr.bf16.mxu0 0
        %3516 = vmatpush1.bf16.msra.mxu0 0
        %3517 = vmatprep.subr.bf16.mxu0 0
        %3518 = vmatpush1.bf16.msra.mxu0 0
        %3519 = vmatprep.subr.bf16.mxu0 0
        %3520 = vmatpush1.bf16.msra.mxu0 0
        %3521 = vmatprep.subr.bf16.mxu0 0
        %3522 = vmatpush1.bf16.msra.mxu0 0
        %3523 = vmatprep.subr.bf16.mxu0 0
        %3524 = vmatpush1.bf16.msra.mxu0 0
        %3525 = vmatprep.subr.bf16.mxu0 0
        %3526 = vmatpush1.bf16.msra.mxu0 0
        %3527 = vmatprep.subr.bf16.mxu0 0
        %3528 = vmatpush1.bf16.msra.mxu0 0
        %3529 = vmatprep.subr.bf16.mxu0 0
        %3530 = vmatpush1.bf16.msra.mxu0 0
        %3531 = vmatprep.subr.bf16.mxu0 0
        %3532 = vmatpush1.bf16.msra.mxu0 0
        %3533 = vmatprep.subr.bf16.mxu0 0
        %3534 = vmatpush1.bf16.msra.mxu0 0
        %3535 = vmatprep.subr.bf16.mxu0 0
        %3536 = vmatpush1.bf16.msra.mxu0 0
        %3537 = vmatprep.subr.bf16.mxu0 0
        %3538 = vmatpush1.bf16.msra.mxu0 0
        %3539 = vmatprep.mubr.bf16.mxu0 0
        %3540 = vmatmul.mubr.bf16.gmra.mrb[0].mxu0 %v3502
        %v3541 = vpop.f32.mrb[0].mxu0
        %v3542 = vadd.f32 0.0, %v3541
        %v3543 = vpop.f32.mrb[0].mxu0
        %v3544 = vpop.f32.mrb[0].mxu0
        %v3545 = vadd.f32 0.0, %v3544
        %v3546 = vpop.f32.mrb[0].mxu0
        %3547 = vmatprep.mubr.bf16.mxu0 0
        %3548 = vmatmul.mubr.bf16.gmra.mrb[0].mxu0 %v3505
        %v3549 = vpop.f32.mrb[0].mxu0
        %v3550 = vadd.f32 0.0, %v3549
        %v3551 = vpop.f32.mrb[0].mxu0
        %v3552 = vpop.f32.mrb[0].mxu0
        %v3553 = vadd.f32 0.0, %v3552
        %v3554 = vpop.f32.mrb[0].mxu0
        %3555 = vdwg.mxu0
        %v3556 = vadd.f32 %v3482, %v3542
        %v3557 = vadd.f32 %v3483, %v3545
        %v3558 = vadd.f32 %v3484, %v3550
        %v3559 = vadd.f32 %v3485, %v3553
        %s3560 = scalar_lea.vmem [#allocation13], 80
        %v3561 = vld [vmem:[%s3560] sm:$0xf]
        %v3562 = vld [vmem:[%s3560 + $0x4] sm:$0xf]
        %v3563 = vld [vmem:[%s3560 + $0x8] sm:$0xf]
        %v3564 = vld [vmem:[%s3560 + $0xc] sm:$0xf]
        %v3565 = vld [vmem:[#allocation3 + $0x8] sm:$0xff]
        %v3566 = vld [vmem:[#allocation3 + $0x10] sm:$0xff]
        %v3567 = vld [vmem:[#allocation3 + $0x20] sm:$0xff]
        %v3568 = vld [vmem:[#allocation3 + $0x28] sm:$0xff]
        %v3573 = vunpack.c.l.b16 %v3561
        %v3574 = vunpack.c.l.b16 %v3562
        %v3575 = vunpack.c.l.b16 %v3563
        %v3576 = vunpack.c.l.b16 %v3564
        %v3577 = vpack.c.b16 %v3574, %v3573
        %v3578 = vpack.c.b16 %v3576, %v3575
        %3583 = vrot.lane.b32.xlu0 %v3565, 127
        %v3584 = vpop.permute.xlu0 %3583
        %3585 = vrot.lane.b32.xlu0 %v3566, 127
        %v3586 = vpop.permute.xlu0 %3585
        %3587 = vrot.lane.b32.xlu0 %v3567, 127
        %v3588 = vpop.permute.xlu0 %3587
        %3589 = vrot.lane.b32.xlu0 %v3568, 127
        %v3590 = vpop.permute.xlu0 %3589
        %v3591 = vsel %vm2214, %v3584, %v3586
        %v3592 = vsel %vm2214, %v3588, %v3590
        %v3596 = vsel %vm2029, %v3577, 0
        %v3599 = vsel %vm2029, %v3578, 0
        %3601 = vmatprep.subr.bf16.mxu0 0
        %3602 = vmatpush1.bf16.msra.mxu0 %v3591
        %3603 = vmatprep.subr.bf16.mxu0 0
        %3604 = vmatpush1.bf16.msra.mxu0 %v3592
        %3605 = vmatprep.subr.bf16.mxu0 0
        %3606 = vmatpush1.bf16.msra.mxu0 0
        %3607 = vmatprep.subr.bf16.mxu0 0
        %3608 = vmatpush1.bf16.msra.mxu0 0
        %3609 = vmatprep.subr.bf16.mxu0 0
        %3610 = vmatpush1.bf16.msra.mxu0 0
        %3611 = vmatprep.subr.bf16.mxu0 0
        %3612 = vmatpush1.bf16.msra.mxu0 0
        %3613 = vmatprep.subr.bf16.mxu0 0
        %3614 = vmatpush1.bf16.msra.mxu0 0
        %3615 = vmatprep.subr.bf16.mxu0 0
        %3616 = vmatpush1.bf16.msra.mxu0 0
        %3617 = vmatprep.subr.bf16.mxu0 0
        %3618 = vmatpush1.bf16.msra.mxu0 0
        %3619 = vmatprep.subr.bf16.mxu0 0
        %3620 = vmatpush1.bf16.msra.mxu0 0
        %3621 = vmatprep.subr.bf16.mxu0 0
        %3622 = vmatpush1.bf16.msra.mxu0 0
        %3623 = vmatprep.subr.bf16.mxu0 0
        %3624 = vmatpush1.bf16.msra.mxu0 0
        %3625 = vmatprep.subr.bf16.mxu0 0
        %3626 = vmatpush1.bf16.msra.mxu0 0
        %3627 = vmatprep.subr.bf16.mxu0 0
        %3628 = vmatpush1.bf16.msra.mxu0 0
        %3629 = vmatprep.subr.bf16.mxu0 0
        %3630 = vmatpush1.bf16.msra.mxu0 0
        %3631 = vmatprep.subr.bf16.mxu0 0
        %3632 = vmatpush1.bf16.msra.mxu0 0
        %3633 = vmatprep.mubr.bf16.mxu0 0
        %3634 = vmatmul.mubr.bf16.gmra.mrb[0].mxu0 %v3596
        %v3635 = vpop.f32.mrb[0].mxu0
        %v3636 = vadd.f32 0.0, %v3635
        %v3637 = vpop.f32.mrb[0].mxu0
        %v3638 = vpop.f32.mrb[0].mxu0
        %v3639 = vadd.f32 0.0, %v3638
        %v3640 = vpop.f32.mrb[0].mxu0
        %3641 = vmatprep.mubr.bf16.mxu0 0
        %3642 = vmatmul.mubr.bf16.gmra.mrb[0].mxu0 %v3599
        %v3643 = vpop.f32.mrb[0].mxu0
        %v3644 = vadd.f32 0.0, %v3643
        %v3645 = vpop.f32.mrb[0].mxu0
        %v3646 = vpop.f32.mrb[0].mxu0
        %v3647 = vadd.f32 0.0, %v3646
        %v3648 = vpop.f32.mrb[0].mxu0
        %3649 = vdwg.mxu0
        %v3650 = vadd.f32 %v3556, %v3636
        %v3651 = vadd.f32 %v3557, %v3639
        %v3652 = vadd.f32 %v3558, %v3644
        %v3653 = vadd.f32 %v3559, %v3647
        %v3654 = vadd.f32 %v3650, %v865
        %v3655 = vadd.f32 %v3651, %v866
        %v3656 = vadd.f32 %v3652, %v867
        %v3657 = vadd.f32 %v3653, %v868
        %3658 = vst [vmem:[%s489] sm:$0xff] %v3654
        %3659 = vst [vmem:[%s489 + $0x8] sm:$0xff] %v3655
        %3660 = vst [vmem:[%s489 + $0x10] sm:$0xff] %v3656
        %3661 = vst [vmem:[%s489 + $0x18] sm:$0xff] %v3657
        %v3662 = vld [vmem:[%s489] sm:$0xff]
        %v3663 = vld [vmem:[%s489 + $0x8] sm:$0xff]
        %v3664 = vld [vmem:[%s489 + $0x10] sm:$0xff]
        %v3665 = vld [vmem:[%s489 + $0x18] sm:$0xff]
        %s3666 = scalar_lea.vmem [#allocation10], 64
        %v3667 = vld [vmem:[%s3666] sm:$0xf]
        %v3668 = vld [vmem:[%s3666 + $0x4] sm:$0xf]
        %v3669 = vld [vmem:[%s3666 + $0x8] sm:$0xf]
        %v3670 = vld [vmem:[%s3666 + $0xc] sm:$0xf]
        %v3671 = vld [vmem:[%s3666 + $0x10] sm:$0xf]
        %v3672 = vld [vmem:[%s3666 + $0x14] sm:$0xf]
        %v3673 = vld [vmem:[%s3666 + $0x18] sm:$0xf]
        %v3674 = vld [vmem:[%s3666 + $0x1c] sm:$0xf]
        %s3675 = scalar_lea.vmem [#allocation12], 128
        %v3676 = vld [vmem:[%s3675] sm:$0xff]
        %v3677 = vld [vmem:[%s3675 + $0x8] sm:$0xff]
        %v3678 = vld [vmem:[%s3675 + $0x10] sm:$0xff]
        %v3679 = vld [vmem:[%s3675 + $0x18] sm:$0xff]
        %v3680 = vld [vmem:[%s3675 + $0x20] sm:$0xff]
        %v3681 = vld [vmem:[%s3675 + $0x28] sm:$0xff]
        %v3682 = vld [vmem:[%s3675 + $0x30] sm:$0xff]
        %v3683 = vld [vmem:[%s3675 + $0x38] sm:$0xff]
        %3685 = vset.pattern.permute.xlu0 0
        %3686 = vperm.xlu0 %3685, %v3676
        %v3687 = vpop.permute.xlu0 %3686
        %3690 = vset.pattern.permute.xlu0 0
        %3691 = vperm.xlu0 %3690, %v3677
        %v3692 = vpop.permute.xlu0 %3691
        %3695 = vset.pattern.permute.xlu0 0
        %3696 = vperm.xlu0 %3695, %v3678
        %v3697 = vpop.permute.xlu0 %3696
        %3700 = vset.pattern.permute.xlu0 0
        %3701 = vperm.xlu0 %3700, %v3679
        %v3702 = vpop.permute.xlu0 %3701
        %3705 = vset.pattern.permute.xlu0 0
        %3706 = vperm.xlu0 %3705, %v3680
        %v3707 = vpop.permute.xlu0 %3706
        %3710 = vset.pattern.permute.xlu0 0
        %3711 = vperm.xlu0 %3710, %v3681
        %v3712 = vpop.permute.xlu0 %3711
        %3715 = vset.pattern.permute.xlu0 0
        %3716 = vperm.xlu0 %3715, %v3682
        %v3717 = vpop.permute.xlu0 %3716
        %3720 = vset.pattern.permute.xlu0 0
        %3721 = vperm.xlu0 %3720, %v3683
        %v3722 = vpop.permute.xlu0 %3721
        %v3732 = vunpack.c.l.b16 %v3667
        %v3733 = vunpack.c.l.b16 %v3668
        %v3734 = vunpack.c.l.b16 %v3669
        %v3735 = vunpack.c.l.b16 %v3670
        %v3736 = vunpack.c.l.b16 %v3671
        %v3737 = vunpack.c.l.b16 %v3672
        %v3738 = vunpack.c.l.b16 %v3673
        %v3739 = vunpack.c.l.b16 %v3674
        %v3740 = vpack.c.b16 %v3733, %v3732
        %v3741 = vpack.c.b16 %v3735, %v3734
        %v3742 = vpack.c.b16 %v3737, %v3736
        %v3743 = vpack.c.b16 %v3739, %v3738
        %v3745 = vsel %vm978, %v3740, 0
        %v3748 = vsel %vm978, %v3741, 0
        %v3751 = vsel %vm978, %v3742, 0
        %v3754 = vsel %vm978, %v3743, 0
        %3756 = vmatprep.subr.bf16.mxu0 0
        %3757 = vmatpush1.bf16.msra.mxu0 %v970
        %3758 = vmatprep.subr.bf16.mxu0 0
        %3759 = vmatpush1.bf16.msra.mxu0 %v971
        %3760 = vmatprep.subr.bf16.mxu0 0
        %3761 = vmatpush1.bf16.msra.mxu0 %v972
        %3762 = vmatprep.subr.bf16.mxu0 0
        %3763 = vmatpush1.bf16.msra.mxu0 %v973
        %3764 = vmatprep.subr.bf16.mxu0 0
        %3765 = vmatpush1.bf16.msra.mxu0 0
        %3766 = vmatprep.subr.bf16.mxu0 0
        %3767 = vmatpush1.bf16.msra.mxu0 0
        %3768 = vmatprep.subr.bf16.mxu0 0
        %3769 = vmatpush1.bf16.msra.mxu0 0
        %3770 = vmatprep.subr.bf16.mxu0 0
        %3771 = vmatpush1.bf16.msra.mxu0 0
        %3772 = vmatprep.subr.bf16.mxu0 0
        %3773 = vmatpush1.bf16.msra.mxu0 0
        %3774 = vmatprep.subr.bf16.mxu0 0
        %3775 = vmatpush1.bf16.msra.mxu0 0
        %3776 = vmatprep.subr.bf16.mxu0 0
        %3777 = vmatpush1.bf16.msra.mxu0 0
        %3778 = vmatprep.subr.bf16.mxu0 0
        %3779 = vmatpush1.bf16.msra.mxu0 0
        %3780 = vmatprep.subr.bf16.mxu0 0
        %3781 = vmatpush1.bf16.msra.mxu0 0
        %3782 = vmatprep.subr.bf16.mxu0 0
        %3783 = vmatpush1.bf16.msra.mxu0 0
        %3784 = vmatprep.subr.bf16.mxu0 0
        %3785 = vmatpush1.bf16.msra.mxu0 0
        %3786 = vmatprep.subr.bf16.mxu0 0
        %3787 = vmatpush1.bf16.msra.mxu0 0
        %3788 = vmatprep.mubr.bf16.mxu0 0
        %3789 = vmatmul.mubr.bf16.gmra.mrb[0].mxu0 %v3745
        %v3790 = vpop.f32.mrb[0].mxu0
        %v3791 = vadd.f32 %v3687, %v3790
        %v3792 = vpop.f32.mrb[0].mxu0
        %v3793 = vpop.f32.mrb[0].mxu0
        %v3794 = vadd.f32 %v3692, %v3793
        %v3795 = vpop.f32.mrb[0].mxu0
        %3796 = vmatprep.mubr.bf16.mxu0 0
        %3797 = vmatmul.mubr.bf16.gmra.mrb[0].mxu0 %v3748
        %v3798 = vpop.f32.mrb[0].mxu0
        %v3799 = vadd.f32 %v3697, %v3798
        %v3800 = vpop.f32.mrb[0].mxu0
        %v3801 = vpop.f32.mrb[0].mxu0
        %v3802 = vadd.f32 %v3702, %v3801
        %v3803 = vpop.f32.mrb[0].mxu0
        %3804 = vmatprep.mubr.bf16.mxu0 0
        %3805 = vmatmul.mubr.bf16.gmra.mrb[0].mxu0 %v3751
        %v3806 = vpop.f32.mrb[0].mxu0
        %v3807 = vadd.f32 %v3707, %v3806
        %v3808 = vpop.f32.mrb[0].mxu0
        %v3809 = vpop.f32.mrb[0].mxu0
        %v3810 = vadd.f32 %v3712, %v3809
        %v3811 = vpop.f32.mrb[0].mxu0
        %3812 = vmatprep.mubr.bf16.mxu0 0
        %3813 = vmatmul.mubr.bf16.gmra.mrb[0].mxu0 %v3754
        %v3814 = vpop.f32.mrb[0].mxu0
        %v3815 = vadd.f32 %v3717, %v3814
        %v3816 = vpop.f32.mrb[0].mxu0
        %v3817 = vpop.f32.mrb[0].mxu0
        %v3818 = vadd.f32 %v3722, %v3817
        %v3819 = vpop.f32.mrb[0].mxu0
        %3820 = vdwg.mxu0
        %3821 = vst [vmem:[#allocation2 + $0x8] sm:$0xff] %v3662
        %3822 = vst [vmem:[#allocation2 + $0x20] sm:$0xff] %v3663
        %3823 = vst [vmem:[#allocation2 + $0x38] sm:$0xff] %v3664
        %3824 = vst [vmem:[#allocation2 + $0x50] sm:$0xff] %v3665
        %v3825 = vld [vmem:[#allocation2] sm:$0xff]
        %v3826 = vld [vmem:[#allocation2 + $0x8] sm:$0xff]
        %v3827 = vld [vmem:[#allocation2 + $0x18] sm:$0xff]
        %v3828 = vld [vmem:[#allocation2 + $0x20] sm:$0xff]
        %v3829 = vld [vmem:[#allocation2 + $0x30] sm:$0xff]
        %v3830 = vld [vmem:[#allocation2 + $0x38] sm:$0xff]
        %v3831 = vld [vmem:[#allocation2 + $0x48] sm:$0xff]
        %v3832 = vld [vmem:[#allocation2 + $0x50] sm:$0xff]
        %3841 = vrot.lane.b32.xlu0 %v3825, 127
        %v3842 = vpop.permute.xlu0 %3841
        %3843 = vrot.lane.b32.xlu0 %v3826, 127
        %v3844 = vpop.permute.xlu0 %3843
        %3845 = vrot.lane.b32.xlu0 %v3827, 127
        %v3846 = vpop.permute.xlu0 %3845
        %3847 = vrot.lane.b32.xlu0 %v3828, 127
        %v3848 = vpop.permute.xlu0 %3847
        %3849 = vrot.lane.b32.xlu0 %v3829, 127
        %v3850 = vpop.permute.xlu0 %3849
        %3851 = vrot.lane.b32.xlu0 %v3830, 127
        %v3852 = vpop.permute.xlu0 %3851
        %3853 = vrot.lane.b32.xlu0 %v3831, 127
        %v3854 = vpop.permute.xlu0 %3853
        %3855 = vrot.lane.b32.xlu0 %v3832, 127
        %v3856 = vpop.permute.xlu0 %3855
        %v3857 = vsel %vm590, %v3842, %v3844
        %v3858 = vsel %vm590, %v3846, %v3848
        %v3859 = vsel %vm590, %v3850, %v3852
        %v3860 = vsel %vm590, %v3854, %v3856
        %v3869 = vadd.f32 %v3825, %v3857
        %v3870 = vadd.f32 %v3826, %v3844
        %v3871 = vadd.f32 %v3827, %v3858
        %v3872 = vadd.f32 %v3828, %v3848
        %v3873 = vadd.f32 %v3829, %v3859
        %v3874 = vadd.f32 %v3830, %v3852
        %v3875 = vadd.f32 %v3831, %v3860
        %v3876 = vadd.f32 %v3832, %v3856
        %3877 = vrot.lane.b32.xlu0 %v3826, 126
        %v3878 = vpop.permute.xlu0 %3877
        %3879 = vrot.lane.b32.xlu0 %v3828, 126
        %v3880 = vpop.permute.xlu0 %3879
        %3881 = vrot.lane.b32.xlu0 %v3830, 126
        %v3882 = vpop.permute.xlu0 %3881
        %3883 = vrot.lane.b32.xlu0 %v3832, 126
        %v3884 = vpop.permute.xlu0 %3883
        %v3889 = vadd.f32 %v3869, %v3878
        %v3890 = vadd.f32 %v3870, %v3878
        %v3891 = vadd.f32 %v3871, %v3880
        %v3892 = vadd.f32 %v3872, %v3880
        %v3893 = vadd.f32 %v3873, %v3882
        %v3894 = vadd.f32 %v3874, %v3882
        %v3895 = vadd.f32 %v3875, %v3884
        %v3896 = vadd.f32 %v3876, %v3884
        %v3897 = vld [vmem:[#allocation2 + $0x10] sm:$0xff]
        %v3898 = vld [vmem:[#allocation2 + $0x28] sm:$0xff]
        %v3899 = vld [vmem:[#allocation2 + $0x40] sm:$0xff]
        %v3900 = vld [vmem:[#allocation2 + $0x58] sm:$0xff]
        %3905 = vrot.lane.b32.xlu0 %v3826, 125
        %v3906 = vpop.permute.xlu0 %3905
        %3907 = vrot.lane.b32.xlu0 %v3897, 125
        %v3908 = vpop.permute.xlu0 %3907
        %3909 = vrot.lane.b32.xlu0 %v3828, 125
        %v3910 = vpop.permute.xlu0 %3909
        %3911 = vrot.lane.b32.xlu0 %v3898, 125
        %v3912 = vpop.permute.xlu0 %3911
        %3913 = vrot.lane.b32.xlu0 %v3830, 125
        %v3914 = vpop.permute.xlu0 %3913
        %3915 = vrot.lane.b32.xlu0 %v3899, 125
        %v3916 = vpop.permute.xlu0 %3915
        %3917 = vrot.lane.b32.xlu0 %v3832, 125
        %v3918 = vpop.permute.xlu0 %3917
        %3919 = vrot.lane.b32.xlu0 %v3900, 125
        %v3920 = vpop.permute.xlu0 %3919
        %v3921 = vsel %vm719, %v3906, %v3908
        %v3922 = vsel %vm719, %v3910, %v3912
        %v3923 = vsel %vm719, %v3914, %v3916
        %v3924 = vsel %vm719, %v3918, %v3920
        %v3933 = vadd.f32 %v3889, %v3906
        %v3934 = vadd.f32 %v3890, %v3921
        %v3935 = vadd.f32 %v3891, %v3910
        %v3936 = vadd.f32 %v3892, %v3922
        %v3937 = vadd.f32 %v3893, %v3914
        %v3938 = vadd.f32 %v3894, %v3923
        %v3939 = vadd.f32 %v3895, %v3918
        %v3940 = vadd.f32 %v3896, %v3924
        %3941 = vrot.lane.b32.xlu0 %v3826, 124
        %v3942 = vpop.permute.xlu0 %3941
        %3943 = vrot.lane.b32.xlu0 %v3897, 124
        %v3944 = vpop.permute.xlu0 %3943
        %3945 = vrot.lane.b32.xlu0 %v3828, 124
        %v3946 = vpop.permute.xlu0 %3945
        %3947 = vrot.lane.b32.xlu0 %v3898, 124
        %v3948 = vpop.permute.xlu0 %3947
        %3949 = vrot.lane.b32.xlu0 %v3830, 124
        %v3950 = vpop.permute.xlu0 %3949
        %3951 = vrot.lane.b32.xlu0 %v3899, 124
        %v3952 = vpop.permute.xlu0 %3951
        %3953 = vrot.lane.b32.xlu0 %v3832, 124
        %v3954 = vpop.permute.xlu0 %3953
        %3955 = vrot.lane.b32.xlu0 %v3900, 124
        %v3956 = vpop.permute.xlu0 %3955
        %v3957 = vsel %vm792, %v3942, %v3944
        %v3958 = vsel %vm792, %v3946, %v3948
        %v3959 = vsel %vm792, %v3950, %v3952
        %v3960 = vsel %vm792, %v3954, %v3956
        %v3969 = vadd.f32 %v3933, %v3942
        %v3970 = vadd.f32 %v3934, %v3957
        %v3971 = vadd.f32 %v3935, %v3946
        %v3972 = vadd.f32 %v3936, %v3958
        %v3973 = vadd.f32 %v3937, %v3950
        %v3974 = vadd.f32 %v3938, %v3959
        %v3975 = vadd.f32 %v3939, %v3954
        %v3976 = vadd.f32 %v3940, %v3960
        %v3977 = vmul.f32 %v3969, %v839
        %v3978 = vmul.f32 %v3970, %v839
        %v3979 = vmul.f32 %v3971, %v839
        %v3980 = vmul.f32 %v3972, %v839
        %v3981 = vmul.f32 %v3973, %v839
        %v3982 = vmul.f32 %v3974, %v839
        %v3983 = vmul.f32 %v3975, %v839
        %v3984 = vmul.f32 %v3976, %v839
        %3993 = vrot.lane.b32.xlu0 %v3977, 2
        %v3994 = vpop.permute.xlu0 %3993
        %3995 = vrot.lane.b32.xlu0 %v3978, 2
        %v3996 = vpop.permute.xlu0 %3995
        %3997 = vrot.lane.b32.xlu0 %v3979, 2
        %v3998 = vpop.permute.xlu0 %3997
        %3999 = vrot.lane.b32.xlu0 %v3980, 2
        %v4000 = vpop.permute.xlu0 %3999
        %4001 = vrot.lane.b32.xlu0 %v3981, 2
        %v4002 = vpop.permute.xlu0 %4001
        %4003 = vrot.lane.b32.xlu0 %v3982, 2
        %v4004 = vpop.permute.xlu0 %4003
        %4005 = vrot.lane.b32.xlu0 %v3983, 2
        %v4006 = vpop.permute.xlu0 %4005
        %4007 = vrot.lane.b32.xlu0 %v3984, 2
        %v4008 = vpop.permute.xlu0 %4007
        %v4009 = vsel %vm501, %v3994, %v3996
        %v4010 = vsel %vm501, %v3998, %v4000
        %v4011 = vsel %vm501, %v4002, %v4004
        %v4012 = vsel %vm501, %v4006, %v4008
        %v4017 = vsub.f32 %v3662, %v4009
        %v4018 = vsub.f32 %v3663, %v4010
        %v4019 = vsub.f32 %v3664, %v4011
        %v4020 = vsub.f32 %v3665, %v4012
        %v4021 = vmul.f32 %v4017, %v4017
        %v4022 = vmul.f32 %v4018, %v4018
        %v4023 = vmul.f32 %v4019, %v4019
        %v4024 = vmul.f32 %v4020, %v4020
        %4025 = vst [vmem:[#allocation2 + $0x8] sm:$0xff] %v4021
        %4026 = vst [vmem:[#allocation2 + $0x20] sm:$0xff] %v4022
        %4027 = vst [vmem:[#allocation2 + $0x38] sm:$0xff] %v4023
        %4028 = vst [vmem:[#allocation2 + $0x50] sm:$0xff] %v4024
        %v4029 = vld [vmem:[#allocation2] sm:$0xff]
        %v4030 = vld [vmem:[#allocation2 + $0x8] sm:$0xff]
        %v4031 = vld [vmem:[#allocation2 + $0x18] sm:$0xff]
        %v4032 = vld [vmem:[#allocation2 + $0x20] sm:$0xff]
        %v4033 = vld [vmem:[#allocation2 + $0x30] sm:$0xff]
        %v4034 = vld [vmem:[#allocation2 + $0x38] sm:$0xff]
        %v4035 = vld [vmem:[#allocation2 + $0x48] sm:$0xff]
        %v4036 = vld [vmem:[#allocation2 + $0x50] sm:$0xff]
        %4045 = vrot.lane.b32.xlu0 %v4029, 127
        %v4046 = vpop.permute.xlu0 %4045
        %4047 = vrot.lane.b32.xlu0 %v4030, 127
        %v4048 = vpop.permute.xlu0 %4047
        %4049 = vrot.lane.b32.xlu0 %v4031, 127
        %v4050 = vpop.permute.xlu0 %4049
        %4051 = vrot.lane.b32.xlu0 %v4032, 127
        %v4052 = vpop.permute.xlu0 %4051
        %4053 = vrot.lane.b32.xlu0 %v4033, 127
        %v4054 = vpop.permute.xlu0 %4053
        %4055 = vrot.lane.b32.xlu0 %v4034, 127
        %v4056 = vpop.permute.xlu0 %4055
        %4057 = vrot.lane.b32.xlu0 %v4035, 127
        %v4058 = vpop.permute.xlu0 %4057
        %4059 = vrot.lane.b32.xlu0 %v4036, 127
        %v4060 = vpop.permute.xlu0 %4059
        %v4061 = vsel %vm590, %v4046, %v4048
        %v4062 = vsel %vm590, %v4050, %v4052
        %v4063 = vsel %vm590, %v4054, %v4056
        %v4064 = vsel %vm590, %v4058, %v4060
        %v4073 = vadd.f32 %v4029, %v4061
        %v4074 = vadd.f32 %v4030, %v4048
        %v4075 = vadd.f32 %v4031, %v4062
        %v4076 = vadd.f32 %v4032, %v4052
        %v4077 = vadd.f32 %v4033, %v4063
        %v4078 = vadd.f32 %v4034, %v4056
        %v4079 = vadd.f32 %v4035, %v4064
        %v4080 = vadd.f32 %v4036, %v4060
        %4081 = vrot.lane.b32.xlu0 %v4030, 126
        %v4082 = vpop.permute.xlu0 %4081
        %4083 = vrot.lane.b32.xlu0 %v4032, 126
        %v4084 = vpop.permute.xlu0 %4083
        %4085 = vrot.lane.b32.xlu0 %v4034, 126
        %v4086 = vpop.permute.xlu0 %4085
        %4087 = vrot.lane.b32.xlu0 %v4036, 126
        %v4088 = vpop.permute.xlu0 %4087
        %v4093 = vadd.f32 %v4073, %v4082
        %v4094 = vadd.f32 %v4074, %v4082
        %v4095 = vadd.f32 %v4075, %v4084
        %v4096 = vadd.f32 %v4076, %v4084
        %v4097 = vadd.f32 %v4077, %v4086
        %v4098 = vadd.f32 %v4078, %v4086
        %v4099 = vadd.f32 %v4079, %v4088
        %v4100 = vadd.f32 %v4080, %v4088
        %v4101 = vld [vmem:[#allocation2 + $0x10] sm:$0xff]
        %v4102 = vld [vmem:[#allocation2 + $0x28] sm:$0xff]
        %v4103 = vld [vmem:[#allocation2 + $0x40] sm:$0xff]
        %v4104 = vld [vmem:[#allocation2 + $0x58] sm:$0xff]
        %4109 = vrot.lane.b32.xlu0 %v4030, 125
        %v4110 = vpop.permute.xlu0 %4109
        %4111 = vrot.lane.b32.xlu0 %v4101, 125
        %v4112 = vpop.permute.xlu0 %4111
        %4113 = vrot.lane.b32.xlu0 %v4032, 125
        %v4114 = vpop.permute.xlu0 %4113
        %4115 = vrot.lane.b32.xlu0 %v4102, 125
        %v4116 = vpop.permute.xlu0 %4115
        %4117 = vrot.lane.b32.xlu0 %v4034, 125
        %v4118 = vpop.permute.xlu0 %4117
        %4119 = vrot.lane.b32.xlu0 %v4103, 125
        %v4120 = vpop.permute.xlu0 %4119
        %4121 = vrot.lane.b32.xlu0 %v4036, 125
        %v4122 = vpop.permute.xlu0 %4121
        %4123 = vrot.lane.b32.xlu0 %v4104, 125
        %v4124 = vpop.permute.xlu0 %4123
        %v4125 = vsel %vm719, %v4110, %v4112
        %v4126 = vsel %vm719, %v4114, %v4116
        %v4127 = vsel %vm719, %v4118, %v4120
        %v4128 = vsel %vm719, %v4122, %v4124
        %v4137 = vadd.f32 %v4093, %v4110
        %v4138 = vadd.f32 %v4094, %v4125
        %v4139 = vadd.f32 %v4095, %v4114
        %v4140 = vadd.f32 %v4096, %v4126
        %v4141 = vadd.f32 %v4097, %v4118
        %v4142 = vadd.f32 %v4098, %v4127
        %v4143 = vadd.f32 %v4099, %v4122
        %v4144 = vadd.f32 %v4100, %v4128
        %4145 = vrot.lane.b32.xlu0 %v4030, 124
        %v4146 = vpop.permute.xlu0 %4145
        %4147 = vrot.lane.b32.xlu0 %v4101, 124
        %v4148 = vpop.permute.xlu0 %4147
        %4149 = vrot.lane.b32.xlu0 %v4032, 124
        %v4150 = vpop.permute.xlu0 %4149
        %4151 = vrot.lane.b32.xlu0 %v4102, 124
        %v4152 = vpop.permute.xlu0 %4151
        %4153 = vrot.lane.b32.xlu0 %v4034, 124
        %v4154 = vpop.permute.xlu0 %4153
        %4155 = vrot.lane.b32.xlu0 %v4103, 124
        %v4156 = vpop.permute.xlu0 %4155
        %4157 = vrot.lane.b32.xlu0 %v4036, 124
        %v4158 = vpop.permute.xlu0 %4157
        %4159 = vrot.lane.b32.xlu0 %v4104, 124
        %v4160 = vpop.permute.xlu0 %4159
        %v4161 = vsel %vm792, %v4146, %v4148
        %v4162 = vsel %vm792, %v4150, %v4152
        %v4163 = vsel %vm792, %v4154, %v4156
        %v4164 = vsel %vm792, %v4158, %v4160
        %v4173 = vadd.f32 %v4137, %v4146
        %v4174 = vadd.f32 %v4138, %v4161
        %v4175 = vadd.f32 %v4139, %v4150
        %v4176 = vadd.f32 %v4140, %v4162
        %v4177 = vadd.f32 %v4141, %v4154
        %v4178 = vadd.f32 %v4142, %v4163
        %v4179 = vadd.f32 %v4143, %v4158
        %v4180 = vadd.f32 %v4144, %v4164
        %v4181 = vmul.f32 %v4173, %v839
        %v4182 = vmul.f32 %v4174, %v839
        %v4183 = vmul.f32 %v4175, %v839
        %v4184 = vmul.f32 %v4176, %v839
        %v4185 = vmul.f32 %v4177, %v839
        %v4186 = vmul.f32 %v4178, %v839
        %v4187 = vmul.f32 %v4179, %v839
        %v4188 = vmul.f32 %v4180, %v839
        %v4189 = vadd.f32 %v4181, 1e-09
        %v4190 = vadd.f32 %v4182, 1e-09
        %v4191 = vadd.f32 %v4183, 1e-09
        %v4192 = vadd.f32 %v4184, 1e-09
        %v4193 = vadd.f32 %v4185, 1e-09
        %v4194 = vadd.f32 %v4186, 1e-09
        %v4195 = vadd.f32 %v4187, 1e-09
        %v4196 = vadd.f32 %v4188, 1e-09
        %v4197 = vrsqrt.pop %v4189
        %v4198 = vrsqrt.pop %v4190
        %v4199 = vrsqrt.pop %v4191
        %v4200 = vrsqrt.pop %v4192
        %v4201 = vrsqrt.pop %v4193
        %v4202 = vrsqrt.pop %v4194
        %v4203 = vrsqrt.pop %v4195
        %v4204 = vrsqrt.pop %v4196
        %4213 = vrot.lane.b32.xlu0 %v4197, 2
        %v4214 = vpop.permute.xlu0 %4213
        %4215 = vrot.lane.b32.xlu0 %v4198, 2
        %v4216 = vpop.permute.xlu0 %4215
        %4217 = vrot.lane.b32.xlu0 %v4199, 2
        %v4218 = vpop.permute.xlu0 %4217
        %4219 = vrot.lane.b32.xlu0 %v4200, 2
        %v4220 = vpop.permute.xlu0 %4219
        %4221 = vrot.lane.b32.xlu0 %v4201, 2
        %v4222 = vpop.permute.xlu0 %4221
        %4223 = vrot.lane.b32.xlu0 %v4202, 2
        %v4224 = vpop.permute.xlu0 %4223
        %4225 = vrot.lane.b32.xlu0 %v4203, 2
        %v4226 = vpop.permute.xlu0 %4225
        %4227 = vrot.lane.b32.xlu0 %v4204, 2
        %v4228 = vpop.permute.xlu0 %4227
        %v4229 = vsel %vm501, %v4214, %v4216
        %v4230 = vsel %vm501, %v4218, %v4220
        %v4231 = vsel %vm501, %v4222, %v4224
        %v4232 = vsel %vm501, %v4226, %v4228
        %v4237 = vmul.f32 %v4017, %v4229
        %v4238 = vmul.f32 %v4018, %v4230
        %v4239 = vmul.f32 %v4019, %v4231
        %v4240 = vmul.f32 %v4020, %v4232
        %v4241 = vmul.f32 %v3791, %v4237
        %v4242 = vmul.f32 %v3794, %v4238
        %v4243 = vmul.f32 %v3799, %v4239
        %v4244 = vmul.f32 %v3802, %v4240
        %v4245 = vadd.f32 %v4241, %v3807
        %v4246 = vadd.f32 %v4242, %v3810
        %v4247 = vadd.f32 %v4243, %v3815
        %v4248 = vadd.f32 %v4244, %v3818
        %s4249 = scalar_lea.vmem [#allocation18], 64
        %v4250 = vld [vmem:[%s4249] sm:$0xff]
        %v4251 = vld [vmem:[%s4249 + $0x8] sm:$0xff]
        %v4252 = vld [vmem:[%s4249 + $0x10] sm:$0xff]
        %v4253 = vld [vmem:[%s4249 + $0x18] sm:$0xff]
        %s4254 = scalar_lea.vmem [#allocation16], 64
        %v4255 = vld [vmem:[%s4254] sm:$0xff]
        %v4256 = vld [vmem:[%s4254 + $0x8] sm:$0xff]
        %v4257 = vld [vmem:[%s4254 + $0x10] sm:$0xff]
        %v4258 = vld [vmem:[%s4254 + $0x18] sm:$0xff]
        %4260 = vset.pattern.permute.xlu0 0
        %4261 = vperm.xlu0 %4260, %v4255
        %v4262 = vpop.permute.xlu0 %4261
        %4265 = vset.pattern.permute.xlu0 0
        %4266 = vperm.xlu0 %4265, %v4256
        %v4267 = vpop.permute.xlu0 %4266
        %4270 = vset.pattern.permute.xlu0 0
        %4271 = vperm.xlu0 %4270, %v4257
        %v4272 = vpop.permute.xlu0 %4271
        %4275 = vset.pattern.permute.xlu0 0
        %4276 = vperm.xlu0 %4275, %v4258
        %v4277 = vpop.permute.xlu0 %4276
        %v4279 = vmul.f32 %v4262, %v4245
        %v4280 = vmul.f32 %v4267, %v4246
        %v4281 = vmul.f32 %v4272, %v4247
        %v4282 = vmul.f32 %v4277, %v4248
        %v4283 = vand.u32 2147483647, %v4279
        %vm4284 = vcmp.le.f32.partialorder %v4283, 0.7853982
        %vm4285 = vcmp.lt.s32.totalorder %v4279, 0
        %v4286 = vand.u32 %v4279, 2139095040
        %v4287 = vshrl.u32 %v4286, 23
        %v4288 = vsub.s32 %v4287, 127
        %v4289 = vand.u32 2147483647, %v4279
        %v4290 = vand.u32 %v4289, 8388607
        %v4291 = vor.u32 %v4290, 8388608
        %v4292 = vsub.s32 0, %v4291
        %v4293 = vadd.s32 %v4288, 1
        %vm4294 = vcmp.gt.s32.totalorder %v4293, 0
        %v4295 = vsel %vm4294, %v4293, 0
        %v4296 = vshrl.u32 %v4295, 5
        %v4297 = vand.u32 %v4295, 31
        %v4298 = vsub.s32 32, %v4297
        %v4299 = vshrl.u32 683565275, %v4298
        %v4300 = vshll.u32 683565275, %v4297
        %v4301 = vshrl.u32 2475754826, %v4298
        %v4302 = vor.u32 %v4300, %v4301
        %v4303 = vshll.u32 2475754826, %v4297
        %v4304 = vshrl.u32 2131351028, %v4298
        %v4305 = vor.u32 %v4303, %v4304
        %v4306 = vshll.u32 2131351028, %v4297
        %v4307 = vshrl.u32 2102212464, %v4298
        %v4308 = vor.u32 %v4306, %v4307
        %v4309 = vshll.u32 2102212464, %v4297
        %v4310 = vshrl.u32 920167782, %v4298
        %v4311 = vor.u32 %v4309, %v4310
        %v4312 = vshll.u32 920167782, %v4297
        %v4313 = vshrl.u32 1326507024, %v4298
        %v4314 = vor.u32 %v4312, %v4313
        %vm4315 = vcmp.lt.s32.totalorder %v4296, 1
        %vm4316 = vcmp.lt.s32.totalorder %v4296, 2
        %vm4317 = vcmp.lt.s32.totalorder %v4296, 3
        %vm4318 = vcmp.lt.s32.totalorder %v4296, 4
        %v4319 = vsel %vm4315, %v4299, %v4302
        %v4320 = vsel %vm4318, %v4308, 2102212464
        %v4321 = vsel %vm4317, %v4305, %v4320
        %v4322 = vsel %vm4316, %v4319, %v4321
        %v4323 = vsel %vm4315, %v4302, %v4305
        %v4324 = vsel %vm4318, %v4311, 920167782
        %v4325 = vsel %vm4317, %v4308, %v4324
        %v4326 = vsel %vm4316, %v4323, %v4325
        %v4327 = vsel %vm4315, %v4305, %v4308
        %v4328 = vsel %vm4318, %v4314, 1326507024
        %v4329 = vsel %vm4317, %v4311, %v4328
        %v4330 = vsel %vm4316, %v4327, %v4329
        %v4331 = vshll.u32 %v4291, 8
        %v4332 = vmul.u32.u64.compose %v4331, %v4330
        %v4333 = vextract.low.u32 %v4332
        %v4334 = vextract.high.u32 %v4332
        %v4335 = vmul.u32.u64.compose %v4331, %v4326
        %v4336 = vextract.low.u32 %v4335
        %v4337 = vextract.high.u32 %v4335
        %v4338 = vmul.u32 %v4331, %v4322
        %v4339 = vadd.s32 %v4334, %v4336
        %vm4340 = vc.u32 %v4334, %v4336
        %v4341 = vadd.s32 %v4337, 1
        %v4342 = vsel %vm4340, %v4341, %v4337
        %v4343 = vadd.s32 %v4338, %v4342
        %v4344 = vadd.s32 %v4343, 536870912
        %v4345 = vshrl.u32 %v4344, 30
        %v4346 = vshll.u32 %v4345, 30
        %v4347 = vsub.s32 %v4343, %v4346
        %vm4348 = vcmp.lt.s32.totalorder %v4347, 0
        %v4349 = vsub.s32 0, %v4347
        %v4350 = vsel %vm4348, %v4349, %v4347
        %v4351 = vclz %v4350
        %v4352 = vsub.s32 %v4351, 2
        %vm4353 = vcmp.gt.s32.totalorder 0, %v4352
        %v4354 = vsel %vm4353, 0, %v4352
        %v4355 = vsub.s32 32, %v4354
        %v4356 = vshll.u32 %v4347, %v4354
        %v4357 = vshrl.u32 %v4339, %v4355
        %v4358 = vor.u32 %v4356, %v4357
        %v4359 = vsub.s32 4294967266, %v4354
        %v4360 = vadd.s32 %v4359, 127
        %v4361 = vshll.u32 %v4360, 23
        %v4362 = vor.u32 4788187, %v4361
        %v4363 = vand.u32 2147483647, %v4362
        %v4365 = vcvt.s32.f32 %v4358
        %v4366 = vmul.f32 %v4365, %v4363
        %v4367 = vxor.u32 %v4366, 2147483648
        %v4368 = vsel %vm4285, %v4367, %v4366
        %v4369 = vsub.s32 4, %v4345
        %v4370 = vsel %vm4285, %v4369, %v4345
        %v4371 = vsel %vm4284, %v4279, %v4368
        %v4372 = vsel %vm4284, 0, %v4370
        %v4373 = vcosq.f32.pop %v4371
        %v4374 = vsinq.f32.pop %v4371
        %vm4375 = vweird.f32 %v4279
        %v4376 = vand.u32 %v4372, 3
        %vm4377 = vcmp.lt.s32.totalorder %v4376, 2
        %vm4378 = vcmp.eq.s32.totalorder %v4376, 0
        %v4379 = vxor.u32 %v4374, 2147483648
        %v4380 = vsel %vm4378, %v4373, %v4379
        %vm4381 = vcmp.eq.s32.totalorder %v4376, 2
        %v4382 = vxor.u32 %v4373, 2147483648
        %v4383 = vsel %vm4381, %v4382, %v4374
        %v4384 = vsel %vm4377, %v4380, %v4383
        %v4385 = vsel %vm4375, nan, %v4384
        %v4386 = vand.u32 2147483647, %v4280
        %vm4387 = vcmp.le.f32.partialorder %v4386, 0.7853982
        %vm4388 = vcmp.lt.s32.totalorder %v4280, 0
        %v4389 = vand.u32 %v4280, 2139095040
        %v4390 = vshrl.u32 %v4389, 23
        %v4391 = vsub.s32 %v4390, 127
        %v4392 = vand.u32 2147483647, %v4280
        %v4393 = vand.u32 %v4392, 8388607
        %v4394 = vor.u32 %v4393, 8388608
        %v4395 = vsub.s32 0, %v4394
        %v4396 = vadd.s32 %v4391, 1
        %vm4397 = vcmp.gt.s32.totalorder %v4396, 0
        %v4398 = vsel %vm4397, %v4396, 0
        %v4399 = vshrl.u32 %v4398, 5
        %v4400 = vand.u32 %v4398, 31
        %v4401 = vsub.s32 32, %v4400
        %v4402 = vshrl.u32 683565275, %v4401
        %v4403 = vshll.u32 683565275, %v4400
        %v4404 = vshrl.u32 2475754826, %v4401
        %v4405 = vor.u32 %v4403, %v4404
        %v4406 = vshll.u32 2475754826, %v4400
        %v4407 = vshrl.u32 2131351028, %v4401
        %v4408 = vor.u32 %v4406, %v4407
        %v4409 = vshll.u32 2131351028, %v4400
        %v4410 = vshrl.u32 2102212464, %v4401
        %v4411 = vor.u32 %v4409, %v4410
        %v4412 = vshll.u32 2102212464, %v4400
        %v4413 = vshrl.u32 920167782, %v4401
        %v4414 = vor.u32 %v4412, %v4413
        %v4415 = vshll.u32 920167782, %v4400
        %v4416 = vshrl.u32 1326507024, %v4401
        %v4417 = vor.u32 %v4415, %v4416
        %vm4418 = vcmp.lt.s32.totalorder %v4399, 1
        %vm4419 = vcmp.lt.s32.totalorder %v4399, 2
        %vm4420 = vcmp.lt.s32.totalorder %v4399, 3
        %vm4421 = vcmp.lt.s32.totalorder %v4399, 4
        %v4422 = vsel %vm4418, %v4402, %v4405
        %v4423 = vsel %vm4421, %v4411, 2102212464
        %v4424 = vsel %vm4420, %v4408, %v4423
        %v4425 = vsel %vm4419, %v4422, %v4424
        %v4426 = vsel %vm4418, %v4405, %v4408
        %v4427 = vsel %vm4421, %v4414, 920167782
        %v4428 = vsel %vm4420, %v4411, %v4427
        %v4429 = vsel %vm4419, %v4426, %v4428
        %v4430 = vsel %vm4418, %v4408, %v4411
        %v4431 = vsel %vm4421, %v4417, 1326507024
        %v4432 = vsel %vm4420, %v4414, %v4431
        %v4433 = vsel %vm4419, %v4430, %v4432
        %v4434 = vshll.u32 %v4394, 8
        %v4435 = vmul.u32.u64.compose %v4434, %v4433
        %v4436 = vextract.low.u32 %v4435
        %v4437 = vextract.high.u32 %v4435
        %v4438 = vmul.u32.u64.compose %v4434, %v4429
        %v4439 = vextract.low.u32 %v4438
        %v4440 = vextract.high.u32 %v4438
        %v4441 = vmul.u32 %v4434, %v4425
        %v4442 = vadd.s32 %v4437, %v4439
        %vm4443 = vc.u32 %v4437, %v4439
        %v4444 = vadd.s32 %v4440, 1
        %v4445 = vsel %vm4443, %v4444, %v4440
        %v4446 = vadd.s32 %v4441, %v4445
        %v4447 = vadd.s32 %v4446, 536870912
        %v4448 = vshrl.u32 %v4447, 30
        %v4449 = vshll.u32 %v4448, 30
        %v4450 = vsub.s32 %v4446, %v4449
        %vm4451 = vcmp.lt.s32.totalorder %v4450, 0
        %v4452 = vsub.s32 0, %v4450
        %v4453 = vsel %vm4451, %v4452, %v4450
        %v4454 = vclz %v4453
        %v4455 = vsub.s32 %v4454, 2
        %vm4456 = vcmp.gt.s32.totalorder 0, %v4455
        %v4457 = vsel %vm4456, 0, %v4455
        %v4458 = vsub.s32 32, %v4457
        %v4459 = vshll.u32 %v4450, %v4457
        %v4460 = vshrl.u32 %v4442, %v4458
        %v4461 = vor.u32 %v4459, %v4460
        %v4462 = vsub.s32 4294967266, %v4457
        %v4463 = vadd.s32 %v4462, 127
        %v4464 = vshll.u32 %v4463, 23
        %v4465 = vor.u32 4788187, %v4464
        %v4466 = vand.u32 2147483647, %v4465
        %v4468 = vcvt.s32.f32 %v4461
        %v4469 = vmul.f32 %v4468, %v4466
        %v4470 = vxor.u32 %v4469, 2147483648
        %v4471 = vsel %vm4388, %v4470, %v4469
        %v4472 = vsub.s32 4, %v4448
        %v4473 = vsel %vm4388, %v4472, %v4448
        %v4474 = vsel %vm4387, %v4280, %v4471
        %v4475 = vsel %vm4387, 0, %v4473
        %v4476 = vcosq.f32.pop %v4474
        %v4477 = vsinq.f32.pop %v4474
        %vm4478 = vweird.f32 %v4280
        %v4479 = vand.u32 %v4475, 3
        %vm4480 = vcmp.lt.s32.totalorder %v4479, 2
        %vm4481 = vcmp.eq.s32.totalorder %v4479, 0
        %v4482 = vxor.u32 %v4477, 2147483648
        %v4483 = vsel %vm4481, %v4476, %v4482
        %vm4484 = vcmp.eq.s32.totalorder %v4479, 2
        %v4485 = vxor.u32 %v4476, 2147483648
        %v4486 = vsel %vm4484, %v4485, %v4477
        %v4487 = vsel %vm4480, %v4483, %v4486
        %v4488 = vsel %vm4478, nan, %v4487
        %v4489 = vand.u32 2147483647, %v4281
        %vm4490 = vcmp.le.f32.partialorder %v4489, 0.7853982
        %vm4491 = vcmp.lt.s32.totalorder %v4281, 0
        %v4492 = vand.u32 %v4281, 2139095040
        %v4493 = vshrl.u32 %v4492, 23
        %v4494 = vsub.s32 %v4493, 127
        %v4495 = vand.u32 2147483647, %v4281
        %v4496 = vand.u32 %v4495, 8388607
        %v4497 = vor.u32 %v4496, 8388608
        %v4498 = vsub.s32 0, %v4497
        %v4499 = vadd.s32 %v4494, 1
        %vm4500 = vcmp.gt.s32.totalorder %v4499, 0
        %v4501 = vsel %vm4500, %v4499, 0
        %v4502 = vshrl.u32 %v4501, 5
        %v4503 = vand.u32 %v4501, 31
        %v4504 = vsub.s32 32, %v4503
        %v4505 = vshrl.u32 683565275, %v4504
        %v4506 = vshll.u32 683565275, %v4503
        %v4507 = vshrl.u32 2475754826, %v4504
        %v4508 = vor.u32 %v4506, %v4507
        %v4509 = vshll.u32 2475754826, %v4503
        %v4510 = vshrl.u32 2131351028, %v4504
        %v4511 = vor.u32 %v4509, %v4510
        %v4512 = vshll.u32 2131351028, %v4503
        %v4513 = vshrl.u32 2102212464, %v4504
        %v4514 = vor.u32 %v4512, %v4513
        %v4515 = vshll.u32 2102212464, %v4503
        %v4516 = vshrl.u32 920167782, %v4504
        %v4517 = vor.u32 %v4515, %v4516
        %v4518 = vshll.u32 920167782, %v4503
        %v4519 = vshrl.u32 1326507024, %v4504
        %v4520 = vor.u32 %v4518, %v4519
        %vm4521 = vcmp.lt.s32.totalorder %v4502, 1
        %vm4522 = vcmp.lt.s32.totalorder %v4502, 2
        %vm4523 = vcmp.lt.s32.totalorder %v4502, 3
        %vm4524 = vcmp.lt.s32.totalorder %v4502, 4
        %v4525 = vsel %vm4521, %v4505, %v4508
        %v4526 = vsel %vm4524, %v4514, 2102212464
        %v4527 = vsel %vm4523, %v4511, %v4526
        %v4528 = vsel %vm4522, %v4525, %v4527
        %v4529 = vsel %vm4521, %v4508, %v4511
        %v4530 = vsel %vm4524, %v4517, 920167782
        %v4531 = vsel %vm4523, %v4514, %v4530
        %v4532 = vsel %vm4522, %v4529, %v4531
        %v4533 = vsel %vm4521, %v4511, %v4514
        %v4534 = vsel %vm4524, %v4520, 1326507024
        %v4535 = vsel %vm4523, %v4517, %v4534
        %v4536 = vsel %vm4522, %v4533, %v4535
        %v4537 = vshll.u32 %v4497, 8
        %v4538 = vmul.u32.u64.compose %v4537, %v4536
        %v4539 = vextract.low.u32 %v4538
        %v4540 = vextract.high.u32 %v4538
        %v4541 = vmul.u32.u64.compose %v4537, %v4532
        %v4542 = vextract.low.u32 %v4541
        %v4543 = vextract.high.u32 %v4541
        %v4544 = vmul.u32 %v4537, %v4528
        %v4545 = vadd.s32 %v4540, %v4542
        %vm4546 = vc.u32 %v4540, %v4542
        %v4547 = vadd.s32 %v4543, 1
        %v4548 = vsel %vm4546, %v4547, %v4543
        %v4549 = vadd.s32 %v4544, %v4548
        %v4550 = vadd.s32 %v4549, 536870912
        %v4551 = vshrl.u32 %v4550, 30
        %v4552 = vshll.u32 %v4551, 30
        %v4553 = vsub.s32 %v4549, %v4552
        %vm4554 = vcmp.lt.s32.totalorder %v4553, 0
        %v4555 = vsub.s32 0, %v4553
        %v4556 = vsel %vm4554, %v4555, %v4553
        %v4557 = vclz %v4556
        %v4558 = vsub.s32 %v4557, 2
        %vm4559 = vcmp.gt.s32.totalorder 0, %v4558
        %v4560 = vsel %vm4559, 0, %v4558
        %v4561 = vsub.s32 32, %v4560
        %v4562 = vshll.u32 %v4553, %v4560
        %v4563 = vshrl.u32 %v4545, %v4561
        %v4564 = vor.u32 %v4562, %v4563
        %v4565 = vsub.s32 4294967266, %v4560
        %v4566 = vadd.s32 %v4565, 127
        %v4567 = vshll.u32 %v4566, 23
        %v4568 = vor.u32 4788187, %v4567
        %v4569 = vand.u32 2147483647, %v4568
        %v4571 = vcvt.s32.f32 %v4564
        %v4572 = vmul.f32 %v4571, %v4569
        %v4573 = vxor.u32 %v4572, 2147483648
        %v4574 = vsel %vm4491, %v4573, %v4572
        %v4575 = vsub.s32 4, %v4551
        %v4576 = vsel %vm4491, %v4575, %v4551
        %v4577 = vsel %vm4490, %v4281, %v4574
        %v4578 = vsel %vm4490, 0, %v4576
        %v4579 = vcosq.f32.pop %v4577
        %v4580 = vsinq.f32.pop %v4577
        %vm4581 = vweird.f32 %v4281
        %v4582 = vand.u32 %v4578, 3
        %vm4583 = vcmp.lt.s32.totalorder %v4582, 2
        %vm4584 = vcmp.eq.s32.totalorder %v4582, 0
        %v4585 = vxor.u32 %v4580, 2147483648
        %v4586 = vsel %vm4584, %v4579, %v4585
        %vm4587 = vcmp.eq.s32.totalorder %v4582, 2
        %v4588 = vxor.u32 %v4579, 2147483648
        %v4589 = vsel %vm4587, %v4588, %v4580
        %v4590 = vsel %vm4583, %v4586, %v4589
        %v4591 = vsel %vm4581, nan, %v4590
        %v4592 = vand.u32 2147483647, %v4282
        %vm4593 = vcmp.le.f32.partialorder %v4592, 0.7853982
        %vm4594 = vcmp.lt.s32.totalorder %v4282, 0
        %v4595 = vand.u32 %v4282, 2139095040
        %v4596 = vshrl.u32 %v4595, 23
        %v4597 = vsub.s32 %v4596, 127
        %v4598 = vand.u32 2147483647, %v4282
        %v4599 = vand.u32 %v4598, 8388607
        %v4600 = vor.u32 %v4599, 8388608
        %v4601 = vsub.s32 0, %v4600
        %v4602 = vadd.s32 %v4597, 1
        %vm4603 = vcmp.gt.s32.totalorder %v4602, 0
        %v4604 = vsel %vm4603, %v4602, 0
        %v4605 = vshrl.u32 %v4604, 5
        %v4606 = vand.u32 %v4604, 31
        %v4607 = vsub.s32 32, %v4606
        %v4608 = vshrl.u32 683565275, %v4607
        %v4609 = vshll.u32 683565275, %v4606
        %v4610 = vshrl.u32 2475754826, %v4607
        %v4611 = vor.u32 %v4609, %v4610
        %v4612 = vshll.u32 2475754826, %v4606
        %v4613 = vshrl.u32 2131351028, %v4607
        %v4614 = vor.u32 %v4612, %v4613
        %v4615 = vshll.u32 2131351028, %v4606
        %v4616 = vshrl.u32 2102212464, %v4607
        %v4617 = vor.u32 %v4615, %v4616
        %v4618 = vshll.u32 2102212464, %v4606
        %v4619 = vshrl.u32 920167782, %v4607
        %v4620 = vor.u32 %v4618, %v4619
        %v4621 = vshll.u32 920167782, %v4606
        %v4622 = vshrl.u32 1326507024, %v4607
        %v4623 = vor.u32 %v4621, %v4622
        %vm4624 = vcmp.lt.s32.totalorder %v4605, 1
        %vm4625 = vcmp.lt.s32.totalorder %v4605, 2
        %vm4626 = vcmp.lt.s32.totalorder %v4605, 3
        %vm4627 = vcmp.lt.s32.totalorder %v4605, 4
        %v4628 = vsel %vm4624, %v4608, %v4611
        %v4629 = vsel %vm4627, %v4617, 2102212464
        %v4630 = vsel %vm4626, %v4614, %v4629
        %v4631 = vsel %vm4625, %v4628, %v4630
        %v4632 = vsel %vm4624, %v4611, %v4614
        %v4633 = vsel %vm4627, %v4620, 920167782
        %v4634 = vsel %vm4626, %v4617, %v4633
        %v4635 = vsel %vm4625, %v4632, %v4634
        %v4636 = vsel %vm4624, %v4614, %v4617
        %v4637 = vsel %vm4627, %v4623, 1326507024
        %v4638 = vsel %vm4626, %v4620, %v4637
        %v4639 = vsel %vm4625, %v4636, %v4638
        %v4640 = vshll.u32 %v4600, 8
        %v4641 = vmul.u32.u64.compose %v4640, %v4639
        %v4642 = vextract.low.u32 %v4641
        %v4643 = vextract.high.u32 %v4641
        %v4644 = vmul.u32.u64.compose %v4640, %v4635
        %v4645 = vextract.low.u32 %v4644
        %v4646 = vextract.high.u32 %v4644
        %v4647 = vmul.u32 %v4640, %v4631
        %v4648 = vadd.s32 %v4643, %v4645
        %vm4649 = vc.u32 %v4643, %v4645
        %v4650 = vadd.s32 %v4646, 1
        %v4651 = vsel %vm4649, %v4650, %v4646
        %v4652 = vadd.s32 %v4647, %v4651
        %v4653 = vadd.s32 %v4652, 536870912
        %v4654 = vshrl.u32 %v4653, 30
        %v4655 = vshll.u32 %v4654, 30
        %v4656 = vsub.s32 %v4652, %v4655
        %vm4657 = vcmp.lt.s32.totalorder %v4656, 0
        %v4658 = vsub.s32 0, %v4656
        %v4659 = vsel %vm4657, %v4658, %v4656
        %v4660 = vclz %v4659
        %v4661 = vsub.s32 %v4660, 2
        %vm4662 = vcmp.gt.s32.totalorder 0, %v4661
        %v4663 = vsel %vm4662, 0, %v4661
        %v4664 = vsub.s32 32, %v4663
        %v4665 = vshll.u32 %v4656, %v4663
        %v4666 = vshrl.u32 %v4648, %v4664
        %v4667 = vor.u32 %v4665, %v4666
        %v4668 = vsub.s32 4294967266, %v4663
        %v4669 = vadd.s32 %v4668, 127
        %v4670 = vshll.u32 %v4669, 23
        %v4671 = vor.u32 4788187, %v4670
        %v4672 = vand.u32 2147483647, %v4671
        %v4674 = vcvt.s32.f32 %v4667
        %v4675 = vmul.f32 %v4674, %v4672
        %v4676 = vxor.u32 %v4675, 2147483648
        %v4677 = vsel %vm4594, %v4676, %v4675
        %v4678 = vsub.s32 4, %v4654
        %v4679 = vsel %vm4594, %v4678, %v4654
        %v4680 = vsel %vm4593, %v4282, %v4677
        %v4681 = vsel %vm4593, 0, %v4679
        %v4682 = vcosq.f32.pop %v4680
        %v4683 = vsinq.f32.pop %v4680
        %vm4684 = vweird.f32 %v4282
        %v4685 = vand.u32 %v4681, 3
        %vm4686 = vcmp.lt.s32.totalorder %v4685, 2
        %vm4687 = vcmp.eq.s32.totalorder %v4685, 0
        %v4688 = vxor.u32 %v4683, 2147483648
        %v4689 = vsel %vm4687, %v4682, %v4688
        %vm4690 = vcmp.eq.s32.totalorder %v4685, 2
        %v4691 = vxor.u32 %v4682, 2147483648
        %v4692 = vsel %vm4690, %v4691, %v4683
        %v4693 = vsel %vm4686, %v4689, %v4692
        %v4694 = vsel %vm4684, nan, %v4693
        %v4695 = vsub.f32 1.0, %v4385
        %v4696 = vsub.f32 1.0, %v4488
        %v4697 = vsub.f32 1.0, %v4591
        %v4698 = vsub.f32 1.0, %v4694
        %4700 = vset.pattern.permute.xlu0 0
        %4701 = vperm.xlu0 %4700, %v4250
        %v4702 = vpop.permute.xlu0 %4701
        %4705 = vset.pattern.permute.xlu0 0
        %4706 = vperm.xlu0 %4705, %v4251
        %v4707 = vpop.permute.xlu0 %4706
        %4710 = vset.pattern.permute.xlu0 0
        %4711 = vperm.xlu0 %4710, %v4252
        %v4712 = vpop.permute.xlu0 %4711
        %4715 = vset.pattern.permute.xlu0 0
        %4716 = vperm.xlu0 %4715, %v4253
        %v4717 = vpop.permute.xlu0 %4716
        %v4719 = vmul.f32 %v4702, %v4695
        %v4720 = vmul.f32 %v4707, %v4696
        %v4721 = vmul.f32 %v4712, %v4697
        %v4722 = vmul.f32 %v4717, %v4698
        %v4723 = vadd.f32 %v4245, %v4719
        %v4724 = vadd.f32 %v4246, %v4720
        %v4725 = vadd.f32 %v4247, %v4721
        %v4726 = vadd.f32 %v4248, %v4722
        %v4727 = vpack.c.bf16 %v4724, %v4723
        %v4728 = vpack.c.bf16 %v4726, %v4725
        %4729 = vst [vmem:[#allocation3 + $0x8] sm:$0xff] %v4727
        %4730 = vst [vmem:[#allocation3 + $0x20] sm:$0xff] %v4728
        %v4731 = vld [vmem:[#allocation3 + $0x8] sm:$0xff]
        %v4732 = vld [vmem:[#allocation3 + $0x20] sm:$0xff]
        %4735 = vrot.lane.b32.xlu0 %v4731, 126
        %v4736 = vpop.permute.xlu0 %4735
        %4737 = vrot.lane.b32.xlu0 %v4732, 126
        %v4738 = vpop.permute.xlu0 %4737
        %4741 = vst.msk [vmem:[#allocation3] sm:$0xff] %vm1974, %v4736
        %4742 = vst.msk [vmem:[#allocation3 + $0x18] sm:$0xff] %vm1974, %v4738
        %v4743 = vld [vmem:[#allocation3 + $0x8] sm:$0xff]
        %v4744 = vld [vmem:[#allocation3 + $0x20] sm:$0xff]
        %4747 = vrot.lane.b32.xlu0 %v4743, 2
        %v4748 = vpop.permute.xlu0 %4747
        %4749 = vrot.lane.b32.xlu0 %v4744, 2
        %v4750 = vpop.permute.xlu0 %4749
        %4753 = vst.msk [vmem:[#allocation3 + $0x10] sm:$0xff] %vm1987, %v4748
        %4754 = vst.msk [vmem:[#allocation3 + $0x28] sm:$0xff] %vm1987, %v4750
        %v4755 = vld [vmem:[#allocation3 + $0x8] sm:$0xff]
        %v4756 = vld [vmem:[#allocation3 + $0x20] sm:$0xff]
        %4759 = vrot.lane.b32.xlu0 %v4755, 124
        %v4760 = vpop.permute.xlu0 %4759
        %4761 = vrot.lane.b32.xlu0 %v4756, 124
        %v4762 = vpop.permute.xlu0 %4761
        %vm4765 = vcmask 1040368
        %4766 = vst.msk [vmem:[#allocation3] sm:$0xff] %vm4765, %v4760
        %4767 = vst.msk [vmem:[#allocation3 + $0x18] sm:$0xff] %vm4765, %v4762
        %v4768 = vld [vmem:[#allocation3 + $0x8] sm:$0xff]
        %v4769 = vld [vmem:[#allocation3 + $0x20] sm:$0xff]
        %4772 = vrot.lane.b32.xlu0 %v4768, 4
        %v4773 = vpop.permute.xlu0 %4772
        %4774 = vrot.lane.b32.xlu0 %v4769, 4
        %v4775 = vpop.permute.xlu0 %4774
        %vm4778 = vcmask 15368
        %4779 = vst.msk [vmem:[#allocation3 + $0x10] sm:$0xff] %vm4778, %v4773
        %4780 = vst.msk [vmem:[#allocation3 + $0x28] sm:$0xff] %vm4778, %v4775
        %v4781 = vld [vmem:[#allocation3 + $0x8] sm:$0xff]
        %v4782 = vld [vmem:[#allocation3 + $0x20] sm:$0xff]
        %4785 = vrot.lane.b32.xlu0 %v4781, 122
        %v4786 = vpop.permute.xlu0 %4785
        %4787 = vrot.lane.b32.xlu0 %v4782, 122
        %v4788 = vpop.permute.xlu0 %4787
        %vm4791 = vcmask 1032168
        %4792 = vst.msk [vmem:[#allocation3] sm:$0xff] %vm4791, %v4786
        %4793 = vst.msk [vmem:[#allocation3 + $0x18] sm:$0xff] %vm4791, %v4788
        %v4794 = vld [vmem:[#allocation3 + $0x8] sm:$0xff]
        %v4795 = vld [vmem:[#allocation3 + $0x20] sm:$0xff]
        %4798 = vrot.lane.b32.xlu0 %v4794, 6
        %v4799 = vpop.permute.xlu0 %4798
        %4800 = vrot.lane.b32.xlu0 %v4795, 6
        %v4801 = vpop.permute.xlu0 %4800
        %vm4804 = vcmask 23568
        %4805 = vst.msk [vmem:[#allocation3 + $0x10] sm:$0xff] %vm4804, %v4799
        %4806 = vst.msk [vmem:[#allocation3 + $0x28] sm:$0xff] %vm4804, %v4801
        %s4807 = scalar_lea.vmem [#allocation15], 64
        %v4808 = vld [vmem:[%s4807] sm:$0xff]
        %v4809 = vld [vmem:[%s4807 + $0x8] sm:$0xff]
        %v4810 = vld [vmem:[%s4807 + $0x10] sm:$0xff]
        %v4811 = vld [vmem:[%s4807 + $0x18] sm:$0xff]
        %s4812 = scalar_lea.vmem [#allocation13], 96
        %v4813 = vld [vmem:[%s4812] sm:$0xf]
        %v4814 = vld [vmem:[%s4812 + $0x4] sm:$0xf]
        %v4815 = vld [vmem:[%s4812 + $0x8] sm:$0xf]
        %v4816 = vld [vmem:[%s4812 + $0xc] sm:$0xf]
        %v4817 = vld [vmem:[#allocation3] sm:$0xff]
        %v4818 = vld [vmem:[#allocation3 + $0x8] sm:$0xff]
        %v4819 = vld [vmem:[#allocation3 + $0x18] sm:$0xff]
        %v4820 = vld [vmem:[#allocation3 + $0x20] sm:$0xff]
        %v4825 = vunpack.c.l.b16 %v4813
        %v4826 = vunpack.c.l.b16 %v4814
        %v4827 = vunpack.c.l.b16 %v4815
        %v4828 = vunpack.c.l.b16 %v4816
        %v4829 = vpack.c.b16 %v4826, %v4825
        %v4830 = vpack.c.b16 %v4828, %v4827
        %4835 = vrot.lane.b32.xlu0 %v4817, 3
        %v4836 = vpop.permute.xlu0 %4835
        %4837 = vrot.lane.b32.xlu0 %v4818, 3
        %v4838 = vpop.permute.xlu0 %4837
        %4839 = vrot.lane.b32.xlu0 %v4819, 3
        %v4840 = vpop.permute.xlu0 %4839
        %4841 = vrot.lane.b32.xlu0 %v4820, 3
        %v4842 = vpop.permute.xlu0 %4841
        %vm4843 = vcmask 23552
        %v4844 = vsel %vm4843, %v4836, %v4838
        %v4845 = vsel %vm4843, %v4840, %v4842
        %v4849 = vsel %vm2029, %v4829, 0
        %v4852 = vsel %vm2029, %v4830, 0
        %4854 = vmatprep.subr.bf16.mxu0 0
        %4855 = vmatpush1.bf16.msra.mxu0 %v4844
        %4856 = vmatprep.subr.bf16.mxu0 0
        %4857 = vmatpush1.bf16.msra.mxu0 %v4845
        %4858 = vmatprep.subr.bf16.mxu0 0
        %4859 = vmatpush1.bf16.msra.mxu0 0
        %4860 = vmatprep.subr.bf16.mxu0 0
        %4861 = vmatpush1.bf16.msra.mxu0 0
        %4862 = vmatprep.subr.bf16.mxu0 0
        %4863 = vmatpush1.bf16.msra.mxu0 0
        %4864 = vmatprep.subr.bf16.mxu0 0
        %4865 = vmatpush1.bf16.msra.mxu0 0
        %4866 = vmatprep.subr.bf16.mxu0 0
        %4867 = vmatpush1.bf16.msra.mxu0 0
        %4868 = vmatprep.subr.bf16.mxu0 0
        %4869 = vmatpush1.bf16.msra.mxu0 0
        %4870 = vmatprep.subr.bf16.mxu0 0
        %4871 = vmatpush1.bf16.msra.mxu0 0
        %4872 = vmatprep.subr.bf16.mxu0 0
        %4873 = vmatpush1.bf16.msra.mxu0 0
        %4874 = vmatprep.subr.bf16.mxu0 0
        %4875 = vmatpush1.bf16.msra.mxu0 0
        %4876 = vmatprep.subr.bf16.mxu0 0
        %4877 = vmatpush1.bf16.msra.mxu0 0
        %4878 = vmatprep.subr.bf16.mxu0 0
        %4879 = vmatpush1.bf16.msra.mxu0 0
        %4880 = vmatprep.subr.bf16.mxu0 0
        %4881 = vmatpush1.bf16.msra.mxu0 0
        %4882 = vmatprep.subr.bf16.mxu0 0
        %4883 = vmatpush1.bf16.msra.mxu0 0
        %4884 = vmatprep.subr.bf16.mxu0 0
        %4885 = vmatpush1.bf16.msra.mxu0 0
        %4886 = vmatprep.mubr.bf16.mxu0 0
        %4887 = vmatmul.mubr.bf16.gmra.mrb[0].mxu0 %v4849
        %v4888 = vpop.f32.mrb[0].mxu0
        %v4889 = vadd.f32 0.0, %v4888
        %v4890 = vpop.f32.mrb[0].mxu0
        %v4891 = vpop.f32.mrb[0].mxu0
        %v4892 = vadd.f32 0.0, %v4891
        %v4893 = vpop.f32.mrb[0].mxu0
        %4894 = vmatprep.mubr.bf16.mxu0 0
        %4895 = vmatmul.mubr.bf16.gmra.mrb[0].mxu0 %v4852
        %v4896 = vpop.f32.mrb[0].mxu0
        %v4897 = vadd.f32 0.0, %v4896
        %v4898 = vpop.f32.mrb[0].mxu0
        %v4899 = vpop.f32.mrb[0].mxu0
        %v4900 = vadd.f32 0.0, %v4899
        %v4901 = vpop.f32.mrb[0].mxu0
        %4902 = vdwg.mxu0
        %4904 = vset.pattern.permute.xlu0 0
        %4905 = vperm.xlu0 %4904, %v4808
        %v4906 = vpop.permute.xlu0 %4905
        %4909 = vset.pattern.permute.xlu0 0
        %4910 = vperm.xlu0 %4909, %v4809
        %v4911 = vpop.permute.xlu0 %4910
        %4914 = vset.pattern.permute.xlu0 0
        %4915 = vperm.xlu0 %4914, %v4810
        %v4916 = vpop.permute.xlu0 %4915
        %4919 = vset.pattern.permute.xlu0 0
        %4920 = vperm.xlu0 %4919, %v4811
        %v4921 = vpop.permute.xlu0 %4920
        %v4923 = vadd.f32 %v4906, %v4889
        %v4924 = vadd.f32 %v4911, %v4892
        %v4925 = vadd.f32 %v4916, %v4897
        %v4926 = vadd.f32 %v4921, %v4900
        %s4927 = scalar_lea.vmem [#allocation13], 112
        %v4928 = vld [vmem:[%s4927] sm:$0xf]
        %v4929 = vld [vmem:[%s4927 + $0x4] sm:$0xf]
        %v4930 = vld [vmem:[%s4927 + $0x8] sm:$0xf]
        %v4931 = vld [vmem:[%s4927 + $0xc] sm:$0xf]
        %v4936 = vunpack.c.l.b16 %v4928
        %v4937 = vunpack.c.l.b16 %v4929
        %v4938 = vunpack.c.l.b16 %v4930
        %v4939 = vunpack.c.l.b16 %v4931
        %v4940 = vpack.c.b16 %v4937, %v4936
        %v4941 = vpack.c.b16 %v4939, %v4938
        %v4943 = vsel %vm2029, %v4940, 0
        %v4946 = vsel %vm2029, %v4941, 0
        %4948 = vmatprep.subr.bf16.mxu0 0
        %4949 = vmatpush1.bf16.msra.mxu0 %v4818
        %4950 = vmatprep.subr.bf16.mxu0 0
        %4951 = vmatpush1.bf16.msra.mxu0 %v4820
        %4952 = vmatprep.subr.bf16.mxu0 0
        %4953 = vmatpush1.bf16.msra.mxu0 0
        %4954 = vmatprep.subr.bf16.mxu0 0
        %4955 = vmatpush1.bf16.msra.mxu0 0
        %4956 = vmatprep.subr.bf16.mxu0 0
        %4957 = vmatpush1.bf16.msra.mxu0 0
        %4958 = vmatprep.subr.bf16.mxu0 0
        %4959 = vmatpush1.bf16.msra.mxu0 0
        %4960 = vmatprep.subr.bf16.mxu0 0
        %4961 = vmatpush1.bf16.msra.mxu0 0
        %4962 = vmatprep.subr.bf16.mxu0 0
        %4963 = vmatpush1.bf16.msra.mxu0 0
        %4964 = vmatprep.subr.bf16.mxu0 0
        %4965 = vmatpush1.bf16.msra.mxu0 0
        %4966 = vmatprep.subr.bf16.mxu0 0
        %4967 = vmatpush1.bf16.msra.mxu0 0
        %4968 = vmatprep.subr.bf16.mxu0 0
        %4969 = vmatpush1.bf16.msra.mxu0 0
        %4970 = vmatprep.subr.bf16.mxu0 0
        %4971 = vmatpush1.bf16.msra.mxu0 0
        %4972 = vmatprep.subr.bf16.mxu0 0
        %4973 = vmatpush1.bf16.msra.mxu0 0
        %4974 = vmatprep.subr.bf16.mxu0 0
        %4975 = vmatpush1.bf16.msra.mxu0 0
        %4976 = vmatprep.subr.bf16.mxu0 0
        %4977 = vmatpush1.bf16.msra.mxu0 0
        %4978 = vmatprep.subr.bf16.mxu0 0
        %4979 = vmatpush1.bf16.msra.mxu0 0
        %4980 = vmatprep.mubr.bf16.mxu0 0
        %4981 = vmatmul.mubr.bf16.gmra.mrb[0].mxu0 %v4943
        %v4982 = vpop.f32.mrb[0].mxu0
        %v4983 = vadd.f32 0.0, %v4982
        %v4984 = vpop.f32.mrb[0].mxu0
        %v4985 = vpop.f32.mrb[0].mxu0
        %v4986 = vadd.f32 0.0, %v4985
        %v4987 = vpop.f32.mrb[0].mxu0
        %4988 = vmatprep.mubr.bf16.mxu0 0
        %4989 = vmatmul.mubr.bf16.gmra.mrb[0].mxu0 %v4946
        %v4990 = vpop.f32.mrb[0].mxu0
        %v4991 = vadd.f32 0.0, %v4990
        %v4992 = vpop.f32.mrb[0].mxu0
        %v4993 = vpop.f32.mrb[0].mxu0
        %v4994 = vadd.f32 0.0, %v4993
        %v4995 = vpop.f32.mrb[0].mxu0
        %4996 = vdwg.mxu0
        %v4997 = vadd.f32 %v4923, %v4983
        %v4998 = vadd.f32 %v4924, %v4986
        %v4999 = vadd.f32 %v4925, %v4991
        %v5000 = vadd.f32 %v4926, %v4994
        %s5001 = scalar_lea.vmem [#allocation13], 128
        %v5002 = vld [vmem:[%s5001] sm:$0xf]
        %v5003 = vld [vmem:[%s5001 + $0x4] sm:$0xf]
        %v5004 = vld [vmem:[%s5001 + $0x8] sm:$0xf]
        %v5005 = vld [vmem:[%s5001 + $0xc] sm:$0xf]
        %v5006 = vld [vmem:[#allocation3 + $0x8] sm:$0xff]
        %v5007 = vld [vmem:[#allocation3 + $0x10] sm:$0xff]
        %v5008 = vld [vmem:[#allocation3 + $0x20] sm:$0xff]
        %v5009 = vld [vmem:[#allocation3 + $0x28] sm:$0xff]
        %v5014 = vunpack.c.l.b16 %v5002
        %v5015 = vunpack.c.l.b16 %v5003
        %v5016 = vunpack.c.l.b16 %v5004
        %v5017 = vunpack.c.l.b16 %v5005
        %v5018 = vpack.c.b16 %v5015, %v5014
        %v5019 = vpack.c.b16 %v5017, %v5016
        %5024 = vrot.lane.b32.xlu0 %v5006, 125
        %v5025 = vpop.permute.xlu0 %5024
        %5026 = vrot.lane.b32.xlu0 %v5007, 125
        %v5027 = vpop.permute.xlu0 %5026
        %5028 = vrot.lane.b32.xlu0 %v5008, 125
        %v5029 = vpop.permute.xlu0 %5028
        %5030 = vrot.lane.b32.xlu0 %v5009, 125
        %v5031 = vpop.permute.xlu0 %5030
        %vm5032 = vcmask 1022976
        %v5033 = vsel %vm5032, %v5025, %v5027
        %v5034 = vsel %vm5032, %v5029, %v5031
        %v5038 = vsel %vm2029, %v5018, 0
        %v5041 = vsel %vm2029, %v5019, 0
        %5043 = vmatprep.subr.bf16.mxu0 0
        %5044 = vmatpush1.bf16.msra.mxu0 %v5033
        %5045 = vmatprep.subr.bf16.mxu0 0
        %5046 = vmatpush1.bf16.msra.mxu0 %v5034
        %5047 = vmatprep.subr.bf16.mxu0 0
        %5048 = vmatpush1.bf16.msra.mxu0 0
        %5049 = vmatprep.subr.bf16.mxu0 0
        %5050 = vmatpush1.bf16.msra.mxu0 0
        %5051 = vmatprep.subr.bf16.mxu0 0
        %5052 = vmatpush1.bf16.msra.mxu0 0
        %5053 = vmatprep.subr.bf16.mxu0 0
        %5054 = vmatpush1.bf16.msra.mxu0 0
        %5055 = vmatprep.subr.bf16.mxu0 0
        %5056 = vmatpush1.bf16.msra.mxu0 0
        %5057 = vmatprep.subr.bf16.mxu0 0
        %5058 = vmatpush1.bf16.msra.mxu0 0
        %5059 = vmatprep.subr.bf16.mxu0 0
        %5060 = vmatpush1.bf16.msra.mxu0 0
        %5061 = vmatprep.subr.bf16.mxu0 0
        %5062 = vmatpush1.bf16.msra.mxu0 0
        %5063 = vmatprep.subr.bf16.mxu0 0
        %5064 = vmatpush1.bf16.msra.mxu0 0
        %5065 = vmatprep.subr.bf16.mxu0 0
        %5066 = vmatpush1.bf16.msra.mxu0 0
        %5067 = vmatprep.subr.bf16.mxu0 0
        %5068 = vmatpush1.bf16.msra.mxu0 0
        %5069 = vmatprep.subr.bf16.mxu0 0
        %5070 = vmatpush1.bf16.msra.mxu0 0
        %5071 = vmatprep.subr.bf16.mxu0 0
        %5072 = vmatpush1.bf16.msra.mxu0 0
        %5073 = vmatprep.subr.bf16.mxu0 0
        %5074 = vmatpush1.bf16.msra.mxu0 0
        %5075 = vmatprep.mubr.bf16.mxu0 0
        %5076 = vmatmul.mubr.bf16.gmra.mrb[0].mxu0 %v5038
        %v5077 = vpop.f32.mrb[0].mxu0
        %v5078 = vadd.f32 0.0, %v5077
        %v5079 = vpop.f32.mrb[0].mxu0
        %v5080 = vpop.f32.mrb[0].mxu0
        %v5081 = vadd.f32 0.0, %v5080
        %v5082 = vpop.f32.mrb[0].mxu0
        %5083 = vmatprep.mubr.bf16.mxu0 0
        %5084 = vmatmul.mubr.bf16.gmra.mrb[0].mxu0 %v5041
        %v5085 = vpop.f32.mrb[0].mxu0
        %v5086 = vadd.f32 0.0, %v5085
        %v5087 = vpop.f32.mrb[0].mxu0
        %v5088 = vpop.f32.mrb[0].mxu0
        %v5089 = vadd.f32 0.0, %v5088
        %v5090 = vpop.f32.mrb[0].mxu0
        %5091 = vdwg.mxu0
        %v5092 = vadd.f32 %v4997, %v5078
        %v5093 = vadd.f32 %v4998, %v5081
        %v5094 = vadd.f32 %v4999, %v5086
        %v5095 = vadd.f32 %v5000, %v5089
        %s5096 = scalar_lea.vmem [#allocation10], 96
        %v5097 = vld [vmem:[%s5096] sm:$0xf]
        %v5098 = vld [vmem:[%s5096 + $0x4] sm:$0xf]
        %v5099 = vld [vmem:[%s5096 + $0x8] sm:$0xf]
        %v5100 = vld [vmem:[%s5096 + $0xc] sm:$0xf]
        %v5101 = vld [vmem:[%s5096 + $0x10] sm:$0xf]
        %v5102 = vld [vmem:[%s5096 + $0x14] sm:$0xf]
        %v5103 = vld [vmem:[%s5096 + $0x18] sm:$0xf]
        %v5104 = vld [vmem:[%s5096 + $0x1c] sm:$0xf]
        %s5105 = scalar_lea.vmem [#allocation12], 192
        %v5106 = vld [vmem:[%s5105] sm:$0xff]
        %v5107 = vld [vmem:[%s5105 + $0x8] sm:$0xff]
        %v5108 = vld [vmem:[%s5105 + $0x10] sm:$0xff]
        %v5109 = vld [vmem:[%s5105 + $0x18] sm:$0xff]
        %v5110 = vld [vmem:[%s5105 + $0x20] sm:$0xff]
        %v5111 = vld [vmem:[%s5105 + $0x28] sm:$0xff]
        %v5112 = vld [vmem:[%s5105 + $0x30] sm:$0xff]
        %v5113 = vld [vmem:[%s5105 + $0x38] sm:$0xff]
        %5115 = vset.pattern.permute.xlu0 0
        %5116 = vperm.xlu0 %5115, %v5106
        %v5117 = vpop.permute.xlu0 %5116
        %5120 = vset.pattern.permute.xlu0 0
        %5121 = vperm.xlu0 %5120, %v5107
        %v5122 = vpop.permute.xlu0 %5121
        %5125 = vset.pattern.permute.xlu0 0
        %5126 = vperm.xlu0 %5125, %v5108
        %v5127 = vpop.permute.xlu0 %5126
        %5130 = vset.pattern.permute.xlu0 0
        %5131 = vperm.xlu0 %5130, %v5109
        %v5132 = vpop.permute.xlu0 %5131
        %5135 = vset.pattern.permute.xlu0 0
        %5136 = vperm.xlu0 %5135, %v5110
        %v5137 = vpop.permute.xlu0 %5136
        %5140 = vset.pattern.permute.xlu0 0
        %5141 = vperm.xlu0 %5140, %v5111
        %v5142 = vpop.permute.xlu0 %5141
        %5145 = vset.pattern.permute.xlu0 0
        %5146 = vperm.xlu0 %5145, %v5112
        %v5147 = vpop.permute.xlu0 %5146
        %5150 = vset.pattern.permute.xlu0 0
        %5151 = vperm.xlu0 %5150, %v5113
        %v5152 = vpop.permute.xlu0 %5151
        %v5162 = vunpack.c.l.b16 %v5097
        %v5163 = vunpack.c.l.b16 %v5098
        %v5164 = vunpack.c.l.b16 %v5099
        %v5165 = vunpack.c.l.b16 %v5100
        %v5166 = vunpack.c.l.b16 %v5101
        %v5167 = vunpack.c.l.b16 %v5102
        %v5168 = vunpack.c.l.b16 %v5103
        %v5169 = vunpack.c.l.b16 %v5104
        %v5170 = vpack.c.b16 %v5163, %v5162
        %v5171 = vpack.c.b16 %v5165, %v5164
        %v5172 = vpack.c.b16 %v5167, %v5166
        %v5173 = vpack.c.b16 %v5169, %v5168
        %v5175 = vsel %vm978, %v5170, 0
        %v5178 = vsel %vm978, %v5171, 0
        %v5181 = vsel %vm978, %v5172, 0
        %v5184 = vsel %vm978, %v5173, 0
        %5186 = vmatprep.subr.bf16.mxu0 0
        %5187 = vmatpush1.bf16.msra.mxu0 %v970
        %5188 = vmatprep.subr.bf16.mxu0 0
        %5189 = vmatpush1.bf16.msra.mxu0 %v971
        %5190 = vmatprep.subr.bf16.mxu0 0
        %5191 = vmatpush1.bf16.msra.mxu0 %v972
        %5192 = vmatprep.subr.bf16.mxu0 0
        %5193 = vmatpush1.bf16.msra.mxu0 %v973
        %5194 = vmatprep.subr.bf16.mxu0 0
        %5195 = vmatpush1.bf16.msra.mxu0 0
        %5196 = vmatprep.subr.bf16.mxu0 0
        %5197 = vmatpush1.bf16.msra.mxu0 0
        %5198 = vmatprep.subr.bf16.mxu0 0
        %5199 = vmatpush1.bf16.msra.mxu0 0
        %5200 = vmatprep.subr.bf16.mxu0 0
        %5201 = vmatpush1.bf16.msra.mxu0 0
        %5202 = vmatprep.subr.bf16.mxu0 0
        %5203 = vmatpush1.bf16.msra.mxu0 0
        %5204 = vmatprep.subr.bf16.mxu0 0
        %5205 = vmatpush1.bf16.msra.mxu0 0
        %5206 = vmatprep.subr.bf16.mxu0 0
        %5207 = vmatpush1.bf16.msra.mxu0 0
        %5208 = vmatprep.subr.bf16.mxu0 0
        %5209 = vmatpush1.bf16.msra.mxu0 0
        %5210 = vmatprep.subr.bf16.mxu0 0
        %5211 = vmatpush1.bf16.msra.mxu0 0
        %5212 = vmatprep.subr.bf16.mxu0 0
        %5213 = vmatpush1.bf16.msra.mxu0 0
        %5214 = vmatprep.subr.bf16.mxu0 0
        %5215 = vmatpush1.bf16.msra.mxu0 0
        %5216 = vmatprep.subr.bf16.mxu0 0
        %5217 = vmatpush1.bf16.msra.mxu0 0
        %5218 = vmatprep.mubr.bf16.mxu0 0
        %5219 = vmatmul.mubr.bf16.gmra.mrb[0].mxu0 %v5175
        %v5220 = vpop.f32.mrb[0].mxu0
        %v5221 = vadd.f32 %v5117, %v5220
        %v5222 = vpop.f32.mrb[0].mxu0
        %v5223 = vpop.f32.mrb[0].mxu0
        %v5224 = vadd.f32 %v5122, %v5223
        %v5225 = vpop.f32.mrb[0].mxu0
        %5226 = vmatprep.mubr.bf16.mxu0 0
        %5227 = vmatmul.mubr.bf16.gmra.mrb[0].mxu0 %v5178
        %v5228 = vpop.f32.mrb[0].mxu0
        %v5229 = vadd.f32 %v5127, %v5228
        %v5230 = vpop.f32.mrb[0].mxu0
        %v5231 = vpop.f32.mrb[0].mxu0
        %v5232 = vadd.f32 %v5132, %v5231
        %v5233 = vpop.f32.mrb[0].mxu0
        %5234 = vmatprep.mubr.bf16.mxu0 0
        %5235 = vmatmul.mubr.bf16.gmra.mrb[0].mxu0 %v5181
        %v5236 = vpop.f32.mrb[0].mxu0
        %v5237 = vadd.f32 %v5137, %v5236
        %v5238 = vpop.f32.mrb[0].mxu0
        %v5239 = vpop.f32.mrb[0].mxu0
        %v5240 = vadd.f32 %v5142, %v5239
        %v5241 = vpop.f32.mrb[0].mxu0
        %5242 = vmatprep.mubr.bf16.mxu0 0
        %5243 = vmatmul.mubr.bf16.gmra.mrb[0].mxu0 %v5184
        %v5244 = vpop.f32.mrb[0].mxu0
        %v5245 = vadd.f32 %v5147, %v5244
        %v5246 = vpop.f32.mrb[0].mxu0
        %v5247 = vpop.f32.mrb[0].mxu0
        %v5248 = vadd.f32 %v5152, %v5247
        %v5249 = vpop.f32.mrb[0].mxu0
        %5250 = vdwg.mxu0
        %5251 = vst [vmem:[#allocation2 + $0x8] sm:$0xff] %v5092
        %5252 = vst [vmem:[#allocation2 + $0x20] sm:$0xff] %v5093
        %5253 = vst [vmem:[#allocation2 + $0x38] sm:$0xff] %v5094
        %5254 = vst [vmem:[#allocation2 + $0x50] sm:$0xff] %v5095
        %v5255 = vld [vmem:[#allocation2] sm:$0xff]
        %v5256 = vld [vmem:[#allocation2 + $0x8] sm:$0xff]
        %v5257 = vld [vmem:[#allocation2 + $0x18] sm:$0xff]
        %v5258 = vld [vmem:[#allocation2 + $0x20] sm:$0xff]
        %v5259 = vld [vmem:[#allocation2 + $0x30] sm:$0xff]
        %v5260 = vld [vmem:[#allocation2 + $0x38] sm:$0xff]
        %v5261 = vld [vmem:[#allocation2 + $0x48] sm:$0xff]
        %v5262 = vld [vmem:[#allocation2 + $0x50] sm:$0xff]
        %5271 = vrot.lane.b32.xlu0 %v5255, 127
        %v5272 = vpop.permute.xlu0 %5271
        %5273 = vrot.lane.b32.xlu0 %v5256, 127
        %v5274 = vpop.permute.xlu0 %5273
        %5275 = vrot.lane.b32.xlu0 %v5257, 127
        %v5276 = vpop.permute.xlu0 %5275
        %5277 = vrot.lane.b32.xlu0 %v5258, 127
        %v5278 = vpop.permute.xlu0 %5277
        %5279 = vrot.lane.b32.xlu0 %v5259, 127
        %v5280 = vpop.permute.xlu0 %5279
        %5281 = vrot.lane.b32.xlu0 %v5260, 127
        %v5282 = vpop.permute.xlu0 %5281
        %5283 = vrot.lane.b32.xlu0 %v5261, 127
        %v5284 = vpop.permute.xlu0 %5283
        %5285 = vrot.lane.b32.xlu0 %v5262, 127
        %v5286 = vpop.permute.xlu0 %5285
        %v5287 = vsel %vm590, %v5272, %v5274
        %v5288 = vsel %vm590, %v5276, %v5278
        %v5289 = vsel %vm590, %v5280, %v5282
        %v5290 = vsel %vm590, %v5284, %v5286
        %v5299 = vadd.f32 %v5255, %v5287
        %v5300 = vadd.f32 %v5256, %v5274
        %v5301 = vadd.f32 %v5257, %v5288
        %v5302 = vadd.f32 %v5258, %v5278
        %v5303 = vadd.f32 %v5259, %v5289
        %v5304 = vadd.f32 %v5260, %v5282
        %v5305 = vadd.f32 %v5261, %v5290
        %v5306 = vadd.f32 %v5262, %v5286
        %5307 = vrot.lane.b32.xlu0 %v5256, 126
        %v5308 = vpop.permute.xlu0 %5307
        %5309 = vrot.lane.b32.xlu0 %v5258, 126
        %v5310 = vpop.permute.xlu0 %5309
        %5311 = vrot.lane.b32.xlu0 %v5260, 126
        %v5312 = vpop.permute.xlu0 %5311
        %5313 = vrot.lane.b32.xlu0 %v5262, 126
        %v5314 = vpop.permute.xlu0 %5313
        %v5319 = vadd.f32 %v5299, %v5308
        %v5320 = vadd.f32 %v5300, %v5308
        %v5321 = vadd.f32 %v5301, %v5310
        %v5322 = vadd.f32 %v5302, %v5310
        %v5323 = vadd.f32 %v5303, %v5312
        %v5324 = vadd.f32 %v5304, %v5312
        %v5325 = vadd.f32 %v5305, %v5314
        %v5326 = vadd.f32 %v5306, %v5314
        %v5327 = vld [vmem:[#allocation2 + $0x10] sm:$0xff]
        %v5328 = vld [vmem:[#allocation2 + $0x28] sm:$0xff]
        %v5329 = vld [vmem:[#allocation2 + $0x40] sm:$0xff]
        %v5330 = vld [vmem:[#allocation2 + $0x58] sm:$0xff]
        %5335 = vrot.lane.b32.xlu0 %v5256, 125
        %v5336 = vpop.permute.xlu0 %5335
        %5337 = vrot.lane.b32.xlu0 %v5327, 125
        %v5338 = vpop.permute.xlu0 %5337
        %5339 = vrot.lane.b32.xlu0 %v5258, 125
        %v5340 = vpop.permute.xlu0 %5339
        %5341 = vrot.lane.b32.xlu0 %v5328, 125
        %v5342 = vpop.permute.xlu0 %5341
        %5343 = vrot.lane.b32.xlu0 %v5260, 125
        %v5344 = vpop.permute.xlu0 %5343
        %5345 = vrot.lane.b32.xlu0 %v5329, 125
        %v5346 = vpop.permute.xlu0 %5345
        %5347 = vrot.lane.b32.xlu0 %v5262, 125
        %v5348 = vpop.permute.xlu0 %5347
        %5349 = vrot.lane.b32.xlu0 %v5330, 125
        %v5350 = vpop.permute.xlu0 %5349
        %v5351 = vsel %vm719, %v5336, %v5338
        %v5352 = vsel %vm719, %v5340, %v5342
        %v5353 = vsel %vm719, %v5344, %v5346
        %v5354 = vsel %vm719, %v5348, %v5350
        %v5363 = vadd.f32 %v5319, %v5336
        %v5364 = vadd.f32 %v5320, %v5351
        %v5365 = vadd.f32 %v5321, %v5340
        %v5366 = vadd.f32 %v5322, %v5352
        %v5367 = vadd.f32 %v5323, %v5344
        %v5368 = vadd.f32 %v5324, %v5353
        %v5369 = vadd.f32 %v5325, %v5348
        %v5370 = vadd.f32 %v5326, %v5354
        %5371 = vrot.lane.b32.xlu0 %v5256, 124
        %v5372 = vpop.permute.xlu0 %5371
        %5373 = vrot.lane.b32.xlu0 %v5327, 124
        %v5374 = vpop.permute.xlu0 %5373
        %5375 = vrot.lane.b32.xlu0 %v5258, 124
        %v5376 = vpop.permute.xlu0 %5375
        %5377 = vrot.lane.b32.xlu0 %v5328, 124
        %v5378 = vpop.permute.xlu0 %5377
        %5379 = vrot.lane.b32.xlu0 %v5260, 124
        %v5380 = vpop.permute.xlu0 %5379
        %5381 = vrot.lane.b32.xlu0 %v5329, 124
        %v5382 = vpop.permute.xlu0 %5381
        %5383 = vrot.lane.b32.xlu0 %v5262, 124
        %v5384 = vpop.permute.xlu0 %5383
        %5385 = vrot.lane.b32.xlu0 %v5330, 124
        %v5386 = vpop.permute.xlu0 %5385
        %v5387 = vsel %vm792, %v5372, %v5374
        %v5388 = vsel %vm792, %v5376, %v5378
        %v5389 = vsel %vm792, %v5380, %v5382
        %v5390 = vsel %vm792, %v5384, %v5386
        %v5399 = vadd.f32 %v5363, %v5372
        %v5400 = vadd.f32 %v5364, %v5387
        %v5401 = vadd.f32 %v5365, %v5376
        %v5402 = vadd.f32 %v5366, %v5388
        %v5403 = vadd.f32 %v5367, %v5380
        %v5404 = vadd.f32 %v5368, %v5389
        %v5405 = vadd.f32 %v5369, %v5384
        %v5406 = vadd.f32 %v5370, %v5390
        %v5407 = vmul.f32 %v5399, %v839
        %v5408 = vmul.f32 %v5400, %v839
        %v5409 = vmul.f32 %v5401, %v839
        %v5410 = vmul.f32 %v5402, %v839
        %v5411 = vmul.f32 %v5403, %v839
        %v5412 = vmul.f32 %v5404, %v839
        %v5413 = vmul.f32 %v5405, %v839
        %v5414 = vmul.f32 %v5406, %v839
        %5423 = vrot.lane.b32.xlu0 %v5407, 2
        %v5424 = vpop.permute.xlu0 %5423
        %5425 = vrot.lane.b32.xlu0 %v5408, 2
        %v5426 = vpop.permute.xlu0 %5425
        %5427 = vrot.lane.b32.xlu0 %v5409, 2
        %v5428 = vpop.permute.xlu0 %5427
        %5429 = vrot.lane.b32.xlu0 %v5410, 2
        %v5430 = vpop.permute.xlu0 %5429
        %5431 = vrot.lane.b32.xlu0 %v5411, 2
        %v5432 = vpop.permute.xlu0 %5431
        %5433 = vrot.lane.b32.xlu0 %v5412, 2
        %v5434 = vpop.permute.xlu0 %5433
        %5435 = vrot.lane.b32.xlu0 %v5413, 2
        %v5436 = vpop.permute.xlu0 %5435
        %5437 = vrot.lane.b32.xlu0 %v5414, 2
        %v5438 = vpop.permute.xlu0 %5437
        %v5439 = vsel %vm501, %v5424, %v5426
        %v5440 = vsel %vm501, %v5428, %v5430
        %v5441 = vsel %vm501, %v5432, %v5434
        %v5442 = vsel %vm501, %v5436, %v5438
        %v5447 = vsub.f32 %v5092, %v5439
        %v5448 = vsub.f32 %v5093, %v5440
        %v5449 = vsub.f32 %v5094, %v5441
        %v5450 = vsub.f32 %v5095, %v5442
        %v5451 = vmul.f32 %v5447, %v5447
        %v5452 = vmul.f32 %v5448, %v5448
        %v5453 = vmul.f32 %v5449, %v5449
        %v5454 = vmul.f32 %v5450, %v5450
        %5455 = vst [vmem:[#allocation2 + $0x8] sm:$0xff] %v5451
        %5456 = vst [vmem:[#allocation2 + $0x20] sm:$0xff] %v5452
        %5457 = vst [vmem:[#allocation2 + $0x38] sm:$0xff] %v5453
        %5458 = vst [vmem:[#allocation2 + $0x50] sm:$0xff] %v5454
        %v5459 = vld [vmem:[#allocation2] sm:$0xff]
        %v5460 = vld [vmem:[#allocation2 + $0x8] sm:$0xff]
        %v5461 = vld [vmem:[#allocation2 + $0x18] sm:$0xff]
        %v5462 = vld [vmem:[#allocation2 + $0x20] sm:$0xff]
        %v5463 = vld [vmem:[#allocation2 + $0x30] sm:$0xff]
        %v5464 = vld [vmem:[#allocation2 + $0x38] sm:$0xff]
        %v5465 = vld [vmem:[#allocation2 + $0x48] sm:$0xff]
        %v5466 = vld [vmem:[#allocation2 + $0x50] sm:$0xff]
        %5475 = vrot.lane.b32.xlu0 %v5459, 127
        %v5476 = vpop.permute.xlu0 %5475
        %5477 = vrot.lane.b32.xlu0 %v5460, 127
        %v5478 = vpop.permute.xlu0 %5477
        %5479 = vrot.lane.b32.xlu0 %v5461, 127
        %v5480 = vpop.permute.xlu0 %5479
        %5481 = vrot.lane.b32.xlu0 %v5462, 127
        %v5482 = vpop.permute.xlu0 %5481
        %5483 = vrot.lane.b32.xlu0 %v5463, 127
        %v5484 = vpop.permute.xlu0 %5483
        %5485 = vrot.lane.b32.xlu0 %v5464, 127
        %v5486 = vpop.permute.xlu0 %5485
        %5487 = vrot.lane.b32.xlu0 %v5465, 127
        %v5488 = vpop.permute.xlu0 %5487
        %5489 = vrot.lane.b32.xlu0 %v5466, 127
        %v5490 = vpop.permute.xlu0 %5489
        %v5491 = vsel %vm590, %v5476, %v5478
        %v5492 = vsel %vm590, %v5480, %v5482
        %v5493 = vsel %vm590, %v5484, %v5486
        %v5494 = vsel %vm590, %v5488, %v5490
        %v5503 = vadd.f32 %v5459, %v5491
        %v5504 = vadd.f32 %v5460, %v5478
        %v5505 = vadd.f32 %v5461, %v5492
        %v5506 = vadd.f32 %v5462, %v5482
        %v5507 = vadd.f32 %v5463, %v5493
        %v5508 = vadd.f32 %v5464, %v5486
        %v5509 = vadd.f32 %v5465, %v5494
        %v5510 = vadd.f32 %v5466, %v5490
        %5511 = vrot.lane.b32.xlu0 %v5460, 126
        %v5512 = vpop.permute.xlu0 %5511
        %5513 = vrot.lane.b32.xlu0 %v5462, 126
        %v5514 = vpop.permute.xlu0 %5513
        %5515 = vrot.lane.b32.xlu0 %v5464, 126
        %v5516 = vpop.permute.xlu0 %5515
        %5517 = vrot.lane.b32.xlu0 %v5466, 126
        %v5518 = vpop.permute.xlu0 %5517
        %v5523 = vadd.f32 %v5503, %v5512
        %v5524 = vadd.f32 %v5504, %v5512
        %v5525 = vadd.f32 %v5505, %v5514
        %v5526 = vadd.f32 %v5506, %v5514
        %v5527 = vadd.f32 %v5507, %v5516
        %v5528 = vadd.f32 %v5508, %v5516
        %v5529 = vadd.f32 %v5509, %v5518
        %v5530 = vadd.f32 %v5510, %v5518
        %v5531 = vld [vmem:[#allocation2 + $0x10] sm:$0xff]
        %v5532 = vld [vmem:[#allocation2 + $0x28] sm:$0xff]
        %v5533 = vld [vmem:[#allocation2 + $0x40] sm:$0xff]
        %v5534 = vld [vmem:[#allocation2 + $0x58] sm:$0xff]
        %5539 = vrot.lane.b32.xlu0 %v5460, 125
        %v5540 = vpop.permute.xlu0 %5539
        %5541 = vrot.lane.b32.xlu0 %v5531, 125
        %v5542 = vpop.permute.xlu0 %5541
        %5543 = vrot.lane.b32.xlu0 %v5462, 125
        %v5544 = vpop.permute.xlu0 %5543
        %5545 = vrot.lane.b32.xlu0 %v5532, 125
        %v5546 = vpop.permute.xlu0 %5545
        %5547 = vrot.lane.b32.xlu0 %v5464, 125
        %v5548 = vpop.permute.xlu0 %5547
        %5549 = vrot.lane.b32.xlu0 %v5533, 125
        %v5550 = vpop.permute.xlu0 %5549
        %5551 = vrot.lane.b32.xlu0 %v5466, 125
        %v5552 = vpop.permute.xlu0 %5551
        %5553 = vrot.lane.b32.xlu0 %v5534, 125
        %v5554 = vpop.permute.xlu0 %5553
        %v5555 = vsel %vm719, %v5540, %v5542
        %v5556 = vsel %vm719, %v5544, %v5546
        %v5557 = vsel %vm719, %v5548, %v5550
        %v5558 = vsel %vm719, %v5552, %v5554
        %v5567 = vadd.f32 %v5523, %v5540
        %v5568 = vadd.f32 %v5524, %v5555
        %v5569 = vadd.f32 %v5525, %v5544
        %v5570 = vadd.f32 %v5526, %v5556
        %v5571 = vadd.f32 %v5527, %v5548
        %v5572 = vadd.f32 %v5528, %v5557
        %v5573 = vadd.f32 %v5529, %v5552
        %v5574 = vadd.f32 %v5530, %v5558
        %5575 = vrot.lane.b32.xlu0 %v5460, 124
        %v5576 = vpop.permute.xlu0 %5575
        %5577 = vrot.lane.b32.xlu0 %v5531, 124
        %v5578 = vpop.permute.xlu0 %5577
        %5579 = vrot.lane.b32.xlu0 %v5462, 124
        %v5580 = vpop.permute.xlu0 %5579
        %5581 = vrot.lane.b32.xlu0 %v5532, 124
        %v5582 = vpop.permute.xlu0 %5581
        %5583 = vrot.lane.b32.xlu0 %v5464, 124
        %v5584 = vpop.permute.xlu0 %5583
        %5585 = vrot.lane.b32.xlu0 %v5533, 124
        %v5586 = vpop.permute.xlu0 %5585
        %5587 = vrot.lane.b32.xlu0 %v5466, 124
        %v5588 = vpop.permute.xlu0 %5587
        %5589 = vrot.lane.b32.xlu0 %v5534, 124
        %v5590 = vpop.permute.xlu0 %5589
        %v5591 = vsel %vm792, %v5576, %v5578
        %v5592 = vsel %vm792, %v5580, %v5582
        %v5593 = vsel %vm792, %v5584, %v5586
        %v5594 = vsel %vm792, %v5588, %v5590
        %v5603 = vadd.f32 %v5567, %v5576
        %v5604 = vadd.f32 %v5568, %v5591
        %v5605 = vadd.f32 %v5569, %v5580
        %v5606 = vadd.f32 %v5570, %v5592
        %v5607 = vadd.f32 %v5571, %v5584
        %v5608 = vadd.f32 %v5572, %v5593
        %v5609 = vadd.f32 %v5573, %v5588
        %v5610 = vadd.f32 %v5574, %v5594
        %v5611 = vmul.f32 %v5603, %v839
        %v5612 = vmul.f32 %v5604, %v839
        %v5613 = vmul.f32 %v5605, %v839
        %v5614 = vmul.f32 %v5606, %v839
        %v5615 = vmul.f32 %v5607, %v839
        %v5616 = vmul.f32 %v5608, %v839
        %v5617 = vmul.f32 %v5609, %v839
        %v5618 = vmul.f32 %v5610, %v839
        %v5619 = vadd.f32 %v5611, 1e-09
        %v5620 = vadd.f32 %v5612, 1e-09
        %v5621 = vadd.f32 %v5613, 1e-09
        %v5622 = vadd.f32 %v5614, 1e-09
        %v5623 = vadd.f32 %v5615, 1e-09
        %v5624 = vadd.f32 %v5616, 1e-09
        %v5625 = vadd.f32 %v5617, 1e-09
        %v5626 = vadd.f32 %v5618, 1e-09
        %v5627 = vrsqrt.pop %v5619
        %v5628 = vrsqrt.pop %v5620
        %v5629 = vrsqrt.pop %v5621
        %v5630 = vrsqrt.pop %v5622
        %v5631 = vrsqrt.pop %v5623
        %v5632 = vrsqrt.pop %v5624
        %v5633 = vrsqrt.pop %v5625
        %v5634 = vrsqrt.pop %v5626
        %5643 = vrot.lane.b32.xlu0 %v5627, 2
        %v5644 = vpop.permute.xlu0 %5643
        %5645 = vrot.lane.b32.xlu0 %v5628, 2
        %v5646 = vpop.permute.xlu0 %5645
        %5647 = vrot.lane.b32.xlu0 %v5629, 2
        %v5648 = vpop.permute.xlu0 %5647
        %5649 = vrot.lane.b32.xlu0 %v5630, 2
        %v5650 = vpop.permute.xlu0 %5649
        %5651 = vrot.lane.b32.xlu0 %v5631, 2
        %v5652 = vpop.permute.xlu0 %5651
        %5653 = vrot.lane.b32.xlu0 %v5632, 2
        %v5654 = vpop.permute.xlu0 %5653
        %5655 = vrot.lane.b32.xlu0 %v5633, 2
        %v5656 = vpop.permute.xlu0 %5655
        %5657 = vrot.lane.b32.xlu0 %v5634, 2
        %v5658 = vpop.permute.xlu0 %5657
        %v5659 = vsel %vm501, %v5644, %v5646
        %v5660 = vsel %vm501, %v5648, %v5650
        %v5661 = vsel %vm501, %v5652, %v5654
        %v5662 = vsel %vm501, %v5656, %v5658
        %v5667 = vmul.f32 %v5447, %v5659
        %v5668 = vmul.f32 %v5448, %v5660
        %v5669 = vmul.f32 %v5449, %v5661
        %v5670 = vmul.f32 %v5450, %v5662
        %v5671 = vmul.f32 %v5221, %v5667
        %v5672 = vmul.f32 %v5224, %v5668
        %v5673 = vmul.f32 %v5229, %v5669
        %v5674 = vmul.f32 %v5232, %v5670
        %v5675 = vadd.f32 %v5671, %v5237
        %v5676 = vadd.f32 %v5672, %v5240
        %v5677 = vadd.f32 %v5673, %v5245
        %v5678 = vadd.f32 %v5674, %v5248
        %s5679 = scalar_lea.vmem [#allocation18], 96
        %v5680 = vld [vmem:[%s5679] sm:$0xff]
        %v5681 = vld [vmem:[%s5679 + $0x8] sm:$0xff]
        %v5682 = vld [vmem:[%s5679 + $0x10] sm:$0xff]
        %v5683 = vld [vmem:[%s5679 + $0x18] sm:$0xff]
        %s5684 = scalar_lea.vmem [#allocation16], 96
        %v5685 = vld [vmem:[%s5684] sm:$0xff]
        %v5686 = vld [vmem:[%s5684 + $0x8] sm:$0xff]
        %v5687 = vld [vmem:[%s5684 + $0x10] sm:$0xff]
        %v5688 = vld [vmem:[%s5684 + $0x18] sm:$0xff]
        %5690 = vset.pattern.permute.xlu0 0
        %5691 = vperm.xlu0 %5690, %v5685
        %v5692 = vpop.permute.xlu0 %5691
        %5695 = vset.pattern.permute.xlu0 0
        %5696 = vperm.xlu0 %5695, %v5686
        %v5697 = vpop.permute.xlu0 %5696
        %5700 = vset.pattern.permute.xlu0 0
        %5701 = vperm.xlu0 %5700, %v5687
        %v5702 = vpop.permute.xlu0 %5701
        %5705 = vset.pattern.permute.xlu0 0
        %5706 = vperm.xlu0 %5705, %v5688
        %v5707 = vpop.permute.xlu0 %5706
        %v5709 = vmul.f32 %v5692, %v5675
        %v5710 = vmul.f32 %v5697, %v5676
        %v5711 = vmul.f32 %v5702, %v5677
        %v5712 = vmul.f32 %v5707, %v5678
        %v5713 = vand.u32 2147483647, %v5709
        %vm5714 = vcmp.le.f32.partialorder %v5713, 0.7853982
        %vm5715 = vcmp.lt.s32.totalorder %v5709, 0
        %v5716 = vand.u32 %v5709, 2139095040
        %v5717 = vshrl.u32 %v5716, 23
        %v5718 = vsub.s32 %v5717, 127
        %v5719 = vand.u32 2147483647, %v5709
        %v5720 = vand.u32 %v5719, 8388607
        %v5721 = vor.u32 %v5720, 8388608
        %v5722 = vsub.s32 0, %v5721
        %v5723 = vadd.s32 %v5718, 1
        %vm5724 = vcmp.gt.s32.totalorder %v5723, 0
        %v5725 = vsel %vm5724, %v5723, 0
        %v5726 = vshrl.u32 %v5725, 5
        %v5727 = vand.u32 %v5725, 31
        %v5728 = vsub.s32 32, %v5727
        %v5729 = vshrl.u32 683565275, %v5728
        %v5730 = vshll.u32 683565275, %v5727
        %v5731 = vshrl.u32 2475754826, %v5728
        %v5732 = vor.u32 %v5730, %v5731
        %v5733 = vshll.u32 2475754826, %v5727
        %v5734 = vshrl.u32 2131351028, %v5728
        %v5735 = vor.u32 %v5733, %v5734
        %v5736 = vshll.u32 2131351028, %v5727
        %v5737 = vshrl.u32 2102212464, %v5728
        %v5738 = vor.u32 %v5736, %v5737
        %v5739 = vshll.u32 2102212464, %v5727
        %v5740 = vshrl.u32 920167782, %v5728
        %v5741 = vor.u32 %v5739, %v5740
        %v5742 = vshll.u32 920167782, %v5727
        %v5743 = vshrl.u32 1326507024, %v5728
        %v5744 = vor.u32 %v5742, %v5743
        %vm5745 = vcmp.lt.s32.totalorder %v5726, 1
        %vm5746 = vcmp.lt.s32.totalorder %v5726, 2
        %vm5747 = vcmp.lt.s32.totalorder %v5726, 3
        %vm5748 = vcmp.lt.s32.totalorder %v5726, 4
        %v5749 = vsel %vm5745, %v5729, %v5732
        %v5750 = vsel %vm5748, %v5738, 2102212464
        %v5751 = vsel %vm5747, %v5735, %v5750
        %v5752 = vsel %vm5746, %v5749, %v5751
        %v5753 = vsel %vm5745, %v5732, %v5735
        %v5754 = vsel %vm5748, %v5741, 920167782
        %v5755 = vsel %vm5747, %v5738, %v5754
        %v5756 = vsel %vm5746, %v5753, %v5755
        %v5757 = vsel %vm5745, %v5735, %v5738
        %v5758 = vsel %vm5748, %v5744, 1326507024
        %v5759 = vsel %vm5747, %v5741, %v5758
        %v5760 = vsel %vm5746, %v5757, %v5759
        %v5761 = vshll.u32 %v5721, 8
        %v5762 = vmul.u32.u64.compose %v5761, %v5760
        %v5763 = vextract.low.u32 %v5762
        %v5764 = vextract.high.u32 %v5762
        %v5765 = vmul.u32.u64.compose %v5761, %v5756
        %v5766 = vextract.low.u32 %v5765
        %v5767 = vextract.high.u32 %v5765
        %v5768 = vmul.u32 %v5761, %v5752
        %v5769 = vadd.s32 %v5764, %v5766
        %vm5770 = vc.u32 %v5764, %v5766
        %v5771 = vadd.s32 %v5767, 1
        %v5772 = vsel %vm5770, %v5771, %v5767
        %v5773 = vadd.s32 %v5768, %v5772
        %v5774 = vadd.s32 %v5773, 536870912
        %v5775 = vshrl.u32 %v5774, 30
        %v5776 = vshll.u32 %v5775, 30
        %v5777 = vsub.s32 %v5773, %v5776
        %vm5778 = vcmp.lt.s32.totalorder %v5777, 0
        %v5779 = vsub.s32 0, %v5777
        %v5780 = vsel %vm5778, %v5779, %v5777
        %v5781 = vclz %v5780
        %v5782 = vsub.s32 %v5781, 2
        %vm5783 = vcmp.gt.s32.totalorder 0, %v5782
        %v5784 = vsel %vm5783, 0, %v5782
        %v5785 = vsub.s32 32, %v5784
        %v5786 = vshll.u32 %v5777, %v5784
        %v5787 = vshrl.u32 %v5769, %v5785
        %v5788 = vor.u32 %v5786, %v5787
        %v5789 = vsub.s32 4294967266, %v5784
        %v5790 = vadd.s32 %v5789, 127
        %v5791 = vshll.u32 %v5790, 23
        %v5792 = vor.u32 4788187, %v5791
        %v5793 = vand.u32 2147483647, %v5792
        %v5795 = vcvt.s32.f32 %v5788
        %v5796 = vmul.f32 %v5795, %v5793
        %v5797 = vxor.u32 %v5796, 2147483648
        %v5798 = vsel %vm5715, %v5797, %v5796
        %v5799 = vsub.s32 4, %v5775
        %v5800 = vsel %vm5715, %v5799, %v5775
        %v5801 = vsel %vm5714, %v5709, %v5798
        %v5802 = vsel %vm5714, 0, %v5800
        %v5803 = vcosq.f32.pop %v5801
        %v5804 = vsinq.f32.pop %v5801
        %vm5805 = vweird.f32 %v5709
        %v5806 = vand.u32 %v5802, 3
        %vm5807 = vcmp.lt.s32.totalorder %v5806, 2
        %vm5808 = vcmp.eq.s32.totalorder %v5806, 0
        %v5809 = vxor.u32 %v5804, 2147483648
        %v5810 = vsel %vm5808, %v5803, %v5809
        %vm5811 = vcmp.eq.s32.totalorder %v5806, 2
        %v5812 = vxor.u32 %v5803, 2147483648
        %v5813 = vsel %vm5811, %v5812, %v5804
        %v5814 = vsel %vm5807, %v5810, %v5813
        %v5815 = vsel %vm5805, nan, %v5814
        %v5816 = vand.u32 2147483647, %v5710
        %vm5817 = vcmp.le.f32.partialorder %v5816, 0.7853982
        %vm5818 = vcmp.lt.s32.totalorder %v5710, 0
        %v5819 = vand.u32 %v5710, 2139095040
        %v5820 = vshrl.u32 %v5819, 23
        %v5821 = vsub.s32 %v5820, 127
        %v5822 = vand.u32 2147483647, %v5710
        %v5823 = vand.u32 %v5822, 8388607
        %v5824 = vor.u32 %v5823, 8388608
        %v5825 = vsub.s32 0, %v5824
        %v5826 = vadd.s32 %v5821, 1
        %vm5827 = vcmp.gt.s32.totalorder %v5826, 0
        %v5828 = vsel %vm5827, %v5826, 0
        %v5829 = vshrl.u32 %v5828, 5
        %v5830 = vand.u32 %v5828, 31
        %v5831 = vsub.s32 32, %v5830
        %v5832 = vshrl.u32 683565275, %v5831
        %v5833 = vshll.u32 683565275, %v5830
        %v5834 = vshrl.u32 2475754826, %v5831
        %v5835 = vor.u32 %v5833, %v5834
        %v5836 = vshll.u32 2475754826, %v5830
        %v5837 = vshrl.u32 2131351028, %v5831
        %v5838 = vor.u32 %v5836, %v5837
        %v5839 = vshll.u32 2131351028, %v5830
        %v5840 = vshrl.u32 2102212464, %v5831
        %v5841 = vor.u32 %v5839, %v5840
        %v5842 = vshll.u32 2102212464, %v5830
        %v5843 = vshrl.u32 920167782, %v5831
        %v5844 = vor.u32 %v5842, %v5843
        %v5845 = vshll.u32 920167782, %v5830
        %v5846 = vshrl.u32 1326507024, %v5831
        %v5847 = vor.u32 %v5845, %v5846
        %vm5848 = vcmp.lt.s32.totalorder %v5829, 1
        %vm5849 = vcmp.lt.s32.totalorder %v5829, 2
        %vm5850 = vcmp.lt.s32.totalorder %v5829, 3
        %vm5851 = vcmp.lt.s32.totalorder %v5829, 4
        %v5852 = vsel %vm5848, %v5832, %v5835
        %v5853 = vsel %vm5851, %v5841, 2102212464
        %v5854 = vsel %vm5850, %v5838, %v5853
        %v5855 = vsel %vm5849, %v5852, %v5854
        %v5856 = vsel %vm5848, %v5835, %v5838
        %v5857 = vsel %vm5851, %v5844, 920167782
        %v5858 = vsel %vm5850, %v5841, %v5857
        %v5859 = vsel %vm5849, %v5856, %v5858
        %v5860 = vsel %vm5848, %v5838, %v5841
        %v5861 = vsel %vm5851, %v5847, 1326507024
        %v5862 = vsel %vm5850, %v5844, %v5861
        %v5863 = vsel %vm5849, %v5860, %v5862
        %v5864 = vshll.u32 %v5824, 8
        %v5865 = vmul.u32.u64.compose %v5864, %v5863
        %v5866 = vextract.low.u32 %v5865
        %v5867 = vextract.high.u32 %v5865
        %v5868 = vmul.u32.u64.compose %v5864, %v5859
        %v5869 = vextract.low.u32 %v5868
        %v5870 = vextract.high.u32 %v5868
        %v5871 = vmul.u32 %v5864, %v5855
        %v5872 = vadd.s32 %v5867, %v5869
        %vm5873 = vc.u32 %v5867, %v5869
        %v5874 = vadd.s32 %v5870, 1
        %v5875 = vsel %vm5873, %v5874, %v5870
        %v5876 = vadd.s32 %v5871, %v5875
        %v5877 = vadd.s32 %v5876, 536870912
        %v5878 = vshrl.u32 %v5877, 30
        %v5879 = vshll.u32 %v5878, 30
        %v5880 = vsub.s32 %v5876, %v5879
        %vm5881 = vcmp.lt.s32.totalorder %v5880, 0
        %v5882 = vsub.s32 0, %v5880
        %v5883 = vsel %vm5881, %v5882, %v5880
        %v5884 = vclz %v5883
        %v5885 = vsub.s32 %v5884, 2
        %vm5886 = vcmp.gt.s32.totalorder 0, %v5885
        %v5887 = vsel %vm5886, 0, %v5885
        %v5888 = vsub.s32 32, %v5887
        %v5889 = vshll.u32 %v5880, %v5887
        %v5890 = vshrl.u32 %v5872, %v5888
        %v5891 = vor.u32 %v5889, %v5890
        %v5892 = vsub.s32 4294967266, %v5887
        %v5893 = vadd.s32 %v5892, 127
        %v5894 = vshll.u32 %v5893, 23
        %v5895 = vor.u32 4788187, %v5894
        %v5896 = vand.u32 2147483647, %v5895
        %v5898 = vcvt.s32.f32 %v5891
        %v5899 = vmul.f32 %v5898, %v5896
        %v5900 = vxor.u32 %v5899, 2147483648
        %v5901 = vsel %vm5818, %v5900, %v5899
        %v5902 = vsub.s32 4, %v5878
        %v5903 = vsel %vm5818, %v5902, %v5878
        %v5904 = vsel %vm5817, %v5710, %v5901
        %v5905 = vsel %vm5817, 0, %v5903
        %v5906 = vcosq.f32.pop %v5904
        %v5907 = vsinq.f32.pop %v5904
        %vm5908 = vweird.f32 %v5710
        %v5909 = vand.u32 %v5905, 3
        %vm5910 = vcmp.lt.s32.totalorder %v5909, 2
        %vm5911 = vcmp.eq.s32.totalorder %v5909, 0
        %v5912 = vxor.u32 %v5907, 2147483648
        %v5913 = vsel %vm5911, %v5906, %v5912
        %vm5914 = vcmp.eq.s32.totalorder %v5909, 2
        %v5915 = vxor.u32 %v5906, 2147483648
        %v5916 = vsel %vm5914, %v5915, %v5907
        %v5917 = vsel %vm5910, %v5913, %v5916
        %v5918 = vsel %vm5908, nan, %v5917
        %v5919 = vand.u32 2147483647, %v5711
        %vm5920 = vcmp.le.f32.partialorder %v5919, 0.7853982
        %vm5921 = vcmp.lt.s32.totalorder %v5711, 0
        %v5922 = vand.u32 %v5711, 2139095040
        %v5923 = vshrl.u32 %v5922, 23
        %v5924 = vsub.s32 %v5923, 127
        %v5925 = vand.u32 2147483647, %v5711
        %v5926 = vand.u32 %v5925, 8388607
        %v5927 = vor.u32 %v5926, 8388608
        %v5928 = vsub.s32 0, %v5927
        %v5929 = vadd.s32 %v5924, 1
        %vm5930 = vcmp.gt.s32.totalorder %v5929, 0
        %v5931 = vsel %vm5930, %v5929, 0
        %v5932 = vshrl.u32 %v5931, 5
        %v5933 = vand.u32 %v5931, 31
        %v5934 = vsub.s32 32, %v5933
        %v5935 = vshrl.u32 683565275, %v5934
        %v5936 = vshll.u32 683565275, %v5933
        %v5937 = vshrl.u32 2475754826, %v5934
        %v5938 = vor.u32 %v5936, %v5937
        %v5939 = vshll.u32 2475754826, %v5933
        %v5940 = vshrl.u32 2131351028, %v5934
        %v5941 = vor.u32 %v5939, %v5940
        %v5942 = vshll.u32 2131351028, %v5933
        %v5943 = vshrl.u32 2102212464, %v5934
        %v5944 = vor.u32 %v5942, %v5943
        %v5945 = vshll.u32 2102212464, %v5933
        %v5946 = vshrl.u32 920167782, %v5934
        %v5947 = vor.u32 %v5945, %v5946
        %v5948 = vshll.u32 920167782, %v5933
        %v5949 = vshrl.u32 1326507024, %v5934
        %v5950 = vor.u32 %v5948, %v5949
        %vm5951 = vcmp.lt.s32.totalorder %v5932, 1
        %vm5952 = vcmp.lt.s32.totalorder %v5932, 2
        %vm5953 = vcmp.lt.s32.totalorder %v5932, 3
        %vm5954 = vcmp.lt.s32.totalorder %v5932, 4
        %v5955 = vsel %vm5951, %v5935, %v5938
        %v5956 = vsel %vm5954, %v5944, 2102212464
        %v5957 = vsel %vm5953, %v5941, %v5956
        %v5958 = vsel %vm5952, %v5955, %v5957
        %v5959 = vsel %vm5951, %v5938, %v5941
        %v5960 = vsel %vm5954, %v5947, 920167782
        %v5961 = vsel %vm5953, %v5944, %v5960
        %v5962 = vsel %vm5952, %v5959, %v5961
        %v5963 = vsel %vm5951, %v5941, %v5944
        %v5964 = vsel %vm5954, %v5950, 1326507024
        %v5965 = vsel %vm5953, %v5947, %v5964
        %v5966 = vsel %vm5952, %v5963, %v5965
        %v5967 = vshll.u32 %v5927, 8
        %v5968 = vmul.u32.u64.compose %v5967, %v5966
        %v5969 = vextract.low.u32 %v5968
        %v5970 = vextract.high.u32 %v5968
        %v5971 = vmul.u32.u64.compose %v5967, %v5962
        %v5972 = vextract.low.u32 %v5971
        %v5973 = vextract.high.u32 %v5971
        %v5974 = vmul.u32 %v5967, %v5958
        %v5975 = vadd.s32 %v5970, %v5972
        %vm5976 = vc.u32 %v5970, %v5972
        %v5977 = vadd.s32 %v5973, 1
        %v5978 = vsel %vm5976, %v5977, %v5973
        %v5979 = vadd.s32 %v5974, %v5978
        %v5980 = vadd.s32 %v5979, 536870912
        %v5981 = vshrl.u32 %v5980, 30
        %v5982 = vshll.u32 %v5981, 30
        %v5983 = vsub.s32 %v5979, %v5982
        %vm5984 = vcmp.lt.s32.totalorder %v5983, 0
        %v5985 = vsub.s32 0, %v5983
        %v5986 = vsel %vm5984, %v5985, %v5983
        %v5987 = vclz %v5986
        %v5988 = vsub.s32 %v5987, 2
        %vm5989 = vcmp.gt.s32.totalorder 0, %v5988
        %v5990 = vsel %vm5989, 0, %v5988
        %v5991 = vsub.s32 32, %v5990
        %v5992 = vshll.u32 %v5983, %v5990
        %v5993 = vshrl.u32 %v5975, %v5991
        %v5994 = vor.u32 %v5992, %v5993
        %v5995 = vsub.s32 4294967266, %v5990
        %v5996 = vadd.s32 %v5995, 127
        %v5997 = vshll.u32 %v5996, 23
        %v5998 = vor.u32 4788187, %v5997
        %v5999 = vand.u32 2147483647, %v5998
        %v6001 = vcvt.s32.f32 %v5994
        %v6002 = vmul.f32 %v6001, %v5999
        %v6003 = vxor.u32 %v6002, 2147483648
        %v6004 = vsel %vm5921, %v6003, %v6002
        %v6005 = vsub.s32 4, %v5981
        %v6006 = vsel %vm5921, %v6005, %v5981
        %v6007 = vsel %vm5920, %v5711, %v6004
        %v6008 = vsel %vm5920, 0, %v6006
        %v6009 = vcosq.f32.pop %v6007
        %v6010 = vsinq.f32.pop %v6007
        %vm6011 = vweird.f32 %v5711
        %v6012 = vand.u32 %v6008, 3
        %vm6013 = vcmp.lt.s32.totalorder %v6012, 2
        %vm6014 = vcmp.eq.s32.totalorder %v6012, 0
        %v6015 = vxor.u32 %v6010, 2147483648
        %v6016 = vsel %vm6014, %v6009, %v6015
        %vm6017 = vcmp.eq.s32.totalorder %v6012, 2
        %v6018 = vxor.u32 %v6009, 2147483648
        %v6019 = vsel %vm6017, %v6018, %v6010
        %v6020 = vsel %vm6013, %v6016, %v6019
        %v6021 = vsel %vm6011, nan, %v6020
        %v6022 = vand.u32 2147483647, %v5712
        %vm6023 = vcmp.le.f32.partialorder %v6022, 0.7853982
        %vm6024 = vcmp.lt.s32.totalorder %v5712, 0
        %v6025 = vand.u32 %v5712, 2139095040
        %v6026 = vshrl.u32 %v6025, 23
        %v6027 = vsub.s32 %v6026, 127
        %v6028 = vand.u32 2147483647, %v5712
        %v6029 = vand.u32 %v6028, 8388607
        %v6030 = vor.u32 %v6029, 8388608
        %v6031 = vsub.s32 0, %v6030
        %v6032 = vadd.s32 %v6027, 1
        %vm6033 = vcmp.gt.s32.totalorder %v6032, 0
        %v6034 = vsel %vm6033, %v6032, 0
        %v6035 = vshrl.u32 %v6034, 5
        %v6036 = vand.u32 %v6034, 31
        %v6037 = vsub.s32 32, %v6036
        %v6038 = vshrl.u32 683565275, %v6037
        %v6039 = vshll.u32 683565275, %v6036
        %v6040 = vshrl.u32 2475754826, %v6037
        %v6041 = vor.u32 %v6039, %v6040
        %v6042 = vshll.u32 2475754826, %v6036
        %v6043 = vshrl.u32 2131351028, %v6037
        %v6044 = vor.u32 %v6042, %v6043
        %v6045 = vshll.u32 2131351028, %v6036
        %v6046 = vshrl.u32 2102212464, %v6037
        %v6047 = vor.u32 %v6045, %v6046
        %v6048 = vshll.u32 2102212464, %v6036
        %v6049 = vshrl.u32 920167782, %v6037
        %v6050 = vor.u32 %v6048, %v6049
        %v6051 = vshll.u32 920167782, %v6036
        %v6052 = vshrl.u32 1326507024, %v6037
        %v6053 = vor.u32 %v6051, %v6052
        %vm6054 = vcmp.lt.s32.totalorder %v6035, 1
        %vm6055 = vcmp.lt.s32.totalorder %v6035, 2
        %vm6056 = vcmp.lt.s32.totalorder %v6035, 3
        %vm6057 = vcmp.lt.s32.totalorder %v6035, 4
        %v6058 = vsel %vm6054, %v6038, %v6041
        %v6059 = vsel %vm6057, %v6047, 2102212464
        %v6060 = vsel %vm6056, %v6044, %v6059
        %v6061 = vsel %vm6055, %v6058, %v6060
        %v6062 = vsel %vm6054, %v6041, %v6044
        %v6063 = vsel %vm6057, %v6050, 920167782
        %v6064 = vsel %vm6056, %v6047, %v6063
        %v6065 = vsel %vm6055, %v6062, %v6064
        %v6066 = vsel %vm6054, %v6044, %v6047
        %v6067 = vsel %vm6057, %v6053, 1326507024
        %v6068 = vsel %vm6056, %v6050, %v6067
        %v6069 = vsel %vm6055, %v6066, %v6068
        %v6070 = vshll.u32 %v6030, 8
        %v6071 = vmul.u32.u64.compose %v6070, %v6069
        %v6072 = vextract.low.u32 %v6071
        %v6073 = vextract.high.u32 %v6071
        %v6074 = vmul.u32.u64.compose %v6070, %v6065
        %v6075 = vextract.low.u32 %v6074
        %v6076 = vextract.high.u32 %v6074
        %v6077 = vmul.u32 %v6070, %v6061
        %v6078 = vadd.s32 %v6073, %v6075
        %vm6079 = vc.u32 %v6073, %v6075
        %v6080 = vadd.s32 %v6076, 1
        %v6081 = vsel %vm6079, %v6080, %v6076
        %v6082 = vadd.s32 %v6077, %v6081
        %v6083 = vadd.s32 %v6082, 536870912
        %v6084 = vshrl.u32 %v6083, 30
        %v6085 = vshll.u32 %v6084, 30
        %v6086 = vsub.s32 %v6082, %v6085
        %vm6087 = vcmp.lt.s32.totalorder %v6086, 0
        %v6088 = vsub.s32 0, %v6086
        %v6089 = vsel %vm6087, %v6088, %v6086
        %v6090 = vclz %v6089
        %v6091 = vsub.s32 %v6090, 2
        %vm6092 = vcmp.gt.s32.totalorder 0, %v6091
        %v6093 = vsel %vm6092, 0, %v6091
        %v6094 = vsub.s32 32, %v6093
        %v6095 = vshll.u32 %v6086, %v6093
        %v6096 = vshrl.u32 %v6078, %v6094
        %v6097 = vor.u32 %v6095, %v6096
        %v6098 = vsub.s32 4294967266, %v6093
        %v6099 = vadd.s32 %v6098, 127
        %v6100 = vshll.u32 %v6099, 23
        %v6101 = vor.u32 4788187, %v6100
        %v6102 = vand.u32 2147483647, %v6101
        %v6104 = vcvt.s32.f32 %v6097
        %v6105 = vmul.f32 %v6104, %v6102
        %v6106 = vxor.u32 %v6105, 2147483648
        %v6107 = vsel %vm6024, %v6106, %v6105
        %v6108 = vsub.s32 4, %v6084
        %v6109 = vsel %vm6024, %v6108, %v6084
        %v6110 = vsel %vm6023, %v5712, %v6107
        %v6111 = vsel %vm6023, 0, %v6109
        %v6112 = vcosq.f32.pop %v6110
        %v6113 = vsinq.f32.pop %v6110
        %vm6114 = vweird.f32 %v5712
        %v6115 = vand.u32 %v6111, 3
        %vm6116 = vcmp.lt.s32.totalorder %v6115, 2
        %vm6117 = vcmp.eq.s32.totalorder %v6115, 0
        %v6118 = vxor.u32 %v6113, 2147483648
        %v6119 = vsel %vm6117, %v6112, %v6118
        %vm6120 = vcmp.eq.s32.totalorder %v6115, 2
        %v6121 = vxor.u32 %v6112, 2147483648
        %v6122 = vsel %vm6120, %v6121, %v6113
        %v6123 = vsel %vm6116, %v6119, %v6122
        %v6124 = vsel %vm6114, nan, %v6123
        %v6125 = vsub.f32 1.0, %v5815
        %v6126 = vsub.f32 1.0, %v5918
        %v6127 = vsub.f32 1.0, %v6021
        %v6128 = vsub.f32 1.0, %v6124
        %6130 = vset.pattern.permute.xlu0 0
        %6131 = vperm.xlu0 %6130, %v5680
        %v6132 = vpop.permute.xlu0 %6131
        %6135 = vset.pattern.permute.xlu0 0
        %6136 = vperm.xlu0 %6135, %v5681
        %v6137 = vpop.permute.xlu0 %6136
        %6140 = vset.pattern.permute.xlu0 0
        %6141 = vperm.xlu0 %6140, %v5682
        %v6142 = vpop.permute.xlu0 %6141
        %6145 = vset.pattern.permute.xlu0 0
        %6146 = vperm.xlu0 %6145, %v5683
        %v6147 = vpop.permute.xlu0 %6146
        %v6149 = vmul.f32 %v6132, %v6125
        %v6150 = vmul.f32 %v6137, %v6126
        %v6151 = vmul.f32 %v6142, %v6127
        %v6152 = vmul.f32 %v6147, %v6128
        %v6153 = vadd.f32 %v5675, %v6149
        %v6154 = vadd.f32 %v5676, %v6150
        %v6155 = vadd.f32 %v5677, %v6151
        %v6156 = vadd.f32 %v5678, %v6152
        %v6157 = vpack.c.bf16 %v6154, %v6153
        %v6158 = vpack.c.bf16 %v6156, %v6155
        %6159 = vst [vmem:[#allocation3 + $0x8] sm:$0xff] %v6157
        %6160 = vst [vmem:[#allocation3 + $0x20] sm:$0xff] %v6158
        %v6161 = vld [vmem:[#allocation3 + $0x8] sm:$0xff]
        %v6162 = vld [vmem:[#allocation3 + $0x20] sm:$0xff]
        %6165 = vrot.lane.b32.xlu0 %v6161, 126
        %v6166 = vpop.permute.xlu0 %6165
        %6167 = vrot.lane.b32.xlu0 %v6162, 126
        %v6168 = vpop.permute.xlu0 %6167
        %6171 = vst.msk [vmem:[#allocation3] sm:$0xff] %vm1974, %v6166
        %6172 = vst.msk [vmem:[#allocation3 + $0x18] sm:$0xff] %vm1974, %v6168
        %v6173 = vld [vmem:[#allocation3 + $0x8] sm:$0xff]
        %v6174 = vld [vmem:[#allocation3 + $0x20] sm:$0xff]
        %6177 = vrot.lane.b32.xlu0 %v6173, 2
        %v6178 = vpop.permute.xlu0 %6177
        %6179 = vrot.lane.b32.xlu0 %v6174, 2
        %v6180 = vpop.permute.xlu0 %6179
        %6183 = vst.msk [vmem:[#allocation3 + $0x10] sm:$0xff] %vm1987, %v6178
        %6184 = vst.msk [vmem:[#allocation3 + $0x28] sm:$0xff] %vm1987, %v6180
        %s6185 = scalar_lea.vmem [#allocation15], 96
        %v6186 = vld [vmem:[%s6185] sm:$0xff]
        %v6187 = vld [vmem:[%s6185 + $0x8] sm:$0xff]
        %v6188 = vld [vmem:[%s6185 + $0x10] sm:$0xff]
        %v6189 = vld [vmem:[%s6185 + $0x18] sm:$0xff]
        %s6190 = scalar_lea.vmem [#allocation13], 144
        %v6191 = vld [vmem:[%s6190] sm:$0xf]
        %v6192 = vld [vmem:[%s6190 + $0x4] sm:$0xf]
        %v6193 = vld [vmem:[%s6190 + $0x8] sm:$0xf]
        %v6194 = vld [vmem:[%s6190 + $0xc] sm:$0xf]
        %v6195 = vld [vmem:[#allocation3] sm:$0xff]
        %v6196 = vld [vmem:[#allocation3 + $0x8] sm:$0xff]
        %v6197 = vld [vmem:[#allocation3 + $0x18] sm:$0xff]
        %v6198 = vld [vmem:[#allocation3 + $0x20] sm:$0xff]
        %v6203 = vunpack.c.l.b16 %v6191
        %v6204 = vunpack.c.l.b16 %v6192
        %v6205 = vunpack.c.l.b16 %v6193
        %v6206 = vunpack.c.l.b16 %v6194
        %v6207 = vpack.c.b16 %v6204, %v6203
        %v6208 = vpack.c.b16 %v6206, %v6205
        %6213 = vrot.lane.b32.xlu0 %v6195, 1
        %v6214 = vpop.permute.xlu0 %6213
        %6215 = vrot.lane.b32.xlu0 %v6196, 1
        %v6216 = vpop.permute.xlu0 %6215
        %6217 = vrot.lane.b32.xlu0 %v6197, 1
        %v6218 = vpop.permute.xlu0 %6217
        %6219 = vrot.lane.b32.xlu0 %v6198, 1
        %v6220 = vpop.permute.xlu0 %6219
        %v6221 = vsel %vm2024, %v6214, %v6216
        %v6222 = vsel %vm2024, %v6218, %v6220
        %v6226 = vsel %vm2029, %v6207, 0
        %v6229 = vsel %vm2029, %v6208, 0
        %6231 = vmatprep.subr.bf16.mxu0 0
        %6232 = vmatpush1.bf16.msra.mxu0 %v6221
        %6233 = vmatprep.subr.bf16.mxu0 0
        %6234 = vmatpush1.bf16.msra.mxu0 %v6222
        %6235 = vmatprep.subr.bf16.mxu0 0
        %6236 = vmatpush1.bf16.msra.mxu0 0
        %6237 = vmatprep.subr.bf16.mxu0 0
        %6238 = vmatpush1.bf16.msra.mxu0 0
        %6239 = vmatprep.subr.bf16.mxu0 0
        %6240 = vmatpush1.bf16.msra.mxu0 0
        %6241 = vmatprep.subr.bf16.mxu0 0
        %6242 = vmatpush1.bf16.msra.mxu0 0
        %6243 = vmatprep.subr.bf16.mxu0 0
        %6244 = vmatpush1.bf16.msra.mxu0 0
        %6245 = vmatprep.subr.bf16.mxu0 0
        %6246 = vmatpush1.bf16.msra.mxu0 0
        %6247 = vmatprep.subr.bf16.mxu0 0
        %6248 = vmatpush1.bf16.msra.mxu0 0
        %6249 = vmatprep.subr.bf16.mxu0 0
        %6250 = vmatpush1.bf16.msra.mxu0 0
        %6251 = vmatprep.subr.bf16.mxu0 0
        %6252 = vmatpush1.bf16.msra.mxu0 0
        %6253 = vmatprep.subr.bf16.mxu0 0
        %6254 = vmatpush1.bf16.msra.mxu0 0
        %6255 = vmatprep.subr.bf16.mxu0 0
        %6256 = vmatpush1.bf16.msra.mxu0 0
        %6257 = vmatprep.subr.bf16.mxu0 0
        %6258 = vmatpush1.bf16.msra.mxu0 0
        %6259 = vmatprep.subr.bf16.mxu0 0
        %6260 = vmatpush1.bf16.msra.mxu0 0
        %6261 = vmatprep.subr.bf16.mxu0 0
        %6262 = vmatpush1.bf16.msra.mxu0 0
        %6263 = vmatprep.mubr.bf16.mxu0 0
        %6264 = vmatmul.mubr.bf16.gmra.mrb[0].mxu0 %v6226
        %v6265 = vpop.f32.mrb[0].mxu0
        %v6266 = vadd.f32 0.0, %v6265
        %v6267 = vpop.f32.mrb[0].mxu0
        %v6268 = vpop.f32.mrb[0].mxu0
        %v6269 = vadd.f32 0.0, %v6268
        %v6270 = vpop.f32.mrb[0].mxu0
        %6271 = vmatprep.mubr.bf16.mxu0 0
        %6272 = vmatmul.mubr.bf16.gmra.mrb[0].mxu0 %v6229
        %v6273 = vpop.f32.mrb[0].mxu0
        %v6274 = vadd.f32 0.0, %v6273
        %v6275 = vpop.f32.mrb[0].mxu0
        %v6276 = vpop.f32.mrb[0].mxu0
        %v6277 = vadd.f32 0.0, %v6276
        %v6278 = vpop.f32.mrb[0].mxu0
        %6279 = vdwg.mxu0
        %6281 = vset.pattern.permute.xlu0 0
        %6282 = vperm.xlu0 %6281, %v6186
        %v6283 = vpop.permute.xlu0 %6282
        %6286 = vset.pattern.permute.xlu0 0
        %6287 = vperm.xlu0 %6286, %v6187
        %v6288 = vpop.permute.xlu0 %6287
        %6291 = vset.pattern.permute.xlu0 0
        %6292 = vperm.xlu0 %6291, %v6188
        %v6293 = vpop.permute.xlu0 %6292
        %6296 = vset.pattern.permute.xlu0 0
        %6297 = vperm.xlu0 %6296, %v6189
        %v6298 = vpop.permute.xlu0 %6297
        %v6300 = vadd.f32 %v6283, %v6266
        %v6301 = vadd.f32 %v6288, %v6269
        %v6302 = vadd.f32 %v6293, %v6274
        %v6303 = vadd.f32 %v6298, %v6277
        %s6304 = scalar_lea.vmem [#allocation13], 160
        %v6305 = vld [vmem:[%s6304] sm:$0xf]
        %v6306 = vld [vmem:[%s6304 + $0x4] sm:$0xf]
        %v6307 = vld [vmem:[%s6304 + $0x8] sm:$0xf]
        %v6308 = vld [vmem:[%s6304 + $0xc] sm:$0xf]
        %v6313 = vunpack.c.l.b16 %v6305
        %v6314 = vunpack.c.l.b16 %v6306
        %v6315 = vunpack.c.l.b16 %v6307
        %v6316 = vunpack.c.l.b16 %v6308
        %v6317 = vpack.c.b16 %v6314, %v6313
        %v6318 = vpack.c.b16 %v6316, %v6315
        %v6320 = vsel %vm2029, %v6317, 0
        %v6323 = vsel %vm2029, %v6318, 0
        %6325 = vmatprep.subr.bf16.mxu0 0
        %6326 = vmatpush1.bf16.msra.mxu0 %v6196
        %6327 = vmatprep.subr.bf16.mxu0 0
        %6328 = vmatpush1.bf16.msra.mxu0 %v6198
        %6329 = vmatprep.subr.bf16.mxu0 0
        %6330 = vmatpush1.bf16.msra.mxu0 0
        %6331 = vmatprep.subr.bf16.mxu0 0
        %6332 = vmatpush1.bf16.msra.mxu0 0
        %6333 = vmatprep.subr.bf16.mxu0 0
        %6334 = vmatpush1.bf16.msra.mxu0 0
        %6335 = vmatprep.subr.bf16.mxu0 0
        %6336 = vmatpush1.bf16.msra.mxu0 0
        %6337 = vmatprep.subr.bf16.mxu0 0
        %6338 = vmatpush1.bf16.msra.mxu0 0
        %6339 = vmatprep.subr.bf16.mxu0 0
        %6340 = vmatpush1.bf16.msra.mxu0 0
        %6341 = vmatprep.subr.bf16.mxu0 0
        %6342 = vmatpush1.bf16.msra.mxu0 0
        %6343 = vmatprep.subr.bf16.mxu0 0
        %6344 = vmatpush1.bf16.msra.mxu0 0
        %6345 = vmatprep.subr.bf16.mxu0 0
        %6346 = vmatpush1.bf16.msra.mxu0 0
        %6347 = vmatprep.subr.bf16.mxu0 0
        %6348 = vmatpush1.bf16.msra.mxu0 0
        %6349 = vmatprep.subr.bf16.mxu0 0
        %6350 = vmatpush1.bf16.msra.mxu0 0
        %6351 = vmatprep.subr.bf16.mxu0 0
        %6352 = vmatpush1.bf16.msra.mxu0 0
        %6353 = vmatprep.subr.bf16.mxu0 0
        %6354 = vmatpush1.bf16.msra.mxu0 0
        %6355 = vmatprep.subr.bf16.mxu0 0
        %6356 = vmatpush1.bf16.msra.mxu0 0
        %6357 = vmatprep.mubr.bf16.mxu0 0
        %6358 = vmatmul.mubr.bf16.gmra.mrb[0].mxu0 %v6320
        %v6359 = vpop.f32.mrb[0].mxu0
        %v6360 = vadd.f32 0.0, %v6359
        %v6361 = vpop.f32.mrb[0].mxu0
        %v6362 = vpop.f32.mrb[0].mxu0
        %v6363 = vadd.f32 0.0, %v6362
        %v6364 = vpop.f32.mrb[0].mxu0
        %6365 = vmatprep.mubr.bf16.mxu0 0
        %6366 = vmatmul.mubr.bf16.gmra.mrb[0].mxu0 %v6323
        %v6367 = vpop.f32.mrb[0].mxu0
        %v6368 = vadd.f32 0.0, %v6367
        %v6369 = vpop.f32.mrb[0].mxu0
        %v6370 = vpop.f32.mrb[0].mxu0
        %v6371 = vadd.f32 0.0, %v6370
        %v6372 = vpop.f32.mrb[0].mxu0
        %6373 = vdwg.mxu0
        %v6374 = vadd.f32 %v6300, %v6360
        %v6375 = vadd.f32 %v6301, %v6363
        %v6376 = vadd.f32 %v6302, %v6368
        %v6377 = vadd.f32 %v6303, %v6371
        %s6378 = scalar_lea.vmem [#allocation13], 176
        %v6379 = vld [vmem:[%s6378] sm:$0xf]
        %v6380 = vld [vmem:[%s6378 + $0x4] sm:$0xf]
        %v6381 = vld [vmem:[%s6378 + $0x8] sm:$0xf]
        %v6382 = vld [vmem:[%s6378 + $0xc] sm:$0xf]
        %v6383 = vld [vmem:[#allocation3 + $0x8] sm:$0xff]
        %v6384 = vld [vmem:[#allocation3 + $0x10] sm:$0xff]
        %v6385 = vld [vmem:[#allocation3 + $0x20] sm:$0xff]
        %v6386 = vld [vmem:[#allocation3 + $0x28] sm:$0xff]
        %v6391 = vunpack.c.l.b16 %v6379
        %v6392 = vunpack.c.l.b16 %v6380
        %v6393 = vunpack.c.l.b16 %v6381
        %v6394 = vunpack.c.l.b16 %v6382
        %v6395 = vpack.c.b16 %v6392, %v6391
        %v6396 = vpack.c.b16 %v6394, %v6393
        %6401 = vrot.lane.b32.xlu0 %v6383, 127
        %v6402 = vpop.permute.xlu0 %6401
        %6403 = vrot.lane.b32.xlu0 %v6384, 127
        %v6404 = vpop.permute.xlu0 %6403
        %6405 = vrot.lane.b32.xlu0 %v6385, 127
        %v6406 = vpop.permute.xlu0 %6405
        %6407 = vrot.lane.b32.xlu0 %v6386, 127
        %v6408 = vpop.permute.xlu0 %6407
        %v6409 = vsel %vm2214, %v6402, %v6404
        %v6410 = vsel %vm2214, %v6406, %v6408
        %v6414 = vsel %vm2029, %v6395, 0
        %v6417 = vsel %vm2029, %v6396, 0
        %6419 = vmatprep.subr.bf16.mxu0 0
        %6420 = vmatpush1.bf16.msra.mxu0 %v6409
        %6421 = vmatprep.subr.bf16.mxu0 0
        %6422 = vmatpush1.bf16.msra.mxu0 %v6410
        %6423 = vmatprep.subr.bf16.mxu0 0
        %6424 = vmatpush1.bf16.msra.mxu0 0
        %6425 = vmatprep.subr.bf16.mxu0 0
        %6426 = vmatpush1.bf16.msra.mxu0 0
        %6427 = vmatprep.subr.bf16.mxu0 0
        %6428 = vmatpush1.bf16.msra.mxu0 0
        %6429 = vmatprep.subr.bf16.mxu0 0
        %6430 = vmatpush1.bf16.msra.mxu0 0
        %6431 = vmatprep.subr.bf16.mxu0 0
        %6432 = vmatpush1.bf16.msra.mxu0 0
        %6433 = vmatprep.subr.bf16.mxu0 0
        %6434 = vmatpush1.bf16.msra.mxu0 0
        %6435 = vmatprep.subr.bf16.mxu0 0
        %6436 = vmatpush1.bf16.msra.mxu0 0
        %6437 = vmatprep.subr.bf16.mxu0 0
        %6438 = vmatpush1.bf16.msra.mxu0 0
        %6439 = vmatprep.subr.bf16.mxu0 0
        %6440 = vmatpush1.bf16.msra.mxu0 0
        %6441 = vmatprep.subr.bf16.mxu0 0
        %6442 = vmatpush1.bf16.msra.mxu0 0
        %6443 = vmatprep.subr.bf16.mxu0 0
        %6444 = vmatpush1.bf16.msra.mxu0 0
        %6445 = vmatprep.subr.bf16.mxu0 0
        %6446 = vmatpush1.bf16.msra.mxu0 0
        %6447 = vmatprep.subr.bf16.mxu0 0
        %6448 = vmatpush1.bf16.msra.mxu0 0
        %6449 = vmatprep.subr.bf16.mxu0 0
        %6450 = vmatpush1.bf16.msra.mxu0 0
        %6451 = vmatprep.mubr.bf16.mxu0 0
        %6452 = vmatmul.mubr.bf16.gmra.mrb[0].mxu0 %v6414
        %v6453 = vpop.f32.mrb[0].mxu0
        %v6454 = vadd.f32 0.0, %v6453
        %v6455 = vpop.f32.mrb[0].mxu0
        %v6456 = vpop.f32.mrb[0].mxu0
        %v6457 = vadd.f32 0.0, %v6456
        %v6458 = vpop.f32.mrb[0].mxu0
        %6459 = vmatprep.mubr.bf16.mxu0 0
        %6460 = vmatmul.mubr.bf16.gmra.mrb[0].mxu0 %v6417
        %v6461 = vpop.f32.mrb[0].mxu0
        %v6462 = vadd.f32 0.0, %v6461
        %v6463 = vpop.f32.mrb[0].mxu0
        %v6464 = vpop.f32.mrb[0].mxu0
        %v6465 = vadd.f32 0.0, %v6464
        %v6466 = vpop.f32.mrb[0].mxu0
        %6467 = vdwg.mxu0
        %v6468 = vadd.f32 %v6374, %v6454
        %v6469 = vadd.f32 %v6375, %v6457
        %v6470 = vadd.f32 %v6376, %v6462
        %v6471 = vadd.f32 %v6377, %v6465
        %v6472 = vadd.f32 %v6468, %v3662
        %v6473 = vadd.f32 %v6469, %v3663
        %v6474 = vadd.f32 %v6470, %v3664
        %v6475 = vadd.f32 %v6471, %v3665
        %6476 = vst [vmem:[%s489] sm:$0xff] %v6472
        %6477 = vst [vmem:[%s489 + $0x8] sm:$0xff] %v6473
        %6478 = vst [vmem:[%s489 + $0x10] sm:$0xff] %v6474
        %6479 = vst [vmem:[%s489 + $0x18] sm:$0xff] %v6475
        %v6480 = vld [vmem:[%s489] sm:$0xff]
        %v6481 = vld [vmem:[%s489 + $0x8] sm:$0xff]
        %v6482 = vld [vmem:[%s489 + $0x10] sm:$0xff]
        %v6483 = vld [vmem:[%s489 + $0x18] sm:$0xff]
        %s6484 = scalar_lea.vmem [#allocation10], 128
        %v6485 = vld [vmem:[%s6484] sm:$0xf]
        %v6486 = vld [vmem:[%s6484 + $0x4] sm:$0xf]
        %v6487 = vld [vmem:[%s6484 + $0x8] sm:$0xf]
        %v6488 = vld [vmem:[%s6484 + $0xc] sm:$0xf]
        %v6489 = vld [vmem:[%s6484 + $0x10] sm:$0xf]
        %v6490 = vld [vmem:[%s6484 + $0x14] sm:$0xf]
        %v6491 = vld [vmem:[%s6484 + $0x18] sm:$0xf]
        %v6492 = vld [vmem:[%s6484 + $0x1c] sm:$0xf]
        %s6493 = scalar_lea.vmem [#allocation12], 256
        %v6494 = vld [vmem:[%s6493] sm:$0xff]
        %v6495 = vld [vmem:[%s6493 + $0x8] sm:$0xff]
        %v6496 = vld [vmem:[%s6493 + $0x10] sm:$0xff]
        %v6497 = vld [vmem:[%s6493 + $0x18] sm:$0xff]
        %v6498 = vld [vmem:[%s6493 + $0x20] sm:$0xff]
        %v6499 = vld [vmem:[%s6493 + $0x28] sm:$0xff]
        %v6500 = vld [vmem:[%s6493 + $0x30] sm:$0xff]
        %v6501 = vld [vmem:[%s6493 + $0x38] sm:$0xff]
        %6503 = vset.pattern.permute.xlu0 0
        %6504 = vperm.xlu0 %6503, %v6494
        %v6505 = vpop.permute.xlu0 %6504
        %6508 = vset.pattern.permute.xlu0 0
        %6509 = vperm.xlu0 %6508, %v6495
        %v6510 = vpop.permute.xlu0 %6509
        %6513 = vset.pattern.permute.xlu0 0
        %6514 = vperm.xlu0 %6513, %v6496
        %v6515 = vpop.permute.xlu0 %6514
        %6518 = vset.pattern.permute.xlu0 0
        %6519 = vperm.xlu0 %6518, %v6497
        %v6520 = vpop.permute.xlu0 %6519
        %6523 = vset.pattern.permute.xlu0 0
        %6524 = vperm.xlu0 %6523, %v6498
        %v6525 = vpop.permute.xlu0 %6524
        %6528 = vset.pattern.permute.xlu0 0
        %6529 = vperm.xlu0 %6528, %v6499
        %v6530 = vpop.permute.xlu0 %6529
        %6533 = vset.pattern.permute.xlu0 0
        %6534 = vperm.xlu0 %6533, %v6500
        %v6535 = vpop.permute.xlu0 %6534
        %6538 = vset.pattern.permute.xlu0 0
        %6539 = vperm.xlu0 %6538, %v6501
        %v6540 = vpop.permute.xlu0 %6539
        %v6550 = vunpack.c.l.b16 %v6485
        %v6551 = vunpack.c.l.b16 %v6486
        %v6552 = vunpack.c.l.b16 %v6487
        %v6553 = vunpack.c.l.b16 %v6488
        %v6554 = vunpack.c.l.b16 %v6489
        %v6555 = vunpack.c.l.b16 %v6490
        %v6556 = vunpack.c.l.b16 %v6491
        %v6557 = vunpack.c.l.b16 %v6492
        %v6558 = vpack.c.b16 %v6551, %v6550
        %v6559 = vpack.c.b16 %v6553, %v6552
        %v6560 = vpack.c.b16 %v6555, %v6554
        %v6561 = vpack.c.b16 %v6557, %v6556
        %v6563 = vsel %vm978, %v6558, 0
        %v6566 = vsel %vm978, %v6559, 0
        %v6569 = vsel %vm978, %v6560, 0
        %v6572 = vsel %vm978, %v6561, 0
        %6574 = vmatprep.subr.bf16.mxu0 0
        %6575 = vmatpush1.bf16.msra.mxu0 %v970
        %6576 = vmatprep.subr.bf16.mxu0 0
        %6577 = vmatpush1.bf16.msra.mxu0 %v971
        %6578 = vmatprep.subr.bf16.mxu0 0
        %6579 = vmatpush1.bf16.msra.mxu0 %v972
        %6580 = vmatprep.subr.bf16.mxu0 0
        %6581 = vmatpush1.bf16.msra.mxu0 %v973
        %6582 = vmatprep.subr.bf16.mxu0 0
        %6583 = vmatpush1.bf16.msra.mxu0 0
        %6584 = vmatprep.subr.bf16.mxu0 0
        %6585 = vmatpush1.bf16.msra.mxu0 0
        %6586 = vmatprep.subr.bf16.mxu0 0
        %6587 = vmatpush1.bf16.msra.mxu0 0
        %6588 = vmatprep.subr.bf16.mxu0 0
        %6589 = vmatpush1.bf16.msra.mxu0 0
        %6590 = vmatprep.subr.bf16.mxu0 0
        %6591 = vmatpush1.bf16.msra.mxu0 0
        %6592 = vmatprep.subr.bf16.mxu0 0
        %6593 = vmatpush1.bf16.msra.mxu0 0
        %6594 = vmatprep.subr.bf16.mxu0 0
        %6595 = vmatpush1.bf16.msra.mxu0 0
        %6596 = vmatprep.subr.bf16.mxu0 0
        %6597 = vmatpush1.bf16.msra.mxu0 0
        %6598 = vmatprep.subr.bf16.mxu0 0
        %6599 = vmatpush1.bf16.msra.mxu0 0
        %6600 = vmatprep.subr.bf16.mxu0 0
        %6601 = vmatpush1.bf16.msra.mxu0 0
        %6602 = vmatprep.subr.bf16.mxu0 0
        %6603 = vmatpush1.bf16.msra.mxu0 0
        %6604 = vmatprep.subr.bf16.mxu0 0
        %6605 = vmatpush1.bf16.msra.mxu0 0
        %6606 = vmatprep.mubr.bf16.mxu0 0
        %6607 = vmatmul.mubr.bf16.gmra.mrb[0].mxu0 %v6563
        %v6608 = vpop.f32.mrb[0].mxu0
        %v6609 = vadd.f32 %v6505, %v6608
        %v6610 = vpop.f32.mrb[0].mxu0
        %v6611 = vpop.f32.mrb[0].mxu0
        %v6612 = vadd.f32 %v6510, %v6611
        %v6613 = vpop.f32.mrb[0].mxu0
        %6614 = vmatprep.mubr.bf16.mxu0 0
        %6615 = vmatmul.mubr.bf16.gmra.mrb[0].mxu0 %v6566
        %v6616 = vpop.f32.mrb[0].mxu0
        %v6617 = vadd.f32 %v6515, %v6616
        %v6618 = vpop.f32.mrb[0].mxu0
        %v6619 = vpop.f32.mrb[0].mxu0
        %v6620 = vadd.f32 %v6520, %v6619
        %v6621 = vpop.f32.mrb[0].mxu0
        %6622 = vmatprep.mubr.bf16.mxu0 0
        %6623 = vmatmul.mubr.bf16.gmra.mrb[0].mxu0 %v6569
        %v6624 = vpop.f32.mrb[0].mxu0
        %v6625 = vadd.f32 %v6525, %v6624
        %v6626 = vpop.f32.mrb[0].mxu0
        %v6627 = vpop.f32.mrb[0].mxu0
        %v6628 = vadd.f32 %v6530, %v6627
        %v6629 = vpop.f32.mrb[0].mxu0
        %6630 = vmatprep.mubr.bf16.mxu0 0
        %6631 = vmatmul.mubr.bf16.gmra.mrb[0].mxu0 %v6572
        %v6632 = vpop.f32.mrb[0].mxu0
        %v6633 = vadd.f32 %v6535, %v6632
        %v6634 = vpop.f32.mrb[0].mxu0
        %v6635 = vpop.f32.mrb[0].mxu0
        %v6636 = vadd.f32 %v6540, %v6635
        %v6637 = vpop.f32.mrb[0].mxu0
        %6638 = vdwg.mxu0
        %6639 = vst [vmem:[#allocation2 + $0x8] sm:$0xff] %v6480
        %6640 = vst [vmem:[#allocation2 + $0x20] sm:$0xff] %v6481
        %6641 = vst [vmem:[#allocation2 + $0x38] sm:$0xff] %v6482
        %6642 = vst [vmem:[#allocation2 + $0x50] sm:$0xff] %v6483
        %v6643 = vld [vmem:[#allocation2] sm:$0xff]
        %v6644 = vld [vmem:[#allocation2 + $0x8] sm:$0xff]
        %v6645 = vld [vmem:[#allocation2 + $0x18] sm:$0xff]
        %v6646 = vld [vmem:[#allocation2 + $0x20] sm:$0xff]
        %v6647 = vld [vmem:[#allocation2 + $0x30] sm:$0xff]
        %v6648 = vld [vmem:[#allocation2 + $0x38] sm:$0xff]
        %v6649 = vld [vmem:[#allocation2 + $0x48] sm:$0xff]
        %v6650 = vld [vmem:[#allocation2 + $0x50] sm:$0xff]
        %6659 = vrot.lane.b32.xlu0 %v6643, 127
        %v6660 = vpop.permute.xlu0 %6659
        %6661 = vrot.lane.b32.xlu0 %v6644, 127
        %v6662 = vpop.permute.xlu0 %6661
        %6663 = vrot.lane.b32.xlu0 %v6645, 127
        %v6664 = vpop.permute.xlu0 %6663
        %6665 = vrot.lane.b32.xlu0 %v6646, 127
        %v6666 = vpop.permute.xlu0 %6665
        %6667 = vrot.lane.b32.xlu0 %v6647, 127
        %v6668 = vpop.permute.xlu0 %6667
        %6669 = vrot.lane.b32.xlu0 %v6648, 127
        %v6670 = vpop.permute.xlu0 %6669
        %6671 = vrot.lane.b32.xlu0 %v6649, 127
        %v6672 = vpop.permute.xlu0 %6671
        %6673 = vrot.lane.b32.xlu0 %v6650, 127
        %v6674 = vpop.permute.xlu0 %6673
        %v6675 = vsel %vm590, %v6660, %v6662
        %v6676 = vsel %vm590, %v6664, %v6666
        %v6677 = vsel %vm590, %v6668, %v6670
        %v6678 = vsel %vm590, %v6672, %v6674
        %v6687 = vadd.f32 %v6643, %v6675
        %v6688 = vadd.f32 %v6644, %v6662
        %v6689 = vadd.f32 %v6645, %v6676
        %v6690 = vadd.f32 %v6646, %v6666
        %v6691 = vadd.f32 %v6647, %v6677
        %v6692 = vadd.f32 %v6648, %v6670
        %v6693 = vadd.f32 %v6649, %v6678
        %v6694 = vadd.f32 %v6650, %v6674
        %6695 = vrot.lane.b32.xlu0 %v6644, 126
        %v6696 = vpop.permute.xlu0 %6695
        %6697 = vrot.lane.b32.xlu0 %v6646, 126
        %v6698 = vpop.permute.xlu0 %6697
        %6699 = vrot.lane.b32.xlu0 %v6648, 126
        %v6700 = vpop.permute.xlu0 %6699
        %6701 = vrot.lane.b32.xlu0 %v6650, 126
        %v6702 = vpop.permute.xlu0 %6701
        %v6707 = vadd.f32 %v6687, %v6696
        %v6708 = vadd.f32 %v6688, %v6696
        %v6709 = vadd.f32 %v6689, %v6698
        %v6710 = vadd.f32 %v6690, %v6698
        %v6711 = vadd.f32 %v6691, %v6700
        %v6712 = vadd.f32 %v6692, %v6700
        %v6713 = vadd.f32 %v6693, %v6702
        %v6714 = vadd.f32 %v6694, %v6702
        %v6715 = vld [vmem:[#allocation2 + $0x10] sm:$0xff]
        %v6716 = vld [vmem:[#allocation2 + $0x28] sm:$0xff]
        %v6717 = vld [vmem:[#allocation2 + $0x40] sm:$0xff]
        %v6718 = vld [vmem:[#allocation2 + $0x58] sm:$0xff]
        %6723 = vrot.lane.b32.xlu0 %v6644, 125
        %v6724 = vpop.permute.xlu0 %6723
        %6725 = vrot.lane.b32.xlu0 %v6715, 125
        %v6726 = vpop.permute.xlu0 %6725
        %6727 = vrot.lane.b32.xlu0 %v6646, 125
        %v6728 = vpop.permute.xlu0 %6727
        %6729 = vrot.lane.b32.xlu0 %v6716, 125
        %v6730 = vpop.permute.xlu0 %6729
        %6731 = vrot.lane.b32.xlu0 %v6648, 125
        %v6732 = vpop.permute.xlu0 %6731
        %6733 = vrot.lane.b32.xlu0 %v6717, 125
        %v6734 = vpop.permute.xlu0 %6733
        %6735 = vrot.lane.b32.xlu0 %v6650, 125
        %v6736 = vpop.permute.xlu0 %6735
        %6737 = vrot.lane.b32.xlu0 %v6718, 125
        %v6738 = vpop.permute.xlu0 %6737
        %v6739 = vsel %vm719, %v6724, %v6726
        %v6740 = vsel %vm719, %v6728, %v6730
        %v6741 = vsel %vm719, %v6732, %v6734
        %v6742 = vsel %vm719, %v6736, %v6738
        %v6751 = vadd.f32 %v6707, %v6724
        %v6752 = vadd.f32 %v6708, %v6739
        %v6753 = vadd.f32 %v6709, %v6728
        %v6754 = vadd.f32 %v6710, %v6740
        %v6755 = vadd.f32 %v6711, %v6732
        %v6756 = vadd.f32 %v6712, %v6741
        %v6757 = vadd.f32 %v6713, %v6736
        %v6758 = vadd.f32 %v6714, %v6742
        %6759 = vrot.lane.b32.xlu0 %v6644, 124
        %v6760 = vpop.permute.xlu0 %6759
        %6761 = vrot.lane.b32.xlu0 %v6715, 124
        %v6762 = vpop.permute.xlu0 %6761
        %6763 = vrot.lane.b32.xlu0 %v6646, 124
        %v6764 = vpop.permute.xlu0 %6763
        %6765 = vrot.lane.b32.xlu0 %v6716, 124
        %v6766 = vpop.permute.xlu0 %6765
        %6767 = vrot.lane.b32.xlu0 %v6648, 124
        %v6768 = vpop.permute.xlu0 %6767
        %6769 = vrot.lane.b32.xlu0 %v6717, 124
        %v6770 = vpop.permute.xlu0 %6769
        %6771 = vrot.lane.b32.xlu0 %v6650, 124
        %v6772 = vpop.permute.xlu0 %6771
        %6773 = vrot.lane.b32.xlu0 %v6718, 124
        %v6774 = vpop.permute.xlu0 %6773
        %v6775 = vsel %vm792, %v6760, %v6762
        %v6776 = vsel %vm792, %v6764, %v6766
        %v6777 = vsel %vm792, %v6768, %v6770
        %v6778 = vsel %vm792, %v6772, %v6774
        %v6787 = vadd.f32 %v6751, %v6760
        %v6788 = vadd.f32 %v6752, %v6775
        %v6789 = vadd.f32 %v6753, %v6764
        %v6790 = vadd.f32 %v6754, %v6776
        %v6791 = vadd.f32 %v6755, %v6768
        %v6792 = vadd.f32 %v6756, %v6777
        %v6793 = vadd.f32 %v6757, %v6772
        %v6794 = vadd.f32 %v6758, %v6778
        %v6795 = vmul.f32 %v6787, %v839
        %v6796 = vmul.f32 %v6788, %v839
        %v6797 = vmul.f32 %v6789, %v839
        %v6798 = vmul.f32 %v6790, %v839
        %v6799 = vmul.f32 %v6791, %v839
        %v6800 = vmul.f32 %v6792, %v839
        %v6801 = vmul.f32 %v6793, %v839
        %v6802 = vmul.f32 %v6794, %v839
        %6811 = vrot.lane.b32.xlu0 %v6795, 2
        %v6812 = vpop.permute.xlu0 %6811
        %6813 = vrot.lane.b32.xlu0 %v6796, 2
        %v6814 = vpop.permute.xlu0 %6813
        %6815 = vrot.lane.b32.xlu0 %v6797, 2
        %v6816 = vpop.permute.xlu0 %6815
        %6817 = vrot.lane.b32.xlu0 %v6798, 2
        %v6818 = vpop.permute.xlu0 %6817
        %6819 = vrot.lane.b32.xlu0 %v6799, 2
        %v6820 = vpop.permute.xlu0 %6819
        %6821 = vrot.lane.b32.xlu0 %v6800, 2
        %v6822 = vpop.permute.xlu0 %6821
        %6823 = vrot.lane.b32.xlu0 %v6801, 2
        %v6824 = vpop.permute.xlu0 %6823
        %6825 = vrot.lane.b32.xlu0 %v6802, 2
        %v6826 = vpop.permute.xlu0 %6825
        %v6827 = vsel %vm501, %v6812, %v6814
        %v6828 = vsel %vm501, %v6816, %v6818
        %v6829 = vsel %vm501, %v6820, %v6822
        %v6830 = vsel %vm501, %v6824, %v6826
        %v6835 = vsub.f32 %v6480, %v6827
        %v6836 = vsub.f32 %v6481, %v6828
        %v6837 = vsub.f32 %v6482, %v6829
        %v6838 = vsub.f32 %v6483, %v6830
        %v6839 = vmul.f32 %v6835, %v6835
        %v6840 = vmul.f32 %v6836, %v6836
        %v6841 = vmul.f32 %v6837, %v6837
        %v6842 = vmul.f32 %v6838, %v6838
        %6843 = vst [vmem:[#allocation2 + $0x8] sm:$0xff] %v6839
        %6844 = vst [vmem:[#allocation2 + $0x20] sm:$0xff] %v6840
        %6845 = vst [vmem:[#allocation2 + $0x38] sm:$0xff] %v6841
        %6846 = vst [vmem:[#allocation2 + $0x50] sm:$0xff] %v6842
        %v6847 = vld [vmem:[#allocation2] sm:$0xff]
        %v6848 = vld [vmem:[#allocation2 + $0x8] sm:$0xff]
        %v6849 = vld [vmem:[#allocation2 + $0x18] sm:$0xff]
        %v6850 = vld [vmem:[#allocation2 + $0x20] sm:$0xff]
        %v6851 = vld [vmem:[#allocation2 + $0x30] sm:$0xff]
        %v6852 = vld [vmem:[#allocation2 + $0x38] sm:$0xff]
        %v6853 = vld [vmem:[#allocation2 + $0x48] sm:$0xff]
        %v6854 = vld [vmem:[#allocation2 + $0x50] sm:$0xff]
        %6863 = vrot.lane.b32.xlu0 %v6847, 127
        %v6864 = vpop.permute.xlu0 %6863
        %6865 = vrot.lane.b32.xlu0 %v6848, 127
        %v6866 = vpop.permute.xlu0 %6865
        %6867 = vrot.lane.b32.xlu0 %v6849, 127
        %v6868 = vpop.permute.xlu0 %6867
        %6869 = vrot.lane.b32.xlu0 %v6850, 127
        %v6870 = vpop.permute.xlu0 %6869
        %6871 = vrot.lane.b32.xlu0 %v6851, 127
        %v6872 = vpop.permute.xlu0 %6871
        %6873 = vrot.lane.b32.xlu0 %v6852, 127
        %v6874 = vpop.permute.xlu0 %6873
        %6875 = vrot.lane.b32.xlu0 %v6853, 127
        %v6876 = vpop.permute.xlu0 %6875
        %6877 = vrot.lane.b32.xlu0 %v6854, 127
        %v6878 = vpop.permute.xlu0 %6877
        %v6879 = vsel %vm590, %v6864, %v6866
        %v6880 = vsel %vm590, %v6868, %v6870
        %v6881 = vsel %vm590, %v6872, %v6874
        %v6882 = vsel %vm590, %v6876, %v6878
        %v6891 = vadd.f32 %v6847, %v6879
        %v6892 = vadd.f32 %v6848, %v6866
        %v6893 = vadd.f32 %v6849, %v6880
        %v6894 = vadd.f32 %v6850, %v6870
        %v6895 = vadd.f32 %v6851, %v6881
        %v6896 = vadd.f32 %v6852, %v6874
        %v6897 = vadd.f32 %v6853, %v6882
        %v6898 = vadd.f32 %v6854, %v6878
        %6899 = vrot.lane.b32.xlu0 %v6848, 126
        %v6900 = vpop.permute.xlu0 %6899
        %6901 = vrot.lane.b32.xlu0 %v6850, 126
        %v6902 = vpop.permute.xlu0 %6901
        %6903 = vrot.lane.b32.xlu0 %v6852, 126
        %v6904 = vpop.permute.xlu0 %6903
        %6905 = vrot.lane.b32.xlu0 %v6854, 126
        %v6906 = vpop.permute.xlu0 %6905
        %v6911 = vadd.f32 %v6891, %v6900
        %v6912 = vadd.f32 %v6892, %v6900
        %v6913 = vadd.f32 %v6893, %v6902
        %v6914 = vadd.f32 %v6894, %v6902
        %v6915 = vadd.f32 %v6895, %v6904
        %v6916 = vadd.f32 %v6896, %v6904
        %v6917 = vadd.f32 %v6897, %v6906
        %v6918 = vadd.f32 %v6898, %v6906
        %v6919 = vld [vmem:[#allocation2 + $0x10] sm:$0xff]
        %v6920 = vld [vmem:[#allocation2 + $0x28] sm:$0xff]
        %v6921 = vld [vmem:[#allocation2 + $0x40] sm:$0xff]
        %v6922 = vld [vmem:[#allocation2 + $0x58] sm:$0xff]
        %6927 = vrot.lane.b32.xlu0 %v6848, 125
        %v6928 = vpop.permute.xlu0 %6927
        %6929 = vrot.lane.b32.xlu0 %v6919, 125
        %v6930 = vpop.permute.xlu0 %6929
        %6931 = vrot.lane.b32.xlu0 %v6850, 125
        %v6932 = vpop.permute.xlu0 %6931
        %6933 = vrot.lane.b32.xlu0 %v6920, 125
        %v6934 = vpop.permute.xlu0 %6933
        %6935 = vrot.lane.b32.xlu0 %v6852, 125
        %v6936 = vpop.permute.xlu0 %6935
        %6937 = vrot.lane.b32.xlu0 %v6921, 125
        %v6938 = vpop.permute.xlu0 %6937
        %6939 = vrot.lane.b32.xlu0 %v6854, 125
        %v6940 = vpop.permute.xlu0 %6939
        %6941 = vrot.lane.b32.xlu0 %v6922, 125
        %v6942 = vpop.permute.xlu0 %6941
        %v6943 = vsel %vm719, %v6928, %v6930
        %v6944 = vsel %vm719, %v6932, %v6934
        %v6945 = vsel %vm719, %v6936, %v6938
        %v6946 = vsel %vm719, %v6940, %v6942
        %v6955 = vadd.f32 %v6911, %v6928
        %v6956 = vadd.f32 %v6912, %v6943
        %v6957 = vadd.f32 %v6913, %v6932
        %v6958 = vadd.f32 %v6914, %v6944
        %v6959 = vadd.f32 %v6915, %v6936
        %v6960 = vadd.f32 %v6916, %v6945
        %v6961 = vadd.f32 %v6917, %v6940
        %v6962 = vadd.f32 %v6918, %v6946
        %6963 = vrot.lane.b32.xlu0 %v6848, 124
        %v6964 = vpop.permute.xlu0 %6963
        %6965 = vrot.lane.b32.xlu0 %v6919, 124
        %v6966 = vpop.permute.xlu0 %6965
        %6967 = vrot.lane.b32.xlu0 %v6850, 124
        %v6968 = vpop.permute.xlu0 %6967
        %6969 = vrot.lane.b32.xlu0 %v6920, 124
        %v6970 = vpop.permute.xlu0 %6969
        %6971 = vrot.lane.b32.xlu0 %v6852, 124
        %v6972 = vpop.permute.xlu0 %6971
        %6973 = vrot.lane.b32.xlu0 %v6921, 124
        %v6974 = vpop.permute.xlu0 %6973
        %6975 = vrot.lane.b32.xlu0 %v6854, 124
        %v6976 = vpop.permute.xlu0 %6975
        %6977 = vrot.lane.b32.xlu0 %v6922, 124
        %v6978 = vpop.permute.xlu0 %6977
        %v6979 = vsel %vm792, %v6964, %v6966
        %v6980 = vsel %vm792, %v6968, %v6970
        %v6981 = vsel %vm792, %v6972, %v6974
        %v6982 = vsel %vm792, %v6976, %v6978
        %v6991 = vadd.f32 %v6955, %v6964
        %v6992 = vadd.f32 %v6956, %v6979
        %v6993 = vadd.f32 %v6957, %v6968
        %v6994 = vadd.f32 %v6958, %v6980
        %v6995 = vadd.f32 %v6959, %v6972
        %v6996 = vadd.f32 %v6960, %v6981
        %v6997 = vadd.f32 %v6961, %v6976
        %v6998 = vadd.f32 %v6962, %v6982
        %v6999 = vmul.f32 %v6991, %v839
        %v7000 = vmul.f32 %v6992, %v839
        %v7001 = vmul.f32 %v6993, %v839
        %v7002 = vmul.f32 %v6994, %v839
        %v7003 = vmul.f32 %v6995, %v839
        %v7004 = vmul.f32 %v6996, %v839
        %v7005 = vmul.f32 %v6997, %v839
        %v7006 = vmul.f32 %v6998, %v839
        %v7007 = vadd.f32 %v6999, 1e-09
        %v7008 = vadd.f32 %v7000, 1e-09
        %v7009 = vadd.f32 %v7001, 1e-09
        %v7010 = vadd.f32 %v7002, 1e-09
        %v7011 = vadd.f32 %v7003, 1e-09
        %v7012 = vadd.f32 %v7004, 1e-09
        %v7013 = vadd.f32 %v7005, 1e-09
        %v7014 = vadd.f32 %v7006, 1e-09
        %v7015 = vrsqrt.pop %v7007
        %v7016 = vrsqrt.pop %v7008
        %v7017 = vrsqrt.pop %v7009
        %v7018 = vrsqrt.pop %v7010
        %v7019 = vrsqrt.pop %v7011
        %v7020 = vrsqrt.pop %v7012
        %v7021 = vrsqrt.pop %v7013
        %v7022 = vrsqrt.pop %v7014
        %7031 = vrot.lane.b32.xlu0 %v7015, 2
        %v7032 = vpop.permute.xlu0 %7031
        %7033 = vrot.lane.b32.xlu0 %v7016, 2
        %v7034 = vpop.permute.xlu0 %7033
        %7035 = vrot.lane.b32.xlu0 %v7017, 2
        %v7036 = vpop.permute.xlu0 %7035
        %7037 = vrot.lane.b32.xlu0 %v7018, 2
        %v7038 = vpop.permute.xlu0 %7037
        %7039 = vrot.lane.b32.xlu0 %v7019, 2
        %v7040 = vpop.permute.xlu0 %7039
        %7041 = vrot.lane.b32.xlu0 %v7020, 2
        %v7042 = vpop.permute.xlu0 %7041
        %7043 = vrot.lane.b32.xlu0 %v7021, 2
        %v7044 = vpop.permute.xlu0 %7043
        %7045 = vrot.lane.b32.xlu0 %v7022, 2
        %v7046 = vpop.permute.xlu0 %7045
        %v7047 = vsel %vm501, %v7032, %v7034
        %v7048 = vsel %vm501, %v7036, %v7038
        %v7049 = vsel %vm501, %v7040, %v7042
        %v7050 = vsel %vm501, %v7044, %v7046
        %v7055 = vmul.f32 %v6835, %v7047
        %v7056 = vmul.f32 %v6836, %v7048
        %v7057 = vmul.f32 %v6837, %v7049
        %v7058 = vmul.f32 %v6838, %v7050
        %v7059 = vmul.f32 %v6609, %v7055
        %v7060 = vmul.f32 %v6612, %v7056
        %v7061 = vmul.f32 %v6617, %v7057
        %v7062 = vmul.f32 %v6620, %v7058
        %v7063 = vadd.f32 %v7059, %v6625
        %v7064 = vadd.f32 %v7060, %v6628
        %v7065 = vadd.f32 %v7061, %v6633
        %v7066 = vadd.f32 %v7062, %v6636
        %s7067 = scalar_lea.vmem [#allocation18], 128
        %v7068 = vld [vmem:[%s7067] sm:$0xff]
        %v7069 = vld [vmem:[%s7067 + $0x8] sm:$0xff]
        %v7070 = vld [vmem:[%s7067 + $0x10] sm:$0xff]
        %v7071 = vld [vmem:[%s7067 + $0x18] sm:$0xff]
        %s7072 = scalar_lea.vmem [#allocation16], 128
        %v7073 = vld [vmem:[%s7072] sm:$0xff]
        %v7074 = vld [vmem:[%s7072 + $0x8] sm:$0xff]
        %v7075 = vld [vmem:[%s7072 + $0x10] sm:$0xff]
        %v7076 = vld [vmem:[%s7072 + $0x18] sm:$0xff]
        %7078 = vset.pattern.permute.xlu0 0
        %7079 = vperm.xlu0 %7078, %v7073
        %v7080 = vpop.permute.xlu0 %7079
        %7083 = vset.pattern.permute.xlu0 0
        %7084 = vperm.xlu0 %7083, %v7074
        %v7085 = vpop.permute.xlu0 %7084
        %7088 = vset.pattern.permute.xlu0 0
        %7089 = vperm.xlu0 %7088, %v7075
        %v7090 = vpop.permute.xlu0 %7089
        %7093 = vset.pattern.permute.xlu0 0
        %7094 = vperm.xlu0 %7093, %v7076
        %v7095 = vpop.permute.xlu0 %7094
        %v7097 = vmul.f32 %v7080, %v7063
        %v7098 = vmul.f32 %v7085, %v7064
        %v7099 = vmul.f32 %v7090, %v7065
        %v7100 = vmul.f32 %v7095, %v7066
        %v7101 = vand.u32 2147483647, %v7097
        %vm7102 = vcmp.le.f32.partialorder %v7101, 0.7853982
        %vm7103 = vcmp.lt.s32.totalorder %v7097, 0
        %v7104 = vand.u32 %v7097, 2139095040
        %v7105 = vshrl.u32 %v7104, 23
        %v7106 = vsub.s32 %v7105, 127
        %v7107 = vand.u32 2147483647, %v7097
        %v7108 = vand.u32 %v7107, 8388607
        %v7109 = vor.u32 %v7108, 8388608
        %v7110 = vsub.s32 0, %v7109
        %v7111 = vadd.s32 %v7106, 1
        %vm7112 = vcmp.gt.s32.totalorder %v7111, 0
        %v7113 = vsel %vm7112, %v7111, 0
        %v7114 = vshrl.u32 %v7113, 5
        %v7115 = vand.u32 %v7113, 31
        %v7116 = vsub.s32 32, %v7115
        %v7117 = vshrl.u32 683565275, %v7116
        %v7118 = vshll.u32 683565275, %v7115
        %v7119 = vshrl.u32 2475754826, %v7116
        %v7120 = vor.u32 %v7118, %v7119
        %v7121 = vshll.u32 2475754826, %v7115
        %v7122 = vshrl.u32 2131351028, %v7116
        %v7123 = vor.u32 %v7121, %v7122
        %v7124 = vshll.u32 2131351028, %v7115
        %v7125 = vshrl.u32 2102212464, %v7116
        %v7126 = vor.u32 %v7124, %v7125
        %v7127 = vshll.u32 2102212464, %v7115
        %v7128 = vshrl.u32 920167782, %v7116
        %v7129 = vor.u32 %v7127, %v7128
        %v7130 = vshll.u32 920167782, %v7115
        %v7131 = vshrl.u32 1326507024, %v7116
        %v7132 = vor.u32 %v7130, %v7131
        %vm7133 = vcmp.lt.s32.totalorder %v7114, 1
        %vm7134 = vcmp.lt.s32.totalorder %v7114, 2
        %vm7135 = vcmp.lt.s32.totalorder %v7114, 3
        %vm7136 = vcmp.lt.s32.totalorder %v7114, 4
        %v7137 = vsel %vm7133, %v7117, %v7120
        %v7138 = vsel %vm7136, %v7126, 2102212464
        %v7139 = vsel %vm7135, %v7123, %v7138
        %v7140 = vsel %vm7134, %v7137, %v7139
        %v7141 = vsel %vm7133, %v7120, %v7123
        %v7142 = vsel %vm7136, %v7129, 920167782
        %v7143 = vsel %vm7135, %v7126, %v7142
        %v7144 = vsel %vm7134, %v7141, %v7143
        %v7145 = vsel %vm7133, %v7123, %v7126
        %v7146 = vsel %vm7136, %v7132, 1326507024
        %v7147 = vsel %vm7135, %v7129, %v7146
        %v7148 = vsel %vm7134, %v7145, %v7147
        %v7149 = vshll.u32 %v7109, 8
        %v7150 = vmul.u32.u64.compose %v7149, %v7148
        %v7151 = vextract.low.u32 %v7150
        %v7152 = vextract.high.u32 %v7150
        %v7153 = vmul.u32.u64.compose %v7149, %v7144
        %v7154 = vextract.low.u32 %v7153
        %v7155 = vextract.high.u32 %v7153
        %v7156 = vmul.u32 %v7149, %v7140
        %v7157 = vadd.s32 %v7152, %v7154
        %vm7158 = vc.u32 %v7152, %v7154
        %v7159 = vadd.s32 %v7155, 1
        %v7160 = vsel %vm7158, %v7159, %v7155
        %v7161 = vadd.s32 %v7156, %v7160
        %v7162 = vadd.s32 %v7161, 536870912
        %v7163 = vshrl.u32 %v7162, 30
        %v7164 = vshll.u32 %v7163, 30
        %v7165 = vsub.s32 %v7161, %v7164
        %vm7166 = vcmp.lt.s32.totalorder %v7165, 0
        %v7167 = vsub.s32 0, %v7165
        %v7168 = vsel %vm7166, %v7167, %v7165
        %v7169 = vclz %v7168
        %v7170 = vsub.s32 %v7169, 2
        %vm7171 = vcmp.gt.s32.totalorder 0, %v7170
        %v7172 = vsel %vm7171, 0, %v7170
        %v7173 = vsub.s32 32, %v7172
        %v7174 = vshll.u32 %v7165, %v7172
        %v7175 = vshrl.u32 %v7157, %v7173
        %v7176 = vor.u32 %v7174, %v7175
        %v7177 = vsub.s32 4294967266, %v7172
        %v7178 = vadd.s32 %v7177, 127
        %v7179 = vshll.u32 %v7178, 23
        %v7180 = vor.u32 4788187, %v7179
        %v7181 = vand.u32 2147483647, %v7180
        %v7183 = vcvt.s32.f32 %v7176
        %v7184 = vmul.f32 %v7183, %v7181
        %v7185 = vxor.u32 %v7184, 2147483648
        %v7186 = vsel %vm7103, %v7185, %v7184
        %v7187 = vsub.s32 4, %v7163
        %v7188 = vsel %vm7103, %v7187, %v7163
        %v7189 = vsel %vm7102, %v7097, %v7186
        %v7190 = vsel %vm7102, 0, %v7188
        %v7191 = vcosq.f32.pop %v7189
        %v7192 = vsinq.f32.pop %v7189
        %vm7193 = vweird.f32 %v7097
        %v7194 = vand.u32 %v7190, 3
        %vm7195 = vcmp.lt.s32.totalorder %v7194, 2
        %vm7196 = vcmp.eq.s32.totalorder %v7194, 0
        %v7197 = vxor.u32 %v7192, 2147483648
        %v7198 = vsel %vm7196, %v7191, %v7197
        %vm7199 = vcmp.eq.s32.totalorder %v7194, 2
        %v7200 = vxor.u32 %v7191, 2147483648
        %v7201 = vsel %vm7199, %v7200, %v7192
        %v7202 = vsel %vm7195, %v7198, %v7201
        %v7203 = vsel %vm7193, nan, %v7202
        %v7204 = vand.u32 2147483647, %v7098
        %vm7205 = vcmp.le.f32.partialorder %v7204, 0.7853982
        %vm7206 = vcmp.lt.s32.totalorder %v7098, 0
        %v7207 = vand.u32 %v7098, 2139095040
        %v7208 = vshrl.u32 %v7207, 23
        %v7209 = vsub.s32 %v7208, 127
        %v7210 = vand.u32 2147483647, %v7098
        %v7211 = vand.u32 %v7210, 8388607
        %v7212 = vor.u32 %v7211, 8388608
        %v7213 = vsub.s32 0, %v7212
        %v7214 = vadd.s32 %v7209, 1
        %vm7215 = vcmp.gt.s32.totalorder %v7214, 0
        %v7216 = vsel %vm7215, %v7214, 0
        %v7217 = vshrl.u32 %v7216, 5
        %v7218 = vand.u32 %v7216, 31
        %v7219 = vsub.s32 32, %v7218
        %v7220 = vshrl.u32 683565275, %v7219
        %v7221 = vshll.u32 683565275, %v7218
        %v7222 = vshrl.u32 2475754826, %v7219
        %v7223 = vor.u32 %v7221, %v7222
        %v7224 = vshll.u32 2475754826, %v7218
        %v7225 = vshrl.u32 2131351028, %v7219
        %v7226 = vor.u32 %v7224, %v7225
        %v7227 = vshll.u32 2131351028, %v7218
        %v7228 = vshrl.u32 2102212464, %v7219
        %v7229 = vor.u32 %v7227, %v7228
        %v7230 = vshll.u32 2102212464, %v7218
        %v7231 = vshrl.u32 920167782, %v7219
        %v7232 = vor.u32 %v7230, %v7231
        %v7233 = vshll.u32 920167782, %v7218
        %v7234 = vshrl.u32 1326507024, %v7219
        %v7235 = vor.u32 %v7233, %v7234
        %vm7236 = vcmp.lt.s32.totalorder %v7217, 1
        %vm7237 = vcmp.lt.s32.totalorder %v7217, 2
        %vm7238 = vcmp.lt.s32.totalorder %v7217, 3
        %vm7239 = vcmp.lt.s32.totalorder %v7217, 4
        %v7240 = vsel %vm7236, %v7220, %v7223
        %v7241 = vsel %vm7239, %v7229, 2102212464
        %v7242 = vsel %vm7238, %v7226, %v7241
        %v7243 = vsel %vm7237, %v7240, %v7242
        %v7244 = vsel %vm7236, %v7223, %v7226
        %v7245 = vsel %vm7239, %v7232, 920167782
        %v7246 = vsel %vm7238, %v7229, %v7245
        %v7247 = vsel %vm7237, %v7244, %v7246
        %v7248 = vsel %vm7236, %v7226, %v7229
        %v7249 = vsel %vm7239, %v7235, 1326507024
        %v7250 = vsel %vm7238, %v7232, %v7249
        %v7251 = vsel %vm7237, %v7248, %v7250
        %v7252 = vshll.u32 %v7212, 8
        %v7253 = vmul.u32.u64.compose %v7252, %v7251
        %v7254 = vextract.low.u32 %v7253
        %v7255 = vextract.high.u32 %v7253
        %v7256 = vmul.u32.u64.compose %v7252, %v7247
        %v7257 = vextract.low.u32 %v7256
        %v7258 = vextract.high.u32 %v7256
        %v7259 = vmul.u32 %v7252, %v7243
        %v7260 = vadd.s32 %v7255, %v7257
        %vm7261 = vc.u32 %v7255, %v7257
        %v7262 = vadd.s32 %v7258, 1
        %v7263 = vsel %vm7261, %v7262, %v7258
        %v7264 = vadd.s32 %v7259, %v7263
        %v7265 = vadd.s32 %v7264, 536870912
        %v7266 = vshrl.u32 %v7265, 30
        %v7267 = vshll.u32 %v7266, 30
        %v7268 = vsub.s32 %v7264, %v7267
        %vm7269 = vcmp.lt.s32.totalorder %v7268, 0
        %v7270 = vsub.s32 0, %v7268
        %v7271 = vsel %vm7269, %v7270, %v7268
        %v7272 = vclz %v7271
        %v7273 = vsub.s32 %v7272, 2
        %vm7274 = vcmp.gt.s32.totalorder 0, %v7273
        %v7275 = vsel %vm7274, 0, %v7273
        %v7276 = vsub.s32 32, %v7275
        %v7277 = vshll.u32 %v7268, %v7275
        %v7278 = vshrl.u32 %v7260, %v7276
        %v7279 = vor.u32 %v7277, %v7278
        %v7280 = vsub.s32 4294967266, %v7275
        %v7281 = vadd.s32 %v7280, 127
        %v7282 = vshll.u32 %v7281, 23
        %v7283 = vor.u32 4788187, %v7282
        %v7284 = vand.u32 2147483647, %v7283
        %v7286 = vcvt.s32.f32 %v7279
        %v7287 = vmul.f32 %v7286, %v7284
        %v7288 = vxor.u32 %v7287, 2147483648
        %v7289 = vsel %vm7206, %v7288, %v7287
        %v7290 = vsub.s32 4, %v7266
        %v7291 = vsel %vm7206, %v7290, %v7266
        %v7292 = vsel %vm7205, %v7098, %v7289
        %v7293 = vsel %vm7205, 0, %v7291
        %v7294 = vcosq.f32.pop %v7292
        %v7295 = vsinq.f32.pop %v7292
        %vm7296 = vweird.f32 %v7098
        %v7297 = vand.u32 %v7293, 3
        %vm7298 = vcmp.lt.s32.totalorder %v7297, 2
        %vm7299 = vcmp.eq.s32.totalorder %v7297, 0
        %v7300 = vxor.u32 %v7295, 2147483648
        %v7301 = vsel %vm7299, %v7294, %v7300
        %vm7302 = vcmp.eq.s32.totalorder %v7297, 2
        %v7303 = vxor.u32 %v7294, 2147483648
        %v7304 = vsel %vm7302, %v7303, %v7295
        %v7305 = vsel %vm7298, %v7301, %v7304
        %v7306 = vsel %vm7296, nan, %v7305
        %v7307 = vand.u32 2147483647, %v7099
        %vm7308 = vcmp.le.f32.partialorder %v7307, 0.7853982
        %vm7309 = vcmp.lt.s32.totalorder %v7099, 0
        %v7310 = vand.u32 %v7099, 2139095040
        %v7311 = vshrl.u32 %v7310, 23
        %v7312 = vsub.s32 %v7311, 127
        %v7313 = vand.u32 2147483647, %v7099
        %v7314 = vand.u32 %v7313, 8388607
        %v7315 = vor.u32 %v7314, 8388608
        %v7316 = vsub.s32 0, %v7315
        %v7317 = vadd.s32 %v7312, 1
        %vm7318 = vcmp.gt.s32.totalorder %v7317, 0
        %v7319 = vsel %vm7318, %v7317, 0
        %v7320 = vshrl.u32 %v7319, 5
        %v7321 = vand.u32 %v7319, 31
        %v7322 = vsub.s32 32, %v7321
        %v7323 = vshrl.u32 683565275, %v7322
        %v7324 = vshll.u32 683565275, %v7321
        %v7325 = vshrl.u32 2475754826, %v7322
        %v7326 = vor.u32 %v7324, %v7325
        %v7327 = vshll.u32 2475754826, %v7321
        %v7328 = vshrl.u32 2131351028, %v7322
        %v7329 = vor.u32 %v7327, %v7328
        %v7330 = vshll.u32 2131351028, %v7321
        %v7331 = vshrl.u32 2102212464, %v7322
        %v7332 = vor.u32 %v7330, %v7331
        %v7333 = vshll.u32 2102212464, %v7321
        %v7334 = vshrl.u32 920167782, %v7322
        %v7335 = vor.u32 %v7333, %v7334
        %v7336 = vshll.u32 920167782, %v7321
        %v7337 = vshrl.u32 1326507024, %v7322
        %v7338 = vor.u32 %v7336, %v7337
        %vm7339 = vcmp.lt.s32.totalorder %v7320, 1
        %vm7340 = vcmp.lt.s32.totalorder %v7320, 2
        %vm7341 = vcmp.lt.s32.totalorder %v7320, 3
        %vm7342 = vcmp.lt.s32.totalorder %v7320, 4
        %v7343 = vsel %vm7339, %v7323, %v7326
        %v7344 = vsel %vm7342, %v7332, 2102212464
        %v7345 = vsel %vm7341, %v7329, %v7344
        %v7346 = vsel %vm7340, %v7343, %v7345
        %v7347 = vsel %vm7339, %v7326, %v7329
        %v7348 = vsel %vm7342, %v7335, 920167782
        %v7349 = vsel %vm7341, %v7332, %v7348
        %v7350 = vsel %vm7340, %v7347, %v7349
        %v7351 = vsel %vm7339, %v7329, %v7332
        %v7352 = vsel %vm7342, %v7338, 1326507024
        %v7353 = vsel %vm7341, %v7335, %v7352
        %v7354 = vsel %vm7340, %v7351, %v7353
        %v7355 = vshll.u32 %v7315, 8
        %v7356 = vmul.u32.u64.compose %v7355, %v7354
        %v7357 = vextract.low.u32 %v7356
        %v7358 = vextract.high.u32 %v7356
        %v7359 = vmul.u32.u64.compose %v7355, %v7350
        %v7360 = vextract.low.u32 %v7359
        %v7361 = vextract.high.u32 %v7359
        %v7362 = vmul.u32 %v7355, %v7346
        %v7363 = vadd.s32 %v7358, %v7360
        %vm7364 = vc.u32 %v7358, %v7360
        %v7365 = vadd.s32 %v7361, 1
        %v7366 = vsel %vm7364, %v7365, %v7361
        %v7367 = vadd.s32 %v7362, %v7366
        %v7368 = vadd.s32 %v7367, 536870912
        %v7369 = vshrl.u32 %v7368, 30
        %v7370 = vshll.u32 %v7369, 30
        %v7371 = vsub.s32 %v7367, %v7370
        %vm7372 = vcmp.lt.s32.totalorder %v7371, 0
        %v7373 = vsub.s32 0, %v7371
        %v7374 = vsel %vm7372, %v7373, %v7371
        %v7375 = vclz %v7374
        %v7376 = vsub.s32 %v7375, 2
        %vm7377 = vcmp.gt.s32.totalorder 0, %v7376
        %v7378 = vsel %vm7377, 0, %v7376
        %v7379 = vsub.s32 32, %v7378
        %v7380 = vshll.u32 %v7371, %v7378
        %v7381 = vshrl.u32 %v7363, %v7379
        %v7382 = vor.u32 %v7380, %v7381
        %v7383 = vsub.s32 4294967266, %v7378
        %v7384 = vadd.s32 %v7383, 127
        %v7385 = vshll.u32 %v7384, 23
        %v7386 = vor.u32 4788187, %v7385
        %v7387 = vand.u32 2147483647, %v7386
        %v7389 = vcvt.s32.f32 %v7382
        %v7390 = vmul.f32 %v7389, %v7387
        %v7391 = vxor.u32 %v7390, 2147483648
        %v7392 = vsel %vm7309, %v7391, %v7390
        %v7393 = vsub.s32 4, %v7369
        %v7394 = vsel %vm7309, %v7393, %v7369
        %v7395 = vsel %vm7308, %v7099, %v7392
        %v7396 = vsel %vm7308, 0, %v7394
        %v7397 = vcosq.f32.pop %v7395
        %v7398 = vsinq.f32.pop %v7395
        %vm7399 = vweird.f32 %v7099
        %v7400 = vand.u32 %v7396, 3
        %vm7401 = vcmp.lt.s32.totalorder %v7400, 2
        %vm7402 = vcmp.eq.s32.totalorder %v7400, 0
        %v7403 = vxor.u32 %v7398, 2147483648
        %v7404 = vsel %vm7402, %v7397, %v7403
        %vm7405 = vcmp.eq.s32.totalorder %v7400, 2
        %v7406 = vxor.u32 %v7397, 2147483648
        %v7407 = vsel %vm7405, %v7406, %v7398
        %v7408 = vsel %vm7401, %v7404, %v7407
        %v7409 = vsel %vm7399, nan, %v7408
        %v7410 = vand.u32 2147483647, %v7100
        %vm7411 = vcmp.le.f32.partialorder %v7410, 0.7853982
        %vm7412 = vcmp.lt.s32.totalorder %v7100, 0
        %v7413 = vand.u32 %v7100, 2139095040
        %v7414 = vshrl.u32 %v7413, 23
        %v7415 = vsub.s32 %v7414, 127
        %v7416 = vand.u32 2147483647, %v7100
        %v7417 = vand.u32 %v7416, 8388607
        %v7418 = vor.u32 %v7417, 8388608
        %v7419 = vsub.s32 0, %v7418
        %v7420 = vadd.s32 %v7415, 1
        %vm7421 = vcmp.gt.s32.totalorder %v7420, 0
        %v7422 = vsel %vm7421, %v7420, 0
        %v7423 = vshrl.u32 %v7422, 5
        %v7424 = vand.u32 %v7422, 31
        %v7425 = vsub.s32 32, %v7424
        %v7426 = vshrl.u32 683565275, %v7425
        %v7427 = vshll.u32 683565275, %v7424
        %v7428 = vshrl.u32 2475754826, %v7425
        %v7429 = vor.u32 %v7427, %v7428
        %v7430 = vshll.u32 2475754826, %v7424
        %v7431 = vshrl.u32 2131351028, %v7425
        %v7432 = vor.u32 %v7430, %v7431
        %v7433 = vshll.u32 2131351028, %v7424
        %v7434 = vshrl.u32 2102212464, %v7425
        %v7435 = vor.u32 %v7433, %v7434
        %v7436 = vshll.u32 2102212464, %v7424
        %v7437 = vshrl.u32 920167782, %v7425
        %v7438 = vor.u32 %v7436, %v7437
        %v7439 = vshll.u32 920167782, %v7424
        %v7440 = vshrl.u32 1326507024, %v7425
        %v7441 = vor.u32 %v7439, %v7440
        %vm7442 = vcmp.lt.s32.totalorder %v7423, 1
        %vm7443 = vcmp.lt.s32.totalorder %v7423, 2
        %vm7444 = vcmp.lt.s32.totalorder %v7423, 3
        %vm7445 = vcmp.lt.s32.totalorder %v7423, 4
        %v7446 = vsel %vm7442, %v7426, %v7429
        %v7447 = vsel %vm7445, %v7435, 2102212464
        %v7448 = vsel %vm7444, %v7432, %v7447
        %v7449 = vsel %vm7443, %v7446, %v7448
        %v7450 = vsel %vm7442, %v7429, %v7432
        %v7451 = vsel %vm7445, %v7438, 920167782
        %v7452 = vsel %vm7444, %v7435, %v7451
        %v7453 = vsel %vm7443, %v7450, %v7452
        %v7454 = vsel %vm7442, %v7432, %v7435
        %v7455 = vsel %vm7445, %v7441, 1326507024
        %v7456 = vsel %vm7444, %v7438, %v7455
        %v7457 = vsel %vm7443, %v7454, %v7456
        %v7458 = vshll.u32 %v7418, 8
        %v7459 = vmul.u32.u64.compose %v7458, %v7457
        %v7460 = vextract.low.u32 %v7459
        %v7461 = vextract.high.u32 %v7459
        %v7462 = vmul.u32.u64.compose %v7458, %v7453
        %v7463 = vextract.low.u32 %v7462
        %v7464 = vextract.high.u32 %v7462
        %v7465 = vmul.u32 %v7458, %v7449
        %v7466 = vadd.s32 %v7461, %v7463
        %vm7467 = vc.u32 %v7461, %v7463
        %v7468 = vadd.s32 %v7464, 1
        %v7469 = vsel %vm7467, %v7468, %v7464
        %v7470 = vadd.s32 %v7465, %v7469
        %v7471 = vadd.s32 %v7470, 536870912
        %v7472 = vshrl.u32 %v7471, 30
        %v7473 = vshll.u32 %v7472, 30
        %v7474 = vsub.s32 %v7470, %v7473
        %vm7475 = vcmp.lt.s32.totalorder %v7474, 0
        %v7476 = vsub.s32 0, %v7474
        %v7477 = vsel %vm7475, %v7476, %v7474
        %v7478 = vclz %v7477
        %v7479 = vsub.s32 %v7478, 2
        %vm7480 = vcmp.gt.s32.totalorder 0, %v7479
        %v7481 = vsel %vm7480, 0, %v7479
        %v7482 = vsub.s32 32, %v7481
        %v7483 = vshll.u32 %v7474, %v7481
        %v7484 = vshrl.u32 %v7466, %v7482
        %v7485 = vor.u32 %v7483, %v7484
        %v7486 = vsub.s32 4294967266, %v7481
        %v7487 = vadd.s32 %v7486, 127
        %v7488 = vshll.u32 %v7487, 23
        %v7489 = vor.u32 4788187, %v7488
        %v7490 = vand.u32 2147483647, %v7489
        %v7492 = vcvt.s32.f32 %v7485
        %v7493 = vmul.f32 %v7492, %v7490
        %v7494 = vxor.u32 %v7493, 2147483648
        %v7495 = vsel %vm7412, %v7494, %v7493
        %v7496 = vsub.s32 4, %v7472
        %v7497 = vsel %vm7412, %v7496, %v7472
        %v7498 = vsel %vm7411, %v7100, %v7495
        %v7499 = vsel %vm7411, 0, %v7497
        %v7500 = vcosq.f32.pop %v7498
        %v7501 = vsinq.f32.pop %v7498
        %vm7502 = vweird.f32 %v7100
        %v7503 = vand.u32 %v7499, 3
        %vm7504 = vcmp.lt.s32.totalorder %v7503, 2
        %vm7505 = vcmp.eq.s32.totalorder %v7503, 0
        %v7506 = vxor.u32 %v7501, 2147483648
        %v7507 = vsel %vm7505, %v7500, %v7506
        %vm7508 = vcmp.eq.s32.totalorder %v7503, 2
        %v7509 = vxor.u32 %v7500, 2147483648
        %v7510 = vsel %vm7508, %v7509, %v7501
        %v7511 = vsel %vm7504, %v7507, %v7510
        %v7512 = vsel %vm7502, nan, %v7511
        %v7513 = vsub.f32 1.0, %v7203
        %v7514 = vsub.f32 1.0, %v7306
        %v7515 = vsub.f32 1.0, %v7409
        %v7516 = vsub.f32 1.0, %v7512
        %7518 = vset.pattern.permute.xlu0 0
        %7519 = vperm.xlu0 %7518, %v7068
        %v7520 = vpop.permute.xlu0 %7519
        %7523 = vset.pattern.permute.xlu0 0
        %7524 = vperm.xlu0 %7523, %v7069
        %v7525 = vpop.permute.xlu0 %7524
        %7528 = vset.pattern.permute.xlu0 0
        %7529 = vperm.xlu0 %7528, %v7070
        %v7530 = vpop.permute.xlu0 %7529
        %7533 = vset.pattern.permute.xlu0 0
        %7534 = vperm.xlu0 %7533, %v7071
        %v7535 = vpop.permute.xlu0 %7534
        %v7537 = vmul.f32 %v7520, %v7513
        %v7538 = vmul.f32 %v7525, %v7514
        %v7539 = vmul.f32 %v7530, %v7515
        %v7540 = vmul.f32 %v7535, %v7516
        %v7541 = vadd.f32 %v7063, %v7537
        %v7542 = vadd.f32 %v7064, %v7538
        %v7543 = vadd.f32 %v7065, %v7539
        %v7544 = vadd.f32 %v7066, %v7540
        %v7545 = vpack.c.bf16 %v7542, %v7541
        %v7546 = vpack.c.bf16 %v7544, %v7543
        %7547 = vst [vmem:[#allocation3 + $0x8] sm:$0xff] %v7545
        %7548 = vst [vmem:[#allocation3 + $0x20] sm:$0xff] %v7546
        %v7549 = vld [vmem:[#allocation3 + $0x8] sm:$0xff]
        %v7550 = vld [vmem:[#allocation3 + $0x20] sm:$0xff]
        %7553 = vrot.lane.b32.xlu0 %v7549, 126
        %v7554 = vpop.permute.xlu0 %7553
        %7555 = vrot.lane.b32.xlu0 %v7550, 126
        %v7556 = vpop.permute.xlu0 %7555
        %7559 = vst.msk [vmem:[#allocation3] sm:$0xff] %vm1974, %v7554
        %7560 = vst.msk [vmem:[#allocation3 + $0x18] sm:$0xff] %vm1974, %v7556
        %v7561 = vld [vmem:[#allocation3 + $0x8] sm:$0xff]
        %v7562 = vld [vmem:[#allocation3 + $0x20] sm:$0xff]
        %7565 = vrot.lane.b32.xlu0 %v7561, 2
        %v7566 = vpop.permute.xlu0 %7565
        %7567 = vrot.lane.b32.xlu0 %v7562, 2
        %v7568 = vpop.permute.xlu0 %7567
        %7571 = vst.msk [vmem:[#allocation3 + $0x10] sm:$0xff] %vm1987, %v7566
        %7572 = vst.msk [vmem:[#allocation3 + $0x28] sm:$0xff] %vm1987, %v7568
        %v7573 = vld [vmem:[#allocation3 + $0x8] sm:$0xff]
        %v7574 = vld [vmem:[#allocation3 + $0x20] sm:$0xff]
        %7577 = vrot.lane.b32.xlu0 %v7573, 124
        %v7578 = vpop.permute.xlu0 %7577
        %7579 = vrot.lane.b32.xlu0 %v7574, 124
        %v7580 = vpop.permute.xlu0 %7579
        %7583 = vst.msk [vmem:[#allocation3] sm:$0xff] %vm4765, %v7578
        %7584 = vst.msk [vmem:[#allocation3 + $0x18] sm:$0xff] %vm4765, %v7580
        %v7585 = vld [vmem:[#allocation3 + $0x8] sm:$0xff]
        %v7586 = vld [vmem:[#allocation3 + $0x20] sm:$0xff]
        %7589 = vrot.lane.b32.xlu0 %v7585, 4
        %v7590 = vpop.permute.xlu0 %7589
        %7591 = vrot.lane.b32.xlu0 %v7586, 4
        %v7592 = vpop.permute.xlu0 %7591
        %7595 = vst.msk [vmem:[#allocation3 + $0x10] sm:$0xff] %vm4778, %v7590
        %7596 = vst.msk [vmem:[#allocation3 + $0x28] sm:$0xff] %vm4778, %v7592
        %v7597 = vld [vmem:[#allocation3 + $0x8] sm:$0xff]
        %v7598 = vld [vmem:[#allocation3 + $0x20] sm:$0xff]
        %7601 = vrot.lane.b32.xlu0 %v7597, 122
        %v7602 = vpop.permute.xlu0 %7601
        %7603 = vrot.lane.b32.xlu0 %v7598, 122
        %v7604 = vpop.permute.xlu0 %7603
        %7607 = vst.msk [vmem:[#allocation3] sm:$0xff] %vm4791, %v7602
        %7608 = vst.msk [vmem:[#allocation3 + $0x18] sm:$0xff] %vm4791, %v7604
        %v7609 = vld [vmem:[#allocation3 + $0x8] sm:$0xff]
        %v7610 = vld [vmem:[#allocation3 + $0x20] sm:$0xff]
        %7613 = vrot.lane.b32.xlu0 %v7609, 6
        %v7614 = vpop.permute.xlu0 %7613
        %7615 = vrot.lane.b32.xlu0 %v7610, 6
        %v7616 = vpop.permute.xlu0 %7615
        %7619 = vst.msk [vmem:[#allocation3 + $0x10] sm:$0xff] %vm4804, %v7614
        %7620 = vst.msk [vmem:[#allocation3 + $0x28] sm:$0xff] %vm4804, %v7616
        %v7621 = vld [vmem:[#allocation3 + $0x8] sm:$0xff]
        %v7622 = vld [vmem:[#allocation3 + $0x20] sm:$0xff]
        %7625 = vrot.lane.b32.xlu0 %v7621, 120
        %v7626 = vpop.permute.xlu0 %7625
        %7627 = vrot.lane.b32.xlu0 %v7622, 120
        %v7628 = vpop.permute.xlu0 %7627
        %vm7631 = vcmask 1023968
        %7632 = vst.msk [vmem:[#allocation3] sm:$0xff] %vm7631, %v7626
        %7633 = vst.msk [vmem:[#allocation3 + $0x18] sm:$0xff] %vm7631, %v7628
        %v7634 = vld [vmem:[#allocation3 + $0x8] sm:$0xff]
        %v7635 = vld [vmem:[#allocation3 + $0x20] sm:$0xff]
        %7638 = vrot.lane.b32.xlu0 %v7634, 8
        %v7639 = vpop.permute.xlu0 %7638
        %7640 = vrot.lane.b32.xlu0 %v7635, 8
        %v7641 = vpop.permute.xlu0 %7640
        %vm7644 = vcmask 31768
        %7645 = vst.msk [vmem:[#allocation3 + $0x10] sm:$0xff] %vm7644, %v7639
        %7646 = vst.msk [vmem:[#allocation3 + $0x28] sm:$0xff] %vm7644, %v7641
        %v7647 = vld [vmem:[#allocation3 + $0x8] sm:$0xff]
        %v7648 = vld [vmem:[#allocation3 + $0x20] sm:$0xff]
        %7651 = vrot.lane.b32.xlu0 %v7647, 118
        %v7652 = vpop.permute.xlu0 %7651
        %7653 = vrot.lane.b32.xlu0 %v7648, 118
        %v7654 = vpop.permute.xlu0 %7653
        %vm7657 = vcmask 1015768
        %7658 = vst.msk [vmem:[#allocation3] sm:$0xff] %vm7657, %v7652
        %7659 = vst.msk [vmem:[#allocation3 + $0x18] sm:$0xff] %vm7657, %v7654
        %v7660 = vld [vmem:[#allocation3 + $0x8] sm:$0xff]
        %v7661 = vld [vmem:[#allocation3 + $0x20] sm:$0xff]
        %7664 = vrot.lane.b32.xlu0 %v7660, 10
        %v7665 = vpop.permute.xlu0 %7664
        %7666 = vrot.lane.b32.xlu0 %v7661, 10
        %v7667 = vpop.permute.xlu0 %7666
        %vm7670 = vcmask 39968
        %7671 = vst.msk [vmem:[#allocation3 + $0x10] sm:$0xff] %vm7670, %v7665
        %7672 = vst.msk [vmem:[#allocation3 + $0x28] sm:$0xff] %vm7670, %v7667
        %s7673 = scalar_lea.vmem [#allocation15], 128
        %v7674 = vld [vmem:[%s7673] sm:$0xff]
        %v7675 = vld [vmem:[%s7673 + $0x8] sm:$0xff]
        %v7676 = vld [vmem:[%s7673 + $0x10] sm:$0xff]
        %v7677 = vld [vmem:[%s7673 + $0x18] sm:$0xff]
        %s7678 = scalar_lea.vmem [#allocation13], 192
        %v7679 = vld [vmem:[%s7678] sm:$0xf]
        %v7680 = vld [vmem:[%s7678 + $0x4] sm:$0xf]
        %v7681 = vld [vmem:[%s7678 + $0x8] sm:$0xf]
        %v7682 = vld [vmem:[%s7678 + $0xc] sm:$0xf]
        %v7683 = vld [vmem:[#allocation3] sm:$0xff]
        %v7684 = vld [vmem:[#allocation3 + $0x8] sm:$0xff]
        %v7685 = vld [vmem:[#allocation3 + $0x18] sm:$0xff]
        %v7686 = vld [vmem:[#allocation3 + $0x20] sm:$0xff]
        %v7691 = vunpack.c.l.b16 %v7679
        %v7692 = vunpack.c.l.b16 %v7680
        %v7693 = vunpack.c.l.b16 %v7681
        %v7694 = vunpack.c.l.b16 %v7682
        %v7695 = vpack.c.b16 %v7692, %v7691
        %v7696 = vpack.c.b16 %v7694, %v7693
        %7701 = vrot.lane.b32.xlu0 %v7683, 5
        %v7702 = vpop.permute.xlu0 %7701
        %7703 = vrot.lane.b32.xlu0 %v7684, 5
        %v7704 = vpop.permute.xlu0 %7703
        %7705 = vrot.lane.b32.xlu0 %v7685, 5
        %v7706 = vpop.permute.xlu0 %7705
        %7707 = vrot.lane.b32.xlu0 %v7686, 5
        %v7708 = vpop.permute.xlu0 %7707
        %vm7709 = vcmask 39936
        %v7710 = vsel %vm7709, %v7702, %v7704
        %v7711 = vsel %vm7709, %v7706, %v7708
        %v7715 = vsel %vm2029, %v7695, 0
        %v7718 = vsel %vm2029, %v7696, 0
        %7720 = vmatprep.subr.bf16.mxu0 0
        %7721 = vmatpush1.bf16.msra.mxu0 %v7710
        %7722 = vmatprep.subr.bf16.mxu0 0
        %7723 = vmatpush1.bf16.msra.mxu0 %v7711
        %7724 = vmatprep.subr.bf16.mxu0 0
        %7725 = vmatpush1.bf16.msra.mxu0 0
        %7726 = vmatprep.subr.bf16.mxu0 0
        %7727 = vmatpush1.bf16.msra.mxu0 0
        %7728 = vmatprep.subr.bf16.mxu0 0
        %7729 = vmatpush1.bf16.msra.mxu0 0
        %7730 = vmatprep.subr.bf16.mxu0 0
        %7731 = vmatpush1.bf16.msra.mxu0 0
        %7732 = vmatprep.subr.bf16.mxu0 0
        %7733 = vmatpush1.bf16.msra.mxu0 0
        %7734 = vmatprep.subr.bf16.mxu0 0
        %7735 = vmatpush1.bf16.msra.mxu0 0
        %7736 = vmatprep.subr.bf16.mxu0 0
        %7737 = vmatpush1.bf16.msra.mxu0 0
        %7738 = vmatprep.subr.bf16.mxu0 0
        %7739 = vmatpush1.bf16.msra.mxu0 0
        %7740 = vmatprep.subr.bf16.mxu0 0
        %7741 = vmatpush1.bf16.msra.mxu0 0
        %7742 = vmatprep.subr.bf16.mxu0 0
        %7743 = vmatpush1.bf16.msra.mxu0 0
        %7744 = vmatprep.subr.bf16.mxu0 0
        %7745 = vmatpush1.bf16.msra.mxu0 0
        %7746 = vmatprep.subr.bf16.mxu0 0
        %7747 = vmatpush1.bf16.msra.mxu0 0
        %7748 = vmatprep.subr.bf16.mxu0 0
        %7749 = vmatpush1.bf16.msra.mxu0 0
        %7750 = vmatprep.subr.bf16.mxu0 0
        %7751 = vmatpush1.bf16.msra.mxu0 0
        %7752 = vmatprep.mubr.bf16.mxu0 0
        %7753 = vmatmul.mubr.bf16.gmra.mrb[0].mxu0 %v7715
        %v7754 = vpop.f32.mrb[0].mxu0
        %v7755 = vadd.f32 0.0, %v7754
        %v7756 = vpop.f32.mrb[0].mxu0
        %v7757 = vpop.f32.mrb[0].mxu0
        %v7758 = vadd.f32 0.0, %v7757
        %v7759 = vpop.f32.mrb[0].mxu0
        %7760 = vmatprep.mubr.bf16.mxu0 0
        %7761 = vmatmul.mubr.bf16.gmra.mrb[0].mxu0 %v7718
        %v7762 = vpop.f32.mrb[0].mxu0
        %v7763 = vadd.f32 0.0, %v7762
        %v7764 = vpop.f32.mrb[0].mxu0
        %v7765 = vpop.f32.mrb[0].mxu0
        %v7766 = vadd.f32 0.0, %v7765
        %v7767 = vpop.f32.mrb[0].mxu0
        %7768 = vdwg.mxu0
        %7770 = vset.pattern.permute.xlu0 0
        %7771 = vperm.xlu0 %7770, %v7674
        %v7772 = vpop.permute.xlu0 %7771
        %7775 = vset.pattern.permute.xlu0 0
        %7776 = vperm.xlu0 %7775, %v7675
        %v7777 = vpop.permute.xlu0 %7776
        %7780 = vset.pattern.permute.xlu0 0
        %7781 = vperm.xlu0 %7780, %v7676
        %v7782 = vpop.permute.xlu0 %7781
        %7785 = vset.pattern.permute.xlu0 0
        %7786 = vperm.xlu0 %7785, %v7677
        %v7787 = vpop.permute.xlu0 %7786
        %v7789 = vadd.f32 %v7772, %v7755
        %v7790 = vadd.f32 %v7777, %v7758
        %v7791 = vadd.f32 %v7782, %v7763
        %v7792 = vadd.f32 %v7787, %v7766
        %s7793 = scalar_lea.vmem [#allocation13], 208
        %v7794 = vld [vmem:[%s7793] sm:$0xf]
        %v7795 = vld [vmem:[%s7793 + $0x4] sm:$0xf]
        %v7796 = vld [vmem:[%s7793 + $0x8] sm:$0xf]
        %v7797 = vld [vmem:[%s7793 + $0xc] sm:$0xf]
        %v7802 = vunpack.c.l.b16 %v7794
        %v7803 = vunpack.c.l.b16 %v7795
        %v7804 = vunpack.c.l.b16 %v7796
        %v7805 = vunpack.c.l.b16 %v7797
        %v7806 = vpack.c.b16 %v7803, %v7802
        %v7807 = vpack.c.b16 %v7805, %v7804
        %v7809 = vsel %vm2029, %v7806, 0
        %v7812 = vsel %vm2029, %v7807, 0
        %7814 = vmatprep.subr.bf16.mxu0 0
        %7815 = vmatpush1.bf16.msra.mxu0 %v7684
        %7816 = vmatprep.subr.bf16.mxu0 0
        %7817 = vmatpush1.bf16.msra.mxu0 %v7686
        %7818 = vmatprep.subr.bf16.mxu0 0
        %7819 = vmatpush1.bf16.msra.mxu0 0
        %7820 = vmatprep.subr.bf16.mxu0 0
        %7821 = vmatpush1.bf16.msra.mxu0 0
        %7822 = vmatprep.subr.bf16.mxu0 0
        %7823 = vmatpush1.bf16.msra.mxu0 0
        %7824 = vmatprep.subr.bf16.mxu0 0
        %7825 = vmatpush1.bf16.msra.mxu0 0
        %7826 = vmatprep.subr.bf16.mxu0 0
        %7827 = vmatpush1.bf16.msra.mxu0 0
        %7828 = vmatprep.subr.bf16.mxu0 0
        %7829 = vmatpush1.bf16.msra.mxu0 0
        %7830 = vmatprep.subr.bf16.mxu0 0
        %7831 = vmatpush1.bf16.msra.mxu0 0
        %7832 = vmatprep.subr.bf16.mxu0 0
        %7833 = vmatpush1.bf16.msra.mxu0 0
        %7834 = vmatprep.subr.bf16.mxu0 0
        %7835 = vmatpush1.bf16.msra.mxu0 0
        %7836 = vmatprep.subr.bf16.mxu0 0
        %7837 = vmatpush1.bf16.msra.mxu0 0
        %7838 = vmatprep.subr.bf16.mxu0 0
        %7839 = vmatpush1.bf16.msra.mxu0 0
        %7840 = vmatprep.subr.bf16.mxu0 0
        %7841 = vmatpush1.bf16.msra.mxu0 0
        %7842 = vmatprep.subr.bf16.mxu0 0
        %7843 = vmatpush1.bf16.msra.mxu0 0
        %7844 = vmatprep.subr.bf16.mxu0 0
        %7845 = vmatpush1.bf16.msra.mxu0 0
        %7846 = vmatprep.mubr.bf16.mxu0 0
        %7847 = vmatmul.mubr.bf16.gmra.mrb[0].mxu0 %v7809
        %v7848 = vpop.f32.mrb[0].mxu0
        %v7849 = vadd.f32 0.0, %v7848
        %v7850 = vpop.f32.mrb[0].mxu0
        %v7851 = vpop.f32.mrb[0].mxu0
        %v7852 = vadd.f32 0.0, %v7851
        %v7853 = vpop.f32.mrb[0].mxu0
        %7854 = vmatprep.mubr.bf16.mxu0 0
        %7855 = vmatmul.mubr.bf16.gmra.mrb[0].mxu0 %v7812
        %v7856 = vpop.f32.mrb[0].mxu0
        %v7857 = vadd.f32 0.0, %v7856
        %v7858 = vpop.f32.mrb[0].mxu0
        %v7859 = vpop.f32.mrb[0].mxu0
        %v7860 = vadd.f32 0.0, %v7859
        %v7861 = vpop.f32.mrb[0].mxu0
        %7862 = vdwg.mxu0
        %v7863 = vadd.f32 %v7789, %v7849
        %v7864 = vadd.f32 %v7790, %v7852
        %v7865 = vadd.f32 %v7791, %v7857
        %v7866 = vadd.f32 %v7792, %v7860
        %s7867 = scalar_lea.vmem [#allocation13], 224
        %v7868 = vld [vmem:[%s7867] sm:$0xf]
        %v7869 = vld [vmem:[%s7867 + $0x4] sm:$0xf]
        %v7870 = vld [vmem:[%s7867 + $0x8] sm:$0xf]
        %v7871 = vld [vmem:[%s7867 + $0xc] sm:$0xf]
        %v7872 = vld [vmem:[#allocation3 + $0x8] sm:$0xff]
        %v7873 = vld [vmem:[#allocation3 + $0x10] sm:$0xff]
        %v7874 = vld [vmem:[#allocation3 + $0x20] sm:$0xff]
        %v7875 = vld [vmem:[#allocation3 + $0x28] sm:$0xff]
        %v7880 = vunpack.c.l.b16 %v7868
        %v7881 = vunpack.c.l.b16 %v7869
        %v7882 = vunpack.c.l.b16 %v7870
        %v7883 = vunpack.c.l.b16 %v7871
        %v7884 = vpack.c.b16 %v7881, %v7880
        %v7885 = vpack.c.b16 %v7883, %v7882
        %7890 = vrot.lane.b32.xlu0 %v7872, 123
        %v7891 = vpop.permute.xlu0 %7890
        %7892 = vrot.lane.b32.xlu0 %v7873, 123
        %v7893 = vpop.permute.xlu0 %7892
        %7894 = vrot.lane.b32.xlu0 %v7874, 123
        %v7895 = vpop.permute.xlu0 %7894
        %7896 = vrot.lane.b32.xlu0 %v7875, 123
        %v7897 = vpop.permute.xlu0 %7896
        %vm7898 = vcmask 1006592
        %v7899 = vsel %vm7898, %v7891, %v7893
        %v7900 = vsel %vm7898, %v7895, %v7897
        %v7904 = vsel %vm2029, %v7884, 0
        %v7907 = vsel %vm2029, %v7885, 0
        %7909 = vmatprep.subr.bf16.mxu0 0
        %7910 = vmatpush1.bf16.msra.mxu0 %v7899
        %7911 = vmatprep.subr.bf16.mxu0 0
        %7912 = vmatpush1.bf16.msra.mxu0 %v7900
        %7913 = vmatprep.subr.bf16.mxu0 0
        %7914 = vmatpush1.bf16.msra.mxu0 0
        %7915 = vmatprep.subr.bf16.mxu0 0
        %7916 = vmatpush1.bf16.msra.mxu0 0
        %7917 = vmatprep.subr.bf16.mxu0 0
        %7918 = vmatpush1.bf16.msra.mxu0 0
        %7919 = vmatprep.subr.bf16.mxu0 0
        %7920 = vmatpush1.bf16.msra.mxu0 0
        %7921 = vmatprep.subr.bf16.mxu0 0
        %7922 = vmatpush1.bf16.msra.mxu0 0
        %7923 = vmatprep.subr.bf16.mxu0 0
        %7924 = vmatpush1.bf16.msra.mxu0 0
        %7925 = vmatprep.subr.bf16.mxu0 0
        %7926 = vmatpush1.bf16.msra.mxu0 0
        %7927 = vmatprep.subr.bf16.mxu0 0
        %7928 = vmatpush1.bf16.msra.mxu0 0
        %7929 = vmatprep.subr.bf16.mxu0 0
        %7930 = vmatpush1.bf16.msra.mxu0 0
        %7931 = vmatprep.subr.bf16.mxu0 0
        %7932 = vmatpush1.bf16.msra.mxu0 0
        %7933 = vmatprep.subr.bf16.mxu0 0
        %7934 = vmatpush1.bf16.msra.mxu0 0
        %7935 = vmatprep.subr.bf16.mxu0 0
        %7936 = vmatpush1.bf16.msra.mxu0 0
        %7937 = vmatprep.subr.bf16.mxu0 0
        %7938 = vmatpush1.bf16.msra.mxu0 0
        %7939 = vmatprep.subr.bf16.mxu0 0
        %7940 = vmatpush1.bf16.msra.mxu0 0
        %7941 = vmatprep.mubr.bf16.mxu0 0
        %7942 = vmatmul.mubr.bf16.gmra.mrb[0].mxu0 %v7904
        %v7943 = vpop.f32.mrb[0].mxu0
        %v7944 = vadd.f32 0.0, %v7943
        %v7945 = vpop.f32.mrb[0].mxu0
        %v7946 = vpop.f32.mrb[0].mxu0
        %v7947 = vadd.f32 0.0, %v7946
        %v7948 = vpop.f32.mrb[0].mxu0
        %7949 = vmatprep.mubr.bf16.mxu0 0
        %7950 = vmatmul.mubr.bf16.gmra.mrb[0].mxu0 %v7907
        %v7951 = vpop.f32.mrb[0].mxu0
        %v7952 = vadd.f32 0.0, %v7951
        %v7953 = vpop.f32.mrb[0].mxu0
        %v7954 = vpop.f32.mrb[0].mxu0
        %v7955 = vadd.f32 0.0, %v7954
        %v7956 = vpop.f32.mrb[0].mxu0
        %7957 = vdwg.mxu0
        %v7958 = vadd.f32 %v7863, %v7944
        %v7959 = vadd.f32 %v7864, %v7947
        %v7960 = vadd.f32 %v7865, %v7952
        %v7961 = vadd.f32 %v7866, %v7955
        %s7962 = scalar_lea.vmem [#allocation10], 160
        %v7963 = vld [vmem:[%s7962] sm:$0xf]
        %v7964 = vld [vmem:[%s7962 + $0x4] sm:$0xf]
        %v7965 = vld [vmem:[%s7962 + $0x8] sm:$0xf]
        %v7966 = vld [vmem:[%s7962 + $0xc] sm:$0xf]
        %v7967 = vld [vmem:[%s7962 + $0x10] sm:$0xf]
        %v7968 = vld [vmem:[%s7962 + $0x14] sm:$0xf]
        %v7969 = vld [vmem:[%s7962 + $0x18] sm:$0xf]
        %v7970 = vld [vmem:[%s7962 + $0x1c] sm:$0xf]
        %s7971 = scalar_lea.vmem [#allocation12], 320
        %v7972 = vld [vmem:[%s7971] sm:$0xff]
        %v7973 = vld [vmem:[%s7971 + $0x8] sm:$0xff]
        %v7974 = vld [vmem:[%s7971 + $0x10] sm:$0xff]
        %v7975 = vld [vmem:[%s7971 + $0x18] sm:$0xff]
        %v7976 = vld [vmem:[%s7971 + $0x20] sm:$0xff]
        %v7977 = vld [vmem:[%s7971 + $0x28] sm:$0xff]
        %v7978 = vld [vmem:[%s7971 + $0x30] sm:$0xff]
        %v7979 = vld [vmem:[%s7971 + $0x38] sm:$0xff]
        %7981 = vset.pattern.permute.xlu0 0
        %7982 = vperm.xlu0 %7981, %v7972
        %v7983 = vpop.permute.xlu0 %7982
        %7986 = vset.pattern.permute.xlu0 0
        %7987 = vperm.xlu0 %7986, %v7973
        %v7988 = vpop.permute.xlu0 %7987
        %7991 = vset.pattern.permute.xlu0 0
        %7992 = vperm.xlu0 %7991, %v7974
        %v7993 = vpop.permute.xlu0 %7992
        %7996 = vset.pattern.permute.xlu0 0
        %7997 = vperm.xlu0 %7996, %v7975
        %v7998 = vpop.permute.xlu0 %7997
        %8001 = vset.pattern.permute.xlu0 0
        %8002 = vperm.xlu0 %8001, %v7976
        %v8003 = vpop.permute.xlu0 %8002
        %8006 = vset.pattern.permute.xlu0 0
        %8007 = vperm.xlu0 %8006, %v7977
        %v8008 = vpop.permute.xlu0 %8007
        %8011 = vset.pattern.permute.xlu0 0
        %8012 = vperm.xlu0 %8011, %v7978
        %v8013 = vpop.permute.xlu0 %8012
        %8016 = vset.pattern.permute.xlu0 0
        %8017 = vperm.xlu0 %8016, %v7979
        %v8018 = vpop.permute.xlu0 %8017
        %v8028 = vunpack.c.l.b16 %v7963
        %v8029 = vunpack.c.l.b16 %v7964
        %v8030 = vunpack.c.l.b16 %v7965
        %v8031 = vunpack.c.l.b16 %v7966
        %v8032 = vunpack.c.l.b16 %v7967
        %v8033 = vunpack.c.l.b16 %v7968
        %v8034 = vunpack.c.l.b16 %v7969
        %v8035 = vunpack.c.l.b16 %v7970
        %v8036 = vpack.c.b16 %v8029, %v8028
        %v8037 = vpack.c.b16 %v8031, %v8030
        %v8038 = vpack.c.b16 %v8033, %v8032
        %v8039 = vpack.c.b16 %v8035, %v8034
        %v8041 = vsel %vm978, %v8036, 0
        %v8044 = vsel %vm978, %v8037, 0
        %v8047 = vsel %vm978, %v8038, 0
        %v8050 = vsel %vm978, %v8039, 0
        %8052 = vmatprep.subr.bf16.mxu0 0
        %8053 = vmatpush1.bf16.msra.mxu0 %v970
        %8054 = vmatprep.subr.bf16.mxu0 0
        %8055 = vmatpush1.bf16.msra.mxu0 %v971
        %8056 = vmatprep.subr.bf16.mxu0 0
        %8057 = vmatpush1.bf16.msra.mxu0 %v972
        %8058 = vmatprep.subr.bf16.mxu0 0
        %8059 = vmatpush1.bf16.msra.mxu0 %v973
        %8060 = vmatprep.subr.bf16.mxu0 0
        %8061 = vmatpush1.bf16.msra.mxu0 0
        %8062 = vmatprep.subr.bf16.mxu0 0
        %8063 = vmatpush1.bf16.msra.mxu0 0
        %8064 = vmatprep.subr.bf16.mxu0 0
        %8065 = vmatpush1.bf16.msra.mxu0 0
        %8066 = vmatprep.subr.bf16.mxu0 0
        %8067 = vmatpush1.bf16.msra.mxu0 0
        %8068 = vmatprep.subr.bf16.mxu0 0
        %8069 = vmatpush1.bf16.msra.mxu0 0
        %8070 = vmatprep.subr.bf16.mxu0 0
        %8071 = vmatpush1.bf16.msra.mxu0 0
        %8072 = vmatprep.subr.bf16.mxu0 0
        %8073 = vmatpush1.bf16.msra.mxu0 0
        %8074 = vmatprep.subr.bf16.mxu0 0
        %8075 = vmatpush1.bf16.msra.mxu0 0
        %8076 = vmatprep.subr.bf16.mxu0 0
        %8077 = vmatpush1.bf16.msra.mxu0 0
        %8078 = vmatprep.subr.bf16.mxu0 0
        %8079 = vmatpush1.bf16.msra.mxu0 0
        %8080 = vmatprep.subr.bf16.mxu0 0
        %8081 = vmatpush1.bf16.msra.mxu0 0
        %8082 = vmatprep.subr.bf16.mxu0 0
        %8083 = vmatpush1.bf16.msra.mxu0 0
        %8084 = vmatprep.mubr.bf16.mxu0 0
        %8085 = vmatmul.mubr.bf16.gmra.mrb[0].mxu0 %v8041
        %v8086 = vpop.f32.mrb[0].mxu0
        %v8087 = vadd.f32 %v7983, %v8086
        %v8088 = vpop.f32.mrb[0].mxu0
        %v8089 = vpop.f32.mrb[0].mxu0
        %v8090 = vadd.f32 %v7988, %v8089
        %v8091 = vpop.f32.mrb[0].mxu0
        %8092 = vmatprep.mubr.bf16.mxu0 0
        %8093 = vmatmul.mubr.bf16.gmra.mrb[0].mxu0 %v8044
        %v8094 = vpop.f32.mrb[0].mxu0
        %v8095 = vadd.f32 %v7993, %v8094
        %v8096 = vpop.f32.mrb[0].mxu0
        %v8097 = vpop.f32.mrb[0].mxu0
        %v8098 = vadd.f32 %v7998, %v8097
        %v8099 = vpop.f32.mrb[0].mxu0
        %8100 = vmatprep.mubr.bf16.mxu0 0
        %8101 = vmatmul.mubr.bf16.gmra.mrb[0].mxu0 %v8047
        %v8102 = vpop.f32.mrb[0].mxu0
        %v8103 = vadd.f32 %v8003, %v8102
        %v8104 = vpop.f32.mrb[0].mxu0
        %v8105 = vpop.f32.mrb[0].mxu0
        %v8106 = vadd.f32 %v8008, %v8105
        %v8107 = vpop.f32.mrb[0].mxu0
        %8108 = vmatprep.mubr.bf16.mxu0 0
        %8109 = vmatmul.mubr.bf16.gmra.mrb[0].mxu0 %v8050
        %v8110 = vpop.f32.mrb[0].mxu0
        %v8111 = vadd.f32 %v8013, %v8110
        %v8112 = vpop.f32.mrb[0].mxu0
        %v8113 = vpop.f32.mrb[0].mxu0
        %v8114 = vadd.f32 %v8018, %v8113
        %v8115 = vpop.f32.mrb[0].mxu0
        %8116 = vdwg.mxu0
        %8117 = vst [vmem:[#allocation2 + $0x8] sm:$0xff] %v7958
        %8118 = vst [vmem:[#allocation2 + $0x20] sm:$0xff] %v7959
        %8119 = vst [vmem:[#allocation2 + $0x38] sm:$0xff] %v7960
        %8120 = vst [vmem:[#allocation2 + $0x50] sm:$0xff] %v7961
        %v8121 = vld [vmem:[#allocation2] sm:$0xff]
        %v8122 = vld [vmem:[#allocation2 + $0x8] sm:$0xff]
        %v8123 = vld [vmem:[#allocation2 + $0x18] sm:$0xff]
        %v8124 = vld [vmem:[#allocation2 + $0x20] sm:$0xff]
        %v8125 = vld [vmem:[#allocation2 + $0x30] sm:$0xff]
        %v8126 = vld [vmem:[#allocation2 + $0x38] sm:$0xff]
        %v8127 = vld [vmem:[#allocation2 + $0x48] sm:$0xff]
        %v8128 = vld [vmem:[#allocation2 + $0x50] sm:$0xff]
        %8137 = vrot.lane.b32.xlu0 %v8121, 127
        %v8138 = vpop.permute.xlu0 %8137
        %8139 = vrot.lane.b32.xlu0 %v8122, 127
        %v8140 = vpop.permute.xlu0 %8139
        %8141 = vrot.lane.b32.xlu0 %v8123, 127
        %v8142 = vpop.permute.xlu0 %8141
        %8143 = vrot.lane.b32.xlu0 %v8124, 127
        %v8144 = vpop.permute.xlu0 %8143
        %8145 = vrot.lane.b32.xlu0 %v8125, 127
        %v8146 = vpop.permute.xlu0 %8145
        %8147 = vrot.lane.b32.xlu0 %v8126, 127
        %v8148 = vpop.permute.xlu0 %8147
        %8149 = vrot.lane.b32.xlu0 %v8127, 127
        %v8150 = vpop.permute.xlu0 %8149
        %8151 = vrot.lane.b32.xlu0 %v8128, 127
        %v8152 = vpop.permute.xlu0 %8151
        %v8153 = vsel %vm590, %v8138, %v8140
        %v8154 = vsel %vm590, %v8142, %v8144
        %v8155 = vsel %vm590, %v8146, %v8148
        %v8156 = vsel %vm590, %v8150, %v8152
        %v8165 = vadd.f32 %v8121, %v8153
        %v8166 = vadd.f32 %v8122, %v8140
        %v8167 = vadd.f32 %v8123, %v8154
        %v8168 = vadd.f32 %v8124, %v8144
        %v8169 = vadd.f32 %v8125, %v8155
        %v8170 = vadd.f32 %v8126, %v8148
        %v8171 = vadd.f32 %v8127, %v8156
        %v8172 = vadd.f32 %v8128, %v8152
        %8173 = vrot.lane.b32.xlu0 %v8122, 126
        %v8174 = vpop.permute.xlu0 %8173
        %8175 = vrot.lane.b32.xlu0 %v8124, 126
        %v8176 = vpop.permute.xlu0 %8175
        %8177 = vrot.lane.b32.xlu0 %v8126, 126
        %v8178 = vpop.permute.xlu0 %8177
        %8179 = vrot.lane.b32.xlu0 %v8128, 126
        %v8180 = vpop.permute.xlu0 %8179
        %v8185 = vadd.f32 %v8165, %v8174
        %v8186 = vadd.f32 %v8166, %v8174
        %v8187 = vadd.f32 %v8167, %v8176
        %v8188 = vadd.f32 %v8168, %v8176
        %v8189 = vadd.f32 %v8169, %v8178
        %v8190 = vadd.f32 %v8170, %v8178
        %v8191 = vadd.f32 %v8171, %v8180
        %v8192 = vadd.f32 %v8172, %v8180
        %v8193 = vld [vmem:[#allocation2 + $0x10] sm:$0xff]
        %v8194 = vld [vmem:[#allocation2 + $0x28] sm:$0xff]
        %v8195 = vld [vmem:[#allocation2 + $0x40] sm:$0xff]
        %v8196 = vld [vmem:[#allocation2 + $0x58] sm:$0xff]
        %8201 = vrot.lane.b32.xlu0 %v8122, 125
        %v8202 = vpop.permute.xlu0 %8201
        %8203 = vrot.lane.b32.xlu0 %v8193, 125
        %v8204 = vpop.permute.xlu0 %8203
        %8205 = vrot.lane.b32.xlu0 %v8124, 125
        %v8206 = vpop.permute.xlu0 %8205
        %8207 = vrot.lane.b32.xlu0 %v8194, 125
        %v8208 = vpop.permute.xlu0 %8207
        %8209 = vrot.lane.b32.xlu0 %v8126, 125
        %v8210 = vpop.permute.xlu0 %8209
        %8211 = vrot.lane.b32.xlu0 %v8195, 125
        %v8212 = vpop.permute.xlu0 %8211
        %8213 = vrot.lane.b32.xlu0 %v8128, 125
        %v8214 = vpop.permute.xlu0 %8213
        %8215 = vrot.lane.b32.xlu0 %v8196, 125
        %v8216 = vpop.permute.xlu0 %8215
        %v8217 = vsel %vm719, %v8202, %v8204
        %v8218 = vsel %vm719, %v8206, %v8208
        %v8219 = vsel %vm719, %v8210, %v8212
        %v8220 = vsel %vm719, %v8214, %v8216
        %v8229 = vadd.f32 %v8185, %v8202
        %v8230 = vadd.f32 %v8186, %v8217
        %v8231 = vadd.f32 %v8187, %v8206
        %v8232 = vadd.f32 %v8188, %v8218
        %v8233 = vadd.f32 %v8189, %v8210
        %v8234 = vadd.f32 %v8190, %v8219
        %v8235 = vadd.f32 %v8191, %v8214
        %v8236 = vadd.f32 %v8192, %v8220
        %8237 = vrot.lane.b32.xlu0 %v8122, 124
        %v8238 = vpop.permute.xlu0 %8237
        %8239 = vrot.lane.b32.xlu0 %v8193, 124
        %v8240 = vpop.permute.xlu0 %8239
        %8241 = vrot.lane.b32.xlu0 %v8124, 124
        %v8242 = vpop.permute.xlu0 %8241
        %8243 = vrot.lane.b32.xlu0 %v8194, 124
        %v8244 = vpop.permute.xlu0 %8243
        %8245 = vrot.lane.b32.xlu0 %v8126, 124
        %v8246 = vpop.permute.xlu0 %8245
        %8247 = vrot.lane.b32.xlu0 %v8195, 124
        %v8248 = vpop.permute.xlu0 %8247
        %8249 = vrot.lane.b32.xlu0 %v8128, 124
        %v8250 = vpop.permute.xlu0 %8249
        %8251 = vrot.lane.b32.xlu0 %v8196, 124
        %v8252 = vpop.permute.xlu0 %8251
        %v8253 = vsel %vm792, %v8238, %v8240
        %v8254 = vsel %vm792, %v8242, %v8244
        %v8255 = vsel %vm792, %v8246, %v8248
        %v8256 = vsel %vm792, %v8250, %v8252
        %v8265 = vadd.f32 %v8229, %v8238
        %v8266 = vadd.f32 %v8230, %v8253
        %v8267 = vadd.f32 %v8231, %v8242
        %v8268 = vadd.f32 %v8232, %v8254
        %v8269 = vadd.f32 %v8233, %v8246
        %v8270 = vadd.f32 %v8234, %v8255
        %v8271 = vadd.f32 %v8235, %v8250
        %v8272 = vadd.f32 %v8236, %v8256
        %v8273 = vmul.f32 %v8265, %v839
        %v8274 = vmul.f32 %v8266, %v839
        %v8275 = vmul.f32 %v8267, %v839
        %v8276 = vmul.f32 %v8268, %v839
        %v8277 = vmul.f32 %v8269, %v839
        %v8278 = vmul.f32 %v8270, %v839
        %v8279 = vmul.f32 %v8271, %v839
        %v8280 = vmul.f32 %v8272, %v839
        %8289 = vrot.lane.b32.xlu0 %v8273, 2
        %v8290 = vpop.permute.xlu0 %8289
        %8291 = vrot.lane.b32.xlu0 %v8274, 2
        %v8292 = vpop.permute.xlu0 %8291
        %8293 = vrot.lane.b32.xlu0 %v8275, 2
        %v8294 = vpop.permute.xlu0 %8293
        %8295 = vrot.lane.b32.xlu0 %v8276, 2
        %v8296 = vpop.permute.xlu0 %8295
        %8297 = vrot.lane.b32.xlu0 %v8277, 2
        %v8298 = vpop.permute.xlu0 %8297
        %8299 = vrot.lane.b32.xlu0 %v8278, 2
        %v8300 = vpop.permute.xlu0 %8299
        %8301 = vrot.lane.b32.xlu0 %v8279, 2
        %v8302 = vpop.permute.xlu0 %8301
        %8303 = vrot.lane.b32.xlu0 %v8280, 2
        %v8304 = vpop.permute.xlu0 %8303
        %v8305 = vsel %vm501, %v8290, %v8292
        %v8306 = vsel %vm501, %v8294, %v8296
        %v8307 = vsel %vm501, %v8298, %v8300
        %v8308 = vsel %vm501, %v8302, %v8304
        %v8313 = vsub.f32 %v7958, %v8305
        %v8314 = vsub.f32 %v7959, %v8306
        %v8315 = vsub.f32 %v7960, %v8307
        %v8316 = vsub.f32 %v7961, %v8308
        %v8317 = vmul.f32 %v8313, %v8313
        %v8318 = vmul.f32 %v8314, %v8314
        %v8319 = vmul.f32 %v8315, %v8315
        %v8320 = vmul.f32 %v8316, %v8316
        %8321 = vst [vmem:[#allocation2 + $0x8] sm:$0xff] %v8317
        %8322 = vst [vmem:[#allocation2 + $0x20] sm:$0xff] %v8318
        %8323 = vst [vmem:[#allocation2 + $0x38] sm:$0xff] %v8319
        %8324 = vst [vmem:[#allocation2 + $0x50] sm:$0xff] %v8320
        %v8325 = vld [vmem:[#allocation2] sm:$0xff]
        %v8326 = vld [vmem:[#allocation2 + $0x8] sm:$0xff]
        %v8327 = vld [vmem:[#allocation2 + $0x18] sm:$0xff]
        %v8328 = vld [vmem:[#allocation2 + $0x20] sm:$0xff]
        %v8329 = vld [vmem:[#allocation2 + $0x30] sm:$0xff]
        %v8330 = vld [vmem:[#allocation2 + $0x38] sm:$0xff]
        %v8331 = vld [vmem:[#allocation2 + $0x48] sm:$0xff]
        %v8332 = vld [vmem:[#allocation2 + $0x50] sm:$0xff]
        %8341 = vrot.lane.b32.xlu0 %v8325, 127
        %v8342 = vpop.permute.xlu0 %8341
        %8343 = vrot.lane.b32.xlu0 %v8326, 127
        %v8344 = vpop.permute.xlu0 %8343
        %8345 = vrot.lane.b32.xlu0 %v8327, 127
        %v8346 = vpop.permute.xlu0 %8345
        %8347 = vrot.lane.b32.xlu0 %v8328, 127
        %v8348 = vpop.permute.xlu0 %8347
        %8349 = vrot.lane.b32.xlu0 %v8329, 127
        %v8350 = vpop.permute.xlu0 %8349
        %8351 = vrot.lane.b32.xlu0 %v8330, 127
        %v8352 = vpop.permute.xlu0 %8351
        %8353 = vrot.lane.b32.xlu0 %v8331, 127
        %v8354 = vpop.permute.xlu0 %8353
        %8355 = vrot.lane.b32.xlu0 %v8332, 127
        %v8356 = vpop.permute.xlu0 %8355
        %v8357 = vsel %vm590, %v8342, %v8344
        %v8358 = vsel %vm590, %v8346, %v8348
        %v8359 = vsel %vm590, %v8350, %v8352
        %v8360 = vsel %vm590, %v8354, %v8356
        %v8369 = vadd.f32 %v8325, %v8357
        %v8370 = vadd.f32 %v8326, %v8344
        %v8371 = vadd.f32 %v8327, %v8358
        %v8372 = vadd.f32 %v8328, %v8348
        %v8373 = vadd.f32 %v8329, %v8359
        %v8374 = vadd.f32 %v8330, %v8352
        %v8375 = vadd.f32 %v8331, %v8360
        %v8376 = vadd.f32 %v8332, %v8356
        %8377 = vrot.lane.b32.xlu0 %v8326, 126
        %v8378 = vpop.permute.xlu0 %8377
        %8379 = vrot.lane.b32.xlu0 %v8328, 126
        %v8380 = vpop.permute.xlu0 %8379
        %8381 = vrot.lane.b32.xlu0 %v8330, 126
        %v8382 = vpop.permute.xlu0 %8381
        %8383 = vrot.lane.b32.xlu0 %v8332, 126
        %v8384 = vpop.permute.xlu0 %8383
        %v8389 = vadd.f32 %v8369, %v8378
        %v8390 = vadd.f32 %v8370, %v8378
        %v8391 = vadd.f32 %v8371, %v8380
        %v8392 = vadd.f32 %v8372, %v8380
        %v8393 = vadd.f32 %v8373, %v8382
        %v8394 = vadd.f32 %v8374, %v8382
        %v8395 = vadd.f32 %v8375, %v8384
        %v8396 = vadd.f32 %v8376, %v8384
        %v8397 = vld [vmem:[#allocation2 + $0x10] sm:$0xff]
        %v8398 = vld [vmem:[#allocation2 + $0x28] sm:$0xff]
        %v8399 = vld [vmem:[#allocation2 + $0x40] sm:$0xff]
        %v8400 = vld [vmem:[#allocation2 + $0x58] sm:$0xff]
        %8405 = vrot.lane.b32.xlu0 %v8326, 125
        %v8406 = vpop.permute.xlu0 %8405
        %8407 = vrot.lane.b32.xlu0 %v8397, 125
        %v8408 = vpop.permute.xlu0 %8407
        %8409 = vrot.lane.b32.xlu0 %v8328, 125
        %v8410 = vpop.permute.xlu0 %8409
        %8411 = vrot.lane.b32.xlu0 %v8398, 125
        %v8412 = vpop.permute.xlu0 %8411
        %8413 = vrot.lane.b32.xlu0 %v8330, 125
        %v8414 = vpop.permute.xlu0 %8413
        %8415 = vrot.lane.b32.xlu0 %v8399, 125
        %v8416 = vpop.permute.xlu0 %8415
        %8417 = vrot.lane.b32.xlu0 %v8332, 125
        %v8418 = vpop.permute.xlu0 %8417
        %8419 = vrot.lane.b32.xlu0 %v8400, 125
        %v8420 = vpop.permute.xlu0 %8419
        %v8421 = vsel %vm719, %v8406, %v8408
        %v8422 = vsel %vm719, %v8410, %v8412
        %v8423 = vsel %vm719, %v8414, %v8416
        %v8424 = vsel %vm719, %v8418, %v8420
        %v8433 = vadd.f32 %v8389, %v8406
        %v8434 = vadd.f32 %v8390, %v8421
        %v8435 = vadd.f32 %v8391, %v8410
        %v8436 = vadd.f32 %v8392, %v8422
        %v8437 = vadd.f32 %v8393, %v8414
        %v8438 = vadd.f32 %v8394, %v8423
        %v8439 = vadd.f32 %v8395, %v8418
        %v8440 = vadd.f32 %v8396, %v8424
        %8441 = vrot.lane.b32.xlu0 %v8326, 124
        %v8442 = vpop.permute.xlu0 %8441
        %8443 = vrot.lane.b32.xlu0 %v8397, 124
        %v8444 = vpop.permute.xlu0 %8443
        %8445 = vrot.lane.b32.xlu0 %v8328, 124
        %v8446 = vpop.permute.xlu0 %8445
        %8447 = vrot.lane.b32.xlu0 %v8398, 124
        %v8448 = vpop.permute.xlu0 %8447
        %8449 = vrot.lane.b32.xlu0 %v8330, 124
        %v8450 = vpop.permute.xlu0 %8449
        %8451 = vrot.lane.b32.xlu0 %v8399, 124
        %v8452 = vpop.permute.xlu0 %8451
        %8453 = vrot.lane.b32.xlu0 %v8332, 124
        %v8454 = vpop.permute.xlu0 %8453
        %8455 = vrot.lane.b32.xlu0 %v8400, 124
        %v8456 = vpop.permute.xlu0 %8455
        %v8457 = vsel %vm792, %v8442, %v8444
        %v8458 = vsel %vm792, %v8446, %v8448
        %v8459 = vsel %vm792, %v8450, %v8452
        %v8460 = vsel %vm792, %v8454, %v8456
        %v8469 = vadd.f32 %v8433, %v8442
        %v8470 = vadd.f32 %v8434, %v8457
        %v8471 = vadd.f32 %v8435, %v8446
        %v8472 = vadd.f32 %v8436, %v8458
        %v8473 = vadd.f32 %v8437, %v8450
        %v8474 = vadd.f32 %v8438, %v8459
        %v8475 = vadd.f32 %v8439, %v8454
        %v8476 = vadd.f32 %v8440, %v8460
        %v8477 = vmul.f32 %v8469, %v839
        %v8478 = vmul.f32 %v8470, %v839
        %v8479 = vmul.f32 %v8471, %v839
        %v8480 = vmul.f32 %v8472, %v839
        %v8481 = vmul.f32 %v8473, %v839
        %v8482 = vmul.f32 %v8474, %v839
        %v8483 = vmul.f32 %v8475, %v839
        %v8484 = vmul.f32 %v8476, %v839
        %v8485 = vadd.f32 %v8477, 1e-09
        %v8486 = vadd.f32 %v8478, 1e-09
        %v8487 = vadd.f32 %v8479, 1e-09
        %v8488 = vadd.f32 %v8480, 1e-09
        %v8489 = vadd.f32 %v8481, 1e-09
        %v8490 = vadd.f32 %v8482, 1e-09
        %v8491 = vadd.f32 %v8483, 1e-09
        %v8492 = vadd.f32 %v8484, 1e-09
        %v8493 = vrsqrt.pop %v8485
        %v8494 = vrsqrt.pop %v8486
        %v8495 = vrsqrt.pop %v8487
        %v8496 = vrsqrt.pop %v8488
        %v8497 = vrsqrt.pop %v8489
        %v8498 = vrsqrt.pop %v8490
        %v8499 = vrsqrt.pop %v8491
        %v8500 = vrsqrt.pop %v8492
        %8509 = vrot.lane.b32.xlu0 %v8493, 2
        %v8510 = vpop.permute.xlu0 %8509
        %8511 = vrot.lane.b32.xlu0 %v8494, 2
        %v8512 = vpop.permute.xlu0 %8511
        %8513 = vrot.lane.b32.xlu0 %v8495, 2
        %v8514 = vpop.permute.xlu0 %8513
        %8515 = vrot.lane.b32.xlu0 %v8496, 2
        %v8516 = vpop.permute.xlu0 %8515
        %8517 = vrot.lane.b32.xlu0 %v8497, 2
        %v8518 = vpop.permute.xlu0 %8517
        %8519 = vrot.lane.b32.xlu0 %v8498, 2
        %v8520 = vpop.permute.xlu0 %8519
        %8521 = vrot.lane.b32.xlu0 %v8499, 2
        %v8522 = vpop.permute.xlu0 %8521
        %8523 = vrot.lane.b32.xlu0 %v8500, 2
        %v8524 = vpop.permute.xlu0 %8523
        %v8525 = vsel %vm501, %v8510, %v8512
        %v8526 = vsel %vm501, %v8514, %v8516
        %v8527 = vsel %vm501, %v8518, %v8520
        %v8528 = vsel %vm501, %v8522, %v8524
        %v8533 = vmul.f32 %v8313, %v8525
        %v8534 = vmul.f32 %v8314, %v8526
        %v8535 = vmul.f32 %v8315, %v8527
        %v8536 = vmul.f32 %v8316, %v8528
        %v8537 = vmul.f32 %v8087, %v8533
        %v8538 = vmul.f32 %v8090, %v8534
        %v8539 = vmul.f32 %v8095, %v8535
        %v8540 = vmul.f32 %v8098, %v8536
        %v8541 = vadd.f32 %v8537, %v8103
        %v8542 = vadd.f32 %v8538, %v8106
        %v8543 = vadd.f32 %v8539, %v8111
        %v8544 = vadd.f32 %v8540, %v8114
        %s8545 = scalar_lea.vmem [#allocation18], 160
        %v8546 = vld [vmem:[%s8545] sm:$0xff]
        %v8547 = vld [vmem:[%s8545 + $0x8] sm:$0xff]
        %v8548 = vld [vmem:[%s8545 + $0x10] sm:$0xff]
        %v8549 = vld [vmem:[%s8545 + $0x18] sm:$0xff]
        %s8550 = scalar_lea.vmem [#allocation16], 160
        %v8551 = vld [vmem:[%s8550] sm:$0xff]
        %v8552 = vld [vmem:[%s8550 + $0x8] sm:$0xff]
        %v8553 = vld [vmem:[%s8550 + $0x10] sm:$0xff]
        %v8554 = vld [vmem:[%s8550 + $0x18] sm:$0xff]
        %8556 = vset.pattern.permute.xlu0 0
        %8557 = vperm.xlu0 %8556, %v8551
        %v8558 = vpop.permute.xlu0 %8557
        %8561 = vset.pattern.permute.xlu0 0
        %8562 = vperm.xlu0 %8561, %v8552
        %v8563 = vpop.permute.xlu0 %8562
        %8566 = vset.pattern.permute.xlu0 0
        %8567 = vperm.xlu0 %8566, %v8553
        %v8568 = vpop.permute.xlu0 %8567
        %8571 = vset.pattern.permute.xlu0 0
        %8572 = vperm.xlu0 %8571, %v8554
        %v8573 = vpop.permute.xlu0 %8572
        %v8575 = vmul.f32 %v8558, %v8541
        %v8576 = vmul.f32 %v8563, %v8542
        %v8577 = vmul.f32 %v8568, %v8543
        %v8578 = vmul.f32 %v8573, %v8544
        %v8579 = vand.u32 2147483647, %v8575
        %vm8580 = vcmp.le.f32.partialorder %v8579, 0.7853982
        %vm8581 = vcmp.lt.s32.totalorder %v8575, 0
        %v8582 = vand.u32 %v8575, 2139095040
        %v8583 = vshrl.u32 %v8582, 23
        %v8584 = vsub.s32 %v8583, 127
        %v8585 = vand.u32 2147483647, %v8575
        %v8586 = vand.u32 %v8585, 8388607
        %v8587 = vor.u32 %v8586, 8388608
        %v8588 = vsub.s32 0, %v8587
        %v8589 = vadd.s32 %v8584, 1
        %vm8590 = vcmp.gt.s32.totalorder %v8589, 0
        %v8591 = vsel %vm8590, %v8589, 0
        %v8592 = vshrl.u32 %v8591, 5
        %v8593 = vand.u32 %v8591, 31
        %v8594 = vsub.s32 32, %v8593
        %v8595 = vshrl.u32 683565275, %v8594
        %v8596 = vshll.u32 683565275, %v8593
        %v8597 = vshrl.u32 2475754826, %v8594
        %v8598 = vor.u32 %v8596, %v8597
        %v8599 = vshll.u32 2475754826, %v8593
        %v8600 = vshrl.u32 2131351028, %v8594
        %v8601 = vor.u32 %v8599, %v8600
        %v8602 = vshll.u32 2131351028, %v8593
        %v8603 = vshrl.u32 2102212464, %v8594
        %v8604 = vor.u32 %v8602, %v8603
        %v8605 = vshll.u32 2102212464, %v8593
        %v8606 = vshrl.u32 920167782, %v8594
        %v8607 = vor.u32 %v8605, %v8606
        %v8608 = vshll.u32 920167782, %v8593
        %v8609 = vshrl.u32 1326507024, %v8594
        %v8610 = vor.u32 %v8608, %v8609
        %vm8611 = vcmp.lt.s32.totalorder %v8592, 1
        %vm8612 = vcmp.lt.s32.totalorder %v8592, 2
        %vm8613 = vcmp.lt.s32.totalorder %v8592, 3
        %vm8614 = vcmp.lt.s32.totalorder %v8592, 4
        %v8615 = vsel %vm8611, %v8595, %v8598
        %v8616 = vsel %vm8614, %v8604, 2102212464
        %v8617 = vsel %vm8613, %v8601, %v8616
        %v8618 = vsel %vm8612, %v8615, %v8617
        %v8619 = vsel %vm8611, %v8598, %v8601
        %v8620 = vsel %vm8614, %v8607, 920167782
        %v8621 = vsel %vm8613, %v8604, %v8620
        %v8622 = vsel %vm8612, %v8619, %v8621
        %v8623 = vsel %vm8611, %v8601, %v8604
        %v8624 = vsel %vm8614, %v8610, 1326507024
        %v8625 = vsel %vm8613, %v8607, %v8624
        %v8626 = vsel %vm8612, %v8623, %v8625
        %v8627 = vshll.u32 %v8587, 8
        %v8628 = vmul.u32.u64.compose %v8627, %v8626
        %v8629 = vextract.low.u32 %v8628
        %v8630 = vextract.high.u32 %v8628
        %v8631 = vmul.u32.u64.compose %v8627, %v8622
        %v8632 = vextract.low.u32 %v8631
        %v8633 = vextract.high.u32 %v8631
        %v8634 = vmul.u32 %v8627, %v8618
        %v8635 = vadd.s32 %v8630, %v8632
        %vm8636 = vc.u32 %v8630, %v8632
        %v8637 = vadd.s32 %v8633, 1
        %v8638 = vsel %vm8636, %v8637, %v8633
        %v8639 = vadd.s32 %v8634, %v8638
        %v8640 = vadd.s32 %v8639, 536870912
        %v8641 = vshrl.u32 %v8640, 30
        %v8642 = vshll.u32 %v8641, 30
        %v8643 = vsub.s32 %v8639, %v8642
        %vm8644 = vcmp.lt.s32.totalorder %v8643, 0
        %v8645 = vsub.s32 0, %v8643
        %v8646 = vsel %vm8644, %v8645, %v8643
        %v8647 = vclz %v8646
        %v8648 = vsub.s32 %v8647, 2
        %vm8649 = vcmp.gt.s32.totalorder 0, %v8648
        %v8650 = vsel %vm8649, 0, %v8648
        %v8651 = vsub.s32 32, %v8650
        %v8652 = vshll.u32 %v8643, %v8650
        %v8653 = vshrl.u32 %v8635, %v8651
        %v8654 = vor.u32 %v8652, %v8653
        %v8655 = vsub.s32 4294967266, %v8650
        %v8656 = vadd.s32 %v8655, 127
        %v8657 = vshll.u32 %v8656, 23
        %v8658 = vor.u32 4788187, %v8657
        %v8659 = vand.u32 2147483647, %v8658
        %v8661 = vcvt.s32.f32 %v8654
        %v8662 = vmul.f32 %v8661, %v8659
        %v8663 = vxor.u32 %v8662, 2147483648
        %v8664 = vsel %vm8581, %v8663, %v8662
        %v8665 = vsub.s32 4, %v8641
        %v8666 = vsel %vm8581, %v8665, %v8641
        %v8667 = vsel %vm8580, %v8575, %v8664
        %v8668 = vsel %vm8580, 0, %v8666
        %v8669 = vcosq.f32.pop %v8667
        %v8670 = vsinq.f32.pop %v8667
        %vm8671 = vweird.f32 %v8575
        %v8672 = vand.u32 %v8668, 3
        %vm8673 = vcmp.lt.s32.totalorder %v8672, 2
        %vm8674 = vcmp.eq.s32.totalorder %v8672, 0
        %v8675 = vxor.u32 %v8670, 2147483648
        %v8676 = vsel %vm8674, %v8669, %v8675
        %vm8677 = vcmp.eq.s32.totalorder %v8672, 2
        %v8678 = vxor.u32 %v8669, 2147483648
        %v8679 = vsel %vm8677, %v8678, %v8670
        %v8680 = vsel %vm8673, %v8676, %v8679
        %v8681 = vsel %vm8671, nan, %v8680
        %v8682 = vand.u32 2147483647, %v8576
        %vm8683 = vcmp.le.f32.partialorder %v8682, 0.7853982
        %vm8684 = vcmp.lt.s32.totalorder %v8576, 0
        %v8685 = vand.u32 %v8576, 2139095040
        %v8686 = vshrl.u32 %v8685, 23
        %v8687 = vsub.s32 %v8686, 127
        %v8688 = vand.u32 2147483647, %v8576
        %v8689 = vand.u32 %v8688, 8388607
        %v8690 = vor.u32 %v8689, 8388608
        %v8691 = vsub.s32 0, %v8690
        %v8692 = vadd.s32 %v8687, 1
        %vm8693 = vcmp.gt.s32.totalorder %v8692, 0
        %v8694 = vsel %vm8693, %v8692, 0
        %v8695 = vshrl.u32 %v8694, 5
        %v8696 = vand.u32 %v8694, 31
        %v8697 = vsub.s32 32, %v8696
        %v8698 = vshrl.u32 683565275, %v8697
        %v8699 = vshll.u32 683565275, %v8696
        %v8700 = vshrl.u32 2475754826, %v8697
        %v8701 = vor.u32 %v8699, %v8700
        %v8702 = vshll.u32 2475754826, %v8696
        %v8703 = vshrl.u32 2131351028, %v8697
        %v8704 = vor.u32 %v8702, %v8703
        %v8705 = vshll.u32 2131351028, %v8696
        %v8706 = vshrl.u32 2102212464, %v8697
        %v8707 = vor.u32 %v8705, %v8706
        %v8708 = vshll.u32 2102212464, %v8696
        %v8709 = vshrl.u32 920167782, %v8697
        %v8710 = vor.u32 %v8708, %v8709
        %v8711 = vshll.u32 920167782, %v8696
        %v8712 = vshrl.u32 1326507024, %v8697
        %v8713 = vor.u32 %v8711, %v8712
        %vm8714 = vcmp.lt.s32.totalorder %v8695, 1
        %vm8715 = vcmp.lt.s32.totalorder %v8695, 2
        %vm8716 = vcmp.lt.s32.totalorder %v8695, 3
        %vm8717 = vcmp.lt.s32.totalorder %v8695, 4
        %v8718 = vsel %vm8714, %v8698, %v8701
        %v8719 = vsel %vm8717, %v8707, 2102212464
        %v8720 = vsel %vm8716, %v8704, %v8719
        %v8721 = vsel %vm8715, %v8718, %v8720
        %v8722 = vsel %vm8714, %v8701, %v8704
        %v8723 = vsel %vm8717, %v8710, 920167782
        %v8724 = vsel %vm8716, %v8707, %v8723
        %v8725 = vsel %vm8715, %v8722, %v8724
        %v8726 = vsel %vm8714, %v8704, %v8707
        %v8727 = vsel %vm8717, %v8713, 1326507024
        %v8728 = vsel %vm8716, %v8710, %v8727
        %v8729 = vsel %vm8715, %v8726, %v8728
        %v8730 = vshll.u32 %v8690, 8
        %v8731 = vmul.u32.u64.compose %v8730, %v8729
        %v8732 = vextract.low.u32 %v8731
        %v8733 = vextract.high.u32 %v8731
        %v8734 = vmul.u32.u64.compose %v8730, %v8725
        %v8735 = vextract.low.u32 %v8734
        %v8736 = vextract.high.u32 %v8734
        %v8737 = vmul.u32 %v8730, %v8721
        %v8738 = vadd.s32 %v8733, %v8735
        %vm8739 = vc.u32 %v8733, %v8735
        %v8740 = vadd.s32 %v8736, 1
        %v8741 = vsel %vm8739, %v8740, %v8736
        %v8742 = vadd.s32 %v8737, %v8741
        %v8743 = vadd.s32 %v8742, 536870912
        %v8744 = vshrl.u32 %v8743, 30
        %v8745 = vshll.u32 %v8744, 30
        %v8746 = vsub.s32 %v8742, %v8745
        %vm8747 = vcmp.lt.s32.totalorder %v8746, 0
        %v8748 = vsub.s32 0, %v8746
        %v8749 = vsel %vm8747, %v8748, %v8746
        %v8750 = vclz %v8749
        %v8751 = vsub.s32 %v8750, 2
        %vm8752 = vcmp.gt.s32.totalorder 0, %v8751
        %v8753 = vsel %vm8752, 0, %v8751
        %v8754 = vsub.s32 32, %v8753
        %v8755 = vshll.u32 %v8746, %v8753
        %v8756 = vshrl.u32 %v8738, %v8754
        %v8757 = vor.u32 %v8755, %v8756
        %v8758 = vsub.s32 4294967266, %v8753
        %v8759 = vadd.s32 %v8758, 127
        %v8760 = vshll.u32 %v8759, 23
        %v8761 = vor.u32 4788187, %v8760
        %v8762 = vand.u32 2147483647, %v8761
        %v8764 = vcvt.s32.f32 %v8757
        %v8765 = vmul.f32 %v8764, %v8762
        %v8766 = vxor.u32 %v8765, 2147483648
        %v8767 = vsel %vm8684, %v8766, %v8765
        %v8768 = vsub.s32 4, %v8744
        %v8769 = vsel %vm8684, %v8768, %v8744
        %v8770 = vsel %vm8683, %v8576, %v8767
        %v8771 = vsel %vm8683, 0, %v8769
        %v8772 = vcosq.f32.pop %v8770
        %v8773 = vsinq.f32.pop %v8770
        %vm8774 = vweird.f32 %v8576
        %v8775 = vand.u32 %v8771, 3
        %vm8776 = vcmp.lt.s32.totalorder %v8775, 2
        %vm8777 = vcmp.eq.s32.totalorder %v8775, 0
        %v8778 = vxor.u32 %v8773, 2147483648
        %v8779 = vsel %vm8777, %v8772, %v8778
        %vm8780 = vcmp.eq.s32.totalorder %v8775, 2
        %v8781 = vxor.u32 %v8772, 2147483648
        %v8782 = vsel %vm8780, %v8781, %v8773
        %v8783 = vsel %vm8776, %v8779, %v8782
        %v8784 = vsel %vm8774, nan, %v8783
        %v8785 = vand.u32 2147483647, %v8577
        %vm8786 = vcmp.le.f32.partialorder %v8785, 0.7853982
        %vm8787 = vcmp.lt.s32.totalorder %v8577, 0
        %v8788 = vand.u32 %v8577, 2139095040
        %v8789 = vshrl.u32 %v8788, 23
        %v8790 = vsub.s32 %v8789, 127
        %v8791 = vand.u32 2147483647, %v8577
        %v8792 = vand.u32 %v8791, 8388607
        %v8793 = vor.u32 %v8792, 8388608
        %v8794 = vsub.s32 0, %v8793
        %v8795 = vadd.s32 %v8790, 1
        %vm8796 = vcmp.gt.s32.totalorder %v8795, 0
        %v8797 = vsel %vm8796, %v8795, 0
        %v8798 = vshrl.u32 %v8797, 5
        %v8799 = vand.u32 %v8797, 31
        %v8800 = vsub.s32 32, %v8799
        %v8801 = vshrl.u32 683565275, %v8800
        %v8802 = vshll.u32 683565275, %v8799
        %v8803 = vshrl.u32 2475754826, %v8800
        %v8804 = vor.u32 %v8802, %v8803
        %v8805 = vshll.u32 2475754826, %v8799
        %v8806 = vshrl.u32 2131351028, %v8800
        %v8807 = vor.u32 %v8805, %v8806
        %v8808 = vshll.u32 2131351028, %v8799
        %v8809 = vshrl.u32 2102212464, %v8800
        %v8810 = vor.u32 %v8808, %v8809
        %v8811 = vshll.u32 2102212464, %v8799
        %v8812 = vshrl.u32 920167782, %v8800
        %v8813 = vor.u32 %v8811, %v8812
        %v8814 = vshll.u32 920167782, %v8799
        %v8815 = vshrl.u32 1326507024, %v8800
        %v8816 = vor.u32 %v8814, %v8815
        %vm8817 = vcmp.lt.s32.totalorder %v8798, 1
        %vm8818 = vcmp.lt.s32.totalorder %v8798, 2
        %vm8819 = vcmp.lt.s32.totalorder %v8798, 3
        %vm8820 = vcmp.lt.s32.totalorder %v8798, 4
        %v8821 = vsel %vm8817, %v8801, %v8804
        %v8822 = vsel %vm8820, %v8810, 2102212464
        %v8823 = vsel %vm8819, %v8807, %v8822
        %v8824 = vsel %vm8818, %v8821, %v8823
        %v8825 = vsel %vm8817, %v8804, %v8807
        %v8826 = vsel %vm8820, %v8813, 920167782
        %v8827 = vsel %vm8819, %v8810, %v8826
        %v8828 = vsel %vm8818, %v8825, %v8827
        %v8829 = vsel %vm8817, %v8807, %v8810
        %v8830 = vsel %vm8820, %v8816, 1326507024
        %v8831 = vsel %vm8819, %v8813, %v8830
        %v8832 = vsel %vm8818, %v8829, %v8831
        %v8833 = vshll.u32 %v8793, 8
        %v8834 = vmul.u32.u64.compose %v8833, %v8832
        %v8835 = vextract.low.u32 %v8834
        %v8836 = vextract.high.u32 %v8834
        %v8837 = vmul.u32.u64.compose %v8833, %v8828
        %v8838 = vextract.low.u32 %v8837
        %v8839 = vextract.high.u32 %v8837
        %v8840 = vmul.u32 %v8833, %v8824
        %v8841 = vadd.s32 %v8836, %v8838
        %vm8842 = vc.u32 %v8836, %v8838
        %v8843 = vadd.s32 %v8839, 1
        %v8844 = vsel %vm8842, %v8843, %v8839
        %v8845 = vadd.s32 %v8840, %v8844
        %v8846 = vadd.s32 %v8845, 536870912
        %v8847 = vshrl.u32 %v8846, 30
        %v8848 = vshll.u32 %v8847, 30
        %v8849 = vsub.s32 %v8845, %v8848
        %vm8850 = vcmp.lt.s32.totalorder %v8849, 0
        %v8851 = vsub.s32 0, %v8849
        %v8852 = vsel %vm8850, %v8851, %v8849
        %v8853 = vclz %v8852
        %v8854 = vsub.s32 %v8853, 2
        %vm8855 = vcmp.gt.s32.totalorder 0, %v8854
        %v8856 = vsel %vm8855, 0, %v8854
        %v8857 = vsub.s32 32, %v8856
        %v8858 = vshll.u32 %v8849, %v8856
        %v8859 = vshrl.u32 %v8841, %v8857
        %v8860 = vor.u32 %v8858, %v8859
        %v8861 = vsub.s32 4294967266, %v8856
        %v8862 = vadd.s32 %v8861, 127
        %v8863 = vshll.u32 %v8862, 23
        %v8864 = vor.u32 4788187, %v8863
        %v8865 = vand.u32 2147483647, %v8864
        %v8867 = vcvt.s32.f32 %v8860
        %v8868 = vmul.f32 %v8867, %v8865
        %v8869 = vxor.u32 %v8868, 2147483648
        %v8870 = vsel %vm8787, %v8869, %v8868
        %v8871 = vsub.s32 4, %v8847
        %v8872 = vsel %vm8787, %v8871, %v8847
        %v8873 = vsel %vm8786, %v8577, %v8870
        %v8874 = vsel %vm8786, 0, %v8872
        %v8875 = vcosq.f32.pop %v8873
        %v8876 = vsinq.f32.pop %v8873
        %vm8877 = vweird.f32 %v8577
        %v8878 = vand.u32 %v8874, 3
        %vm8879 = vcmp.lt.s32.totalorder %v8878, 2
        %vm8880 = vcmp.eq.s32.totalorder %v8878, 0
        %v8881 = vxor.u32 %v8876, 2147483648
        %v8882 = vsel %vm8880, %v8875, %v8881
        %vm8883 = vcmp.eq.s32.totalorder %v8878, 2
        %v8884 = vxor.u32 %v8875, 2147483648
        %v8885 = vsel %vm8883, %v8884, %v8876
        %v8886 = vsel %vm8879, %v8882, %v8885
        %v8887 = vsel %vm8877, nan, %v8886
        %v8888 = vand.u32 2147483647, %v8578
        %vm8889 = vcmp.le.f32.partialorder %v8888, 0.7853982
        %vm8890 = vcmp.lt.s32.totalorder %v8578, 0
        %v8891 = vand.u32 %v8578, 2139095040
        %v8892 = vshrl.u32 %v8891, 23
        %v8893 = vsub.s32 %v8892, 127
        %v8894 = vand.u32 2147483647, %v8578
        %v8895 = vand.u32 %v8894, 8388607
        %v8896 = vor.u32 %v8895, 8388608
        %v8897 = vsub.s32 0, %v8896
        %v8898 = vadd.s32 %v8893, 1
        %vm8899 = vcmp.gt.s32.totalorder %v8898, 0
        %v8900 = vsel %vm8899, %v8898, 0
        %v8901 = vshrl.u32 %v8900, 5
        %v8902 = vand.u32 %v8900, 31
        %v8903 = vsub.s32 32, %v8902
        %v8904 = vshrl.u32 683565275, %v8903
        %v8905 = vshll.u32 683565275, %v8902
        %v8906 = vshrl.u32 2475754826, %v8903
        %v8907 = vor.u32 %v8905, %v8906
        %v8908 = vshll.u32 2475754826, %v8902
        %v8909 = vshrl.u32 2131351028, %v8903
        %v8910 = vor.u32 %v8908, %v8909
        %v8911 = vshll.u32 2131351028, %v8902
        %v8912 = vshrl.u32 2102212464, %v8903
        %v8913 = vor.u32 %v8911, %v8912
        %v8914 = vshll.u32 2102212464, %v8902
        %v8915 = vshrl.u32 920167782, %v8903
        %v8916 = vor.u32 %v8914, %v8915
        %v8917 = vshll.u32 920167782, %v8902
        %v8918 = vshrl.u32 1326507024, %v8903
        %v8919 = vor.u32 %v8917, %v8918
        %vm8920 = vcmp.lt.s32.totalorder %v8901, 1
        %vm8921 = vcmp.lt.s32.totalorder %v8901, 2
        %vm8922 = vcmp.lt.s32.totalorder %v8901, 3
        %vm8923 = vcmp.lt.s32.totalorder %v8901, 4
        %v8924 = vsel %vm8920, %v8904, %v8907
        %v8925 = vsel %vm8923, %v8913, 2102212464
        %v8926 = vsel %vm8922, %v8910, %v8925
        %v8927 = vsel %vm8921, %v8924, %v8926
        %v8928 = vsel %vm8920, %v8907, %v8910
        %v8929 = vsel %vm8923, %v8916, 920167782
        %v8930 = vsel %vm8922, %v8913, %v8929
        %v8931 = vsel %vm8921, %v8928, %v8930
        %v8932 = vsel %vm8920, %v8910, %v8913
        %v8933 = vsel %vm8923, %v8919, 1326507024
        %v8934 = vsel %vm8922, %v8916, %v8933
        %v8935 = vsel %vm8921, %v8932, %v8934
        %v8936 = vshll.u32 %v8896, 8
        %v8937 = vmul.u32.u64.compose %v8936, %v8935
        %v8938 = vextract.low.u32 %v8937
        %v8939 = vextract.high.u32 %v8937
        %v8940 = vmul.u32.u64.compose %v8936, %v8931
        %v8941 = vextract.low.u32 %v8940
        %v8942 = vextract.high.u32 %v8940
        %v8943 = vmul.u32 %v8936, %v8927
        %v8944 = vadd.s32 %v8939, %v8941
        %vm8945 = vc.u32 %v8939, %v8941
        %v8946 = vadd.s32 %v8942, 1
        %v8947 = vsel %vm8945, %v8946, %v8942
        %v8948 = vadd.s32 %v8943, %v8947
        %v8949 = vadd.s32 %v8948, 536870912
        %v8950 = vshrl.u32 %v8949, 30
        %v8951 = vshll.u32 %v8950, 30
        %v8952 = vsub.s32 %v8948, %v8951
        %vm8953 = vcmp.lt.s32.totalorder %v8952, 0
        %v8954 = vsub.s32 0, %v8952
        %v8955 = vsel %vm8953, %v8954, %v8952
        %v8956 = vclz %v8955
        %v8957 = vsub.s32 %v8956, 2
        %vm8958 = vcmp.gt.s32.totalorder 0, %v8957
        %v8959 = vsel %vm8958, 0, %v8957
        %v8960 = vsub.s32 32, %v8959
        %v8961 = vshll.u32 %v8952, %v8959
        %v8962 = vshrl.u32 %v8944, %v8960
        %v8963 = vor.u32 %v8961, %v8962
        %v8964 = vsub.s32 4294967266, %v8959
        %v8965 = vadd.s32 %v8964, 127
        %v8966 = vshll.u32 %v8965, 23
        %v8967 = vor.u32 4788187, %v8966
        %v8968 = vand.u32 2147483647, %v8967
        %v8970 = vcvt.s32.f32 %v8963
        %v8971 = vmul.f32 %v8970, %v8968
        %v8972 = vxor.u32 %v8971, 2147483648
        %v8973 = vsel %vm8890, %v8972, %v8971
        %v8974 = vsub.s32 4, %v8950
        %v8975 = vsel %vm8890, %v8974, %v8950
        %v8976 = vsel %vm8889, %v8578, %v8973
        %v8977 = vsel %vm8889, 0, %v8975
        %v8978 = vcosq.f32.pop %v8976
        %v8979 = vsinq.f32.pop %v8976
        %vm8980 = vweird.f32 %v8578
        %v8981 = vand.u32 %v8977, 3
        %vm8982 = vcmp.lt.s32.totalorder %v8981, 2
        %vm8983 = vcmp.eq.s32.totalorder %v8981, 0
        %v8984 = vxor.u32 %v8979, 2147483648
        %v8985 = vsel %vm8983, %v8978, %v8984
        %vm8986 = vcmp.eq.s32.totalorder %v8981, 2
        %v8987 = vxor.u32 %v8978, 2147483648
        %v8988 = vsel %vm8986, %v8987, %v8979
        %v8989 = vsel %vm8982, %v8985, %v8988
        %v8990 = vsel %vm8980, nan, %v8989
        %v8991 = vsub.f32 1.0, %v8681
        %v8992 = vsub.f32 1.0, %v8784
        %v8993 = vsub.f32 1.0, %v8887
        %v8994 = vsub.f32 1.0, %v8990
        %8996 = vset.pattern.permute.xlu0 0
        %8997 = vperm.xlu0 %8996, %v8546
        %v8998 = vpop.permute.xlu0 %8997
        %9001 = vset.pattern.permute.xlu0 0
        %9002 = vperm.xlu0 %9001, %v8547
        %v9003 = vpop.permute.xlu0 %9002
        %9006 = vset.pattern.permute.xlu0 0
        %9007 = vperm.xlu0 %9006, %v8548
        %v9008 = vpop.permute.xlu0 %9007
        %9011 = vset.pattern.permute.xlu0 0
        %9012 = vperm.xlu0 %9011, %v8549
        %v9013 = vpop.permute.xlu0 %9012
        %v9015 = vmul.f32 %v8998, %v8991
        %v9016 = vmul.f32 %v9003, %v8992
        %v9017 = vmul.f32 %v9008, %v8993
        %v9018 = vmul.f32 %v9013, %v8994
        %v9019 = vadd.f32 %v8541, %v9015
        %v9020 = vadd.f32 %v8542, %v9016
        %v9021 = vadd.f32 %v8543, %v9017
        %v9022 = vadd.f32 %v8544, %v9018
        %v9023 = vpack.c.bf16 %v9020, %v9019
        %v9024 = vpack.c.bf16 %v9022, %v9021
        %9025 = vst [vmem:[#allocation3 + $0x8] sm:$0xff] %v9023
        %9026 = vst [vmem:[#allocation3 + $0x20] sm:$0xff] %v9024
        %v9027 = vld [vmem:[#allocation3 + $0x8] sm:$0xff]
        %v9028 = vld [vmem:[#allocation3 + $0x20] sm:$0xff]
        %9031 = vrot.lane.b32.xlu0 %v9027, 126
        %v9032 = vpop.permute.xlu0 %9031
        %9033 = vrot.lane.b32.xlu0 %v9028, 126
        %v9034 = vpop.permute.xlu0 %9033
        %9037 = vst.msk [vmem:[#allocation3] sm:$0xff] %vm1974, %v9032
        %9038 = vst.msk [vmem:[#allocation3 + $0x18] sm:$0xff] %vm1974, %v9034
        %v9039 = vld [vmem:[#allocation3 + $0x8] sm:$0xff]
        %v9040 = vld [vmem:[#allocation3 + $0x20] sm:$0xff]
        %9043 = vrot.lane.b32.xlu0 %v9039, 2
        %v9044 = vpop.permute.xlu0 %9043
        %9045 = vrot.lane.b32.xlu0 %v9040, 2
        %v9046 = vpop.permute.xlu0 %9045
        %9049 = vst.msk [vmem:[#allocation3 + $0x10] sm:$0xff] %vm1987, %v9044
        %9050 = vst.msk [vmem:[#allocation3 + $0x28] sm:$0xff] %vm1987, %v9046
        %s9051 = scalar_lea.vmem [#allocation15], 160
        %v9052 = vld [vmem:[%s9051] sm:$0xff]
        %v9053 = vld [vmem:[%s9051 + $0x8] sm:$0xff]
        %v9054 = vld [vmem:[%s9051 + $0x10] sm:$0xff]
        %v9055 = vld [vmem:[%s9051 + $0x18] sm:$0xff]
        %s9056 = scalar_lea.vmem [#allocation13], 240
        %v9057 = vld [vmem:[%s9056] sm:$0xf]
        %v9058 = vld [vmem:[%s9056 + $0x4] sm:$0xf]
        %v9059 = vld [vmem:[%s9056 + $0x8] sm:$0xf]
        %v9060 = vld [vmem:[%s9056 + $0xc] sm:$0xf]
        %v9061 = vld [vmem:[#allocation3] sm:$0xff]
        %v9062 = vld [vmem:[#allocation3 + $0x8] sm:$0xff]
        %v9063 = vld [vmem:[#allocation3 + $0x18] sm:$0xff]
        %v9064 = vld [vmem:[#allocation3 + $0x20] sm:$0xff]
        %v9069 = vunpack.c.l.b16 %v9057
        %v9070 = vunpack.c.l.b16 %v9058
        %v9071 = vunpack.c.l.b16 %v9059
        %v9072 = vunpack.c.l.b16 %v9060
        %v9073 = vpack.c.b16 %v9070, %v9069
        %v9074 = vpack.c.b16 %v9072, %v9071
        %9079 = vrot.lane.b32.xlu0 %v9061, 1
        %v9080 = vpop.permute.xlu0 %9079
        %9081 = vrot.lane.b32.xlu0 %v9062, 1
        %v9082 = vpop.permute.xlu0 %9081
        %9083 = vrot.lane.b32.xlu0 %v9063, 1
        %v9084 = vpop.permute.xlu0 %9083
        %9085 = vrot.lane.b32.xlu0 %v9064, 1
        %v9086 = vpop.permute.xlu0 %9085
        %v9087 = vsel %vm2024, %v9080, %v9082
        %v9088 = vsel %vm2024, %v9084, %v9086
        %v9092 = vsel %vm2029, %v9073, 0
        %v9095 = vsel %vm2029, %v9074, 0
        %9097 = vmatprep.subr.bf16.mxu0 0
        %9098 = vmatpush1.bf16.msra.mxu0 %v9087
        %9099 = vmatprep.subr.bf16.mxu0 0
        %9100 = vmatpush1.bf16.msra.mxu0 %v9088
        %9101 = vmatprep.subr.bf16.mxu0 0
        %9102 = vmatpush1.bf16.msra.mxu0 0
        %9103 = vmatprep.subr.bf16.mxu0 0
        %9104 = vmatpush1.bf16.msra.mxu0 0
        %9105 = vmatprep.subr.bf16.mxu0 0
        %9106 = vmatpush1.bf16.msra.mxu0 0
        %9107 = vmatprep.subr.bf16.mxu0 0
        %9108 = vmatpush1.bf16.msra.mxu0 0
        %9109 = vmatprep.subr.bf16.mxu0 0
        %9110 = vmatpush1.bf16.msra.mxu0 0
        %9111 = vmatprep.subr.bf16.mxu0 0
        %9112 = vmatpush1.bf16.msra.mxu0 0
        %9113 = vmatprep.subr.bf16.mxu0 0
        %9114 = vmatpush1.bf16.msra.mxu0 0
        %9115 = vmatprep.subr.bf16.mxu0 0
        %9116 = vmatpush1.bf16.msra.mxu0 0
        %9117 = vmatprep.subr.bf16.mxu0 0
        %9118 = vmatpush1.bf16.msra.mxu0 0
        %9119 = vmatprep.subr.bf16.mxu0 0
        %9120 = vmatpush1.bf16.msra.mxu0 0
        %9121 = vmatprep.subr.bf16.mxu0 0
        %9122 = vmatpush1.bf16.msra.mxu0 0
        %9123 = vmatprep.subr.bf16.mxu0 0
        %9124 = vmatpush1.bf16.msra.mxu0 0
        %9125 = vmatprep.subr.bf16.mxu0 0
        %9126 = vmatpush1.bf16.msra.mxu0 0
        %9127 = vmatprep.subr.bf16.mxu0 0
        %9128 = vmatpush1.bf16.msra.mxu0 0
        %9129 = vmatprep.mubr.bf16.mxu0 0
        %9130 = vmatmul.mubr.bf16.gmra.mrb[0].mxu0 %v9092
        %v9131 = vpop.f32.mrb[0].mxu0
        %v9132 = vadd.f32 0.0, %v9131
        %v9133 = vpop.f32.mrb[0].mxu0
        %v9134 = vpop.f32.mrb[0].mxu0
        %v9135 = vadd.f32 0.0, %v9134
        %v9136 = vpop.f32.mrb[0].mxu0
        %9137 = vmatprep.mubr.bf16.mxu0 0
        %9138 = vmatmul.mubr.bf16.gmra.mrb[0].mxu0 %v9095
        %v9139 = vpop.f32.mrb[0].mxu0
        %v9140 = vadd.f32 0.0, %v9139
        %v9141 = vpop.f32.mrb[0].mxu0
        %v9142 = vpop.f32.mrb[0].mxu0
        %v9143 = vadd.f32 0.0, %v9142
        %v9144 = vpop.f32.mrb[0].mxu0
        %9145 = vdwg.mxu0
        %9147 = vset.pattern.permute.xlu0 0
        %9148 = vperm.xlu0 %9147, %v9052
        %v9149 = vpop.permute.xlu0 %9148
        %9152 = vset.pattern.permute.xlu0 0
        %9153 = vperm.xlu0 %9152, %v9053
        %v9154 = vpop.permute.xlu0 %9153
        %9157 = vset.pattern.permute.xlu0 0
        %9158 = vperm.xlu0 %9157, %v9054
        %v9159 = vpop.permute.xlu0 %9158
        %9162 = vset.pattern.permute.xlu0 0
        %9163 = vperm.xlu0 %9162, %v9055
        %v9164 = vpop.permute.xlu0 %9163
        %v9166 = vadd.f32 %v9149, %v9132
        %v9167 = vadd.f32 %v9154, %v9135
        %v9168 = vadd.f32 %v9159, %v9140
        %v9169 = vadd.f32 %v9164, %v9143
        %s9170 = scalar_lea.vmem [#allocation13], 256
        %v9171 = vld [vmem:[%s9170] sm:$0xf]
        %v9172 = vld [vmem:[%s9170 + $0x4] sm:$0xf]
        %v9173 = vld [vmem:[%s9170 + $0x8] sm:$0xf]
        %v9174 = vld [vmem:[%s9170 + $0xc] sm:$0xf]
        %v9179 = vunpack.c.l.b16 %v9171
        %v9180 = vunpack.c.l.b16 %v9172
        %v9181 = vunpack.c.l.b16 %v9173
        %v9182 = vunpack.c.l.b16 %v9174
        %v9183 = vpack.c.b16 %v9180, %v9179
        %v9184 = vpack.c.b16 %v9182, %v9181
        %v9186 = vsel %vm2029, %v9183, 0
        %v9189 = vsel %vm2029, %v9184, 0
        %9191 = vmatprep.subr.bf16.mxu0 0
        %9192 = vmatpush1.bf16.msra.mxu0 %v9062
        %9193 = vmatprep.subr.bf16.mxu0 0
        %9194 = vmatpush1.bf16.msra.mxu0 %v9064
        %9195 = vmatprep.subr.bf16.mxu0 0
        %9196 = vmatpush1.bf16.msra.mxu0 0
        %9197 = vmatprep.subr.bf16.mxu0 0
        %9198 = vmatpush1.bf16.msra.mxu0 0
        %9199 = vmatprep.subr.bf16.mxu0 0
        %9200 = vmatpush1.bf16.msra.mxu0 0
        %9201 = vmatprep.subr.bf16.mxu0 0
        %9202 = vmatpush1.bf16.msra.mxu0 0
        %9203 = vmatprep.subr.bf16.mxu0 0
        %9204 = vmatpush1.bf16.msra.mxu0 0
        %9205 = vmatprep.subr.bf16.mxu0 0
        %9206 = vmatpush1.bf16.msra.mxu0 0
        %9207 = vmatprep.subr.bf16.mxu0 0
        %9208 = vmatpush1.bf16.msra.mxu0 0
        %9209 = vmatprep.subr.bf16.mxu0 0
        %9210 = vmatpush1.bf16.msra.mxu0 0
        %9211 = vmatprep.subr.bf16.mxu0 0
        %9212 = vmatpush1.bf16.msra.mxu0 0
        %9213 = vmatprep.subr.bf16.mxu0 0
        %9214 = vmatpush1.bf16.msra.mxu0 0
        %9215 = vmatprep.subr.bf16.mxu0 0
        %9216 = vmatpush1.bf16.msra.mxu0 0
        %9217 = vmatprep.subr.bf16.mxu0 0
        %9218 = vmatpush1.bf16.msra.mxu0 0
        %9219 = vmatprep.subr.bf16.mxu0 0
        %9220 = vmatpush1.bf16.msra.mxu0 0
        %9221 = vmatprep.subr.bf16.mxu0 0
        %9222 = vmatpush1.bf16.msra.mxu0 0
        %9223 = vmatprep.mubr.bf16.mxu0 0
        %9224 = vmatmul.mubr.bf16.gmra.mrb[0].mxu0 %v9186
        %v9225 = vpop.f32.mrb[0].mxu0
        %v9226 = vadd.f32 0.0, %v9225
        %v9227 = vpop.f32.mrb[0].mxu0
        %v9228 = vpop.f32.mrb[0].mxu0
        %v9229 = vadd.f32 0.0, %v9228
        %v9230 = vpop.f32.mrb[0].mxu0
        %9231 = vmatprep.mubr.bf16.mxu0 0
        %9232 = vmatmul.mubr.bf16.gmra.mrb[0].mxu0 %v9189
        %v9233 = vpop.f32.mrb[0].mxu0
        %v9234 = vadd.f32 0.0, %v9233
        %v9235 = vpop.f32.mrb[0].mxu0
        %v9236 = vpop.f32.mrb[0].mxu0
        %v9237 = vadd.f32 0.0, %v9236
        %v9238 = vpop.f32.mrb[0].mxu0
        %9239 = vdwg.mxu0
        %v9240 = vadd.f32 %v9166, %v9226
        %v9241 = vadd.f32 %v9167, %v9229
        %v9242 = vadd.f32 %v9168, %v9234
        %v9243 = vadd.f32 %v9169, %v9237
        %s9244 = scalar_lea.vmem [#allocation13], 272
        %v9245 = vld [vmem:[%s9244] sm:$0xf]
        %v9246 = vld [vmem:[%s9244 + $0x4] sm:$0xf]
        %v9247 = vld [vmem:[%s9244 + $0x8] sm:$0xf]
        %v9248 = vld [vmem:[%s9244 + $0xc] sm:$0xf]
        %v9249 = vld [vmem:[#allocation3 + $0x8] sm:$0xff]
        %v9250 = vld [vmem:[#allocation3 + $0x10] sm:$0xff]
        %v9251 = vld [vmem:[#allocation3 + $0x20] sm:$0xff]
        %v9252 = vld [vmem:[#allocation3 + $0x28] sm:$0xff]
        %v9257 = vunpack.c.l.b16 %v9245
        %v9258 = vunpack.c.l.b16 %v9246
        %v9259 = vunpack.c.l.b16 %v9247
        %v9260 = vunpack.c.l.b16 %v9248
        %v9261 = vpack.c.b16 %v9258, %v9257
        %v9262 = vpack.c.b16 %v9260, %v9259
        %9267 = vrot.lane.b32.xlu0 %v9249, 127
        %v9268 = vpop.permute.xlu0 %9267
        %9269 = vrot.lane.b32.xlu0 %v9250, 127
        %v9270 = vpop.permute.xlu0 %9269
        %9271 = vrot.lane.b32.xlu0 %v9251, 127
        %v9272 = vpop.permute.xlu0 %9271
        %9273 = vrot.lane.b32.xlu0 %v9252, 127
        %v9274 = vpop.permute.xlu0 %9273
        %v9275 = vsel %vm2214, %v9268, %v9270
        %v9276 = vsel %vm2214, %v9272, %v9274
        %v9280 = vsel %vm2029, %v9261, 0
        %v9283 = vsel %vm2029, %v9262, 0
        %9285 = vmatprep.subr.bf16.mxu0 0
        %9286 = vmatpush1.bf16.msra.mxu0 %v9275
        %9287 = vmatprep.subr.bf16.mxu0 0
        %9288 = vmatpush1.bf16.msra.mxu0 %v9276
        %9289 = vmatprep.subr.bf16.mxu0 0
        %9290 = vmatpush1.bf16.msra.mxu0 0
        %9291 = vmatprep.subr.bf16.mxu0 0
        %9292 = vmatpush1.bf16.msra.mxu0 0
        %9293 = vmatprep.subr.bf16.mxu0 0
        %9294 = vmatpush1.bf16.msra.mxu0 0
        %9295 = vmatprep.subr.bf16.mxu0 0
        %9296 = vmatpush1.bf16.msra.mxu0 0
        %9297 = vmatprep.subr.bf16.mxu0 0
        %9298 = vmatpush1.bf16.msra.mxu0 0
        %9299 = vmatprep.subr.bf16.mxu0 0
        %9300 = vmatpush1.bf16.msra.mxu0 0
        %9301 = vmatprep.subr.bf16.mxu0 0
        %9302 = vmatpush1.bf16.msra.mxu0 0
        %9303 = vmatprep.subr.bf16.mxu0 0
        %9304 = vmatpush1.bf16.msra.mxu0 0
        %9305 = vmatprep.subr.bf16.mxu0 0
        %9306 = vmatpush1.bf16.msra.mxu0 0
        %9307 = vmatprep.subr.bf16.mxu0 0
        %9308 = vmatpush1.bf16.msra.mxu0 0
        %9309 = vmatprep.subr.bf16.mxu0 0
        %9310 = vmatpush1.bf16.msra.mxu0 0
        %9311 = vmatprep.subr.bf16.mxu0 0
        %9312 = vmatpush1.bf16.msra.mxu0 0
        %9313 = vmatprep.subr.bf16.mxu0 0
        %9314 = vmatpush1.bf16.msra.mxu0 0
        %9315 = vmatprep.subr.bf16.mxu0 0
        %9316 = vmatpush1.bf16.msra.mxu0 0
        %9317 = vmatprep.mubr.bf16.mxu0 0
        %9318 = vmatmul.mubr.bf16.gmra.mrb[0].mxu0 %v9280
        %v9319 = vpop.f32.mrb[0].mxu0
        %v9320 = vadd.f32 0.0, %v9319
        %v9321 = vpop.f32.mrb[0].mxu0
        %v9322 = vpop.f32.mrb[0].mxu0
        %v9323 = vadd.f32 0.0, %v9322
        %v9324 = vpop.f32.mrb[0].mxu0
        %9325 = vmatprep.mubr.bf16.mxu0 0
        %9326 = vmatmul.mubr.bf16.gmra.mrb[0].mxu0 %v9283
        %v9327 = vpop.f32.mrb[0].mxu0
        %v9328 = vadd.f32 0.0, %v9327
        %v9329 = vpop.f32.mrb[0].mxu0
        %v9330 = vpop.f32.mrb[0].mxu0
        %v9331 = vadd.f32 0.0, %v9330
        %v9332 = vpop.f32.mrb[0].mxu0
        %9333 = vdwg.mxu0
        %v9334 = vadd.f32 %v9240, %v9320
        %v9335 = vadd.f32 %v9241, %v9323
        %v9336 = vadd.f32 %v9242, %v9328
        %v9337 = vadd.f32 %v9243, %v9331
        %v9338 = vadd.f32 %v9334, %v6480
        %v9339 = vadd.f32 %v9335, %v6481
        %v9340 = vadd.f32 %v9336, %v6482
        %v9341 = vadd.f32 %v9337, %v6483
        %9342 = vst [vmem:[%s489] sm:$0xff] %v9338
        %9343 = vst [vmem:[%s489 + $0x8] sm:$0xff] %v9339
        %9344 = vst [vmem:[%s489 + $0x10] sm:$0xff] %v9340
        %9345 = vst [vmem:[%s489 + $0x18] sm:$0xff] %v9341
        %s9346 = sand.u32 %s239, 1
        %s9347 = scalar_lea.sflag [#allocation6], %s9346
        %s9348 = sand.u32 %s239, 1
        %s9349 = smul.addr %s9348, 32
        %s9350 = scalar_lea.vmem [#allocation19], %s9349
        // Predicated region
        $region93: #{ada_conv_block1d.1} parent=55 // pred_check
          %p9351 = pneg %p249
        $region94: #{ada_conv_block1d.1} parent=55 // pred_check_branch
          %9353 = sbr.rel (%p9351) target = $region96
        $region95: #{ada_conv_block1d.1} parent=55 // pred_region
          %s9355 = ssub.s32 512, 512
          %9356 = vsyncadd %s9347, %s9355
          %s9357 = smul.addr %s32, 4
          %s9358 = smul.addr %s9357, 128
          %s9359 = scalar_lea.hbm %s9, %s9358
          %s9360 = sshll.u32 %s9350, 4
          %s9361 = int_to_ptr.vmem [resolvable:$true] %s9360
          %9366 = dma.vmem_to_hbm [thread:$0]  %s9361, 512, %s9359, %s9347, 128, 128, 8
        $region96: #{ada_conv_block1d.1} parent=55 // pred_fallthru
          _
      $region56: #{ada_conv_block1d.1} parent=5 // pred_fallthru
        _
      %p9367 = scmp.le.s32.totalorder 2, %s27
      // Predicated region
      $region97: #{ada_conv_block1d.1} parent=5 // pred_check
        %p9368 = pneg %p9367
      $region98: #{ada_conv_block1d.1} parent=5 // pred_check_branch
        %9370 = sbr.rel (%p9368) target = $region100
      $region99: #{ada_conv_block1d.1} parent=5 // pred_region
        %s9371 = ssub.s32 %s27, 2
        // Predicated region
        $region101: #{ada_conv_block1d.1} parent=99 // pred_check
          %p9372 = pneg %p255
        $region102: #{ada_conv_block1d.1} parent=99 // pred_check_branch
          %9374 = sbr.rel (%p9372) target = $region104
        $region103: #{ada_conv_block1d.1} parent=99 // pred_region
          %s9375 = sand.u32 %s240, 1
          %s9376 = scalar_lea.sflag [#allocation6], %s9375
          %s9377 = sand.u32 %s240, 1
          %s9378 = smul.addr %s9377, 32
          %s9379 = scalar_lea.vmem [#allocation19], %s9378
          %9380 = dma.done %s9376, 512
        $region104: #{ada_conv_block1d.1} parent=99 // pred_fallthru
          _
      $region100: #{ada_conv_block1d.1} parent=5 // pred_fallthru
        _
    $region6: #{ada_conv_block1d.1} parent=1 // loop_footer
      %s31 = sadd.s32 1, %s27
    $region7: #{ada_conv_block1d.1} parent=1 // loop_footer_branch
      %26 = sbr.rel target = $region3
    $region8: #{ada_conv_block1d.1} parent=1 // loop_exit
      _
    %9381 = vsyncpa [#allocation5], 1
    %s9382 = scalar_lea.sflag [#allocation5], 1
    %9383 = vsyncpa %s9382, 1
    %9384 = vsyncpa [#allocation8], 1
    %s9385 = scalar_lea.sflag [#allocation8], 1
    %9386 = vsyncpa %s9385, 1
    %9387 = vsyncpa [#allocation11], 1
    %9388 = vsyncpa [#allocation14], 1
    %9389 = vsyncpa [#allocation17], 1
    %9390 = vsyncpa [#allocation6], 1
    %s9391 = scalar_lea.sflag [#allocation6], 1
    %9392 = vsyncpa %s9391, 1

</llo_original>
